<compile_context>
chip_gen: v5e
topology: v5e:2x2
jax: 0.10.0
libtpu: 0.0.40
codegen_flags: <defaults>
</compile_context>

<pallas_src>
import functools

import jax
import jax.numpy as jnp
from jax.experimental import pallas as pl
from jax.experimental.pallas import tpu as pltpu


def _generator_mlp_kernel(x_ref, w1_ref, b1_ref, w2_ref, b2_ref,
                          w3_ref, b3_ref, w4_ref, b4_ref, out_ref):
    """Whole 4-layer MLP in one invocation (all operands resident in VMEM).

    Weights stay bf16 and are fed directly to the MXU; only the small (Bp, K)
    activation is cast to bf16.  Accumulation, bias add, LeakyReLU(0.2) and
    tanh are f32 (matches the f32 PyTorch reference up to bf16 rounding)."""

    def leaky_relu(v):
        return jnp.where(v > 0, v, 0.2 * v)

    def layer(h, w_ref, b_ref):
        # bf16 LHS (tiny) x bf16 RHS (weights) -> f32 accumulation on the MXU.
        return jnp.dot(h.astype(jnp.bfloat16), w_ref[...],
                       preferred_element_type=jnp.float32) + b_ref[...]

    h = leaky_relu(layer(x_ref[...], w1_ref, b1_ref))
    h = leaky_relu(layer(h, w2_ref, b2_ref))
    h = leaky_relu(layer(h, w3_ref, b3_ref))
    out_ref[...] = jnp.tanh(layer(h, w4_ref, b4_ref)).astype(out_ref.dtype)


# Whole-array, single-buffered VMEM operand (no grid, no pipelining).
_VMEM_SPEC = pl.BlockSpec(memory_space=pltpu.MemorySpace.VMEM)


@functools.partial(jax.jit, static_argnames=("img_size", "latent_dim"))
def generator_forward(latent_space, labels, params, *, img_size=28, latent_dim=100):
    """JAX/Pallas equivalent of Generator.forward (expects prepared params)."""
    emb_table = params["emb"]                  # (classes, classes) f32
    w1, b1 = params["w1"], params["b1"]        # (128, 256) bf16, (1, 256) f32
    w2, b2 = params["w2"], params["b2"]        # (256, 512) bf16
    w3, b3 = params["w3"], params["b3"]        # (512, 1024) bf16
    w4, b4 = params["w4"], params["b4"]        # (1024, 2432) bf16 (lane-padded)

    B = latent_space.shape[0]
    latent_space = latent_space.reshape(B, latent_dim)
    label_emb = emb_table[labels]                                  # gather (glue)
    inputs = jnp.concatenate([latent_space, label_emb], axis=1)    # (B, 110)

    in_dim_p = w1.shape[0]                     # 128 (lane-padded K)
    out_dim = img_size * img_size * 3          # 2352
    out_dim_p = w4.shape[1]                    # 2432 (lane-padded N)

    # Pad batch to a multiple of 8 (f32 sublane) and width to in_dim_p.
    Bp = max(8, ((B + 7) // 8) * 8)
    x = jnp.zeros((Bp, in_dim_p), jnp.float32)
    x = x.at[:B, :inputs.shape[1]].set(inputs.astype(jnp.float32))

    flops = 2 * Bp * sum(w.shape[0] * w.shape[1] for w in (w1, w2, w3, w4))
    bytes_accessed = (
        x.size * 4 + Bp * out_dim_p * 4
        + sum(w.size * 2 for w in (w1, w2, w3, w4))      # bf16 weight stream
        + sum(b.size * 4 for b in (b1, b2, b3, b4)))

    out_padded = pl.pallas_call(
        _generator_mlp_kernel,
        out_shape=jax.ShapeDtypeStruct((Bp, out_dim_p), jnp.float32),
        in_specs=[_VMEM_SPEC] * 9,
        out_specs=_VMEM_SPEC,
        compiler_params=pltpu.CompilerParams(
            vmem_limit_bytes=16 * 1024 * 1024,   # ~7 MiB actual residency
        ),
        cost_estimate=pl.CostEstimate(
            flops=flops,
            transcendentals=Bp * out_dim_p,
            bytes_accessed=bytes_accessed),
    )(x, w1, b1, w2, b2, w3, b3, w4, b4)

    # Drop batch/lane padding, reshape to (B, size, size, 3).
    return out_padded[:B, :out_dim].reshape(B, img_size, img_size, 3)


def init_generator_params(key, classes=10, latent_dim=100, size=28):
    """Deterministic f32 params in the PyTorch module's logical shapes.

    Linear weights stored as (in_features, out_features) so the kernel uses
    x @ W (equivalent to PyTorch's x @ W_pt.T). Biases stored as (1, out)."""
    dims = [latent_dim + classes, 256, 512, 1024, size * size * 3]
    keys = jax.random.split(key, 1 + 2 * (len(dims) - 1))
    params = {"emb": jax.random.normal(keys[0], (classes, classes), jnp.float32)}
    for li in range(len(dims) - 1):
        fan_in, fan_out = dims[li], dims[li + 1]
        bound = 1.0 / jnp.sqrt(fan_in)
        wk, bk = keys[1 + 2 * li], keys[2 + 2 * li]
        params[f"w{li + 1}"] = jax.random.uniform(
            wk, (fan_in, fan_out), jnp.float32, -bound, bound)
        params[f"b{li + 1}"] = jax.random.uniform(
            bk, (1, fan_out), jnp.float32, -bound, bound)
    return params


def _pad_to_multiple(x, axis, multiple):
    size = x.shape[axis]
    target = ((size + multiple - 1) // multiple) * multiple
    if target == size:
        return x
    pad = [(0, 0)] * x.ndim
    pad[axis] = (0, target - size)
    return jnp.pad(x, pad)


def prepare_generator_params(params):
    """One-time conversion to kernel layout: lane-pad w1 rows (110 -> 128) and
    w4/b4 cols (2352 -> 2432), cast weights to bf16 (biases stay f32)."""
    return {
        "emb": params["emb"],
        "w1": _pad_to_multiple(params["w1"], 0, 128).astype(jnp.bfloat16),
        "b1": params["b1"],
        "w2": params["w2"].astype(jnp.bfloat16),
        "b2": params["b2"],
        "w3": params["w3"].astype(jnp.bfloat16),
        "b3": params["b3"],
        "w4": _pad_to_multiple(params["w4"], 1, 128).astype(jnp.bfloat16),
        "b4": _pad_to_multiple(params["b4"], 1, 128),
    }


if __name__ == "__main__":
    classes, latent_dim, size = 10, 100, 28
    B = 2

    key = jax.random.PRNGKey(0)
    pkey, zkey, lkey = jax.random.split(key, 3)

    params = init_generator_params(pkey, classes=classes,
                                   latent_dim=latent_dim, size=size)
    kernel_params = prepare_generator_params(params)

    latent = jax.random.normal(zkey, (B, latent_dim), jnp.float32)
    labels = jax.random.randint(lkey, (B,), 0, classes)

    out = generator_forward(latent, labels, kernel_params,
                            img_size=size, latent_dim=latent_dim)
    out = jax.block_until_ready(out)

    # Pure-JAX f32 reference (kernel uses bf16 weights/activations on the MXU
    # -> loose tolerance).
    def ref_forward(latent, labels, p):
        inp = jnp.concatenate([latent.reshape(B, latent_dim), p["emb"][labels]], 1)
        h = inp
        for li in range(1, 4):
            h = h @ p[f"w{li}"] + p[f"b{li}"]
            h = jnp.where(h > 0, h, 0.2 * h)
        o = jnp.tanh(h @ p["w4"] + p["b4"])
        return o.reshape(B, size, size, 3)

    ref = ref_forward(latent, labels, params)

    assert out.shape == (B, size, size, 3), out.shape
    assert bool(jnp.all(jnp.isfinite(out)))
    assert bool(jnp.all(jnp.abs(out) <= 1.0 + 1e-6))        # tanh output range
    assert bool(jnp.max(jnp.abs(out - ref)) < 5e-2), float(jnp.max(jnp.abs(out - ref)))
    print("KERNEL_OK")
</pallas_src>

<mosaic_0001>
module attributes {stable_mosaic.version = 11 : i64} {
  func.func @_generator_mlp_kernel(%arg0: memref<8x128xf32, #tpu.memory_space<vmem>>, %arg1: memref<128x256xbf16, #tpu.memory_space<vmem>>, %arg2: memref<1x256xf32, #tpu.memory_space<vmem>>, %arg3: memref<256x512xbf16, #tpu.memory_space<vmem>>, %arg4: memref<1x512xf32, #tpu.memory_space<vmem>>, %arg5: memref<512x1024xbf16, #tpu.memory_space<vmem>>, %arg6: memref<1x1024xf32, #tpu.memory_space<vmem>>, %arg7: memref<1024x2432xbf16, #tpu.memory_space<vmem>>, %arg8: memref<1x2432xf32, #tpu.memory_space<vmem>>, %arg9: memref<8x2432xf32, #tpu.memory_space<vmem>>) attributes {dimension_semantics = [], scalar_prefetch = 0 : i64, scratch_operands = 0 : i64, tpu.core_type = #tpu.core_type<tc>} {
    %c0 = arith.constant 0 : index
    %c0_0 = arith.constant 0 : index
    %0 = vector.load %arg0[%c0, %c0_0] : memref<8x128xf32, #tpu.memory_space<vmem>>, vector<8x128xf32>
    %1 = arith.truncf %0 : vector<8x128xf32> to vector<8x128xbf16>
    %c0_1 = arith.constant 0 : index
    %c0_2 = arith.constant 0 : index
    %2 = vector.load %arg1[%c0_1, %c0_2] : memref<128x256xbf16, #tpu.memory_space<vmem>>, vector<128x256xbf16>
    %cst = arith.constant dense<0.000000e+00> : vector<8x256xf32>
    %3 = tpu.matmul %1, %2, %cst {dimension_numbers = #tpu.dot_dimension_numbers<[1], [0], [0], [1], [0, 0, 1, 1], [], []>} : vector<8x128xbf16>, vector<128x256xbf16>, vector<8x256xf32> -> vector<8x256xf32>
    %c0_3 = arith.constant 0 : index
    %c0_4 = arith.constant 0 : index
    %4 = vector.load %arg2[%c0_3, %c0_4] : memref<1x256xf32, #tpu.memory_space<vmem>>, vector<1x256xf32>
    %5 = vector.broadcast %4 : vector<1x256xf32> to vector<8x256xf32>
    %6 = arith.addf %3, %5 : vector<8x256xf32>
    %cst_5 = arith.constant 0.000000e+00 : f32
    %7 = vector.broadcast %cst_5 : f32 to vector<8x256xf32>
    %8 = arith.cmpf ogt, %6, %7 : vector<8x256xf32>
    %cst_6 = arith.constant 2.000000e-01 : f32
    %9 = vector.broadcast %cst_6 : f32 to vector<8x256xf32>
    %10 = arith.mulf %9, %6 : vector<8x256xf32>
    %11 = arith.select %8, %6, %10 : vector<8x256xi1>, vector<8x256xf32>
    %12 = arith.truncf %11 : vector<8x256xf32> to vector<8x256xbf16>
    %c0_7 = arith.constant 0 : index
    %c0_8 = arith.constant 0 : index
    %13 = vector.load %arg3[%c0_7, %c0_8] : memref<256x512xbf16, #tpu.memory_space<vmem>>, vector<256x512xbf16>
    %cst_9 = arith.constant dense<0.000000e+00> : vector<8x512xf32>
    %14 = tpu.matmul %12, %13, %cst_9 {dimension_numbers = #tpu.dot_dimension_numbers<[1], [0], [0], [1], [0, 0, 1, 1], [], []>} : vector<8x256xbf16>, vector<256x512xbf16>, vector<8x512xf32> -> vector<8x512xf32>
    %c0_10 = arith.constant 0 : index
    %c0_11 = arith.constant 0 : index
    %15 = vector.load %arg4[%c0_10, %c0_11] : memref<1x512xf32, #tpu.memory_space<vmem>>, vector<1x512xf32>
    %16 = vector.broadcast %15 : vector<1x512xf32> to vector<8x512xf32>
    %17 = arith.addf %14, %16 : vector<8x512xf32>
    %cst_12 = arith.constant 0.000000e+00 : f32
    %18 = vector.broadcast %cst_12 : f32 to vector<8x512xf32>
    %19 = arith.cmpf ogt, %17, %18 : vector<8x512xf32>
    %cst_13 = arith.constant 2.000000e-01 : f32
    %20 = vector.broadcast %cst_13 : f32 to vector<8x512xf32>
    %21 = arith.mulf %20, %17 : vector<8x512xf32>
    %22 = arith.select %19, %17, %21 : vector<8x512xi1>, vector<8x512xf32>
    %23 = arith.truncf %22 : vector<8x512xf32> to vector<8x512xbf16>
    %c0_14 = arith.constant 0 : index
    %c0_15 = arith.constant 0 : index
    %24 = vector.load %arg5[%c0_14, %c0_15] : memref<512x1024xbf16, #tpu.memory_space<vmem>>, vector<512x1024xbf16>
    %cst_16 = arith.constant dense<0.000000e+00> : vector<8x1024xf32>
    %25 = tpu.matmul %23, %24, %cst_16 {dimension_numbers = #tpu.dot_dimension_numbers<[1], [0], [0], [1], [0, 0, 1, 1], [], []>} : vector<8x512xbf16>, vector<512x1024xbf16>, vector<8x1024xf32> -> vector<8x1024xf32>
    %c0_17 = arith.constant 0 : index
    %c0_18 = arith.constant 0 : index
    %26 = vector.load %arg6[%c0_17, %c0_18] : memref<1x1024xf32, #tpu.memory_space<vmem>>, vector<1x1024xf32>
    %27 = vector.broadcast %26 : vector<1x1024xf32> to vector<8x1024xf32>
    %28 = arith.addf %25, %27 : vector<8x1024xf32>
    %cst_19 = arith.constant 0.000000e+00 : f32
    %29 = vector.broadcast %cst_19 : f32 to vector<8x1024xf32>
    %30 = arith.cmpf ogt, %28, %29 : vector<8x1024xf32>
    %cst_20 = arith.constant 2.000000e-01 : f32
    %31 = vector.broadcast %cst_20 : f32 to vector<8x1024xf32>
    %32 = arith.mulf %31, %28 : vector<8x1024xf32>
    %33 = arith.select %30, %28, %32 : vector<8x1024xi1>, vector<8x1024xf32>
    %34 = arith.truncf %33 : vector<8x1024xf32> to vector<8x1024xbf16>
    %c0_21 = arith.constant 0 : index
    %c0_22 = arith.constant 0 : index
    %35 = vector.load %arg7[%c0_21, %c0_22] : memref<1024x2432xbf16, #tpu.memory_space<vmem>>, vector<1024x2432xbf16>
    %cst_23 = arith.constant dense<0.000000e+00> : vector<8x2432xf32>
    %36 = tpu.matmul %34, %35, %cst_23 {dimension_numbers = #tpu.dot_dimension_numbers<[1], [0], [0], [1], [0, 0, 1, 1], [], []>} : vector<8x1024xbf16>, vector<1024x2432xbf16>, vector<8x2432xf32> -> vector<8x2432xf32>
    %c0_24 = arith.constant 0 : index
    %c0_25 = arith.constant 0 : index
    %37 = vector.load %arg8[%c0_24, %c0_25] : memref<1x2432xf32, #tpu.memory_space<vmem>>, vector<1x2432xf32>
    %38 = vector.broadcast %37 : vector<1x2432xf32> to vector<8x2432xf32>
    %39 = arith.addf %36, %38 : vector<8x2432xf32>
    %40 = math.tanh %39 : vector<8x2432xf32>
    %c0_26 = arith.constant 0 : index
    %c0_27 = arith.constant 0 : index
    %41 = vector.load %arg9[%c0_26, %c0_27] : memref<8x2432xf32, #tpu.memory_space<vmem>>, vector<8x2432xf32>
    tpu.vector_store %arg9[%c0_26, %c0_27], %40 {strides = array<i32>} : memref<8x2432xf32, #tpu.memory_space<vmem>>, vector<8x2432xf32>,
    return
  }
}

</mosaic_0001>

<llo_original>
// kernel: generator_forward.1
$region0: #{generator_forward.1}
  #allocation0 [shape = 'u32[]', space=smem, size = 0x4, offset = 0x4, fixed_abs, tag = 'smem constant byte address 0x4 - core index']
  #allocation1 [shape = 'u32[72,128]{1,0:T(1,128)}', space=vmem, size = 0x9000, scoped, tag = 'internal scratch']
  %s0 = inlined_call_operand.vmem [shape: f32[8,128], index: 0, kind: input, shape index: {}]
  %s1 = inlined_call_operand.hbm [shape: bf16[128,256], index: 1, kind: input, shape index: {}]
  %s2 = inlined_call_operand.hbm [shape: f32[1,256], index: 2, kind: input, shape index: {}]
  %s3 = inlined_call_operand.hbm [shape: bf16[256,512], index: 3, kind: input, shape index: {}]
  %s4 = inlined_call_operand.hbm [shape: f32[1,512], index: 4, kind: input, shape index: {}]
  %s5 = inlined_call_operand.hbm [shape: bf16[512,1024], index: 5, kind: input, shape index: {}]
  %s6 = inlined_call_operand.hbm [shape: f32[1,1024], index: 6, kind: input, shape index: {}]
  %s7 = inlined_call_operand.hbm [shape: bf16[1024,2432], index: 7, kind: input, shape index: {}]
  %s8 = inlined_call_operand.hbm [shape: f32[1,2432], index: 8, kind: input, shape index: {}]
  %s9 = inlined_call_operand.vmem [shape: f32[8,2432], index: 9, kind: output, shape index: {}]
  %s10 = sld [smem:[#allocation0]]
  $region78: #{generator_forward.1} parent=0
    _
  %s12 = ssub.s32 1, %s10
  %s13 = scalar_select 0, %s12, %s10
  $region1: #{generator_forward.1} parent=0
    #allocation2 [shape = 'u8[65536]{0}', space=vmem, size = 0x10000, scoped, tag = 'input window, operand 1, single buffered']
    #allocation3 [shape = 's32[1]{0}', space=sflag, size = 0x4, scoped, tag = 'scoped memory for generator_forward.1']
    #allocation4 [shape = 'u8[1024]{0}', space=vmem, size = 0x400, scoped, tag = 'input window, operand 2, single buffered']
    #allocation5 [shape = 's32[1]{0}', space=sflag, size = 0x4, scoped, tag = 'scoped memory for generator_forward.1']
    #allocation6 [shape = 'u8[262144]{0}', space=vmem, size = 0x40000, scoped, tag = 'input window, operand 3, single buffered']
    #allocation7 [shape = 'u8[2048]{0}', space=vmem, size = 0x800, scoped, tag = 'input window, operand 4, single buffered']
    #allocation8 [shape = 's32[1]{0}', space=sflag, size = 0x4, scoped, tag = 'scoped memory for generator_forward.1']
    #allocation9 [shape = 'u8[1048576]{0}', space=vmem, size = 0x100000, scoped, tag = 'input window, operand 5, single buffered']
    #allocation10 [shape = 'u8[4096]{0}', space=vmem, size = 0x1000, scoped, tag = 'input window, operand 6, single buffered']
    #allocation11 [shape = 's32[1]{0}', space=sflag, size = 0x4, scoped, tag = 'scoped memory for generator_forward.1']
    #allocation12 [shape = 'u8[4980736]{0}', space=vmem, size = 0x4c0000, scoped, tag = 'input window, operand 7, single buffered']
    #allocation13 [shape = 'u8[9728]{0}', space=vmem, size = 0x2800, scoped, tag = 'input window, operand 8, single buffered']
    #allocation14 [shape = 's32[1]{0}', space=sflag, size = 0x4, scoped, tag = 'scoped memory for generator_forward.1']
    %14 = vsyncpa [#allocation3], 0
    %15 = vsyncpa [#allocation5], 0
    %16 = vsyncpa [#allocation8], 0
    %17 = vsyncpa [#allocation11], 0
    %18 = vsyncpa [#allocation14], 0
    // Predicated region
    $region2: #{generator_forward.1} parent=1 // pred_check
      _
    $region3: #{generator_forward.1} parent=1 // pred_check_branch
      %20 = sbr.rel (0) target = $region5
    $region4: #{generator_forward.1} parent=1 // pred_region
      _
    $region5: #{generator_forward.1} parent=1 // pred_fallthru
      _
    // Predicated region
    $region6: #{generator_forward.1} parent=1 // pred_check
      _
    $region7: #{generator_forward.1} parent=1 // pred_check_branch
      %22 = sbr.rel (0) target = $region9
    $region8: #{generator_forward.1} parent=1 // pred_region
      %24 = vsyncadd [#allocation3], 0
      %s25 = sshll.u32 %s1, 4
      %s26 = int_to_ptr.hbm [resolvable:$true] %s25
      %s27 = sshll.u32 [#allocation2], 4
      %s28 = int_to_ptr.vmem [resolvable:$true] %s27
      %33 = dma.hbm_to_vmem [thread:$0]  %s26, 2048, %s28, [#allocation3], 128, 128, 8
    $region9: #{generator_forward.1} parent=1 // pred_fallthru
      _
    // Predicated region
    $region10: #{generator_forward.1} parent=1 // pred_check
      _
    $region11: #{generator_forward.1} parent=1 // pred_check_branch
      %35 = sbr.rel (0) target = $region13
    $region12: #{generator_forward.1} parent=1 // pred_region
      %37 = vsyncadd [#allocation5], 0
      %s39 = sshll.u32 %s2, 4
      %s40 = int_to_ptr.hbm [resolvable:$true] %s39
      %s41 = sshll.u32 [#allocation4], 4
      %s42 = int_to_ptr.vmem [resolvable:$true] %s41
      %44 = dma.hbm_to_vmem [thread:$0]  %s40, 32, %s42, [#allocation5]
    $region13: #{generator_forward.1} parent=1 // pred_fallthru
      _
    // Predicated region
    $region14: #{generator_forward.1} parent=1 // pred_check
      _
    $region15: #{generator_forward.1} parent=1 // pred_check_branch
      %46 = sbr.rel (0) target = $region17
    $region16: #{generator_forward.1} parent=1 // pred_region
      %48 = vsyncadd [#allocation5], 0
      %s49 = sshll.u32 %s3, 4
      %s50 = int_to_ptr.hbm [resolvable:$true] %s49
      %s51 = sshll.u32 [#allocation6], 4
      %s52 = int_to_ptr.vmem [resolvable:$true] %s51
      %57 = dma.hbm_to_vmem [thread:$0]  %s50, 8192, %s52, [#allocation5], 256, 256, 16
    $region17: #{generator_forward.1} parent=1 // pred_fallthru
      _
    // Predicated region
    $region18: #{generator_forward.1} parent=1 // pred_check
      _
    $region19: #{generator_forward.1} parent=1 // pred_check_branch
      %59 = sbr.rel (0) target = $region21
    $region20: #{generator_forward.1} parent=1 // pred_region
      %61 = vsyncadd [#allocation8], 0
      %s63 = sshll.u32 %s4, 4
      %s64 = int_to_ptr.hbm [resolvable:$true] %s63
      %s65 = sshll.u32 [#allocation7], 4
      %s66 = int_to_ptr.vmem [resolvable:$true] %s65
      %68 = dma.hbm_to_vmem [thread:$0]  %s64, 64, %s66, [#allocation8]
    $region21: #{generator_forward.1} parent=1 // pred_fallthru
      _
    // Predicated region
    $region22: #{generator_forward.1} parent=1 // pred_check
      _
    $region23: #{generator_forward.1} parent=1 // pred_check_branch
      %70 = sbr.rel (0) target = $region25
    $region24: #{generator_forward.1} parent=1 // pred_region
      %72 = vsyncadd [#allocation8], 0
      %s73 = sshll.u32 %s5, 4
      %s74 = int_to_ptr.hbm [resolvable:$true] %s73
      %s75 = sshll.u32 [#allocation9], 4
      %s76 = int_to_ptr.vmem [resolvable:$true] %s75
      %81 = dma.hbm_to_vmem [thread:$0]  %s74, 32768, %s76, [#allocation8], 512, 512, 32
    $region25: #{generator_forward.1} parent=1 // pred_fallthru
      _
    // Predicated region
    $region26: #{generator_forward.1} parent=1 // pred_check
      _
    $region27: #{generator_forward.1} parent=1 // pred_check_branch
      %83 = sbr.rel (0) target = $region29
    $region28: #{generator_forward.1} parent=1 // pred_region
      %85 = vsyncadd [#allocation11], 0
      %s87 = sshll.u32 %s6, 4
      %s88 = int_to_ptr.hbm [resolvable:$true] %s87
      %s89 = sshll.u32 [#allocation10], 4
      %s90 = int_to_ptr.vmem [resolvable:$true] %s89
      %92 = dma.hbm_to_vmem [thread:$0]  %s88, 128, %s90, [#allocation11]
    $region29: #{generator_forward.1} parent=1 // pred_fallthru
      _
    // Predicated region
    $region30: #{generator_forward.1} parent=1 // pred_check
      _
    $region31: #{generator_forward.1} parent=1 // pred_check_branch
      %94 = sbr.rel (0) target = $region33
    $region32: #{generator_forward.1} parent=1 // pred_region
      %96 = vsyncadd [#allocation11], 0
      %s97 = sshll.u32 %s7, 4
      %s98 = int_to_ptr.hbm [resolvable:$true] %s97
      %s99 = sshll.u32 [#allocation12], 4
      %s100 = int_to_ptr.vmem [resolvable:$true] %s99
      %105 = dma.hbm_to_vmem [thread:$0]  %s98, 155648, %s100, [#allocation11], 1216, 1216, 76
    $region33: #{generator_forward.1} parent=1 // pred_fallthru
      _
    // Predicated region
    $region34: #{generator_forward.1} parent=1 // pred_check
      _
    $region35: #{generator_forward.1} parent=1 // pred_check_branch
      %107 = sbr.rel (0) target = $region37
    $region36: #{generator_forward.1} parent=1 // pred_region
      %109 = vsyncadd [#allocation14], 0
      %s111 = sshll.u32 %s8, 4
      %s112 = int_to_ptr.hbm [resolvable:$true] %s111
      %s113 = sshll.u32 [#allocation13], 4
      %s114 = int_to_ptr.vmem [resolvable:$true] %s113
      %116 = dma.hbm_to_vmem [thread:$0]  %s112, 304, %s114, [#allocation14]
    $region37: #{generator_forward.1} parent=1 // pred_fallthru
      _
    // Predicated region
    $region38: #{generator_forward.1} parent=1 // pred_check
      _
    $region39: #{generator_forward.1} parent=1 // pred_check_branch
      %118 = sbr.rel (0) target = $region41
    $region40: #{generator_forward.1} parent=1 // pred_region
      %120 = dma.done [#allocation3], 2048
    $region41: #{generator_forward.1} parent=1 // pred_fallthru
      _
    // Predicated region
    $region42: #{generator_forward.1} parent=1 // pred_check
      _
    $region43: #{generator_forward.1} parent=1 // pred_check_branch
      %122 = sbr.rel (0) target = $region45
    $region44: #{generator_forward.1} parent=1 // pred_region
      %124 = dma.done [#allocation5], 32
    $region45: #{generator_forward.1} parent=1 // pred_fallthru
      _
    // Predicated region
    $region46: #{generator_forward.1} parent=1 // pred_check
      _
    $region47: #{generator_forward.1} parent=1 // pred_check_branch
      %126 = sbr.rel (0) target = $region49
    $region48: #{generator_forward.1} parent=1 // pred_region
      %128 = dma.done [#allocation5], 8192
    $region49: #{generator_forward.1} parent=1 // pred_fallthru
      _
    // Predicated region
    $region50: #{generator_forward.1} parent=1 // pred_check
      _
    $region51: #{generator_forward.1} parent=1 // pred_check_branch
      %130 = sbr.rel (0) target = $region53
    $region52: #{generator_forward.1} parent=1 // pred_region
      %132 = dma.done [#allocation8], 64
    $region53: #{generator_forward.1} parent=1 // pred_fallthru
      _
    // Predicated region
    $region54: #{generator_forward.1} parent=1 // pred_check
      _
    $region55: #{generator_forward.1} parent=1 // pred_check_branch
      %134 = sbr.rel (0) target = $region57
    $region56: #{generator_forward.1} parent=1 // pred_region
      %136 = dma.done [#allocation8], 32768
    $region57: #{generator_forward.1} parent=1 // pred_fallthru
      _
    // Predicated region
    $region58: #{generator_forward.1} parent=1 // pred_check
      _
    $region59: #{generator_forward.1} parent=1 // pred_check_branch
      %138 = sbr.rel (0) target = $region61
    $region60: #{generator_forward.1} parent=1 // pred_region
      %140 = dma.done [#allocation11], 128
    $region61: #{generator_forward.1} parent=1 // pred_fallthru
      _
    // Predicated region
    $region62: #{generator_forward.1} parent=1 // pred_check
      _
    $region63: #{generator_forward.1} parent=1 // pred_check_branch
      %142 = sbr.rel (0) target = $region65
    $region64: #{generator_forward.1} parent=1 // pred_region
      %144 = dma.done [#allocation11], 155648
    $region65: #{generator_forward.1} parent=1 // pred_fallthru
      _
    // Predicated region
    $region66: #{generator_forward.1} parent=1 // pred_check
      _
    $region67: #{generator_forward.1} parent=1 // pred_check_branch
      %146 = sbr.rel (0) target = $region69
    $region68: #{generator_forward.1} parent=1 // pred_region
      %148 = dma.done [#allocation14], 304
    $region69: #{generator_forward.1} parent=1 // pred_fallthru
      _
    %v149 = vld [vmem:[%s0] sm:$0xff]
    %v150 = vpack.c.bf16 %v149, %v149
    %v151 = vld [vmem:[#allocation2] sm:$0xff]
    %v152 = vld [vmem:[#allocation2 + $0x8] sm:$0xff]
    %v153 = vld [vmem:[#allocation2 + $0x10] sm:$0xff]
    %v154 = vld [vmem:[#allocation2 + $0x18] sm:$0xff]
    %v155 = vld [vmem:[#allocation2 + $0x20] sm:$0xff]
    %v156 = vld [vmem:[#allocation2 + $0x28] sm:$0xff]
    %v157 = vld [vmem:[#allocation2 + $0x30] sm:$0xff]
    %v158 = vld [vmem:[#allocation2 + $0x38] sm:$0xff]
    %v159 = vld [vmem:[#allocation2 + $0x40] sm:$0xff]
    %v160 = vld [vmem:[#allocation2 + $0x48] sm:$0xff]
    %v161 = vld [vmem:[#allocation2 + $0x50] sm:$0xff]
    %v162 = vld [vmem:[#allocation2 + $0x58] sm:$0xff]
    %v163 = vld [vmem:[#allocation2 + $0x60] sm:$0xff]
    %v164 = vld [vmem:[#allocation2 + $0x68] sm:$0xff]
    %v165 = vld [vmem:[#allocation2 + $0x70] sm:$0xff]
    %v166 = vld [vmem:[#allocation2 + $0x78] sm:$0xff]
    %v167 = vld [vmem:[#allocation4] sm:$0x3]
    %v169 = vperm.slane %v167, 0
    %v170 = vperm.slane %v167, 1
    %v189 = vunpack.c.l.b16 %v151
    %v190 = vunpack.c.h.b16 %v151
    %v191 = vunpack.c.l.b16 %v152
    %v192 = vunpack.c.h.b16 %v152
    %v193 = vunpack.c.l.b16 %v153
    %v194 = vunpack.c.h.b16 %v153
    %v195 = vunpack.c.l.b16 %v154
    %v196 = vunpack.c.h.b16 %v154
    %v197 = vunpack.c.l.b16 %v155
    %v198 = vunpack.c.h.b16 %v155
    %v199 = vunpack.c.l.b16 %v156
    %v200 = vunpack.c.h.b16 %v156
    %v201 = vunpack.c.l.b16 %v157
    %v202 = vunpack.c.h.b16 %v157
    %v203 = vunpack.c.l.b16 %v158
    %v204 = vunpack.c.h.b16 %v158
    %v205 = vunpack.c.l.b16 %v159
    %v206 = vunpack.c.h.b16 %v159
    %v207 = vunpack.c.l.b16 %v160
    %v208 = vunpack.c.h.b16 %v160
    %v209 = vunpack.c.l.b16 %v161
    %v210 = vunpack.c.h.b16 %v161
    %v211 = vunpack.c.l.b16 %v162
    %v212 = vunpack.c.h.b16 %v162
    %v213 = vunpack.c.l.b16 %v163
    %v214 = vunpack.c.h.b16 %v163
    %v215 = vunpack.c.l.b16 %v164
    %v216 = vunpack.c.h.b16 %v164
    %v217 = vunpack.c.l.b16 %v165
    %v218 = vunpack.c.h.b16 %v165
    %v219 = vunpack.c.l.b16 %v166
    %v220 = vunpack.c.h.b16 %v166
    %v221 = vpack.c.b16 %v191, %v189
    %v222 = vpack.c.b16 %v192, %v190
    %v223 = vpack.c.b16 %v195, %v193
    %v224 = vpack.c.b16 %v196, %v194
    %v225 = vpack.c.b16 %v199, %v197
    %v226 = vpack.c.b16 %v200, %v198
    %v227 = vpack.c.b16 %v203, %v201
    %v228 = vpack.c.b16 %v204, %v202
    %v229 = vpack.c.b16 %v207, %v205
    %v230 = vpack.c.b16 %v208, %v206
    %v231 = vpack.c.b16 %v211, %v209
    %v232 = vpack.c.b16 %v212, %v210
    %v233 = vpack.c.b16 %v215, %v213
    %v234 = vpack.c.b16 %v216, %v214
    %v235 = vpack.c.b16 %v219, %v217
    %v236 = vpack.c.b16 %v220, %v218
    %253 = vmatpush.bf16.msra.mxu0 %v235
    %254 = vmatpush.bf16.msra.mxu0 %v233
    %255 = vmatpush.bf16.msra.mxu0 %v231
    %256 = vmatpush.bf16.msra.mxu0 %v229
    %257 = vmatpush.bf16.msra.mxu0 %v227
    %258 = vmatpush.bf16.msra.mxu0 %v225
    %259 = vmatpush.bf16.msra.mxu0 %v223
    %260 = vmatpush.bf16.msra.mxu0 %v221
    %261 = vmatmul.bf16.gmra.mxu0 %v150
    %v262 = vpop.f32.mrf.mxu0
    %v263 = vadd.f32 %v169, %v262
    %v264 = vpop.f32.mrf.mxu0
    %265 = vdwg.mxu0
    %266 = vmatpush.bf16.msra.mxu0 %v236
    %267 = vmatpush.bf16.msra.mxu0 %v234
    %268 = vmatpush.bf16.msra.mxu0 %v232
    %269 = vmatpush.bf16.msra.mxu0 %v230
    %270 = vmatpush.bf16.msra.mxu0 %v228
    %271 = vmatpush.bf16.msra.mxu0 %v226
    %272 = vmatpush.bf16.msra.mxu0 %v224
    %273 = vmatpush.bf16.msra.mxu0 %v222
    %274 = vmatmul.bf16.gmra.mxu0 %v150
    %v275 = vpop.f32.mrf.mxu0
    %v276 = vadd.f32 %v170, %v275
    %v277 = vpop.f32.mrf.mxu0
    %278 = vdwg.mxu0
    %vm279 = vcmp.gt.f32.partialorder %v263, 0.0
    %vm280 = vcmp.gt.f32.partialorder %v276, 0.0
    %v281 = vmul.f32 %v263, 0.2
    %v282 = vmul.f32 %v276, 0.2
    %v283 = vsel %vm279, %v263, %v281
    %v284 = vsel %vm280, %v276, %v282
    %v285 = vpack.c.bf16 %v283, %v283
    %v286 = vpack.c.bf16 %v284, %v284
    %v287 = vld [vmem:[#allocation6] sm:$0xff]
    %v288 = vld [vmem:[#allocation6 + $0x8] sm:$0xff]
    %v289 = vld [vmem:[#allocation6 + $0x10] sm:$0xff]
    %v290 = vld [vmem:[#allocation6 + $0x18] sm:$0xff]
    %v291 = vld [vmem:[#allocation6 + $0x20] sm:$0xff]
    %v292 = vld [vmem:[#allocation6 + $0x28] sm:$0xff]
    %v293 = vld [vmem:[#allocation6 + $0x30] sm:$0xff]
    %v294 = vld [vmem:[#allocation6 + $0x38] sm:$0xff]
    %v295 = vld [vmem:[#allocation6 + $0x40] sm:$0xff]
    %v296 = vld [vmem:[#allocation6 + $0x48] sm:$0xff]
    %v297 = vld [vmem:[#allocation6 + $0x50] sm:$0xff]
    %v298 = vld [vmem:[#allocation6 + $0x58] sm:$0xff]
    %v299 = vld [vmem:[#allocation6 + $0x60] sm:$0xff]
    %v300 = vld [vmem:[#allocation6 + $0x68] sm:$0xff]
    %v301 = vld [vmem:[#allocation6 + $0x70] sm:$0xff]
    %v302 = vld [vmem:[#allocation6 + $0x78] sm:$0xff]
    %v303 = vld [vmem:[#allocation6 + $0x80] sm:$0xff]
    %v304 = vld [vmem:[#allocation6 + $0x88] sm:$0xff]
    %v305 = vld [vmem:[#allocation6 + $0x90] sm:$0xff]
    %v306 = vld [vmem:[#allocation6 + $0x98] sm:$0xff]
    %v307 = vld [vmem:[#allocation6 + $0xa0] sm:$0xff]
    %v308 = vld [vmem:[#allocation6 + $0xa8] sm:$0xff]
    %v309 = vld [vmem:[#allocation6 + $0xb0] sm:$0xff]
    %v310 = vld [vmem:[#allocation6 + $0xb8] sm:$0xff]
    %v311 = vld [vmem:[#allocation6 + $0xc0] sm:$0xff]
    %v312 = vld [vmem:[#allocation6 + $0xc8] sm:$0xff]
    %v313 = vld [vmem:[#allocation6 + $0xd0] sm:$0xff]
    %v314 = vld [vmem:[#allocation6 + $0xd8] sm:$0xff]
    %v315 = vld [vmem:[#allocation6 + $0xe0] sm:$0xff]
    %v316 = vld [vmem:[#allocation6 + $0xe8] sm:$0xff]
    %v317 = vld [vmem:[#allocation6 + $0xf0] sm:$0xff]
    %v318 = vld [vmem:[#allocation6 + $0xf8] sm:$0xff]
    %v319 = vld [vmem:[#allocation6 + $0x100] sm:$0xff]
    %v320 = vld [vmem:[#allocation6 + $0x108] sm:$0xff]
    %v321 = vld [vmem:[#allocation6 + $0x110] sm:$0xff]
    %v322 = vld [vmem:[#allocation6 + $0x118] sm:$0xff]
    %v323 = vld [vmem:[#allocation6 + $0x120] sm:$0xff]
    %v324 = vld [vmem:[#allocation6 + $0x128] sm:$0xff]
    %v325 = vld [vmem:[#allocation6 + $0x130] sm:$0xff]
    %v326 = vld [vmem:[#allocation6 + $0x138] sm:$0xff]
    %v327 = vld [vmem:[#allocation6 + $0x140] sm:$0xff]
    %v328 = vld [vmem:[#allocation6 + $0x148] sm:$0xff]
    %v329 = vld [vmem:[#allocation6 + $0x150] sm:$0xff]
    %v330 = vld [vmem:[#allocation6 + $0x158] sm:$0xff]
    %v331 = vld [vmem:[#allocation6 + $0x160] sm:$0xff]
    %v332 = vld [vmem:[#allocation6 + $0x168] sm:$0xff]
    %v333 = vld [vmem:[#allocation6 + $0x170] sm:$0xff]
    %v334 = vld [vmem:[#allocation6 + $0x178] sm:$0xff]
    %v335 = vld [vmem:[#allocation6 + $0x180] sm:$0xff]
    %v336 = vld [vmem:[#allocation6 + $0x188] sm:$0xff]
    %v337 = vld [vmem:[#allocation6 + $0x190] sm:$0xff]
    %v338 = vld [vmem:[#allocation6 + $0x198] sm:$0xff]
    %v339 = vld [vmem:[#allocation6 + $0x1a0] sm:$0xff]
    %v340 = vld [vmem:[#allocation6 + $0x1a8] sm:$0xff]
    %v341 = vld [vmem:[#allocation6 + $0x1b0] sm:$0xff]
    %v342 = vld [vmem:[#allocation6 + $0x1b8] sm:$0xff]
    %v343 = vld [vmem:[#allocation6 + $0x1c0] sm:$0xff]
    %v344 = vld [vmem:[#allocation6 + $0x1c8] sm:$0xff]
    %v345 = vld [vmem:[#allocation6 + $0x1d0] sm:$0xff]
    %v346 = vld [vmem:[#allocation6 + $0x1d8] sm:$0xff]
    %v347 = vld [vmem:[#allocation6 + $0x1e0] sm:$0xff]
    %v348 = vld [vmem:[#allocation6 + $0x1e8] sm:$0xff]
    %v349 = vld [vmem:[#allocation6 + $0x1f0] sm:$0xff]
    %v350 = vld [vmem:[#allocation6 + $0x1f8] sm:$0xff]
    %v351 = vld [vmem:[#allocation7] sm:$0xf]
    %v353 = vperm.slane %v351, 0
    %v354 = vperm.slane %v351, 1
    %v355 = vperm.slane %v351, 2
    %v356 = vperm.slane %v351, 3
    %v425 = vunpack.c.l.b16 %v287
    %v426 = vunpack.c.h.b16 %v287
    %v427 = vunpack.c.l.b16 %v288
    %v428 = vunpack.c.h.b16 %v288
    %v429 = vunpack.c.l.b16 %v289
    %v430 = vunpack.c.h.b16 %v289
    %v431 = vunpack.c.l.b16 %v290
    %v432 = vunpack.c.h.b16 %v290
    %v433 = vunpack.c.l.b16 %v291
    %v434 = vunpack.c.h.b16 %v291
    %v435 = vunpack.c.l.b16 %v292
    %v436 = vunpack.c.h.b16 %v292
    %v437 = vunpack.c.l.b16 %v293
    %v438 = vunpack.c.h.b16 %v293
    %v439 = vunpack.c.l.b16 %v294
    %v440 = vunpack.c.h.b16 %v294
    %v441 = vunpack.c.l.b16 %v295
    %v442 = vunpack.c.h.b16 %v295
    %v443 = vunpack.c.l.b16 %v296
    %v444 = vunpack.c.h.b16 %v296
    %v445 = vunpack.c.l.b16 %v297
    %v446 = vunpack.c.h.b16 %v297
    %v447 = vunpack.c.l.b16 %v298
    %v448 = vunpack.c.h.b16 %v298
    %v449 = vunpack.c.l.b16 %v299
    %v450 = vunpack.c.h.b16 %v299
    %v451 = vunpack.c.l.b16 %v300
    %v452 = vunpack.c.h.b16 %v300
    %v453 = vunpack.c.l.b16 %v301
    %v454 = vunpack.c.h.b16 %v301
    %v455 = vunpack.c.l.b16 %v302
    %v456 = vunpack.c.h.b16 %v302
    %v457 = vunpack.c.l.b16 %v303
    %v458 = vunpack.c.h.b16 %v303
    %v459 = vunpack.c.l.b16 %v304
    %v460 = vunpack.c.h.b16 %v304
    %v461 = vunpack.c.l.b16 %v305
    %v462 = vunpack.c.h.b16 %v305
    %v463 = vunpack.c.l.b16 %v306
    %v464 = vunpack.c.h.b16 %v306
    %v465 = vunpack.c.l.b16 %v307
    %v466 = vunpack.c.h.b16 %v307
    %v467 = vunpack.c.l.b16 %v308
    %v468 = vunpack.c.h.b16 %v308
    %v469 = vunpack.c.l.b16 %v309
    %v470 = vunpack.c.h.b16 %v309
    %v471 = vunpack.c.l.b16 %v310
    %v472 = vunpack.c.h.b16 %v310
    %v473 = vunpack.c.l.b16 %v311
    %v474 = vunpack.c.h.b16 %v311
    %v475 = vunpack.c.l.b16 %v312
    %v476 = vunpack.c.h.b16 %v312
    %v477 = vunpack.c.l.b16 %v313
    %v478 = vunpack.c.h.b16 %v313
    %v479 = vunpack.c.l.b16 %v314
    %v480 = vunpack.c.h.b16 %v314
    %v481 = vunpack.c.l.b16 %v315
    %v482 = vunpack.c.h.b16 %v315
    %v483 = vunpack.c.l.b16 %v316
    %v484 = vunpack.c.h.b16 %v316
    %v485 = vunpack.c.l.b16 %v317
    %v486 = vunpack.c.h.b16 %v317
    %v487 = vunpack.c.l.b16 %v318
    %v488 = vunpack.c.h.b16 %v318
    %v489 = vunpack.c.l.b16 %v319
    %v490 = vunpack.c.h.b16 %v319
    %v491 = vunpack.c.l.b16 %v320
    %v492 = vunpack.c.h.b16 %v320
    %v493 = vunpack.c.l.b16 %v321
    %v494 = vunpack.c.h.b16 %v321
    %v495 = vunpack.c.l.b16 %v322
    %v496 = vunpack.c.h.b16 %v322
    %v497 = vunpack.c.l.b16 %v323
    %v498 = vunpack.c.h.b16 %v323
    %v499 = vunpack.c.l.b16 %v324
    %v500 = vunpack.c.h.b16 %v324
    %v501 = vunpack.c.l.b16 %v325
    %v502 = vunpack.c.h.b16 %v325
    %v503 = vunpack.c.l.b16 %v326
    %v504 = vunpack.c.h.b16 %v326
    %v505 = vunpack.c.l.b16 %v327
    %v506 = vunpack.c.h.b16 %v327
    %v507 = vunpack.c.l.b16 %v328
    %v508 = vunpack.c.h.b16 %v328
    %v509 = vunpack.c.l.b16 %v329
    %v510 = vunpack.c.h.b16 %v329
    %v511 = vunpack.c.l.b16 %v330
    %v512 = vunpack.c.h.b16 %v330
    %v513 = vunpack.c.l.b16 %v331
    %v514 = vunpack.c.h.b16 %v331
    %v515 = vunpack.c.l.b16 %v332
    %v516 = vunpack.c.h.b16 %v332
    %v517 = vunpack.c.l.b16 %v333
    %v518 = vunpack.c.h.b16 %v333
    %v519 = vunpack.c.l.b16 %v334
    %v520 = vunpack.c.h.b16 %v334
    %v521 = vunpack.c.l.b16 %v335
    %v522 = vunpack.c.h.b16 %v335
    %v523 = vunpack.c.l.b16 %v336
    %v524 = vunpack.c.h.b16 %v336
    %v525 = vunpack.c.l.b16 %v337
    %v526 = vunpack.c.h.b16 %v337
    %v527 = vunpack.c.l.b16 %v338
    %v528 = vunpack.c.h.b16 %v338
    %v529 = vunpack.c.l.b16 %v339
    %v530 = vunpack.c.h.b16 %v339
    %v531 = vunpack.c.l.b16 %v340
    %v532 = vunpack.c.h.b16 %v340
    %v533 = vunpack.c.l.b16 %v341
    %v534 = vunpack.c.h.b16 %v341
    %v535 = vunpack.c.l.b16 %v342
    %v536 = vunpack.c.h.b16 %v342
    %v537 = vunpack.c.l.b16 %v343
    %v538 = vunpack.c.h.b16 %v343
    %v539 = vunpack.c.l.b16 %v344
    %v540 = vunpack.c.h.b16 %v344
    %v541 = vunpack.c.l.b16 %v345
    %v542 = vunpack.c.h.b16 %v345
    %v543 = vunpack.c.l.b16 %v346
    %v544 = vunpack.c.h.b16 %v346
    %v545 = vunpack.c.l.b16 %v347
    %v546 = vunpack.c.h.b16 %v347
    %v547 = vunpack.c.l.b16 %v348
    %v548 = vunpack.c.h.b16 %v348
    %v549 = vunpack.c.l.b16 %v349
    %v550 = vunpack.c.h.b16 %v349
    %v551 = vunpack.c.l.b16 %v350
    %v552 = vunpack.c.h.b16 %v350
    %v553 = vpack.c.b16 %v429, %v425
    %v554 = vpack.c.b16 %v430, %v426
    %v555 = vpack.c.b16 %v431, %v427
    %v556 = vpack.c.b16 %v432, %v428
    %v557 = vpack.c.b16 %v437, %v433
    %v558 = vpack.c.b16 %v438, %v434
    %v559 = vpack.c.b16 %v439, %v435
    %v560 = vpack.c.b16 %v440, %v436
    %v561 = vpack.c.b16 %v445, %v441
    %v562 = vpack.c.b16 %v446, %v442
    %v563 = vpack.c.b16 %v447, %v443
    %v564 = vpack.c.b16 %v448, %v444
    %v565 = vpack.c.b16 %v453, %v449
    %v566 = vpack.c.b16 %v454, %v450
    %v567 = vpack.c.b16 %v455, %v451
    %v568 = vpack.c.b16 %v456, %v452
    %v569 = vpack.c.b16 %v461, %v457
    %v570 = vpack.c.b16 %v462, %v458
    %v571 = vpack.c.b16 %v463, %v459
    %v572 = vpack.c.b16 %v464, %v460
    %v573 = vpack.c.b16 %v469, %v465
    %v574 = vpack.c.b16 %v470, %v466
    %v575 = vpack.c.b16 %v471, %v467
    %v576 = vpack.c.b16 %v472, %v468
    %v577 = vpack.c.b16 %v477, %v473
    %v578 = vpack.c.b16 %v478, %v474
    %v579 = vpack.c.b16 %v479, %v475
    %v580 = vpack.c.b16 %v480, %v476
    %v581 = vpack.c.b16 %v485, %v481
    %v582 = vpack.c.b16 %v486, %v482
    %v583 = vpack.c.b16 %v487, %v483
    %v584 = vpack.c.b16 %v488, %v484
    %v585 = vpack.c.b16 %v493, %v489
    %v586 = vpack.c.b16 %v494, %v490
    %v587 = vpack.c.b16 %v495, %v491
    %v588 = vpack.c.b16 %v496, %v492
    %v589 = vpack.c.b16 %v501, %v497
    %v590 = vpack.c.b16 %v502, %v498
    %v591 = vpack.c.b16 %v503, %v499
    %v592 = vpack.c.b16 %v504, %v500
    %v593 = vpack.c.b16 %v509, %v505
    %v594 = vpack.c.b16 %v510, %v506
    %v595 = vpack.c.b16 %v511, %v507
    %v596 = vpack.c.b16 %v512, %v508
    %v597 = vpack.c.b16 %v517, %v513
    %v598 = vpack.c.b16 %v518, %v514
    %v599 = vpack.c.b16 %v519, %v515
    %v600 = vpack.c.b16 %v520, %v516
    %v601 = vpack.c.b16 %v525, %v521
    %v602 = vpack.c.b16 %v526, %v522
    %v603 = vpack.c.b16 %v527, %v523
    %v604 = vpack.c.b16 %v528, %v524
    %v605 = vpack.c.b16 %v533, %v529
    %v606 = vpack.c.b16 %v534, %v530
    %v607 = vpack.c.b16 %v535, %v531
    %v608 = vpack.c.b16 %v536, %v532
    %v609 = vpack.c.b16 %v541, %v537
    %v610 = vpack.c.b16 %v542, %v538
    %v611 = vpack.c.b16 %v543, %v539
    %v612 = vpack.c.b16 %v544, %v540
    %v613 = vpack.c.b16 %v549, %v545
    %v614 = vpack.c.b16 %v550, %v546
    %v615 = vpack.c.b16 %v551, %v547
    %v616 = vpack.c.b16 %v552, %v548
    %681 = vmatpush.bf16.msra.mxu0 %v581
    %682 = vmatpush.bf16.msra.mxu0 %v577
    %683 = vmatpush.bf16.msra.mxu0 %v573
    %684 = vmatpush.bf16.msra.mxu0 %v569
    %685 = vmatpush.bf16.msra.mxu0 %v565
    %686 = vmatpush.bf16.msra.mxu0 %v561
    %687 = vmatpush.bf16.msra.mxu0 %v557
    %688 = vmatpush.bf16.msra.mxu0 %v553
    %689 = vmatmul.bf16.gmra.mxu0 %v285
    %v690 = vpop.f32.mrf.mxu0
    %v691 = vadd.f32 %v353, %v690
    %v692 = vpop.f32.mrf.mxu0
    %693 = vdwg.mxu0
    %694 = vmatpush.bf16.msra.mxu0 %v613
    %695 = vmatpush.bf16.msra.mxu0 %v609
    %696 = vmatpush.bf16.msra.mxu0 %v605
    %697 = vmatpush.bf16.msra.mxu0 %v601
    %698 = vmatpush.bf16.msra.mxu0 %v597
    %699 = vmatpush.bf16.msra.mxu0 %v593
    %700 = vmatpush.bf16.msra.mxu0 %v589
    %701 = vmatpush.bf16.msra.mxu0 %v585
    %702 = vmatmul.bf16.gmra.mxu0 %v286
    %v703 = vpop.f32.mrf.mxu0
    %v704 = vadd.f32 %v691, %v703
    %v705 = vpop.f32.mrf.mxu0
    %706 = vdwg.mxu0
    %707 = vmatpush.bf16.msra.mxu0 %v582
    %708 = vmatpush.bf16.msra.mxu0 %v578
    %709 = vmatpush.bf16.msra.mxu0 %v574
    %710 = vmatpush.bf16.msra.mxu0 %v570
    %711 = vmatpush.bf16.msra.mxu0 %v566
    %712 = vmatpush.bf16.msra.mxu0 %v562
    %713 = vmatpush.bf16.msra.mxu0 %v558
    %714 = vmatpush.bf16.msra.mxu0 %v554
    %715 = vmatmul.bf16.gmra.mxu0 %v285
    %v716 = vpop.f32.mrf.mxu0
    %v717 = vadd.f32 %v354, %v716
    %v718 = vpop.f32.mrf.mxu0
    %719 = vdwg.mxu0
    %720 = vmatpush.bf16.msra.mxu0 %v614
    %721 = vmatpush.bf16.msra.mxu0 %v610
    %722 = vmatpush.bf16.msra.mxu0 %v606
    %723 = vmatpush.bf16.msra.mxu0 %v602
    %724 = vmatpush.bf16.msra.mxu0 %v598
    %725 = vmatpush.bf16.msra.mxu0 %v594
    %726 = vmatpush.bf16.msra.mxu0 %v590
    %727 = vmatpush.bf16.msra.mxu0 %v586
    %728 = vmatmul.bf16.gmra.mxu0 %v286
    %v729 = vpop.f32.mrf.mxu0
    %v730 = vadd.f32 %v717, %v729
    %v731 = vpop.f32.mrf.mxu0
    %732 = vdwg.mxu0
    %733 = vmatpush.bf16.msra.mxu0 %v583
    %734 = vmatpush.bf16.msra.mxu0 %v579
    %735 = vmatpush.bf16.msra.mxu0 %v575
    %736 = vmatpush.bf16.msra.mxu0 %v571
    %737 = vmatpush.bf16.msra.mxu0 %v567
    %738 = vmatpush.bf16.msra.mxu0 %v563
    %739 = vmatpush.bf16.msra.mxu0 %v559
    %740 = vmatpush.bf16.msra.mxu0 %v555
    %741 = vmatmul.bf16.gmra.mxu0 %v285
    %v742 = vpop.f32.mrf.mxu0
    %v743 = vadd.f32 %v355, %v742
    %v744 = vpop.f32.mrf.mxu0
    %745 = vdwg.mxu0
    %746 = vmatpush.bf16.msra.mxu0 %v615
    %747 = vmatpush.bf16.msra.mxu0 %v611
    %748 = vmatpush.bf16.msra.mxu0 %v607
    %749 = vmatpush.bf16.msra.mxu0 %v603
    %750 = vmatpush.bf16.msra.mxu0 %v599
    %751 = vmatpush.bf16.msra.mxu0 %v595
    %752 = vmatpush.bf16.msra.mxu0 %v591
    %753 = vmatpush.bf16.msra.mxu0 %v587
    %754 = vmatmul.bf16.gmra.mxu0 %v286
    %v755 = vpop.f32.mrf.mxu0
    %v756 = vadd.f32 %v743, %v755
    %v757 = vpop.f32.mrf.mxu0
    %758 = vdwg.mxu0
    %759 = vmatpush.bf16.msra.mxu0 %v584
    %760 = vmatpush.bf16.msra.mxu0 %v580
    %761 = vmatpush.bf16.msra.mxu0 %v576
    %762 = vmatpush.bf16.msra.mxu0 %v572
    %763 = vmatpush.bf16.msra.mxu0 %v568
    %764 = vmatpush.bf16.msra.mxu0 %v564
    %765 = vmatpush.bf16.msra.mxu0 %v560
    %766 = vmatpush.bf16.msra.mxu0 %v556
    %767 = vmatmul.bf16.gmra.mxu0 %v285
    %v768 = vpop.f32.mrf.mxu0
    %v769 = vadd.f32 %v356, %v768
    %v770 = vpop.f32.mrf.mxu0
    %771 = vdwg.mxu0
    %772 = vmatpush.bf16.msra.mxu0 %v616
    %773 = vmatpush.bf16.msra.mxu0 %v612
    %774 = vmatpush.bf16.msra.mxu0 %v608
    %775 = vmatpush.bf16.msra.mxu0 %v604
    %776 = vmatpush.bf16.msra.mxu0 %v600
    %777 = vmatpush.bf16.msra.mxu0 %v596
    %778 = vmatpush.bf16.msra.mxu0 %v592
    %779 = vmatpush.bf16.msra.mxu0 %v588
    %780 = vmatmul.bf16.gmra.mxu0 %v286
    %v781 = vpop.f32.mrf.mxu0
    %v782 = vadd.f32 %v769, %v781
    %v783 = vpop.f32.mrf.mxu0
    %784 = vdwg.mxu0
    %vm785 = vcmp.gt.f32.partialorder %v704, 0.0
    %vm786 = vcmp.gt.f32.partialorder %v730, 0.0
    %vm787 = vcmp.gt.f32.partialorder %v756, 0.0
    %vm788 = vcmp.gt.f32.partialorder %v782, 0.0
    %v789 = vmul.f32 %v704, 0.2
    %v790 = vmul.f32 %v730, 0.2
    %v791 = vmul.f32 %v756, 0.2
    %v792 = vmul.f32 %v782, 0.2
    %v793 = vsel %vm785, %v704, %v789
    %v794 = vsel %vm786, %v730, %v790
    %v795 = vsel %vm787, %v756, %v791
    %v796 = vsel %vm788, %v782, %v792
    %v797 = vpack.c.bf16 %v793, %v793
    %v798 = vpack.c.bf16 %v794, %v794
    %v799 = vpack.c.bf16 %v795, %v795
    %v800 = vpack.c.bf16 %v796, %v796
    %v801 = vld [vmem:[#allocation9] sm:$0xff]
    %v802 = vld [vmem:[#allocation9 + $0x8] sm:$0xff]
    %v803 = vld [vmem:[#allocation9 + $0x10] sm:$0xff]
    %v804 = vld [vmem:[#allocation9 + $0x18] sm:$0xff]
    %v805 = vld [vmem:[#allocation9 + $0x20] sm:$0xff]
    %v806 = vld [vmem:[#allocation9 + $0x28] sm:$0xff]
    %v807 = vld [vmem:[#allocation9 + $0x30] sm:$0xff]
    %v808 = vld [vmem:[#allocation9 + $0x38] sm:$0xff]
    %v809 = vld [vmem:[#allocation9 + $0x40] sm:$0xff]
    %v810 = vld [vmem:[#allocation9 + $0x48] sm:$0xff]
    %v811 = vld [vmem:[#allocation9 + $0x50] sm:$0xff]
    %v812 = vld [vmem:[#allocation9 + $0x58] sm:$0xff]
    %v813 = vld [vmem:[#allocation9 + $0x60] sm:$0xff]
    %v814 = vld [vmem:[#allocation9 + $0x68] sm:$0xff]
    %v815 = vld [vmem:[#allocation9 + $0x70] sm:$0xff]
    %v816 = vld [vmem:[#allocation9 + $0x78] sm:$0xff]
    %v817 = vld [vmem:[#allocation9 + $0x80] sm:$0xff]
    %v818 = vld [vmem:[#allocation9 + $0x88] sm:$0xff]
    %v819 = vld [vmem:[#allocation9 + $0x90] sm:$0xff]
    %v820 = vld [vmem:[#allocation9 + $0x98] sm:$0xff]
    %v821 = vld [vmem:[#allocation9 + $0xa0] sm:$0xff]
    %v822 = vld [vmem:[#allocation9 + $0xa8] sm:$0xff]
    %v823 = vld [vmem:[#allocation9 + $0xb0] sm:$0xff]
    %v824 = vld [vmem:[#allocation9 + $0xb8] sm:$0xff]
    %v825 = vld [vmem:[#allocation9 + $0xc0] sm:$0xff]
    %v826 = vld [vmem:[#allocation9 + $0xc8] sm:$0xff]
    %v827 = vld [vmem:[#allocation9 + $0xd0] sm:$0xff]
    %v828 = vld [vmem:[#allocation9 + $0xd8] sm:$0xff]
    %v829 = vld [vmem:[#allocation9 + $0xe0] sm:$0xff]
    %v830 = vld [vmem:[#allocation9 + $0xe8] sm:$0xff]
    %v831 = vld [vmem:[#allocation9 + $0xf0] sm:$0xff]
    %v832 = vld [vmem:[#allocation9 + $0xf8] sm:$0xff]
    %v833 = vld [vmem:[#allocation9 + $0x100] sm:$0xff]
    %v834 = vld [vmem:[#allocation9 + $0x108] sm:$0xff]
    %v835 = vld [vmem:[#allocation9 + $0x110] sm:$0xff]
    %v836 = vld [vmem:[#allocation9 + $0x118] sm:$0xff]
    %v837 = vld [vmem:[#allocation9 + $0x120] sm:$0xff]
    %v838 = vld [vmem:[#allocation9 + $0x128] sm:$0xff]
    %v839 = vld [vmem:[#allocation9 + $0x130] sm:$0xff]
    %v840 = vld [vmem:[#allocation9 + $0x138] sm:$0xff]
    %v841 = vld [vmem:[#allocation9 + $0x140] sm:$0xff]
    %v842 = vld [vmem:[#allocation9 + $0x148] sm:$0xff]
    %v843 = vld [vmem:[#allocation9 + $0x150] sm:$0xff]
    %v844 = vld [vmem:[#allocation9 + $0x158] sm:$0xff]
    %v845 = vld [vmem:[#allocation9 + $0x160] sm:$0xff]
    %v846 = vld [vmem:[#allocation9 + $0x168] sm:$0xff]
    %v847 = vld [vmem:[#allocation9 + $0x170] sm:$0xff]
    %v848 = vld [vmem:[#allocation9 + $0x178] sm:$0xff]
    %v849 = vld [vmem:[#allocation9 + $0x180] sm:$0xff]
    %v850 = vld [vmem:[#allocation9 + $0x188] sm:$0xff]
    %v851 = vld [vmem:[#allocation9 + $0x190] sm:$0xff]
    %v852 = vld [vmem:[#allocation9 + $0x198] sm:$0xff]
    %v853 = vld [vmem:[#allocation9 + $0x1a0] sm:$0xff]
    %v854 = vld [vmem:[#allocation9 + $0x1a8] sm:$0xff]
    %v855 = vld [vmem:[#allocation9 + $0x1b0] sm:$0xff]
    %v856 = vld [vmem:[#allocation9 + $0x1b8] sm:$0xff]
    %v857 = vld [vmem:[#allocation9 + $0x1c0] sm:$0xff]
    %v858 = vld [vmem:[#allocation9 + $0x1c8] sm:$0xff]
    %v859 = vld [vmem:[#allocation9 + $0x1d0] sm:$0xff]
    %v860 = vld [vmem:[#allocation9 + $0x1d8] sm:$0xff]
    %v861 = vld [vmem:[#allocation9 + $0x1e0] sm:$0xff]
    %v862 = vld [vmem:[#allocation9 + $0x1e8] sm:$0xff]
    %v863 = vld [vmem:[#allocation9 + $0x1f0] sm:$0xff]
    %v864 = vld [vmem:[#allocation9 + $0x1f8] sm:$0xff]
    %v865 = vld [vmem:[#allocation9 + $0x200] sm:$0xff]
    %v866 = vld [vmem:[#allocation9 + $0x208] sm:$0xff]
    %v867 = vld [vmem:[#allocation9 + $0x210] sm:$0xff]
    %v868 = vld [vmem:[#allocation9 + $0x218] sm:$0xff]
    %v869 = vld [vmem:[#allocation9 + $0x220] sm:$0xff]
    %v870 = vld [vmem:[#allocation9 + $0x228] sm:$0xff]
    %v871 = vld [vmem:[#allocation9 + $0x230] sm:$0xff]
    %v872 = vld [vmem:[#allocation9 + $0x238] sm:$0xff]
    %v873 = vld [vmem:[#allocation9 + $0x240] sm:$0xff]
    %v874 = vld [vmem:[#allocation9 + $0x248] sm:$0xff]
    %v875 = vld [vmem:[#allocation9 + $0x250] sm:$0xff]
    %v876 = vld [vmem:[#allocation9 + $0x258] sm:$0xff]
    %v877 = vld [vmem:[#allocation9 + $0x260] sm:$0xff]
    %v878 = vld [vmem:[#allocation9 + $0x268] sm:$0xff]
    %v879 = vld [vmem:[#allocation9 + $0x270] sm:$0xff]
    %v880 = vld [vmem:[#allocation9 + $0x278] sm:$0xff]
    %v881 = vld [vmem:[#allocation9 + $0x280] sm:$0xff]
    %v882 = vld [vmem:[#allocation9 + $0x288] sm:$0xff]
    %v883 = vld [vmem:[#allocation9 + $0x290] sm:$0xff]
    %v884 = vld [vmem:[#allocation9 + $0x298] sm:$0xff]
    %v885 = vld [vmem:[#allocation9 + $0x2a0] sm:$0xff]
    %v886 = vld [vmem:[#allocation9 + $0x2a8] sm:$0xff]
    %v887 = vld [vmem:[#allocation9 + $0x2b0] sm:$0xff]
    %v888 = vld [vmem:[#allocation9 + $0x2b8] sm:$0xff]
    %v889 = vld [vmem:[#allocation9 + $0x2c0] sm:$0xff]
    %v890 = vld [vmem:[#allocation9 + $0x2c8] sm:$0xff]
    %v891 = vld [vmem:[#allocation9 + $0x2d0] sm:$0xff]
    %v892 = vld [vmem:[#allocation9 + $0x2d8] sm:$0xff]
    %v893 = vld [vmem:[#allocation9 + $0x2e0] sm:$0xff]
    %v894 = vld [vmem:[#allocation9 + $0x2e8] sm:$0xff]
    %v895 = vld [vmem:[#allocation9 + $0x2f0] sm:$0xff]
    %v896 = vld [vmem:[#allocation9 + $0x2f8] sm:$0xff]
    %v897 = vld [vmem:[#allocation9 + $0x300] sm:$0xff]
    %v898 = vld [vmem:[#allocation9 + $0x308] sm:$0xff]
    %v899 = vld [vmem:[#allocation9 + $0x310] sm:$0xff]
    %v900 = vld [vmem:[#allocation9 + $0x318] sm:$0xff]
    %v901 = vld [vmem:[#allocation9 + $0x320] sm:$0xff]
    %v902 = vld [vmem:[#allocation9 + $0x328] sm:$0xff]
    %v903 = vld [vmem:[#allocation9 + $0x330] sm:$0xff]
    %v904 = vld [vmem:[#allocation9 + $0x338] sm:$0xff]
    %v905 = vld [vmem:[#allocation9 + $0x340] sm:$0xff]
    %v906 = vld [vmem:[#allocation9 + $0x348] sm:$0xff]
    %v907 = vld [vmem:[#allocation9 + $0x350] sm:$0xff]
    %v908 = vld [vmem:[#allocation9 + $0x358] sm:$0xff]
    %v909 = vld [vmem:[#allocation9 + $0x360] sm:$0xff]
    %v910 = vld [vmem:[#allocation9 + $0x368] sm:$0xff]
    %v911 = vld [vmem:[#allocation9 + $0x370] sm:$0xff]
    %v912 = vld [vmem:[#allocation9 + $0x378] sm:$0xff]
    %v913 = vld [vmem:[#allocation9 + $0x380] sm:$0xff]
    %v914 = vld [vmem:[#allocation9 + $0x388] sm:$0xff]
    %v915 = vld [vmem:[#allocation9 + $0x390] sm:$0xff]
    %v916 = vld [vmem:[#allocation9 + $0x398] sm:$0xff]
    %v917 = vld [vmem:[#allocation9 + $0x3a0] sm:$0xff]
    %v918 = vld [vmem:[#allocation9 + $0x3a8] sm:$0xff]
    %v919 = vld [vmem:[#allocation9 + $0x3b0] sm:$0xff]
    %v920 = vld [vmem:[#allocation9 + $0x3b8] sm:$0xff]
    %v921 = vld [vmem:[#allocation9 + $0x3c0] sm:$0xff]
    %v922 = vld [vmem:[#allocation9 + $0x3c8] sm:$0xff]
    %v923 = vld [vmem:[#allocation9 + $0x3d0] sm:$0xff]
    %v924 = vld [vmem:[#allocation9 + $0x3d8] sm:$0xff]
    %v925 = vld [vmem:[#allocation9 + $0x3e0] sm:$0xff]
    %v926 = vld [vmem:[#allocation9 + $0x3e8] sm:$0xff]
    %v927 = vld [vmem:[#allocation9 + $0x3f0] sm:$0xff]
    %v928 = vld [vmem:[#allocation9 + $0x3f8] sm:$0xff]
    %v929 = vld [vmem:[#allocation9 + $0x400] sm:$0xff]
    %v930 = vld [vmem:[#allocation9 + $0x408] sm:$0xff]
    %v931 = vld [vmem:[#allocation9 + $0x410] sm:$0xff]
    %v932 = vld [vmem:[#allocation9 + $0x418] sm:$0xff]
    %v933 = vld [vmem:[#allocation9 + $0x420] sm:$0xff]
    %v934 = vld [vmem:[#allocation9 + $0x428] sm:$0xff]
    %v935 = vld [vmem:[#allocation9 + $0x430] sm:$0xff]
    %v936 = vld [vmem:[#allocation9 + $0x438] sm:$0xff]
    %v937 = vld [vmem:[#allocation9 + $0x440] sm:$0xff]
    %v938 = vld [vmem:[#allocation9 + $0x448] sm:$0xff]
    %v939 = vld [vmem:[#allocation9 + $0x450] sm:$0xff]
    %v940 = vld [vmem:[#allocation9 + $0x458] sm:$0xff]
    %v941 = vld [vmem:[#allocation9 + $0x460] sm:$0xff]
    %v942 = vld [vmem:[#allocation9 + $0x468] sm:$0xff]
    %v943 = vld [vmem:[#allocation9 + $0x470] sm:$0xff]
    %v944 = vld [vmem:[#allocation9 + $0x478] sm:$0xff]
    %v945 = vld [vmem:[#allocation9 + $0x480] sm:$0xff]
    %v946 = vld [vmem:[#allocation9 + $0x488] sm:$0xff]
    %v947 = vld [vmem:[#allocation9 + $0x490] sm:$0xff]
    %v948 = vld [vmem:[#allocation9 + $0x498] sm:$0xff]
    %v949 = vld [vmem:[#allocation9 + $0x4a0] sm:$0xff]
    %v950 = vld [vmem:[#allocation9 + $0x4a8] sm:$0xff]
    %v951 = vld [vmem:[#allocation9 + $0x4b0] sm:$0xff]
    %v952 = vld [vmem:[#allocation9 + $0x4b8] sm:$0xff]
    %v953 = vld [vmem:[#allocation9 + $0x4c0] sm:$0xff]
    %v954 = vld [vmem:[#allocation9 + $0x4c8] sm:$0xff]
    %v955 = vld [vmem:[#allocation9 + $0x4d0] sm:$0xff]
    %v956 = vld [vmem:[#allocation9 + $0x4d8] sm:$0xff]
    %v957 = vld [vmem:[#allocation9 + $0x4e0] sm:$0xff]
    %v958 = vld [vmem:[#allocation9 + $0x4e8] sm:$0xff]
    %v959 = vld [vmem:[#allocation9 + $0x4f0] sm:$0xff]
    %v960 = vld [vmem:[#allocation9 + $0x4f8] sm:$0xff]
    %v961 = vld [vmem:[#allocation9 + $0x500] sm:$0xff]
    %v962 = vld [vmem:[#allocation9 + $0x508] sm:$0xff]
    %v963 = vld [vmem:[#allocation9 + $0x510] sm:$0xff]
    %v964 = vld [vmem:[#allocation9 + $0x518] sm:$0xff]
    %v965 = vld [vmem:[#allocation9 + $0x520] sm:$0xff]
    %v966 = vld [vmem:[#allocation9 + $0x528] sm:$0xff]
    %v967 = vld [vmem:[#allocation9 + $0x530] sm:$0xff]
    %v968 = vld [vmem:[#allocation9 + $0x538] sm:$0xff]
    %v969 = vld [vmem:[#allocation9 + $0x540] sm:$0xff]
    %v970 = vld [vmem:[#allocation9 + $0x548] sm:$0xff]
    %v971 = vld [vmem:[#allocation9 + $0x550] sm:$0xff]
    %v972 = vld [vmem:[#allocation9 + $0x558] sm:$0xff]
    %v973 = vld [vmem:[#allocation9 + $0x560] sm:$0xff]
    %v974 = vld [vmem:[#allocation9 + $0x568] sm:$0xff]
    %v975 = vld [vmem:[#allocation9 + $0x570] sm:$0xff]
    %v976 = vld [vmem:[#allocation9 + $0x578] sm:$0xff]
    %v977 = vld [vmem:[#allocation9 + $0x580] sm:$0xff]
    %v978 = vld [vmem:[#allocation9 + $0x588] sm:$0xff]
    %v979 = vld [vmem:[#allocation9 + $0x590] sm:$0xff]
    %v980 = vld [vmem:[#allocation9 + $0x598] sm:$0xff]
    %v981 = vld [vmem:[#allocation9 + $0x5a0] sm:$0xff]
    %v982 = vld [vmem:[#allocation9 + $0x5a8] sm:$0xff]
    %v983 = vld [vmem:[#allocation9 + $0x5b0] sm:$0xff]
    %v984 = vld [vmem:[#allocation9 + $0x5b8] sm:$0xff]
    %v985 = vld [vmem:[#allocation9 + $0x5c0] sm:$0xff]
    %v986 = vld [vmem:[#allocation9 + $0x5c8] sm:$0xff]
    %v987 = vld [vmem:[#allocation9 + $0x5d0] sm:$0xff]
    %v988 = vld [vmem:[#allocation9 + $0x5d8] sm:$0xff]
    %v989 = vld [vmem:[#allocation9 + $0x5e0] sm:$0xff]
    %v990 = vld [vmem:[#allocation9 + $0x5e8] sm:$0xff]
    %v991 = vld [vmem:[#allocation9 + $0x5f0] sm:$0xff]
    %v992 = vld [vmem:[#allocation9 + $0x5f8] sm:$0xff]
    %v993 = vld [vmem:[#allocation9 + $0x600] sm:$0xff]
    %v994 = vld [vmem:[#allocation9 + $0x608] sm:$0xff]
    %v995 = vld [vmem:[#allocation9 + $0x610] sm:$0xff]
    %v996 = vld [vmem:[#allocation9 + $0x618] sm:$0xff]
    %v997 = vld [vmem:[#allocation9 + $0x620] sm:$0xff]
    %v998 = vld [vmem:[#allocation9 + $0x628] sm:$0xff]
    %v999 = vld [vmem:[#allocation9 + $0x630] sm:$0xff]
    %v1000 = vld [vmem:[#allocation9 + $0x638] sm:$0xff]
    %v1001 = vld [vmem:[#allocation9 + $0x640] sm:$0xff]
    %v1002 = vld [vmem:[#allocation9 + $0x648] sm:$0xff]
    %v1003 = vld [vmem:[#allocation9 + $0x650] sm:$0xff]
    %v1004 = vld [vmem:[#allocation9 + $0x658] sm:$0xff]
    %v1005 = vld [vmem:[#allocation9 + $0x660] sm:$0xff]
    %v1006 = vld [vmem:[#allocation9 + $0x668] sm:$0xff]
    %v1007 = vld [vmem:[#allocation9 + $0x670] sm:$0xff]
    %v1008 = vld [vmem:[#allocation9 + $0x678] sm:$0xff]
    %v1009 = vld [vmem:[#allocation9 + $0x680] sm:$0xff]
    %v1010 = vld [vmem:[#allocation9 + $0x688] sm:$0xff]
    %v1011 = vld [vmem:[#allocation9 + $0x690] sm:$0xff]
    %v1012 = vld [vmem:[#allocation9 + $0x698] sm:$0xff]
    %v1013 = vld [vmem:[#allocation9 + $0x6a0] sm:$0xff]
    %v1014 = vld [vmem:[#allocation9 + $0x6a8] sm:$0xff]
    %v1015 = vld [vmem:[#allocation9 + $0x6b0] sm:$0xff]
    %v1016 = vld [vmem:[#allocation9 + $0x6b8] sm:$0xff]
    %v1017 = vld [vmem:[#allocation9 + $0x6c0] sm:$0xff]
    %v1018 = vld [vmem:[#allocation9 + $0x6c8] sm:$0xff]
    %v1019 = vld [vmem:[#allocation9 + $0x6d0] sm:$0xff]
    %v1020 = vld [vmem:[#allocation9 + $0x6d8] sm:$0xff]
    %v1021 = vld [vmem:[#allocation9 + $0x6e0] sm:$0xff]
    %v1022 = vld [vmem:[#allocation9 + $0x6e8] sm:$0xff]
    %v1023 = vld [vmem:[#allocation9 + $0x6f0] sm:$0xff]
    %v1024 = vld [vmem:[#allocation9 + $0x6f8] sm:$0xff]
    %v1025 = vld [vmem:[#allocation9 + $0x700] sm:$0xff]
    %v1026 = vld [vmem:[#allocation9 + $0x708] sm:$0xff]
    %v1027 = vld [vmem:[#allocation9 + $0x710] sm:$0xff]
    %v1028 = vld [vmem:[#allocation9 + $0x718] sm:$0xff]
    %v1029 = vld [vmem:[#allocation9 + $0x720] sm:$0xff]
    %v1030 = vld [vmem:[#allocation9 + $0x728] sm:$0xff]
    %v1031 = vld [vmem:[#allocation9 + $0x730] sm:$0xff]
    %v1032 = vld [vmem:[#allocation9 + $0x738] sm:$0xff]
    %v1033 = vld [vmem:[#allocation9 + $0x740] sm:$0xff]
    %v1034 = vld [vmem:[#allocation9 + $0x748] sm:$0xff]
    %v1035 = vld [vmem:[#allocation9 + $0x750] sm:$0xff]
    %v1036 = vld [vmem:[#allocation9 + $0x758] sm:$0xff]
    %v1037 = vld [vmem:[#allocation9 + $0x760] sm:$0xff]
    %v1038 = vld [vmem:[#allocation9 + $0x768] sm:$0xff]
    %v1039 = vld [vmem:[#allocation9 + $0x770] sm:$0xff]
    %v1040 = vld [vmem:[#allocation9 + $0x778] sm:$0xff]
    %v1041 = vld [vmem:[#allocation9 + $0x780] sm:$0xff]
    %v1042 = vld [vmem:[#allocation9 + $0x788] sm:$0xff]
    %v1043 = vld [vmem:[#allocation9 + $0x790] sm:$0xff]
    %v1044 = vld [vmem:[#allocation9 + $0x798] sm:$0xff]
    %v1045 = vld [vmem:[#allocation9 + $0x7a0] sm:$0xff]
    %v1046 = vld [vmem:[#allocation9 + $0x7a8] sm:$0xff]
    %v1047 = vld [vmem:[#allocation9 + $0x7b0] sm:$0xff]
    %v1048 = vld [vmem:[#allocation9 + $0x7b8] sm:$0xff]
    %v1049 = vld [vmem:[#allocation9 + $0x7c0] sm:$0xff]
    %v1050 = vld [vmem:[#allocation9 + $0x7c8] sm:$0xff]
    %v1051 = vld [vmem:[#allocation9 + $0x7d0] sm:$0xff]
    %v1052 = vld [vmem:[#allocation9 + $0x7d8] sm:$0xff]
    %v1053 = vld [vmem:[#allocation9 + $0x7e0] sm:$0xff]
    %v1054 = vld [vmem:[#allocation9 + $0x7e8] sm:$0xff]
    %v1055 = vld [vmem:[#allocation9 + $0x7f0] sm:$0xff]
    %v1056 = vld [vmem:[#allocation9 + $0x7f8] sm:$0xff]
    %v1057 = vld [vmem:[#allocation10] sm:$0xff]
    %v1059 = vperm.slane %v1057, 0
    %v1060 = vperm.slane %v1057, 1
    %v1061 = vperm.slane %v1057, 2
    %v1062 = vperm.slane %v1057, 3
    %v1063 = vperm.slane %v1057, 4
    %v1064 = vperm.slane %v1057, 5
    %v1065 = vperm.slane %v1057, 6
    %v1066 = vperm.slane %v1057, 7
    %v1331 = vunpack.c.l.b16 %v801
    %v1332 = vunpack.c.h.b16 %v801
    %v1333 = vunpack.c.l.b16 %v802
    %v1334 = vunpack.c.h.b16 %v802
    %v1335 = vunpack.c.l.b16 %v803
    %v1336 = vunpack.c.h.b16 %v803
    %v1337 = vunpack.c.l.b16 %v804
    %v1338 = vunpack.c.h.b16 %v804
    %v1339 = vunpack.c.l.b16 %v805
    %v1340 = vunpack.c.h.b16 %v805
    %v1341 = vunpack.c.l.b16 %v806
    %v1342 = vunpack.c.h.b16 %v806
    %v1343 = vunpack.c.l.b16 %v807
    %v1344 = vunpack.c.h.b16 %v807
    %v1345 = vunpack.c.l.b16 %v808
    %v1346 = vunpack.c.h.b16 %v808
    %v1347 = vunpack.c.l.b16 %v809
    %v1348 = vunpack.c.h.b16 %v809
    %v1349 = vunpack.c.l.b16 %v810
    %v1350 = vunpack.c.h.b16 %v810
    %v1351 = vunpack.c.l.b16 %v811
    %v1352 = vunpack.c.h.b16 %v811
    %v1353 = vunpack.c.l.b16 %v812
    %v1354 = vunpack.c.h.b16 %v812
    %v1355 = vunpack.c.l.b16 %v813
    %v1356 = vunpack.c.h.b16 %v813
    %v1357 = vunpack.c.l.b16 %v814
    %v1358 = vunpack.c.h.b16 %v814
    %v1359 = vunpack.c.l.b16 %v815
    %v1360 = vunpack.c.h.b16 %v815
    %v1361 = vunpack.c.l.b16 %v816
    %v1362 = vunpack.c.h.b16 %v816
    %v1363 = vunpack.c.l.b16 %v817
    %v1364 = vunpack.c.h.b16 %v817
    %v1365 = vunpack.c.l.b16 %v818
    %v1366 = vunpack.c.h.b16 %v818
    %v1367 = vunpack.c.l.b16 %v819
    %v1368 = vunpack.c.h.b16 %v819
    %v1369 = vunpack.c.l.b16 %v820
    %v1370 = vunpack.c.h.b16 %v820
    %v1371 = vunpack.c.l.b16 %v821
    %v1372 = vunpack.c.h.b16 %v821
    %v1373 = vunpack.c.l.b16 %v822
    %v1374 = vunpack.c.h.b16 %v822
    %v1375 = vunpack.c.l.b16 %v823
    %v1376 = vunpack.c.h.b16 %v823
    %v1377 = vunpack.c.l.b16 %v824
    %v1378 = vunpack.c.h.b16 %v824
    %v1379 = vunpack.c.l.b16 %v825
    %v1380 = vunpack.c.h.b16 %v825
    %v1381 = vunpack.c.l.b16 %v826
    %v1382 = vunpack.c.h.b16 %v826
    %v1383 = vunpack.c.l.b16 %v827
    %v1384 = vunpack.c.h.b16 %v827
    %v1385 = vunpack.c.l.b16 %v828
    %v1386 = vunpack.c.h.b16 %v828
    %v1387 = vunpack.c.l.b16 %v829
    %v1388 = vunpack.c.h.b16 %v829
    %v1389 = vunpack.c.l.b16 %v830
    %v1390 = vunpack.c.h.b16 %v830
    %v1391 = vunpack.c.l.b16 %v831
    %v1392 = vunpack.c.h.b16 %v831
    %v1393 = vunpack.c.l.b16 %v832
    %v1394 = vunpack.c.h.b16 %v832
    %v1395 = vunpack.c.l.b16 %v833
    %v1396 = vunpack.c.h.b16 %v833
    %v1397 = vunpack.c.l.b16 %v834
    %v1398 = vunpack.c.h.b16 %v834
    %v1399 = vunpack.c.l.b16 %v835
    %v1400 = vunpack.c.h.b16 %v835
    %v1401 = vunpack.c.l.b16 %v836
    %v1402 = vunpack.c.h.b16 %v836
    %v1403 = vunpack.c.l.b16 %v837
    %v1404 = vunpack.c.h.b16 %v837
    %v1405 = vunpack.c.l.b16 %v838
    %v1406 = vunpack.c.h.b16 %v838
    %v1407 = vunpack.c.l.b16 %v839
    %v1408 = vunpack.c.h.b16 %v839
    %v1409 = vunpack.c.l.b16 %v840
    %v1410 = vunpack.c.h.b16 %v840
    %v1411 = vunpack.c.l.b16 %v841
    %v1412 = vunpack.c.h.b16 %v841
    %v1413 = vunpack.c.l.b16 %v842
    %v1414 = vunpack.c.h.b16 %v842
    %v1415 = vunpack.c.l.b16 %v843
    %v1416 = vunpack.c.h.b16 %v843
    %v1417 = vunpack.c.l.b16 %v844
    %v1418 = vunpack.c.h.b16 %v844
    %v1419 = vunpack.c.l.b16 %v845
    %v1420 = vunpack.c.h.b16 %v845
    %v1421 = vunpack.c.l.b16 %v846
    %v1422 = vunpack.c.h.b16 %v846
    %v1423 = vunpack.c.l.b16 %v847
    %v1424 = vunpack.c.h.b16 %v847
    %v1425 = vunpack.c.l.b16 %v848
    %v1426 = vunpack.c.h.b16 %v848
    %v1427 = vunpack.c.l.b16 %v849
    %v1428 = vunpack.c.h.b16 %v849
    %v1429 = vunpack.c.l.b16 %v850
    %v1430 = vunpack.c.h.b16 %v850
    %v1431 = vunpack.c.l.b16 %v851
    %v1432 = vunpack.c.h.b16 %v851
    %v1433 = vunpack.c.l.b16 %v852
    %v1434 = vunpack.c.h.b16 %v852
    %v1435 = vunpack.c.l.b16 %v853
    %v1436 = vunpack.c.h.b16 %v853
    %v1437 = vunpack.c.l.b16 %v854
    %v1438 = vunpack.c.h.b16 %v854
    %v1439 = vunpack.c.l.b16 %v855
    %v1440 = vunpack.c.h.b16 %v855
    %v1441 = vunpack.c.l.b16 %v856
    %v1442 = vunpack.c.h.b16 %v856
    %v1443 = vunpack.c.l.b16 %v857
    %v1444 = vunpack.c.h.b16 %v857
    %v1445 = vunpack.c.l.b16 %v858
    %v1446 = vunpack.c.h.b16 %v858
    %v1447 = vunpack.c.l.b16 %v859
    %v1448 = vunpack.c.h.b16 %v859
    %v1449 = vunpack.c.l.b16 %v860
    %v1450 = vunpack.c.h.b16 %v860
    %v1451 = vunpack.c.l.b16 %v861
    %v1452 = vunpack.c.h.b16 %v861
    %v1453 = vunpack.c.l.b16 %v862
    %v1454 = vunpack.c.h.b16 %v862
    %v1455 = vunpack.c.l.b16 %v863
    %v1456 = vunpack.c.h.b16 %v863
    %v1457 = vunpack.c.l.b16 %v864
    %v1458 = vunpack.c.h.b16 %v864
    %v1459 = vunpack.c.l.b16 %v865
    %v1460 = vunpack.c.h.b16 %v865
    %v1461 = vunpack.c.l.b16 %v866
    %v1462 = vunpack.c.h.b16 %v866
    %v1463 = vunpack.c.l.b16 %v867
    %v1464 = vunpack.c.h.b16 %v867
    %v1465 = vunpack.c.l.b16 %v868
    %v1466 = vunpack.c.h.b16 %v868
    %v1467 = vunpack.c.l.b16 %v869
    %v1468 = vunpack.c.h.b16 %v869
    %v1469 = vunpack.c.l.b16 %v870
    %v1470 = vunpack.c.h.b16 %v870
    %v1471 = vunpack.c.l.b16 %v871
    %v1472 = vunpack.c.h.b16 %v871
    %v1473 = vunpack.c.l.b16 %v872
    %v1474 = vunpack.c.h.b16 %v872
    %v1475 = vunpack.c.l.b16 %v873
    %v1476 = vunpack.c.h.b16 %v873
    %v1477 = vunpack.c.l.b16 %v874
    %v1478 = vunpack.c.h.b16 %v874
    %v1479 = vunpack.c.l.b16 %v875
    %v1480 = vunpack.c.h.b16 %v875
    %v1481 = vunpack.c.l.b16 %v876
    %v1482 = vunpack.c.h.b16 %v876
    %v1483 = vunpack.c.l.b16 %v877
    %v1484 = vunpack.c.h.b16 %v877
    %v1485 = vunpack.c.l.b16 %v878
    %v1486 = vunpack.c.h.b16 %v878
    %v1487 = vunpack.c.l.b16 %v879
    %v1488 = vunpack.c.h.b16 %v879
    %v1489 = vunpack.c.l.b16 %v880
    %v1490 = vunpack.c.h.b16 %v880
    %v1491 = vunpack.c.l.b16 %v881
    %v1492 = vunpack.c.h.b16 %v881
    %v1493 = vunpack.c.l.b16 %v882
    %v1494 = vunpack.c.h.b16 %v882
    %v1495 = vunpack.c.l.b16 %v883
    %v1496 = vunpack.c.h.b16 %v883
    %v1497 = vunpack.c.l.b16 %v884
    %v1498 = vunpack.c.h.b16 %v884
    %v1499 = vunpack.c.l.b16 %v885
    %v1500 = vunpack.c.h.b16 %v885
    %v1501 = vunpack.c.l.b16 %v886
    %v1502 = vunpack.c.h.b16 %v886
    %v1503 = vunpack.c.l.b16 %v887
    %v1504 = vunpack.c.h.b16 %v887
    %v1505 = vunpack.c.l.b16 %v888
    %v1506 = vunpack.c.h.b16 %v888
    %v1507 = vunpack.c.l.b16 %v889
    %v1508 = vunpack.c.h.b16 %v889
    %v1509 = vunpack.c.l.b16 %v890
    %v1510 = vunpack.c.h.b16 %v890
    %v1511 = vunpack.c.l.b16 %v891
    %v1512 = vunpack.c.h.b16 %v891
    %v1513 = vunpack.c.l.b16 %v892
    %v1514 = vunpack.c.h.b16 %v892
    %v1515 = vunpack.c.l.b16 %v893
    %v1516 = vunpack.c.h.b16 %v893
    %v1517 = vunpack.c.l.b16 %v894
    %v1518 = vunpack.c.h.b16 %v894
    %v1519 = vunpack.c.l.b16 %v895
    %v1520 = vunpack.c.h.b16 %v895
    %v1521 = vunpack.c.l.b16 %v896
    %v1522 = vunpack.c.h.b16 %v896
    %v1523 = vunpack.c.l.b16 %v897
    %v1524 = vunpack.c.h.b16 %v897
    %v1525 = vunpack.c.l.b16 %v898
    %v1526 = vunpack.c.h.b16 %v898
    %v1527 = vunpack.c.l.b16 %v899
    %v1528 = vunpack.c.h.b16 %v899
    %v1529 = vunpack.c.l.b16 %v900
    %v1530 = vunpack.c.h.b16 %v900
    %v1531 = vunpack.c.l.b16 %v901
    %v1532 = vunpack.c.h.b16 %v901
    %v1533 = vunpack.c.l.b16 %v902
    %v1534 = vunpack.c.h.b16 %v902
    %v1535 = vunpack.c.l.b16 %v903
    %v1536 = vunpack.c.h.b16 %v903
    %v1537 = vunpack.c.l.b16 %v904
    %v1538 = vunpack.c.h.b16 %v904
    %v1539 = vunpack.c.l.b16 %v905
    %v1540 = vunpack.c.h.b16 %v905
    %v1541 = vunpack.c.l.b16 %v906
    %v1542 = vunpack.c.h.b16 %v906
    %v1543 = vunpack.c.l.b16 %v907
    %v1544 = vunpack.c.h.b16 %v907
    %v1545 = vunpack.c.l.b16 %v908
    %v1546 = vunpack.c.h.b16 %v908
    %v1547 = vunpack.c.l.b16 %v909
    %v1548 = vunpack.c.h.b16 %v909
    %v1549 = vunpack.c.l.b16 %v910
    %v1550 = vunpack.c.h.b16 %v910
    %v1551 = vunpack.c.l.b16 %v911
    %v1552 = vunpack.c.h.b16 %v911
    %v1553 = vunpack.c.l.b16 %v912
    %v1554 = vunpack.c.h.b16 %v912
    %v1555 = vunpack.c.l.b16 %v913
    %v1556 = vunpack.c.h.b16 %v913
    %v1557 = vunpack.c.l.b16 %v914
    %v1558 = vunpack.c.h.b16 %v914
    %v1559 = vunpack.c.l.b16 %v915
    %v1560 = vunpack.c.h.b16 %v915
    %v1561 = vunpack.c.l.b16 %v916
    %v1562 = vunpack.c.h.b16 %v916
    %v1563 = vunpack.c.l.b16 %v917
    %v1564 = vunpack.c.h.b16 %v917
    %v1565 = vunpack.c.l.b16 %v918
    %v1566 = vunpack.c.h.b16 %v918
    %v1567 = vunpack.c.l.b16 %v919
    %v1568 = vunpack.c.h.b16 %v919
    %v1569 = vunpack.c.l.b16 %v920
    %v1570 = vunpack.c.h.b16 %v920
    %v1571 = vunpack.c.l.b16 %v921
    %v1572 = vunpack.c.h.b16 %v921
    %v1573 = vunpack.c.l.b16 %v922
    %v1574 = vunpack.c.h.b16 %v922
    %v1575 = vunpack.c.l.b16 %v923
    %v1576 = vunpack.c.h.b16 %v923
    %v1577 = vunpack.c.l.b16 %v924
    %v1578 = vunpack.c.h.b16 %v924
    %v1579 = vunpack.c.l.b16 %v925
    %v1580 = vunpack.c.h.b16 %v925
    %v1581 = vunpack.c.l.b16 %v926
    %v1582 = vunpack.c.h.b16 %v926
    %v1583 = vunpack.c.l.b16 %v927
    %v1584 = vunpack.c.h.b16 %v927
    %v1585 = vunpack.c.l.b16 %v928
    %v1586 = vunpack.c.h.b16 %v928
    %v1587 = vunpack.c.l.b16 %v929
    %v1588 = vunpack.c.h.b16 %v929
    %v1589 = vunpack.c.l.b16 %v930
    %v1590 = vunpack.c.h.b16 %v930
    %v1591 = vunpack.c.l.b16 %v931
    %v1592 = vunpack.c.h.b16 %v931
    %v1593 = vunpack.c.l.b16 %v932
    %v1594 = vunpack.c.h.b16 %v932
    %v1595 = vunpack.c.l.b16 %v933
    %v1596 = vunpack.c.h.b16 %v933
    %v1597 = vunpack.c.l.b16 %v934
    %v1598 = vunpack.c.h.b16 %v934
    %v1599 = vunpack.c.l.b16 %v935
    %v1600 = vunpack.c.h.b16 %v935
    %v1601 = vunpack.c.l.b16 %v936
    %v1602 = vunpack.c.h.b16 %v936
    %v1603 = vunpack.c.l.b16 %v937
    %v1604 = vunpack.c.h.b16 %v937
    %v1605 = vunpack.c.l.b16 %v938
    %v1606 = vunpack.c.h.b16 %v938
    %v1607 = vunpack.c.l.b16 %v939
    %v1608 = vunpack.c.h.b16 %v939
    %v1609 = vunpack.c.l.b16 %v940
    %v1610 = vunpack.c.h.b16 %v940
    %v1611 = vunpack.c.l.b16 %v941
    %v1612 = vunpack.c.h.b16 %v941
    %v1613 = vunpack.c.l.b16 %v942
    %v1614 = vunpack.c.h.b16 %v942
    %v1615 = vunpack.c.l.b16 %v943
    %v1616 = vunpack.c.h.b16 %v943
    %v1617 = vunpack.c.l.b16 %v944
    %v1618 = vunpack.c.h.b16 %v944
    %v1619 = vunpack.c.l.b16 %v945
    %v1620 = vunpack.c.h.b16 %v945
    %v1621 = vunpack.c.l.b16 %v946
    %v1622 = vunpack.c.h.b16 %v946
    %v1623 = vunpack.c.l.b16 %v947
    %v1624 = vunpack.c.h.b16 %v947
    %v1625 = vunpack.c.l.b16 %v948
    %v1626 = vunpack.c.h.b16 %v948
    %v1627 = vunpack.c.l.b16 %v949
    %v1628 = vunpack.c.h.b16 %v949
    %v1629 = vunpack.c.l.b16 %v950
    %v1630 = vunpack.c.h.b16 %v950
    %v1631 = vunpack.c.l.b16 %v951
    %v1632 = vunpack.c.h.b16 %v951
    %v1633 = vunpack.c.l.b16 %v952
    %v1634 = vunpack.c.h.b16 %v952
    %v1635 = vunpack.c.l.b16 %v953
    %v1636 = vunpack.c.h.b16 %v953
    %v1637 = vunpack.c.l.b16 %v954
    %v1638 = vunpack.c.h.b16 %v954
    %v1639 = vunpack.c.l.b16 %v955
    %v1640 = vunpack.c.h.b16 %v955
    %v1641 = vunpack.c.l.b16 %v956
    %v1642 = vunpack.c.h.b16 %v956
    %v1643 = vunpack.c.l.b16 %v957
    %v1644 = vunpack.c.h.b16 %v957
    %v1645 = vunpack.c.l.b16 %v958
    %v1646 = vunpack.c.h.b16 %v958
    %v1647 = vunpack.c.l.b16 %v959
    %v1648 = vunpack.c.h.b16 %v959
    %v1649 = vunpack.c.l.b16 %v960
    %v1650 = vunpack.c.h.b16 %v960
    %v1651 = vunpack.c.l.b16 %v961
    %v1652 = vunpack.c.h.b16 %v961
    %v1653 = vunpack.c.l.b16 %v962
    %v1654 = vunpack.c.h.b16 %v962
    %v1655 = vunpack.c.l.b16 %v963
    %v1656 = vunpack.c.h.b16 %v963
    %v1657 = vunpack.c.l.b16 %v964
    %v1658 = vunpack.c.h.b16 %v964
    %v1659 = vunpack.c.l.b16 %v965
    %v1660 = vunpack.c.h.b16 %v965
    %v1661 = vunpack.c.l.b16 %v966
    %v1662 = vunpack.c.h.b16 %v966
    %v1663 = vunpack.c.l.b16 %v967
    %v1664 = vunpack.c.h.b16 %v967
    %v1665 = vunpack.c.l.b16 %v968
    %v1666 = vunpack.c.h.b16 %v968
    %v1667 = vunpack.c.l.b16 %v969
    %v1668 = vunpack.c.h.b16 %v969
    %v1669 = vunpack.c.l.b16 %v970
    %v1670 = vunpack.c.h.b16 %v970
    %v1671 = vunpack.c.l.b16 %v971
    %v1672 = vunpack.c.h.b16 %v971
    %v1673 = vunpack.c.l.b16 %v972
    %v1674 = vunpack.c.h.b16 %v972
    %v1675 = vunpack.c.l.b16 %v973
    %v1676 = vunpack.c.h.b16 %v973
    %v1677 = vunpack.c.l.b16 %v974
    %v1678 = vunpack.c.h.b16 %v974
    %v1679 = vunpack.c.l.b16 %v975
    %v1680 = vunpack.c.h.b16 %v975
    %v1681 = vunpack.c.l.b16 %v976
    %v1682 = vunpack.c.h.b16 %v976
    %v1683 = vunpack.c.l.b16 %v977
    %v1684 = vunpack.c.h.b16 %v977
    %v1685 = vunpack.c.l.b16 %v978
    %v1686 = vunpack.c.h.b16 %v978
    %v1687 = vunpack.c.l.b16 %v979
    %v1688 = vunpack.c.h.b16 %v979
    %v1689 = vunpack.c.l.b16 %v980
    %v1690 = vunpack.c.h.b16 %v980
    %v1691 = vunpack.c.l.b16 %v981
    %v1692 = vunpack.c.h.b16 %v981
    %v1693 = vunpack.c.l.b16 %v982
    %v1694 = vunpack.c.h.b16 %v982
    %v1695 = vunpack.c.l.b16 %v983
    %v1696 = vunpack.c.h.b16 %v983
    %v1697 = vunpack.c.l.b16 %v984
    %v1698 = vunpack.c.h.b16 %v984
    %v1699 = vunpack.c.l.b16 %v985
    %v1700 = vunpack.c.h.b16 %v985
    %v1701 = vunpack.c.l.b16 %v986
    %v1702 = vunpack.c.h.b16 %v986
    %v1703 = vunpack.c.l.b16 %v987
    %v1704 = vunpack.c.h.b16 %v987
    %v1705 = vunpack.c.l.b16 %v988
    %v1706 = vunpack.c.h.b16 %v988
    %v1707 = vunpack.c.l.b16 %v989
    %v1708 = vunpack.c.h.b16 %v989
    %v1709 = vunpack.c.l.b16 %v990
    %v1710 = vunpack.c.h.b16 %v990
    %v1711 = vunpack.c.l.b16 %v991
    %v1712 = vunpack.c.h.b16 %v991
    %v1713 = vunpack.c.l.b16 %v992
    %v1714 = vunpack.c.h.b16 %v992
    %v1715 = vunpack.c.l.b16 %v993
    %v1716 = vunpack.c.h.b16 %v993
    %v1717 = vunpack.c.l.b16 %v994
    %v1718 = vunpack.c.h.b16 %v994
    %v1719 = vunpack.c.l.b16 %v995
    %v1720 = vunpack.c.h.b16 %v995
    %v1721 = vunpack.c.l.b16 %v996
    %v1722 = vunpack.c.h.b16 %v996
    %v1723 = vunpack.c.l.b16 %v997
    %v1724 = vunpack.c.h.b16 %v997
    %v1725 = vunpack.c.l.b16 %v998
    %v1726 = vunpack.c.h.b16 %v998
    %v1727 = vunpack.c.l.b16 %v999
    %v1728 = vunpack.c.h.b16 %v999
    %v1729 = vunpack.c.l.b16 %v1000
    %v1730 = vunpack.c.h.b16 %v1000
    %v1731 = vunpack.c.l.b16 %v1001
    %v1732 = vunpack.c.h.b16 %v1001
    %v1733 = vunpack.c.l.b16 %v1002
    %v1734 = vunpack.c.h.b16 %v1002
    %v1735 = vunpack.c.l.b16 %v1003
    %v1736 = vunpack.c.h.b16 %v1003
    %v1737 = vunpack.c.l.b16 %v1004
    %v1738 = vunpack.c.h.b16 %v1004
    %v1739 = vunpack.c.l.b16 %v1005
    %v1740 = vunpack.c.h.b16 %v1005
    %v1741 = vunpack.c.l.b16 %v1006
    %v1742 = vunpack.c.h.b16 %v1006
    %v1743 = vunpack.c.l.b16 %v1007
    %v1744 = vunpack.c.h.b16 %v1007
    %v1745 = vunpack.c.l.b16 %v1008
    %v1746 = vunpack.c.h.b16 %v1008
    %v1747 = vunpack.c.l.b16 %v1009
    %v1748 = vunpack.c.h.b16 %v1009
    %v1749 = vunpack.c.l.b16 %v1010
    %v1750 = vunpack.c.h.b16 %v1010
    %v1751 = vunpack.c.l.b16 %v1011
    %v1752 = vunpack.c.h.b16 %v1011
    %v1753 = vunpack.c.l.b16 %v1012
    %v1754 = vunpack.c.h.b16 %v1012
    %v1755 = vunpack.c.l.b16 %v1013
    %v1756 = vunpack.c.h.b16 %v1013
    %v1757 = vunpack.c.l.b16 %v1014
    %v1758 = vunpack.c.h.b16 %v1014
    %v1759 = vunpack.c.l.b16 %v1015
    %v1760 = vunpack.c.h.b16 %v1015
    %v1761 = vunpack.c.l.b16 %v1016
    %v1762 = vunpack.c.h.b16 %v1016
    %v1763 = vunpack.c.l.b16 %v1017
    %v1764 = vunpack.c.h.b16 %v1017
    %v1765 = vunpack.c.l.b16 %v1018
    %v1766 = vunpack.c.h.b16 %v1018
    %v1767 = vunpack.c.l.b16 %v1019
    %v1768 = vunpack.c.h.b16 %v1019
    %v1769 = vunpack.c.l.b16 %v1020
    %v1770 = vunpack.c.h.b16 %v1020
    %v1771 = vunpack.c.l.b16 %v1021
    %v1772 = vunpack.c.h.b16 %v1021
    %v1773 = vunpack.c.l.b16 %v1022
    %v1774 = vunpack.c.h.b16 %v1022
    %v1775 = vunpack.c.l.b16 %v1023
    %v1776 = vunpack.c.h.b16 %v1023
    %v1777 = vunpack.c.l.b16 %v1024
    %v1778 = vunpack.c.h.b16 %v1024
    %v1779 = vunpack.c.l.b16 %v1025
    %v1780 = vunpack.c.h.b16 %v1025
    %v1781 = vunpack.c.l.b16 %v1026
    %v1782 = vunpack.c.h.b16 %v1026
    %v1783 = vunpack.c.l.b16 %v1027
    %v1784 = vunpack.c.h.b16 %v1027
    %v1785 = vunpack.c.l.b16 %v1028
    %v1786 = vunpack.c.h.b16 %v1028
    %v1787 = vunpack.c.l.b16 %v1029
    %v1788 = vunpack.c.h.b16 %v1029
    %v1789 = vunpack.c.l.b16 %v1030
    %v1790 = vunpack.c.h.b16 %v1030
    %v1791 = vunpack.c.l.b16 %v1031
    %v1792 = vunpack.c.h.b16 %v1031
    %v1793 = vunpack.c.l.b16 %v1032
    %v1794 = vunpack.c.h.b16 %v1032
    %v1795 = vunpack.c.l.b16 %v1033
    %v1796 = vunpack.c.h.b16 %v1033
    %v1797 = vunpack.c.l.b16 %v1034
    %v1798 = vunpack.c.h.b16 %v1034
    %v1799 = vunpack.c.l.b16 %v1035
    %v1800 = vunpack.c.h.b16 %v1035
    %v1801 = vunpack.c.l.b16 %v1036
    %v1802 = vunpack.c.h.b16 %v1036
    %v1803 = vunpack.c.l.b16 %v1037
    %v1804 = vunpack.c.h.b16 %v1037
    %v1805 = vunpack.c.l.b16 %v1038
    %v1806 = vunpack.c.h.b16 %v1038
    %v1807 = vunpack.c.l.b16 %v1039
    %v1808 = vunpack.c.h.b16 %v1039
    %v1809 = vunpack.c.l.b16 %v1040
    %v1810 = vunpack.c.h.b16 %v1040
    %v1811 = vunpack.c.l.b16 %v1041
    %v1812 = vunpack.c.h.b16 %v1041
    %v1813 = vunpack.c.l.b16 %v1042
    %v1814 = vunpack.c.h.b16 %v1042
    %v1815 = vunpack.c.l.b16 %v1043
    %v1816 = vunpack.c.h.b16 %v1043
    %v1817 = vunpack.c.l.b16 %v1044
    %v1818 = vunpack.c.h.b16 %v1044
    %v1819 = vunpack.c.l.b16 %v1045
    %v1820 = vunpack.c.h.b16 %v1045
    %v1821 = vunpack.c.l.b16 %v1046
    %v1822 = vunpack.c.h.b16 %v1046
    %v1823 = vunpack.c.l.b16 %v1047
    %v1824 = vunpack.c.h.b16 %v1047
    %v1825 = vunpack.c.l.b16 %v1048
    %v1826 = vunpack.c.h.b16 %v1048
    %v1827 = vunpack.c.l.b16 %v1049
    %v1828 = vunpack.c.h.b16 %v1049
    %v1829 = vunpack.c.l.b16 %v1050
    %v1830 = vunpack.c.h.b16 %v1050
    %v1831 = vunpack.c.l.b16 %v1051
    %v1832 = vunpack.c.h.b16 %v1051
    %v1833 = vunpack.c.l.b16 %v1052
    %v1834 = vunpack.c.h.b16 %v1052
    %v1835 = vunpack.c.l.b16 %v1053
    %v1836 = vunpack.c.h.b16 %v1053
    %v1837 = vunpack.c.l.b16 %v1054
    %v1838 = vunpack.c.h.b16 %v1054
    %v1839 = vunpack.c.l.b16 %v1055
    %v1840 = vunpack.c.h.b16 %v1055
    %v1841 = vunpack.c.l.b16 %v1056
    %v1842 = vunpack.c.h.b16 %v1056
    %v1843 = vpack.c.b16 %v1339, %v1331
    %v1844 = vpack.c.b16 %v1340, %v1332
    %v1845 = vpack.c.b16 %v1341, %v1333
    %v1846 = vpack.c.b16 %v1342, %v1334
    %v1847 = vpack.c.b16 %v1343, %v1335
    %v1848 = vpack.c.b16 %v1344, %v1336
    %v1849 = vpack.c.b16 %v1345, %v1337
    %v1850 = vpack.c.b16 %v1346, %v1338
    %v1851 = vpack.c.b16 %v1355, %v1347
    %v1852 = vpack.c.b16 %v1356, %v1348
    %v1853 = vpack.c.b16 %v1357, %v1349
    %v1854 = vpack.c.b16 %v1358, %v1350
    %v1855 = vpack.c.b16 %v1359, %v1351
    %v1856 = vpack.c.b16 %v1360, %v1352
    %v1857 = vpack.c.b16 %v1361, %v1353
    %v1858 = vpack.c.b16 %v1362, %v1354
    %v1859 = vpack.c.b16 %v1371, %v1363
    %v1860 = vpack.c.b16 %v1372, %v1364
    %v1861 = vpack.c.b16 %v1373, %v1365
    %v1862 = vpack.c.b16 %v1374, %v1366
    %v1863 = vpack.c.b16 %v1375, %v1367
    %v1864 = vpack.c.b16 %v1376, %v1368
    %v1865 = vpack.c.b16 %v1377, %v1369
    %v1866 = vpack.c.b16 %v1378, %v1370
    %v1867 = vpack.c.b16 %v1387, %v1379
    %v1868 = vpack.c.b16 %v1388, %v1380
    %v1869 = vpack.c.b16 %v1389, %v1381
    %v1870 = vpack.c.b16 %v1390, %v1382
    %v1871 = vpack.c.b16 %v1391, %v1383
    %v1872 = vpack.c.b16 %v1392, %v1384
    %v1873 = vpack.c.b16 %v1393, %v1385
    %v1874 = vpack.c.b16 %v1394, %v1386
    %v1875 = vpack.c.b16 %v1403, %v1395
    %v1876 = vpack.c.b16 %v1404, %v1396
    %v1877 = vpack.c.b16 %v1405, %v1397
    %v1878 = vpack.c.b16 %v1406, %v1398
    %v1879 = vpack.c.b16 %v1407, %v1399
    %v1880 = vpack.c.b16 %v1408, %v1400
    %v1881 = vpack.c.b16 %v1409, %v1401
    %v1882 = vpack.c.b16 %v1410, %v1402
    %v1883 = vpack.c.b16 %v1419, %v1411
    %v1884 = vpack.c.b16 %v1420, %v1412
    %v1885 = vpack.c.b16 %v1421, %v1413
    %v1886 = vpack.c.b16 %v1422, %v1414
    %v1887 = vpack.c.b16 %v1423, %v1415
    %v1888 = vpack.c.b16 %v1424, %v1416
    %v1889 = vpack.c.b16 %v1425, %v1417
    %v1890 = vpack.c.b16 %v1426, %v1418
    %v1891 = vpack.c.b16 %v1435, %v1427
    %v1892 = vpack.c.b16 %v1436, %v1428
    %v1893 = vpack.c.b16 %v1437, %v1429
    %v1894 = vpack.c.b16 %v1438, %v1430
    %v1895 = vpack.c.b16 %v1439, %v1431
    %v1896 = vpack.c.b16 %v1440, %v1432
    %v1897 = vpack.c.b16 %v1441, %v1433
    %v1898 = vpack.c.b16 %v1442, %v1434
    %v1899 = vpack.c.b16 %v1451, %v1443
    %v1900 = vpack.c.b16 %v1452, %v1444
    %v1901 = vpack.c.b16 %v1453, %v1445
    %v1902 = vpack.c.b16 %v1454, %v1446
    %v1903 = vpack.c.b16 %v1455, %v1447
    %v1904 = vpack.c.b16 %v1456, %v1448
    %v1905 = vpack.c.b16 %v1457, %v1449
    %v1906 = vpack.c.b16 %v1458, %v1450
    %v1907 = vpack.c.b16 %v1467, %v1459
    %v1908 = vpack.c.b16 %v1468, %v1460
    %v1909 = vpack.c.b16 %v1469, %v1461
    %v1910 = vpack.c.b16 %v1470, %v1462
    %v1911 = vpack.c.b16 %v1471, %v1463
    %v1912 = vpack.c.b16 %v1472, %v1464
    %v1913 = vpack.c.b16 %v1473, %v1465
    %v1914 = vpack.c.b16 %v1474, %v1466
    %v1915 = vpack.c.b16 %v1483, %v1475
    %v1916 = vpack.c.b16 %v1484, %v1476
    %v1917 = vpack.c.b16 %v1485, %v1477
    %v1918 = vpack.c.b16 %v1486, %v1478
    %v1919 = vpack.c.b16 %v1487, %v1479
    %v1920 = vpack.c.b16 %v1488, %v1480
    %v1921 = vpack.c.b16 %v1489, %v1481
    %v1922 = vpack.c.b16 %v1490, %v1482
    %v1923 = vpack.c.b16 %v1499, %v1491
    %v1924 = vpack.c.b16 %v1500, %v1492
    %v1925 = vpack.c.b16 %v1501, %v1493
    %v1926 = vpack.c.b16 %v1502, %v1494
    %v1927 = vpack.c.b16 %v1503, %v1495
    %v1928 = vpack.c.b16 %v1504, %v1496
    %v1929 = vpack.c.b16 %v1505, %v1497
    %v1930 = vpack.c.b16 %v1506, %v1498
    %v1931 = vpack.c.b16 %v1515, %v1507
    %v1932 = vpack.c.b16 %v1516, %v1508
    %v1933 = vpack.c.b16 %v1517, %v1509
    %v1934 = vpack.c.b16 %v1518, %v1510
    %v1935 = vpack.c.b16 %v1519, %v1511
    %v1936 = vpack.c.b16 %v1520, %v1512
    %v1937 = vpack.c.b16 %v1521, %v1513
    %v1938 = vpack.c.b16 %v1522, %v1514
    %v1939 = vpack.c.b16 %v1531, %v1523
    %v1940 = vpack.c.b16 %v1532, %v1524
    %v1941 = vpack.c.b16 %v1533, %v1525
    %v1942 = vpack.c.b16 %v1534, %v1526
    %v1943 = vpack.c.b16 %v1535, %v1527
    %v1944 = vpack.c.b16 %v1536, %v1528
    %v1945 = vpack.c.b16 %v1537, %v1529
    %v1946 = vpack.c.b16 %v1538, %v1530
    %v1947 = vpack.c.b16 %v1547, %v1539
    %v1948 = vpack.c.b16 %v1548, %v1540
    %v1949 = vpack.c.b16 %v1549, %v1541
    %v1950 = vpack.c.b16 %v1550, %v1542
    %v1951 = vpack.c.b16 %v1551, %v1543
    %v1952 = vpack.c.b16 %v1552, %v1544
    %v1953 = vpack.c.b16 %v1553, %v1545
    %v1954 = vpack.c.b16 %v1554, %v1546
    %v1955 = vpack.c.b16 %v1563, %v1555
    %v1956 = vpack.c.b16 %v1564, %v1556
    %v1957 = vpack.c.b16 %v1565, %v1557
    %v1958 = vpack.c.b16 %v1566, %v1558
    %v1959 = vpack.c.b16 %v1567, %v1559
    %v1960 = vpack.c.b16 %v1568, %v1560
    %v1961 = vpack.c.b16 %v1569, %v1561
    %v1962 = vpack.c.b16 %v1570, %v1562
    %v1963 = vpack.c.b16 %v1579, %v1571
    %v1964 = vpack.c.b16 %v1580, %v1572
    %v1965 = vpack.c.b16 %v1581, %v1573
    %v1966 = vpack.c.b16 %v1582, %v1574
    %v1967 = vpack.c.b16 %v1583, %v1575
    %v1968 = vpack.c.b16 %v1584, %v1576
    %v1969 = vpack.c.b16 %v1585, %v1577
    %v1970 = vpack.c.b16 %v1586, %v1578
    %v1971 = vpack.c.b16 %v1595, %v1587
    %v1972 = vpack.c.b16 %v1596, %v1588
    %v1973 = vpack.c.b16 %v1597, %v1589
    %v1974 = vpack.c.b16 %v1598, %v1590
    %v1975 = vpack.c.b16 %v1599, %v1591
    %v1976 = vpack.c.b16 %v1600, %v1592
    %v1977 = vpack.c.b16 %v1601, %v1593
    %v1978 = vpack.c.b16 %v1602, %v1594
    %v1979 = vpack.c.b16 %v1611, %v1603
    %v1980 = vpack.c.b16 %v1612, %v1604
    %v1981 = vpack.c.b16 %v1613, %v1605
    %v1982 = vpack.c.b16 %v1614, %v1606
    %v1983 = vpack.c.b16 %v1615, %v1607
    %v1984 = vpack.c.b16 %v1616, %v1608
    %v1985 = vpack.c.b16 %v1617, %v1609
    %v1986 = vpack.c.b16 %v1618, %v1610
    %v1987 = vpack.c.b16 %v1627, %v1619
    %v1988 = vpack.c.b16 %v1628, %v1620
    %v1989 = vpack.c.b16 %v1629, %v1621
    %v1990 = vpack.c.b16 %v1630, %v1622
    %v1991 = vpack.c.b16 %v1631, %v1623
    %v1992 = vpack.c.b16 %v1632, %v1624
    %v1993 = vpack.c.b16 %v1633, %v1625
    %v1994 = vpack.c.b16 %v1634, %v1626
    %v1995 = vpack.c.b16 %v1643, %v1635
    %v1996 = vpack.c.b16 %v1644, %v1636
    %v1997 = vpack.c.b16 %v1645, %v1637
    %v1998 = vpack.c.b16 %v1646, %v1638
    %v1999 = vpack.c.b16 %v1647, %v1639
    %v2000 = vpack.c.b16 %v1648, %v1640
    %v2001 = vpack.c.b16 %v1649, %v1641
    %v2002 = vpack.c.b16 %v1650, %v1642
    %v2003 = vpack.c.b16 %v1659, %v1651
    %v2004 = vpack.c.b16 %v1660, %v1652
    %v2005 = vpack.c.b16 %v1661, %v1653
    %v2006 = vpack.c.b16 %v1662, %v1654
    %v2007 = vpack.c.b16 %v1663, %v1655
    %v2008 = vpack.c.b16 %v1664, %v1656
    %v2009 = vpack.c.b16 %v1665, %v1657
    %v2010 = vpack.c.b16 %v1666, %v1658
    %v2011 = vpack.c.b16 %v1675, %v1667
    %v2012 = vpack.c.b16 %v1676, %v1668
    %v2013 = vpack.c.b16 %v1677, %v1669
    %v2014 = vpack.c.b16 %v1678, %v1670
    %v2015 = vpack.c.b16 %v1679, %v1671
    %v2016 = vpack.c.b16 %v1680, %v1672
    %v2017 = vpack.c.b16 %v1681, %v1673
    %v2018 = vpack.c.b16 %v1682, %v1674
    %v2019 = vpack.c.b16 %v1691, %v1683
    %v2020 = vpack.c.b16 %v1692, %v1684
    %v2021 = vpack.c.b16 %v1693, %v1685
    %v2022 = vpack.c.b16 %v1694, %v1686
    %v2023 = vpack.c.b16 %v1695, %v1687
    %v2024 = vpack.c.b16 %v1696, %v1688
    %v2025 = vpack.c.b16 %v1697, %v1689
    %v2026 = vpack.c.b16 %v1698, %v1690
    %v2027 = vpack.c.b16 %v1707, %v1699
    %v2028 = vpack.c.b16 %v1708, %v1700
    %v2029 = vpack.c.b16 %v1709, %v1701
    %v2030 = vpack.c.b16 %v1710, %v1702
    %v2031 = vpack.c.b16 %v1711, %v1703
    %v2032 = vpack.c.b16 %v1712, %v1704
    %v2033 = vpack.c.b16 %v1713, %v1705
    %v2034 = vpack.c.b16 %v1714, %v1706
    %v2035 = vpack.c.b16 %v1723, %v1715
    %v2036 = vpack.c.b16 %v1724, %v1716
    %v2037 = vpack.c.b16 %v1725, %v1717
    %v2038 = vpack.c.b16 %v1726, %v1718
    %v2039 = vpack.c.b16 %v1727, %v1719
    %v2040 = vpack.c.b16 %v1728, %v1720
    %v2041 = vpack.c.b16 %v1729, %v1721
    %v2042 = vpack.c.b16 %v1730, %v1722
    %v2043 = vpack.c.b16 %v1739, %v1731
    %v2044 = vpack.c.b16 %v1740, %v1732
    %v2045 = vpack.c.b16 %v1741, %v1733
    %v2046 = vpack.c.b16 %v1742, %v1734
    %v2047 = vpack.c.b16 %v1743, %v1735
    %v2048 = vpack.c.b16 %v1744, %v1736
    %v2049 = vpack.c.b16 %v1745, %v1737
    %v2050 = vpack.c.b16 %v1746, %v1738
    %v2051 = vpack.c.b16 %v1755, %v1747
    %v2052 = vpack.c.b16 %v1756, %v1748
    %v2053 = vpack.c.b16 %v1757, %v1749
    %v2054 = vpack.c.b16 %v1758, %v1750
    %v2055 = vpack.c.b16 %v1759, %v1751
    %v2056 = vpack.c.b16 %v1760, %v1752
    %v2057 = vpack.c.b16 %v1761, %v1753
    %v2058 = vpack.c.b16 %v1762, %v1754
    %v2059 = vpack.c.b16 %v1771, %v1763
    %v2060 = vpack.c.b16 %v1772, %v1764
    %v2061 = vpack.c.b16 %v1773, %v1765
    %v2062 = vpack.c.b16 %v1774, %v1766
    %v2063 = vpack.c.b16 %v1775, %v1767
    %v2064 = vpack.c.b16 %v1776, %v1768
    %v2065 = vpack.c.b16 %v1777, %v1769
    %v2066 = vpack.c.b16 %v1778, %v1770
    %v2067 = vpack.c.b16 %v1787, %v1779
    %v2068 = vpack.c.b16 %v1788, %v1780
    %v2069 = vpack.c.b16 %v1789, %v1781
    %v2070 = vpack.c.b16 %v1790, %v1782
    %v2071 = vpack.c.b16 %v1791, %v1783
    %v2072 = vpack.c.b16 %v1792, %v1784
    %v2073 = vpack.c.b16 %v1793, %v1785
    %v2074 = vpack.c.b16 %v1794, %v1786
    %v2075 = vpack.c.b16 %v1803, %v1795
    %v2076 = vpack.c.b16 %v1804, %v1796
    %v2077 = vpack.c.b16 %v1805, %v1797
    %v2078 = vpack.c.b16 %v1806, %v1798
    %v2079 = vpack.c.b16 %v1807, %v1799
    %v2080 = vpack.c.b16 %v1808, %v1800
    %v2081 = vpack.c.b16 %v1809, %v1801
    %v2082 = vpack.c.b16 %v1810, %v1802
    %v2083 = vpack.c.b16 %v1819, %v1811
    %v2084 = vpack.c.b16 %v1820, %v1812
    %v2085 = vpack.c.b16 %v1821, %v1813
    %v2086 = vpack.c.b16 %v1822, %v1814
    %v2087 = vpack.c.b16 %v1823, %v1815
    %v2088 = vpack.c.b16 %v1824, %v1816
    %v2089 = vpack.c.b16 %v1825, %v1817
    %v2090 = vpack.c.b16 %v1826, %v1818
    %v2091 = vpack.c.b16 %v1835, %v1827
    %v2092 = vpack.c.b16 %v1836, %v1828
    %v2093 = vpack.c.b16 %v1837, %v1829
    %v2094 = vpack.c.b16 %v1838, %v1830
    %v2095 = vpack.c.b16 %v1839, %v1831
    %v2096 = vpack.c.b16 %v1840, %v1832
    %v2097 = vpack.c.b16 %v1841, %v1833
    %v2098 = vpack.c.b16 %v1842, %v1834
    %2355 = vmatpush.bf16.msra.mxu0 %v1899
    %2356 = vmatpush.bf16.msra.mxu0 %v1891
    %2357 = vmatpush.bf16.msra.mxu0 %v1883
    %2358 = vmatpush.bf16.msra.mxu0 %v1875
    %2359 = vmatpush.bf16.msra.mxu0 %v1867
    %2360 = vmatpush.bf16.msra.mxu0 %v1859
    %2361 = vmatpush.bf16.msra.mxu0 %v1851
    %2362 = vmatpush.bf16.msra.mxu0 %v1843
    %2363 = vmatmul.bf16.gmra.mxu0 %v797
    %v2364 = vpop.f32.mrf.mxu0
    %v2365 = vadd.f32 %v1059, %v2364
    %v2366 = vpop.f32.mrf.mxu0
    %2367 = vdwg.mxu0
    %2368 = vmatpush.bf16.msra.mxu0 %v1963
    %2369 = vmatpush.bf16.msra.mxu0 %v1955
    %2370 = vmatpush.bf16.msra.mxu0 %v1947
    %2371 = vmatpush.bf16.msra.mxu0 %v1939
    %2372 = vmatpush.bf16.msra.mxu0 %v1931
    %2373 = vmatpush.bf16.msra.mxu0 %v1923
    %2374 = vmatpush.bf16.msra.mxu0 %v1915
    %2375 = vmatpush.bf16.msra.mxu0 %v1907
    %2376 = vmatmul.bf16.gmra.mxu0 %v798
    %v2377 = vpop.f32.mrf.mxu0
    %v2378 = vadd.f32 %v2365, %v2377
    %v2379 = vpop.f32.mrf.mxu0
    %2380 = vdwg.mxu0
    %2381 = vmatpush.bf16.msra.mxu0 %v2027
    %2382 = vmatpush.bf16.msra.mxu0 %v2019
    %2383 = vmatpush.bf16.msra.mxu0 %v2011
    %2384 = vmatpush.bf16.msra.mxu0 %v2003
    %2385 = vmatpush.bf16.msra.mxu0 %v1995
    %2386 = vmatpush.bf16.msra.mxu0 %v1987
    %2387 = vmatpush.bf16.msra.mxu0 %v1979
    %2388 = vmatpush.bf16.msra.mxu0 %v1971
    %2389 = vmatmul.bf16.gmra.mxu0 %v799
    %v2390 = vpop.f32.mrf.mxu0
    %v2391 = vadd.f32 %v2378, %v2390
    %v2392 = vpop.f32.mrf.mxu0
    %2393 = vdwg.mxu0
    %2394 = vmatpush.bf16.msra.mxu0 %v2091
    %2395 = vmatpush.bf16.msra.mxu0 %v2083
    %2396 = vmatpush.bf16.msra.mxu0 %v2075
    %2397 = vmatpush.bf16.msra.mxu0 %v2067
    %2398 = vmatpush.bf16.msra.mxu0 %v2059
    %2399 = vmatpush.bf16.msra.mxu0 %v2051
    %2400 = vmatpush.bf16.msra.mxu0 %v2043
    %2401 = vmatpush.bf16.msra.mxu0 %v2035
    %2402 = vmatmul.bf16.gmra.mxu0 %v800
    %v2403 = vpop.f32.mrf.mxu0
    %v2404 = vadd.f32 %v2391, %v2403
    %v2405 = vpop.f32.mrf.mxu0
    %2406 = vdwg.mxu0
    %2407 = vmatpush.bf16.msra.mxu0 %v1900
    %2408 = vmatpush.bf16.msra.mxu0 %v1892
    %2409 = vmatpush.bf16.msra.mxu0 %v1884
    %2410 = vmatpush.bf16.msra.mxu0 %v1876
    %2411 = vmatpush.bf16.msra.mxu0 %v1868
    %2412 = vmatpush.bf16.msra.mxu0 %v1860
    %2413 = vmatpush.bf16.msra.mxu0 %v1852
    %2414 = vmatpush.bf16.msra.mxu0 %v1844
    %2415 = vmatmul.bf16.gmra.mxu0 %v797
    %v2416 = vpop.f32.mrf.mxu0
    %v2417 = vadd.f32 %v1060, %v2416
    %v2418 = vpop.f32.mrf.mxu0
    %2419 = vdwg.mxu0
    %2420 = vmatpush.bf16.msra.mxu0 %v1964
    %2421 = vmatpush.bf16.msra.mxu0 %v1956
    %2422 = vmatpush.bf16.msra.mxu0 %v1948
    %2423 = vmatpush.bf16.msra.mxu0 %v1940
    %2424 = vmatpush.bf16.msra.mxu0 %v1932
    %2425 = vmatpush.bf16.msra.mxu0 %v1924
    %2426 = vmatpush.bf16.msra.mxu0 %v1916
    %2427 = vmatpush.bf16.msra.mxu0 %v1908
    %2428 = vmatmul.bf16.gmra.mxu0 %v798
    %v2429 = vpop.f32.mrf.mxu0
    %v2430 = vadd.f32 %v2417, %v2429
    %v2431 = vpop.f32.mrf.mxu0
    %2432 = vdwg.mxu0
    %2433 = vmatpush.bf16.msra.mxu0 %v2028
    %2434 = vmatpush.bf16.msra.mxu0 %v2020
    %2435 = vmatpush.bf16.msra.mxu0 %v2012
    %2436 = vmatpush.bf16.msra.mxu0 %v2004
    %2437 = vmatpush.bf16.msra.mxu0 %v1996
    %2438 = vmatpush.bf16.msra.mxu0 %v1988
    %2439 = vmatpush.bf16.msra.mxu0 %v1980
    %2440 = vmatpush.bf16.msra.mxu0 %v1972
    %2441 = vmatmul.bf16.gmra.mxu0 %v799
    %v2442 = vpop.f32.mrf.mxu0
    %v2443 = vadd.f32 %v2430, %v2442
    %v2444 = vpop.f32.mrf.mxu0
    %2445 = vdwg.mxu0
    %2446 = vmatpush.bf16.msra.mxu0 %v2092
    %2447 = vmatpush.bf16.msra.mxu0 %v2084
    %2448 = vmatpush.bf16.msra.mxu0 %v2076
    %2449 = vmatpush.bf16.msra.mxu0 %v2068
    %2450 = vmatpush.bf16.msra.mxu0 %v2060
    %2451 = vmatpush.bf16.msra.mxu0 %v2052
    %2452 = vmatpush.bf16.msra.mxu0 %v2044
    %2453 = vmatpush.bf16.msra.mxu0 %v2036
    %2454 = vmatmul.bf16.gmra.mxu0 %v800
    %v2455 = vpop.f32.mrf.mxu0
    %v2456 = vadd.f32 %v2443, %v2455
    %v2457 = vpop.f32.mrf.mxu0
    %2458 = vdwg.mxu0
    %2459 = vmatpush.bf16.msra.mxu0 %v1901
    %2460 = vmatpush.bf16.msra.mxu0 %v1893
    %2461 = vmatpush.bf16.msra.mxu0 %v1885
    %2462 = vmatpush.bf16.msra.mxu0 %v1877
    %2463 = vmatpush.bf16.msra.mxu0 %v1869
    %2464 = vmatpush.bf16.msra.mxu0 %v1861
    %2465 = vmatpush.bf16.msra.mxu0 %v1853
    %2466 = vmatpush.bf16.msra.mxu0 %v1845
    %2467 = vmatmul.bf16.gmra.mxu0 %v797
    %v2468 = vpop.f32.mrf.mxu0
    %v2469 = vadd.f32 %v1061, %v2468
    %v2470 = vpop.f32.mrf.mxu0
    %2471 = vdwg.mxu0
    %2472 = vmatpush.bf16.msra.mxu0 %v1965
    %2473 = vmatpush.bf16.msra.mxu0 %v1957
    %2474 = vmatpush.bf16.msra.mxu0 %v1949
    %2475 = vmatpush.bf16.msra.mxu0 %v1941
    %2476 = vmatpush.bf16.msra.mxu0 %v1933
    %2477 = vmatpush.bf16.msra.mxu0 %v1925
    %2478 = vmatpush.bf16.msra.mxu0 %v1917
    %2479 = vmatpush.bf16.msra.mxu0 %v1909
    %2480 = vmatmul.bf16.gmra.mxu0 %v798
    %v2481 = vpop.f32.mrf.mxu0
    %v2482 = vadd.f32 %v2469, %v2481
    %v2483 = vpop.f32.mrf.mxu0
    %2484 = vdwg.mxu0
    %2485 = vmatpush.bf16.msra.mxu0 %v2029
    %2486 = vmatpush.bf16.msra.mxu0 %v2021
    %2487 = vmatpush.bf16.msra.mxu0 %v2013
    %2488 = vmatpush.bf16.msra.mxu0 %v2005
    %2489 = vmatpush.bf16.msra.mxu0 %v1997
    %2490 = vmatpush.bf16.msra.mxu0 %v1989
    %2491 = vmatpush.bf16.msra.mxu0 %v1981
    %2492 = vmatpush.bf16.msra.mxu0 %v1973
    %2493 = vmatmul.bf16.gmra.mxu0 %v799
    %v2494 = vpop.f32.mrf.mxu0
    %v2495 = vadd.f32 %v2482, %v2494
    %v2496 = vpop.f32.mrf.mxu0
    %2497 = vdwg.mxu0
    %2498 = vmatpush.bf16.msra.mxu0 %v2093
    %2499 = vmatpush.bf16.msra.mxu0 %v2085
    %2500 = vmatpush.bf16.msra.mxu0 %v2077
    %2501 = vmatpush.bf16.msra.mxu0 %v2069
    %2502 = vmatpush.bf16.msra.mxu0 %v2061
    %2503 = vmatpush.bf16.msra.mxu0 %v2053
    %2504 = vmatpush.bf16.msra.mxu0 %v2045
    %2505 = vmatpush.bf16.msra.mxu0 %v2037
    %2506 = vmatmul.bf16.gmra.mxu0 %v800
    %v2507 = vpop.f32.mrf.mxu0
    %v2508 = vadd.f32 %v2495, %v2507
    %v2509 = vpop.f32.mrf.mxu0
    %2510 = vdwg.mxu0
    %2511 = vmatpush.bf16.msra.mxu0 %v1902
    %2512 = vmatpush.bf16.msra.mxu0 %v1894
    %2513 = vmatpush.bf16.msra.mxu0 %v1886
    %2514 = vmatpush.bf16.msra.mxu0 %v1878
    %2515 = vmatpush.bf16.msra.mxu0 %v1870
    %2516 = vmatpush.bf16.msra.mxu0 %v1862
    %2517 = vmatpush.bf16.msra.mxu0 %v1854
    %2518 = vmatpush.bf16.msra.mxu0 %v1846
    %2519 = vmatmul.bf16.gmra.mxu0 %v797
    %v2520 = vpop.f32.mrf.mxu0
    %v2521 = vadd.f32 %v1062, %v2520
    %v2522 = vpop.f32.mrf.mxu0
    %2523 = vdwg.mxu0
    %2524 = vmatpush.bf16.msra.mxu0 %v1966
    %2525 = vmatpush.bf16.msra.mxu0 %v1958
    %2526 = vmatpush.bf16.msra.mxu0 %v1950
    %2527 = vmatpush.bf16.msra.mxu0 %v1942
    %2528 = vmatpush.bf16.msra.mxu0 %v1934
    %2529 = vmatpush.bf16.msra.mxu0 %v1926
    %2530 = vmatpush.bf16.msra.mxu0 %v1918
    %2531 = vmatpush.bf16.msra.mxu0 %v1910
    %2532 = vmatmul.bf16.gmra.mxu0 %v798
    %v2533 = vpop.f32.mrf.mxu0
    %v2534 = vadd.f32 %v2521, %v2533
    %v2535 = vpop.f32.mrf.mxu0
    %2536 = vdwg.mxu0
    %2537 = vmatpush.bf16.msra.mxu0 %v2030
    %2538 = vmatpush.bf16.msra.mxu0 %v2022
    %2539 = vmatpush.bf16.msra.mxu0 %v2014
    %2540 = vmatpush.bf16.msra.mxu0 %v2006
    %2541 = vmatpush.bf16.msra.mxu0 %v1998
    %2542 = vmatpush.bf16.msra.mxu0 %v1990
    %2543 = vmatpush.bf16.msra.mxu0 %v1982
    %2544 = vmatpush.bf16.msra.mxu0 %v1974
    %2545 = vmatmul.bf16.gmra.mxu0 %v799
    %v2546 = vpop.f32.mrf.mxu0
    %v2547 = vadd.f32 %v2534, %v2546
    %v2548 = vpop.f32.mrf.mxu0
    %2549 = vdwg.mxu0
    %2550 = vmatpush.bf16.msra.mxu0 %v2094
    %2551 = vmatpush.bf16.msra.mxu0 %v2086
    %2552 = vmatpush.bf16.msra.mxu0 %v2078
    %2553 = vmatpush.bf16.msra.mxu0 %v2070
    %2554 = vmatpush.bf16.msra.mxu0 %v2062
    %2555 = vmatpush.bf16.msra.mxu0 %v2054
    %2556 = vmatpush.bf16.msra.mxu0 %v2046
    %2557 = vmatpush.bf16.msra.mxu0 %v2038
    %2558 = vmatmul.bf16.gmra.mxu0 %v800
    %v2559 = vpop.f32.mrf.mxu0
    %v2560 = vadd.f32 %v2547, %v2559
    %v2561 = vpop.f32.mrf.mxu0
    %2562 = vdwg.mxu0
    %2563 = vmatpush.bf16.msra.mxu0 %v1903
    %2564 = vmatpush.bf16.msra.mxu0 %v1895
    %2565 = vmatpush.bf16.msra.mxu0 %v1887
    %2566 = vmatpush.bf16.msra.mxu0 %v1879
    %2567 = vmatpush.bf16.msra.mxu0 %v1871
    %2568 = vmatpush.bf16.msra.mxu0 %v1863
    %2569 = vmatpush.bf16.msra.mxu0 %v1855
    %2570 = vmatpush.bf16.msra.mxu0 %v1847
    %2571 = vmatmul.bf16.gmra.mxu0 %v797
    %v2572 = vpop.f32.mrf.mxu0
    %v2573 = vadd.f32 %v1063, %v2572
    %v2574 = vpop.f32.mrf.mxu0
    %2575 = vdwg.mxu0
    %2576 = vmatpush.bf16.msra.mxu0 %v1967
    %2577 = vmatpush.bf16.msra.mxu0 %v1959
    %2578 = vmatpush.bf16.msra.mxu0 %v1951
    %2579 = vmatpush.bf16.msra.mxu0 %v1943
    %2580 = vmatpush.bf16.msra.mxu0 %v1935
    %2581 = vmatpush.bf16.msra.mxu0 %v1927
    %2582 = vmatpush.bf16.msra.mxu0 %v1919
    %2583 = vmatpush.bf16.msra.mxu0 %v1911
    %2584 = vmatmul.bf16.gmra.mxu0 %v798
    %v2585 = vpop.f32.mrf.mxu0
    %v2586 = vadd.f32 %v2573, %v2585
    %v2587 = vpop.f32.mrf.mxu0
    %2588 = vdwg.mxu0
    %2589 = vmatpush.bf16.msra.mxu0 %v2031
    %2590 = vmatpush.bf16.msra.mxu0 %v2023
    %2591 = vmatpush.bf16.msra.mxu0 %v2015
    %2592 = vmatpush.bf16.msra.mxu0 %v2007
    %2593 = vmatpush.bf16.msra.mxu0 %v1999
    %2594 = vmatpush.bf16.msra.mxu0 %v1991
    %2595 = vmatpush.bf16.msra.mxu0 %v1983
    %2596 = vmatpush.bf16.msra.mxu0 %v1975
    %2597 = vmatmul.bf16.gmra.mxu0 %v799
    %v2598 = vpop.f32.mrf.mxu0
    %v2599 = vadd.f32 %v2586, %v2598
    %v2600 = vpop.f32.mrf.mxu0
    %2601 = vdwg.mxu0
    %2602 = vmatpush.bf16.msra.mxu0 %v2095
    %2603 = vmatpush.bf16.msra.mxu0 %v2087
    %2604 = vmatpush.bf16.msra.mxu0 %v2079
    %2605 = vmatpush.bf16.msra.mxu0 %v2071
    %2606 = vmatpush.bf16.msra.mxu0 %v2063
    %2607 = vmatpush.bf16.msra.mxu0 %v2055
    %2608 = vmatpush.bf16.msra.mxu0 %v2047
    %2609 = vmatpush.bf16.msra.mxu0 %v2039
    %2610 = vmatmul.bf16.gmra.mxu0 %v800
    %v2611 = vpop.f32.mrf.mxu0
    %v2612 = vadd.f32 %v2599, %v2611
    %v2613 = vpop.f32.mrf.mxu0
    %2614 = vdwg.mxu0
    %2615 = vmatpush.bf16.msra.mxu0 %v1904
    %2616 = vmatpush.bf16.msra.mxu0 %v1896
    %2617 = vmatpush.bf16.msra.mxu0 %v1888
    %2618 = vmatpush.bf16.msra.mxu0 %v1880
    %2619 = vmatpush.bf16.msra.mxu0 %v1872
    %2620 = vmatpush.bf16.msra.mxu0 %v1864
    %2621 = vmatpush.bf16.msra.mxu0 %v1856
    %2622 = vmatpush.bf16.msra.mxu0 %v1848
    %2623 = vmatmul.bf16.gmra.mxu0 %v797
    %v2624 = vpop.f32.mrf.mxu0
    %v2625 = vadd.f32 %v1064, %v2624
    %v2626 = vpop.f32.mrf.mxu0
    %2627 = vdwg.mxu0
    %2628 = vmatpush.bf16.msra.mxu0 %v1968
    %2629 = vmatpush.bf16.msra.mxu0 %v1960
    %2630 = vmatpush.bf16.msra.mxu0 %v1952
    %2631 = vmatpush.bf16.msra.mxu0 %v1944
    %2632 = vmatpush.bf16.msra.mxu0 %v1936
    %2633 = vmatpush.bf16.msra.mxu0 %v1928
    %2634 = vmatpush.bf16.msra.mxu0 %v1920
    %2635 = vmatpush.bf16.msra.mxu0 %v1912
    %2636 = vmatmul.bf16.gmra.mxu0 %v798
    %v2637 = vpop.f32.mrf.mxu0
    %v2638 = vadd.f32 %v2625, %v2637
    %v2639 = vpop.f32.mrf.mxu0
    %2640 = vdwg.mxu0
    %2641 = vmatpush.bf16.msra.mxu0 %v2032
    %2642 = vmatpush.bf16.msra.mxu0 %v2024
    %2643 = vmatpush.bf16.msra.mxu0 %v2016
    %2644 = vmatpush.bf16.msra.mxu0 %v2008
    %2645 = vmatpush.bf16.msra.mxu0 %v2000
    %2646 = vmatpush.bf16.msra.mxu0 %v1992
    %2647 = vmatpush.bf16.msra.mxu0 %v1984
    %2648 = vmatpush.bf16.msra.mxu0 %v1976
    %2649 = vmatmul.bf16.gmra.mxu0 %v799
    %v2650 = vpop.f32.mrf.mxu0
    %v2651 = vadd.f32 %v2638, %v2650
    %v2652 = vpop.f32.mrf.mxu0
    %2653 = vdwg.mxu0
    %2654 = vmatpush.bf16.msra.mxu0 %v2096
    %2655 = vmatpush.bf16.msra.mxu0 %v2088
    %2656 = vmatpush.bf16.msra.mxu0 %v2080
    %2657 = vmatpush.bf16.msra.mxu0 %v2072
    %2658 = vmatpush.bf16.msra.mxu0 %v2064
    %2659 = vmatpush.bf16.msra.mxu0 %v2056
    %2660 = vmatpush.bf16.msra.mxu0 %v2048
    %2661 = vmatpush.bf16.msra.mxu0 %v2040
    %2662 = vmatmul.bf16.gmra.mxu0 %v800
    %v2663 = vpop.f32.mrf.mxu0
    %v2664 = vadd.f32 %v2651, %v2663
    %v2665 = vpop.f32.mrf.mxu0
    %2666 = vdwg.mxu0
    %2667 = vmatpush.bf16.msra.mxu0 %v1905
    %2668 = vmatpush.bf16.msra.mxu0 %v1897
    %2669 = vmatpush.bf16.msra.mxu0 %v1889
    %2670 = vmatpush.bf16.msra.mxu0 %v1881
    %2671 = vmatpush.bf16.msra.mxu0 %v1873
    %2672 = vmatpush.bf16.msra.mxu0 %v1865
    %2673 = vmatpush.bf16.msra.mxu0 %v1857
    %2674 = vmatpush.bf16.msra.mxu0 %v1849
    %2675 = vmatmul.bf16.gmra.mxu0 %v797
    %v2676 = vpop.f32.mrf.mxu0
    %v2677 = vadd.f32 %v1065, %v2676
    %v2678 = vpop.f32.mrf.mxu0
    %2679 = vdwg.mxu0
    %2680 = vmatpush.bf16.msra.mxu0 %v1969
    %2681 = vmatpush.bf16.msra.mxu0 %v1961
    %2682 = vmatpush.bf16.msra.mxu0 %v1953
    %2683 = vmatpush.bf16.msra.mxu0 %v1945
    %2684 = vmatpush.bf16.msra.mxu0 %v1937
    %2685 = vmatpush.bf16.msra.mxu0 %v1929
    %2686 = vmatpush.bf16.msra.mxu0 %v1921
    %2687 = vmatpush.bf16.msra.mxu0 %v1913
    %2688 = vmatmul.bf16.gmra.mxu0 %v798
    %v2689 = vpop.f32.mrf.mxu0
    %v2690 = vadd.f32 %v2677, %v2689
    %v2691 = vpop.f32.mrf.mxu0
    %2692 = vdwg.mxu0
    %2693 = vmatpush.bf16.msra.mxu0 %v2033
    %2694 = vmatpush.bf16.msra.mxu0 %v2025
    %2695 = vmatpush.bf16.msra.mxu0 %v2017
    %2696 = vmatpush.bf16.msra.mxu0 %v2009
    %2697 = vmatpush.bf16.msra.mxu0 %v2001
    %2698 = vmatpush.bf16.msra.mxu0 %v1993
    %2699 = vmatpush.bf16.msra.mxu0 %v1985
    %2700 = vmatpush.bf16.msra.mxu0 %v1977
    %2701 = vmatmul.bf16.gmra.mxu0 %v799
    %v2702 = vpop.f32.mrf.mxu0
    %v2703 = vadd.f32 %v2690, %v2702
    %v2704 = vpop.f32.mrf.mxu0
    %2705 = vdwg.mxu0
    %2706 = vmatpush.bf16.msra.mxu0 %v2097
    %2707 = vmatpush.bf16.msra.mxu0 %v2089
    %2708 = vmatpush.bf16.msra.mxu0 %v2081
    %2709 = vmatpush.bf16.msra.mxu0 %v2073
    %2710 = vmatpush.bf16.msra.mxu0 %v2065
    %2711 = vmatpush.bf16.msra.mxu0 %v2057
    %2712 = vmatpush.bf16.msra.mxu0 %v2049
    %2713 = vmatpush.bf16.msra.mxu0 %v2041
    %2714 = vmatmul.bf16.gmra.mxu0 %v800
    %v2715 = vpop.f32.mrf.mxu0
    %v2716 = vadd.f32 %v2703, %v2715
    %v2717 = vpop.f32.mrf.mxu0
    %2718 = vdwg.mxu0
    %2719 = vmatpush.bf16.msra.mxu0 %v1906
    %2720 = vmatpush.bf16.msra.mxu0 %v1898
    %2721 = vmatpush.bf16.msra.mxu0 %v1890
    %2722 = vmatpush.bf16.msra.mxu0 %v1882
    %2723 = vmatpush.bf16.msra.mxu0 %v1874
    %2724 = vmatpush.bf16.msra.mxu0 %v1866
    %2725 = vmatpush.bf16.msra.mxu0 %v1858
    %2726 = vmatpush.bf16.msra.mxu0 %v1850
    %2727 = vmatmul.bf16.gmra.mxu0 %v797
    %v2728 = vpop.f32.mrf.mxu0
    %v2729 = vadd.f32 %v1066, %v2728
    %v2730 = vpop.f32.mrf.mxu0
    %2731 = vdwg.mxu0
    %2732 = vmatpush.bf16.msra.mxu0 %v1970
    %2733 = vmatpush.bf16.msra.mxu0 %v1962
    %2734 = vmatpush.bf16.msra.mxu0 %v1954
    %2735 = vmatpush.bf16.msra.mxu0 %v1946
    %2736 = vmatpush.bf16.msra.mxu0 %v1938
    %2737 = vmatpush.bf16.msra.mxu0 %v1930
    %2738 = vmatpush.bf16.msra.mxu0 %v1922
    %2739 = vmatpush.bf16.msra.mxu0 %v1914
    %2740 = vmatmul.bf16.gmra.mxu0 %v798
    %v2741 = vpop.f32.mrf.mxu0
    %v2742 = vadd.f32 %v2729, %v2741
    %v2743 = vpop.f32.mrf.mxu0
    %2744 = vdwg.mxu0
    %2745 = vmatpush.bf16.msra.mxu0 %v2034
    %2746 = vmatpush.bf16.msra.mxu0 %v2026
    %2747 = vmatpush.bf16.msra.mxu0 %v2018
    %2748 = vmatpush.bf16.msra.mxu0 %v2010
    %2749 = vmatpush.bf16.msra.mxu0 %v2002
    %2750 = vmatpush.bf16.msra.mxu0 %v1994
    %2751 = vmatpush.bf16.msra.mxu0 %v1986
    %2752 = vmatpush.bf16.msra.mxu0 %v1978
    %2753 = vmatmul.bf16.gmra.mxu0 %v799
    %v2754 = vpop.f32.mrf.mxu0
    %v2755 = vadd.f32 %v2742, %v2754
    %v2756 = vpop.f32.mrf.mxu0
    %2757 = vdwg.mxu0
    %2758 = vmatpush.bf16.msra.mxu0 %v2098
    %2759 = vmatpush.bf16.msra.mxu0 %v2090
    %2760 = vmatpush.bf16.msra.mxu0 %v2082
    %2761 = vmatpush.bf16.msra.mxu0 %v2074
    %2762 = vmatpush.bf16.msra.mxu0 %v2066
    %2763 = vmatpush.bf16.msra.mxu0 %v2058
    %2764 = vmatpush.bf16.msra.mxu0 %v2050
    %2765 = vmatpush.bf16.msra.mxu0 %v2042
    %2766 = vmatmul.bf16.gmra.mxu0 %v800
    %v2767 = vpop.f32.mrf.mxu0
    %v2768 = vadd.f32 %v2755, %v2767
    %v2769 = vpop.f32.mrf.mxu0
    %2770 = vdwg.mxu0
    %vm2771 = vcmp.gt.f32.partialorder %v2404, 0.0
    %vm2772 = vcmp.gt.f32.partialorder %v2456, 0.0
    %vm2773 = vcmp.gt.f32.partialorder %v2508, 0.0
    %vm2774 = vcmp.gt.f32.partialorder %v2560, 0.0
    %vm2775 = vcmp.gt.f32.partialorder %v2612, 0.0
    %vm2776 = vcmp.gt.f32.partialorder %v2664, 0.0
    %vm2777 = vcmp.gt.f32.partialorder %v2716, 0.0
    %vm2778 = vcmp.gt.f32.partialorder %v2768, 0.0
    %v2779 = vmul.f32 %v2404, 0.2
    %v2780 = vmul.f32 %v2456, 0.2
    %v2781 = vmul.f32 %v2508, 0.2
    %v2782 = vmul.f32 %v2560, 0.2
    %v2783 = vmul.f32 %v2612, 0.2
    %v2784 = vmul.f32 %v2664, 0.2
    %v2785 = vmul.f32 %v2716, 0.2
    %v2786 = vmul.f32 %v2768, 0.2
    %v2787 = vsel %vm2771, %v2404, %v2779
    %v2788 = vsel %vm2772, %v2456, %v2780
    %v2789 = vsel %vm2773, %v2508, %v2781
    %v2790 = vsel %vm2774, %v2560, %v2782
    %v2791 = vsel %vm2775, %v2612, %v2783
    %v2792 = vsel %vm2776, %v2664, %v2784
    %v2793 = vsel %vm2777, %v2716, %v2785
    %v2794 = vsel %vm2778, %v2768, %v2786
    %v2795 = vpack.c.bf16 %v2787, %v2787
    %v2796 = vpack.c.bf16 %v2788, %v2788
    %v2797 = vpack.c.bf16 %v2789, %v2789
    %v2798 = vpack.c.bf16 %v2790, %v2790
    %v2799 = vpack.c.bf16 %v2791, %v2791
    %v2800 = vpack.c.bf16 %v2792, %v2792
    %v2801 = vpack.c.bf16 %v2793, %v2793
    %v2802 = vpack.c.bf16 %v2794, %v2794
    %v2803 = vld [vmem:[#allocation12] sm:$0xff]
    %v2804 = vld [vmem:[#allocation12 + $0x8] sm:$0xff]
    %v2805 = vld [vmem:[#allocation12 + $0x10] sm:$0xff]
    %v2806 = vld [vmem:[#allocation12 + $0x18] sm:$0xff]
    %v2807 = vld [vmem:[#allocation12 + $0x20] sm:$0xff]
    %v2808 = vld [vmem:[#allocation12 + $0x28] sm:$0xff]
    %v2809 = vld [vmem:[#allocation12 + $0x30] sm:$0xff]
    %v2810 = vld [vmem:[#allocation12 + $0x38] sm:$0xff]
    %v2811 = vld [vmem:[#allocation12 + $0x40] sm:$0xff]
    %v2812 = vld [vmem:[#allocation12 + $0x48] sm:$0xf]
    %v2813 = vld [vmem:[#allocation12 + $0x4c] sm:$0xff]
    %v2814 = vld [vmem:[#allocation12 + $0x54] sm:$0xff]
    %v2815 = vld [vmem:[#allocation12 + $0x5c] sm:$0xff]
    %v2816 = vld [vmem:[#allocation12 + $0x64] sm:$0xff]
    %v2817 = vld [vmem:[#allocation12 + $0x6c] sm:$0xff]
    %v2818 = vld [vmem:[#allocation12 + $0x74] sm:$0xff]
    %v2819 = vld [vmem:[#allocation12 + $0x7c] sm:$0xff]
    %v2820 = vld [vmem:[#allocation12 + $0x84] sm:$0xff]
    %v2821 = vld [vmem:[#allocation12 + $0x8c] sm:$0xff]
    %v2822 = vld [vmem:[#allocation12 + $0x94] sm:$0xf]
    %v2823 = vld [vmem:[#allocation12 + $0x98] sm:$0xff]
    %v2824 = vld [vmem:[#allocation12 + $0xa0] sm:$0xff]
    %v2825 = vld [vmem:[#allocation12 + $0xa8] sm:$0xff]
    %v2826 = vld [vmem:[#allocation12 + $0xb0] sm:$0xff]
    %v2827 = vld [vmem:[#allocation12 + $0xb8] sm:$0xff]
    %v2828 = vld [vmem:[#allocation12 + $0xc0] sm:$0xff]
    %v2829 = vld [vmem:[#allocation12 + $0xc8] sm:$0xff]
    %v2830 = vld [vmem:[#allocation12 + $0xd0] sm:$0xff]
    %v2831 = vld [vmem:[#allocation12 + $0xd8] sm:$0xff]
    %v2832 = vld [vmem:[#allocation12 + $0xe0] sm:$0xf]
    %v2833 = vld [vmem:[#allocation12 + $0xe4] sm:$0xff]
    %v2834 = vld [vmem:[#allocation12 + $0xec] sm:$0xff]
    %v2835 = vld [vmem:[#allocation12 + $0xf4] sm:$0xff]
    %v2836 = vld [vmem:[#allocation12 + $0xfc] sm:$0xff]
    %v2837 = vld [vmem:[#allocation12 + $0x104] sm:$0xff]
    %v2838 = vld [vmem:[#allocation12 + $0x10c] sm:$0xff]
    %v2839 = vld [vmem:[#allocation12 + $0x114] sm:$0xff]
    %v2840 = vld [vmem:[#allocation12 + $0x11c] sm:$0xff]
    %v2841 = vld [vmem:[#allocation12 + $0x124] sm:$0xff]
    %v2842 = vld [vmem:[#allocation12 + $0x12c] sm:$0xf]
    %v2843 = vld [vmem:[#allocation12 + $0x130] sm:$0xff]
    %v2844 = vld [vmem:[#allocation12 + $0x138] sm:$0xff]
    %v2845 = vld [vmem:[#allocation12 + $0x140] sm:$0xff]
    %v2846 = vld [vmem:[#allocation12 + $0x148] sm:$0xff]
    %v2847 = vld [vmem:[#allocation12 + $0x150] sm:$0xff]
    %v2848 = vld [vmem:[#allocation12 + $0x158] sm:$0xff]
    %v2849 = vld [vmem:[#allocation12 + $0x160] sm:$0xff]
    %v2850 = vld [vmem:[#allocation12 + $0x168] sm:$0xff]
    %v2851 = vld [vmem:[#allocation12 + $0x170] sm:$0xff]
    %v2852 = vld [vmem:[#allocation12 + $0x178] sm:$0xf]
    %v2853 = vld [vmem:[#allocation12 + $0x17c] sm:$0xff]
    %v2854 = vld [vmem:[#allocation12 + $0x184] sm:$0xff]
    %v2855 = vld [vmem:[#allocation12 + $0x18c] sm:$0xff]
    %v2856 = vld [vmem:[#allocation12 + $0x194] sm:$0xff]
    %v2857 = vld [vmem:[#allocation12 + $0x19c] sm:$0xff]
    %v2858 = vld [vmem:[#allocation12 + $0x1a4] sm:$0xff]
    %v2859 = vld [vmem:[#allocation12 + $0x1ac] sm:$0xff]
    %v2860 = vld [vmem:[#allocation12 + $0x1b4] sm:$0xff]
    %v2861 = vld [vmem:[#allocation12 + $0x1bc] sm:$0xff]
    %v2862 = vld [vmem:[#allocation12 + $0x1c4] sm:$0xf]
    %v2863 = vld [vmem:[#allocation12 + $0x1c8] sm:$0xff]
    %v2864 = vld [vmem:[#allocation12 + $0x1d0] sm:$0xff]
    %v2865 = vld [vmem:[#allocation12 + $0x1d8] sm:$0xff]
    %v2866 = vld [vmem:[#allocation12 + $0x1e0] sm:$0xff]
    %v2867 = vld [vmem:[#allocation12 + $0x1e8] sm:$0xff]
    %v2868 = vld [vmem:[#allocation12 + $0x1f0] sm:$0xff]
    %v2869 = vld [vmem:[#allocation12 + $0x1f8] sm:$0xff]
    %v2870 = vld [vmem:[#allocation12 + $0x200] sm:$0xff]
    %v2871 = vld [vmem:[#allocation12 + $0x208] sm:$0xff]
    %v2872 = vld [vmem:[#allocation12 + $0x210] sm:$0xf]
    %v2873 = vld [vmem:[#allocation12 + $0x214] sm:$0xff]
    %v2874 = vld [vmem:[#allocation12 + $0x21c] sm:$0xff]
    %v2875 = vld [vmem:[#allocation12 + $0x224] sm:$0xff]
    %v2876 = vld [vmem:[#allocation12 + $0x22c] sm:$0xff]
    %v2877 = vld [vmem:[#allocation12 + $0x234] sm:$0xff]
    %v2878 = vld [vmem:[#allocation12 + $0x23c] sm:$0xff]
    %v2879 = vld [vmem:[#allocation12 + $0x244] sm:$0xff]
    %v2880 = vld [vmem:[#allocation12 + $0x24c] sm:$0xff]
    %v2881 = vld [vmem:[#allocation12 + $0x254] sm:$0xff]
    %v2882 = vld [vmem:[#allocation12 + $0x25c] sm:$0xf]
    %v2883 = vld [vmem:[#allocation12 + $0x260] sm:$0xff]
    %v2884 = vld [vmem:[#allocation12 + $0x268] sm:$0xff]
    %v2885 = vld [vmem:[#allocation12 + $0x270] sm:$0xff]
    %v2886 = vld [vmem:[#allocation12 + $0x278] sm:$0xff]
    %v2887 = vld [vmem:[#allocation12 + $0x280] sm:$0xff]
    %v2888 = vld [vmem:[#allocation12 + $0x288] sm:$0xff]
    %v2889 = vld [vmem:[#allocation12 + $0x290] sm:$0xff]
    %v2890 = vld [vmem:[#allocation12 + $0x298] sm:$0xff]
    %v2891 = vld [vmem:[#allocation12 + $0x2a0] sm:$0xff]
    %v2892 = vld [vmem:[#allocation12 + $0x2a8] sm:$0xf]
    %v2893 = vld [vmem:[#allocation12 + $0x2ac] sm:$0xff]
    %v2894 = vld [vmem:[#allocation12 + $0x2b4] sm:$0xff]
    %v2895 = vld [vmem:[#allocation12 + $0x2bc] sm:$0xff]
    %v2896 = vld [vmem:[#allocation12 + $0x2c4] sm:$0xff]
    %v2897 = vld [vmem:[#allocation12 + $0x2cc] sm:$0xff]
    %v2898 = vld [vmem:[#allocation12 + $0x2d4] sm:$0xff]
    %v2899 = vld [vmem:[#allocation12 + $0x2dc] sm:$0xff]
    %v2900 = vld [vmem:[#allocation12 + $0x2e4] sm:$0xff]
    %v2901 = vld [vmem:[#allocation12 + $0x2ec] sm:$0xff]
    %v2902 = vld [vmem:[#allocation12 + $0x2f4] sm:$0xf]
    %v2903 = vld [vmem:[#allocation12 + $0x2f8] sm:$0xff]
    %v2904 = vld [vmem:[#allocation12 + $0x300] sm:$0xff]
    %v2905 = vld [vmem:[#allocation12 + $0x308] sm:$0xff]
    %v2906 = vld [vmem:[#allocation12 + $0x310] sm:$0xff]
    %v2907 = vld [vmem:[#allocation12 + $0x318] sm:$0xff]
    %v2908 = vld [vmem:[#allocation12 + $0x320] sm:$0xff]
    %v2909 = vld [vmem:[#allocation12 + $0x328] sm:$0xff]
    %v2910 = vld [vmem:[#allocation12 + $0x330] sm:$0xff]
    %v2911 = vld [vmem:[#allocation12 + $0x338] sm:$0xff]
    %v2912 = vld [vmem:[#allocation12 + $0x340] sm:$0xf]
    %v2913 = vld [vmem:[#allocation12 + $0x344] sm:$0xff]
    %v2914 = vld [vmem:[#allocation12 + $0x34c] sm:$0xff]
    %v2915 = vld [vmem:[#allocation12 + $0x354] sm:$0xff]
    %v2916 = vld [vmem:[#allocation12 + $0x35c] sm:$0xff]
    %v2917 = vld [vmem:[#allocation12 + $0x364] sm:$0xff]
    %v2918 = vld [vmem:[#allocation12 + $0x36c] sm:$0xff]
    %v2919 = vld [vmem:[#allocation12 + $0x374] sm:$0xff]
    %v2920 = vld [vmem:[#allocation12 + $0x37c] sm:$0xff]
    %v2921 = vld [vmem:[#allocation12 + $0x384] sm:$0xff]
    %v2922 = vld [vmem:[#allocation12 + $0x38c] sm:$0xf]
    %v2923 = vld [vmem:[#allocation12 + $0x390] sm:$0xff]
    %v2924 = vld [vmem:[#allocation12 + $0x398] sm:$0xff]
    %v2925 = vld [vmem:[#allocation12 + $0x3a0] sm:$0xff]
    %v2926 = vld [vmem:[#allocation12 + $0x3a8] sm:$0xff]
    %v2927 = vld [vmem:[#allocation12 + $0x3b0] sm:$0xff]
    %v2928 = vld [vmem:[#allocation12 + $0x3b8] sm:$0xff]
    %v2929 = vld [vmem:[#allocation12 + $0x3c0] sm:$0xff]
    %v2930 = vld [vmem:[#allocation12 + $0x3c8] sm:$0xff]
    %v2931 = vld [vmem:[#allocation12 + $0x3d0] sm:$0xff]
    %v2932 = vld [vmem:[#allocation12 + $0x3d8] sm:$0xf]
    %v2933 = vld [vmem:[#allocation12 + $0x3dc] sm:$0xff]
    %v2934 = vld [vmem:[#allocation12 + $0x3e4] sm:$0xff]
    %v2935 = vld [vmem:[#allocation12 + $0x3ec] sm:$0xff]
    %v2936 = vld [vmem:[#allocation12 + $0x3f4] sm:$0xff]
    %v2937 = vld [vmem:[#allocation12 + $0x3fc] sm:$0xff]
    %v2938 = vld [vmem:[#allocation12 + $0x404] sm:$0xff]
    %v2939 = vld [vmem:[#allocation12 + $0x40c] sm:$0xff]
    %v2940 = vld [vmem:[#allocation12 + $0x414] sm:$0xff]
    %v2941 = vld [vmem:[#allocation12 + $0x41c] sm:$0xff]
    %v2942 = vld [vmem:[#allocation12 + $0x424] sm:$0xf]
    %v2943 = vld [vmem:[#allocation12 + $0x428] sm:$0xff]
    %v2944 = vld [vmem:[#allocation12 + $0x430] sm:$0xff]
    %v2945 = vld [vmem:[#allocation12 + $0x438] sm:$0xff]
    %v2946 = vld [vmem:[#allocation12 + $0x440] sm:$0xff]
    %v2947 = vld [vmem:[#allocation12 + $0x448] sm:$0xff]
    %v2948 = vld [vmem:[#allocation12 + $0x450] sm:$0xff]
    %v2949 = vld [vmem:[#allocation12 + $0x458] sm:$0xff]
    %v2950 = vld [vmem:[#allocation12 + $0x460] sm:$0xff]
    %v2951 = vld [vmem:[#allocation12 + $0x468] sm:$0xff]
    %v2952 = vld [vmem:[#allocation12 + $0x470] sm:$0xf]
    %v2953 = vld [vmem:[#allocation12 + $0x474] sm:$0xff]
    %v2954 = vld [vmem:[#allocation12 + $0x47c] sm:$0xff]
    %v2955 = vld [vmem:[#allocation12 + $0x484] sm:$0xff]
    %v2956 = vld [vmem:[#allocation12 + $0x48c] sm:$0xff]
    %v2957 = vld [vmem:[#allocation12 + $0x494] sm:$0xff]
    %v2958 = vld [vmem:[#allocation12 + $0x49c] sm:$0xff]
    %v2959 = vld [vmem:[#allocation12 + $0x4a4] sm:$0xff]
    %v2960 = vld [vmem:[#allocation12 + $0x4ac] sm:$0xff]
    %v2961 = vld [vmem:[#allocation12 + $0x4b4] sm:$0xff]
    %v2962 = vld [vmem:[#allocation12 + $0x4bc] sm:$0xf]
    %v2963 = vld [vmem:[#allocation12 + $0x4c0] sm:$0xff]
    %v2964 = vld [vmem:[#allocation12 + $0x4c8] sm:$0xff]
    %v2965 = vld [vmem:[#allocation12 + $0x4d0] sm:$0xff]
    %v2966 = vld [vmem:[#allocation12 + $0x4d8] sm:$0xff]
    %v2967 = vld [vmem:[#allocation12 + $0x4e0] sm:$0xff]
    %v2968 = vld [vmem:[#allocation12 + $0x4e8] sm:$0xff]
    %v2969 = vld [vmem:[#allocation12 + $0x4f0] sm:$0xff]
    %v2970 = vld [vmem:[#allocation12 + $0x4f8] sm:$0xff]
    %v2971 = vld [vmem:[#allocation12 + $0x500] sm:$0xff]
    %v2972 = vld [vmem:[#allocation12 + $0x508] sm:$0xf]
    %v2973 = vld [vmem:[#allocation12 + $0x50c] sm:$0xff]
    %v2974 = vld [vmem:[#allocation12 + $0x514] sm:$0xff]
    %v2975 = vld [vmem:[#allocation12 + $0x51c] sm:$0xff]
    %v2976 = vld [vmem:[#allocation12 + $0x524] sm:$0xff]
    %v2977 = vld [vmem:[#allocation12 + $0x52c] sm:$0xff]
    %v2978 = vld [vmem:[#allocation12 + $0x534] sm:$0xff]
    %v2979 = vld [vmem:[#allocation12 + $0x53c] sm:$0xff]
    %v2980 = vld [vmem:[#allocation12 + $0x544] sm:$0xff]
    %v2981 = vld [vmem:[#allocation12 + $0x54c] sm:$0xff]
    %v2982 = vld [vmem:[#allocation12 + $0x554] sm:$0xf]
    %v2983 = vld [vmem:[#allocation12 + $0x558] sm:$0xff]
    %v2984 = vld [vmem:[#allocation12 + $0x560] sm:$0xff]
    %v2985 = vld [vmem:[#allocation12 + $0x568] sm:$0xff]
    %v2986 = vld [vmem:[#allocation12 + $0x570] sm:$0xff]
    %v2987 = vld [vmem:[#allocation12 + $0x578] sm:$0xff]
    %v2988 = vld [vmem:[#allocation12 + $0x580] sm:$0xff]
    %v2989 = vld [vmem:[#allocation12 + $0x588] sm:$0xff]
    %v2990 = vld [vmem:[#allocation12 + $0x590] sm:$0xff]
    %v2991 = vld [vmem:[#allocation12 + $0x598] sm:$0xff]
    %v2992 = vld [vmem:[#allocation12 + $0x5a0] sm:$0xf]
    %v2993 = vld [vmem:[#allocation12 + $0x5a4] sm:$0xff]
    %v2994 = vld [vmem:[#allocation12 + $0x5ac] sm:$0xff]
    %v2995 = vld [vmem:[#allocation12 + $0x5b4] sm:$0xff]
    %v2996 = vld [vmem:[#allocation12 + $0x5bc] sm:$0xff]
    %v2997 = vld [vmem:[#allocation12 + $0x5c4] sm:$0xff]
    %v2998 = vld [vmem:[#allocation12 + $0x5cc] sm:$0xff]
    %v2999 = vld [vmem:[#allocation12 + $0x5d4] sm:$0xff]
    %v3000 = vld [vmem:[#allocation12 + $0x5dc] sm:$0xff]
    %v3001 = vld [vmem:[#allocation12 + $0x5e4] sm:$0xff]
    %v3002 = vld [vmem:[#allocation12 + $0x5ec] sm:$0xf]
    %v3003 = vld [vmem:[#allocation12 + $0x5f0] sm:$0xff]
    %v3004 = vld [vmem:[#allocation12 + $0x5f8] sm:$0xff]
    %v3005 = vld [vmem:[#allocation12 + $0x600] sm:$0xff]
    %v3006 = vld [vmem:[#allocation12 + $0x608] sm:$0xff]
    %v3007 = vld [vmem:[#allocation12 + $0x610] sm:$0xff]
    %v3008 = vld [vmem:[#allocation12 + $0x618] sm:$0xff]
    %v3009 = vld [vmem:[#allocation12 + $0x620] sm:$0xff]
    %v3010 = vld [vmem:[#allocation12 + $0x628] sm:$0xff]
    %v3011 = vld [vmem:[#allocation12 + $0x630] sm:$0xff]
    %v3012 = vld [vmem:[#allocation12 + $0x638] sm:$0xf]
    %v3013 = vld [vmem:[#allocation12 + $0x63c] sm:$0xff]
    %v3014 = vld [vmem:[#allocation12 + $0x644] sm:$0xff]
    %v3015 = vld [vmem:[#allocation12 + $0x64c] sm:$0xff]
    %v3016 = vld [vmem:[#allocation12 + $0x654] sm:$0xff]
    %v3017 = vld [vmem:[#allocation12 + $0x65c] sm:$0xff]
    %v3018 = vld [vmem:[#allocation12 + $0x664] sm:$0xff]
    %v3019 = vld [vmem:[#allocation12 + $0x66c] sm:$0xff]
    %v3020 = vld [vmem:[#allocation12 + $0x674] sm:$0xff]
    %v3021 = vld [vmem:[#allocation12 + $0x67c] sm:$0xff]
    %v3022 = vld [vmem:[#allocation12 + $0x684] sm:$0xf]
    %v3023 = vld [vmem:[#allocation12 + $0x688] sm:$0xff]
    %v3024 = vld [vmem:[#allocation12 + $0x690] sm:$0xff]
    %v3025 = vld [vmem:[#allocation12 + $0x698] sm:$0xff]
    %v3026 = vld [vmem:[#allocation12 + $0x6a0] sm:$0xff]
    %v3027 = vld [vmem:[#allocation12 + $0x6a8] sm:$0xff]
    %v3028 = vld [vmem:[#allocation12 + $0x6b0] sm:$0xff]
    %v3029 = vld [vmem:[#allocation12 + $0x6b8] sm:$0xff]
    %v3030 = vld [vmem:[#allocation12 + $0x6c0] sm:$0xff]
    %v3031 = vld [vmem:[#allocation12 + $0x6c8] sm:$0xff]
    %v3032 = vld [vmem:[#allocation12 + $0x6d0] sm:$0xf]
    %v3033 = vld [vmem:[#allocation12 + $0x6d4] sm:$0xff]
    %v3034 = vld [vmem:[#allocation12 + $0x6dc] sm:$0xff]
    %v3035 = vld [vmem:[#allocation12 + $0x6e4] sm:$0xff]
    %v3036 = vld [vmem:[#allocation12 + $0x6ec] sm:$0xff]
    %v3037 = vld [vmem:[#allocation12 + $0x6f4] sm:$0xff]
    %v3038 = vld [vmem:[#allocation12 + $0x6fc] sm:$0xff]
    %v3039 = vld [vmem:[#allocation12 + $0x704] sm:$0xff]
    %v3040 = vld [vmem:[#allocation12 + $0x70c] sm:$0xff]
    %v3041 = vld [vmem:[#allocation12 + $0x714] sm:$0xff]
    %v3042 = vld [vmem:[#allocation12 + $0x71c] sm:$0xf]
    %v3043 = vld [vmem:[#allocation12 + $0x720] sm:$0xff]
    %v3044 = vld [vmem:[#allocation12 + $0x728] sm:$0xff]
    %v3045 = vld [vmem:[#allocation12 + $0x730] sm:$0xff]
    %v3046 = vld [vmem:[#allocation12 + $0x738] sm:$0xff]
    %v3047 = vld [vmem:[#allocation12 + $0x740] sm:$0xff]
    %v3048 = vld [vmem:[#allocation12 + $0x748] sm:$0xff]
    %v3049 = vld [vmem:[#allocation12 + $0x750] sm:$0xff]
    %v3050 = vld [vmem:[#allocation12 + $0x758] sm:$0xff]
    %v3051 = vld [vmem:[#allocation12 + $0x760] sm:$0xff]
    %v3052 = vld [vmem:[#allocation12 + $0x768] sm:$0xf]
    %v3053 = vld [vmem:[#allocation12 + $0x76c] sm:$0xff]
    %v3054 = vld [vmem:[#allocation12 + $0x774] sm:$0xff]
    %v3055 = vld [vmem:[#allocation12 + $0x77c] sm:$0xff]
    %v3056 = vld [vmem:[#allocation12 + $0x784] sm:$0xff]
    %v3057 = vld [vmem:[#allocation12 + $0x78c] sm:$0xff]
    %v3058 = vld [vmem:[#allocation12 + $0x794] sm:$0xff]
    %v3059 = vld [vmem:[#allocation12 + $0x79c] sm:$0xff]
    %v3060 = vld [vmem:[#allocation12 + $0x7a4] sm:$0xff]
    %v3061 = vld [vmem:[#allocation12 + $0x7ac] sm:$0xff]
    %v3062 = vld [vmem:[#allocation12 + $0x7b4] sm:$0xf]
    %v3063 = vld [vmem:[#allocation12 + $0x7b8] sm:$0xff]
    %v3064 = vld [vmem:[#allocation12 + $0x7c0] sm:$0xff]
    %v3065 = vld [vmem:[#allocation12 + $0x7c8] sm:$0xff]
    %v3066 = vld [vmem:[#allocation12 + $0x7d0] sm:$0xff]
    %v3067 = vld [vmem:[#allocation12 + $0x7d8] sm:$0xff]
    %v3068 = vld [vmem:[#allocation12 + $0x7e0] sm:$0xff]
    %v3069 = vld [vmem:[#allocation12 + $0x7e8] sm:$0xff]
    %v3070 = vld [vmem:[#allocation12 + $0x7f0] sm:$0xff]
    %v3071 = vld [vmem:[#allocation12 + $0x7f8] sm:$0xff]
    %v3072 = vld [vmem:[#allocation12 + $0x800] sm:$0xf]
    %v3073 = vld [vmem:[#allocation12 + $0x804] sm:$0xff]
    %v3074 = vld [vmem:[#allocation12 + $0x80c] sm:$0xff]
    %v3075 = vld [vmem:[#allocation12 + $0x814] sm:$0xff]
    %v3076 = vld [vmem:[#allocation12 + $0x81c] sm:$0xff]
    %v3077 = vld [vmem:[#allocation12 + $0x824] sm:$0xff]
    %v3078 = vld [vmem:[#allocation12 + $0x82c] sm:$0xff]
    %v3079 = vld [vmem:[#allocation12 + $0x834] sm:$0xff]
    %v3080 = vld [vmem:[#allocation12 + $0x83c] sm:$0xff]
    %v3081 = vld [vmem:[#allocation12 + $0x844] sm:$0xff]
    %v3082 = vld [vmem:[#allocation12 + $0x84c] sm:$0xf]
    %v3083 = vld [vmem:[#allocation12 + $0x850] sm:$0xff]
    %v3084 = vld [vmem:[#allocation12 + $0x858] sm:$0xff]
    %v3085 = vld [vmem:[#allocation12 + $0x860] sm:$0xff]
    %v3086 = vld [vmem:[#allocation12 + $0x868] sm:$0xff]
    %v3087 = vld [vmem:[#allocation12 + $0x870] sm:$0xff]
    %v3088 = vld [vmem:[#allocation12 + $0x878] sm:$0xff]
    %v3089 = vld [vmem:[#allocation12 + $0x880] sm:$0xff]
    %v3090 = vld [vmem:[#allocation12 + $0x888] sm:$0xff]
    %v3091 = vld [vmem:[#allocation12 + $0x890] sm:$0xff]
    %v3092 = vld [vmem:[#allocation12 + $0x898] sm:$0xf]
    %v3093 = vld [vmem:[#allocation12 + $0x89c] sm:$0xff]
    %v3094 = vld [vmem:[#allocation12 + $0x8a4] sm:$0xff]
    %v3095 = vld [vmem:[#allocation12 + $0x8ac] sm:$0xff]
    %v3096 = vld [vmem:[#allocation12 + $0x8b4] sm:$0xff]
    %v3097 = vld [vmem:[#allocation12 + $0x8bc] sm:$0xff]
    %v3098 = vld [vmem:[#allocation12 + $0x8c4] sm:$0xff]
    %v3099 = vld [vmem:[#allocation12 + $0x8cc] sm:$0xff]
    %v3100 = vld [vmem:[#allocation12 + $0x8d4] sm:$0xff]
    %v3101 = vld [vmem:[#allocation12 + $0x8dc] sm:$0xff]
    %v3102 = vld [vmem:[#allocation12 + $0x8e4] sm:$0xf]
    %v3103 = vld [vmem:[#allocation12 + $0x8e8] sm:$0xff]
    %v3104 = vld [vmem:[#allocation12 + $0x8f0] sm:$0xff]
    %v3105 = vld [vmem:[#allocation12 + $0x8f8] sm:$0xff]
    %v3106 = vld [vmem:[#allocation12 + $0x900] sm:$0xff]
    %v3107 = vld [vmem:[#allocation12 + $0x908] sm:$0xff]
    %v3108 = vld [vmem:[#allocation12 + $0x910] sm:$0xff]
    %v3109 = vld [vmem:[#allocation12 + $0x918] sm:$0xff]
    %v3110 = vld [vmem:[#allocation12 + $0x920] sm:$0xff]
    %v3111 = vld [vmem:[#allocation12 + $0x928] sm:$0xff]
    %v3112 = vld [vmem:[#allocation12 + $0x930] sm:$0xf]
    %v3113 = vld [vmem:[#allocation12 + $0x934] sm:$0xff]
    %v3114 = vld [vmem:[#allocation12 + $0x93c] sm:$0xff]
    %v3115 = vld [vmem:[#allocation12 + $0x944] sm:$0xff]
    %v3116 = vld [vmem:[#allocation12 + $0x94c] sm:$0xff]
    %v3117 = vld [vmem:[#allocation12 + $0x954] sm:$0xff]
    %v3118 = vld [vmem:[#allocation12 + $0x95c] sm:$0xff]
    %v3119 = vld [vmem:[#allocation12 + $0x964] sm:$0xff]
    %v3120 = vld [vmem:[#allocation12 + $0x96c] sm:$0xff]
    %v3121 = vld [vmem:[#allocation12 + $0x974] sm:$0xff]
    %v3122 = vld [vmem:[#allocation12 + $0x97c] sm:$0xf]
    %v3123 = vld [vmem:[#allocation12 + $0x980] sm:$0xff]
    %v3124 = vld [vmem:[#allocation12 + $0x988] sm:$0xff]
    %v3125 = vld [vmem:[#allocation12 + $0x990] sm:$0xff]
    %v3126 = vld [vmem:[#allocation12 + $0x998] sm:$0xff]
    %v3127 = vld [vmem:[#allocation12 + $0x9a0] sm:$0xff]
    %v3128 = vld [vmem:[#allocation12 + $0x9a8] sm:$0xff]
    %v3129 = vld [vmem:[#allocation12 + $0x9b0] sm:$0xff]
    %v3130 = vld [vmem:[#allocation12 + $0x9b8] sm:$0xff]
    %v3131 = vld [vmem:[#allocation12 + $0x9c0] sm:$0xff]
    %v3132 = vld [vmem:[#allocation12 + $0x9c8] sm:$0xf]
    %v3133 = vld [vmem:[#allocation12 + $0x9cc] sm:$0xff]
    %v3134 = vld [vmem:[#allocation12 + $0x9d4] sm:$0xff]
    %v3135 = vld [vmem:[#allocation12 + $0x9dc] sm:$0xff]
    %v3136 = vld [vmem:[#allocation12 + $0x9e4] sm:$0xff]
    %v3137 = vld [vmem:[#allocation12 + $0x9ec] sm:$0xff]
    %v3138 = vld [vmem:[#allocation12 + $0x9f4] sm:$0xff]
    %v3139 = vld [vmem:[#allocation12 + $0x9fc] sm:$0xff]
    %v3140 = vld [vmem:[#allocation12 + $0xa04] sm:$0xff]
    %v3141 = vld [vmem:[#allocation12 + $0xa0c] sm:$0xff]
    %v3142 = vld [vmem:[#allocation12 + $0xa14] sm:$0xf]
    %v3143 = vld [vmem:[#allocation12 + $0xa18] sm:$0xff]
    %v3144 = vld [vmem:[#allocation12 + $0xa20] sm:$0xff]
    %v3145 = vld [vmem:[#allocation12 + $0xa28] sm:$0xff]
    %v3146 = vld [vmem:[#allocation12 + $0xa30] sm:$0xff]
    %v3147 = vld [vmem:[#allocation12 + $0xa38] sm:$0xff]
    %v3148 = vld [vmem:[#allocation12 + $0xa40] sm:$0xff]
    %v3149 = vld [vmem:[#allocation12 + $0xa48] sm:$0xff]
    %v3150 = vld [vmem:[#allocation12 + $0xa50] sm:$0xff]
    %v3151 = vld [vmem:[#allocation12 + $0xa58] sm:$0xff]
    %v3152 = vld [vmem:[#allocation12 + $0xa60] sm:$0xf]
    %v3153 = vld [vmem:[#allocation12 + $0xa64] sm:$0xff]
    %v3154 = vld [vmem:[#allocation12 + $0xa6c] sm:$0xff]
    %v3155 = vld [vmem:[#allocation12 + $0xa74] sm:$0xff]
    %v3156 = vld [vmem:[#allocation12 + $0xa7c] sm:$0xff]
    %v3157 = vld [vmem:[#allocation12 + $0xa84] sm:$0xff]
    %v3158 = vld [vmem:[#allocation12 + $0xa8c] sm:$0xff]
    %v3159 = vld [vmem:[#allocation12 + $0xa94] sm:$0xff]
    %v3160 = vld [vmem:[#allocation12 + $0xa9c] sm:$0xff]
    %v3161 = vld [vmem:[#allocation12 + $0xaa4] sm:$0xff]
    %v3162 = vld [vmem:[#allocation12 + $0xaac] sm:$0xf]
    %v3163 = vld [vmem:[#allocation12 + $0xab0] sm:$0xff]
    %v3164 = vld [vmem:[#allocation12 + $0xab8] sm:$0xff]
    %v3165 = vld [vmem:[#allocation12 + $0xac0] sm:$0xff]
    %v3166 = vld [vmem:[#allocation12 + $0xac8] sm:$0xff]
    %v3167 = vld [vmem:[#allocation12 + $0xad0] sm:$0xff]
    %v3168 = vld [vmem:[#allocation12 + $0xad8] sm:$0xff]
    %v3169 = vld [vmem:[#allocation12 + $0xae0] sm:$0xff]
    %v3170 = vld [vmem:[#allocation12 + $0xae8] sm:$0xff]
    %v3171 = vld [vmem:[#allocation12 + $0xaf0] sm:$0xff]
    %v3172 = vld [vmem:[#allocation12 + $0xaf8] sm:$0xf]
    %v3173 = vld [vmem:[#allocation12 + $0xafc] sm:$0xff]
    %v3174 = vld [vmem:[#allocation12 + $0xb04] sm:$0xff]
    %v3175 = vld [vmem:[#allocation12 + $0xb0c] sm:$0xff]
    %v3176 = vld [vmem:[#allocation12 + $0xb14] sm:$0xff]
    %v3177 = vld [vmem:[#allocation12 + $0xb1c] sm:$0xff]
    %v3178 = vld [vmem:[#allocation12 + $0xb24] sm:$0xff]
    %v3179 = vld [vmem:[#allocation12 + $0xb2c] sm:$0xff]
    %v3180 = vld [vmem:[#allocation12 + $0xb34] sm:$0xff]
    %v3181 = vld [vmem:[#allocation12 + $0xb3c] sm:$0xff]
    %v3182 = vld [vmem:[#allocation12 + $0xb44] sm:$0xf]
    %v3183 = vld [vmem:[#allocation12 + $0xb48] sm:$0xff]
    %v3184 = vld [vmem:[#allocation12 + $0xb50] sm:$0xff]
    %v3185 = vld [vmem:[#allocation12 + $0xb58] sm:$0xff]
    %v3186 = vld [vmem:[#allocation12 + $0xb60] sm:$0xff]
    %v3187 = vld [vmem:[#allocation12 + $0xb68] sm:$0xff]
    %v3188 = vld [vmem:[#allocation12 + $0xb70] sm:$0xff]
    %v3189 = vld [vmem:[#allocation12 + $0xb78] sm:$0xff]
    %v3190 = vld [vmem:[#allocation12 + $0xb80] sm:$0xff]
    %v3191 = vld [vmem:[#allocation12 + $0xb88] sm:$0xff]
    %v3192 = vld [vmem:[#allocation12 + $0xb90] sm:$0xf]
    %v3193 = vld [vmem:[#allocation12 + $0xb94] sm:$0xff]
    %v3194 = vld [vmem:[#allocation12 + $0xb9c] sm:$0xff]
    %v3195 = vld [vmem:[#allocation12 + $0xba4] sm:$0xff]
    %v3196 = vld [vmem:[#allocation12 + $0xbac] sm:$0xff]
    %v3197 = vld [vmem:[#allocation12 + $0xbb4] sm:$0xff]
    %v3198 = vld [vmem:[#allocation12 + $0xbbc] sm:$0xff]
    %v3199 = vld [vmem:[#allocation12 + $0xbc4] sm:$0xff]
    %v3200 = vld [vmem:[#allocation12 + $0xbcc] sm:$0xff]
    %v3201 = vld [vmem:[#allocation12 + $0xbd4] sm:$0xff]
    %v3202 = vld [vmem:[#allocation12 + $0xbdc] sm:$0xf]
    %v3203 = vld [vmem:[#allocation12 + $0xbe0] sm:$0xff]
    %v3204 = vld [vmem:[#allocation12 + $0xbe8] sm:$0xff]
    %v3205 = vld [vmem:[#allocation12 + $0xbf0] sm:$0xff]
    %v3206 = vld [vmem:[#allocation12 + $0xbf8] sm:$0xff]
    %v3207 = vld [vmem:[#allocation12 + $0xc00] sm:$0xff]
    %v3208 = vld [vmem:[#allocation12 + $0xc08] sm:$0xff]
    %v3209 = vld [vmem:[#allocation12 + $0xc10] sm:$0xff]
    %v3210 = vld [vmem:[#allocation12 + $0xc18] sm:$0xff]
    %v3211 = vld [vmem:[#allocation12 + $0xc20] sm:$0xff]
    %v3212 = vld [vmem:[#allocation12 + $0xc28] sm:$0xf]
    %v3213 = vld [vmem:[#allocation12 + $0xc2c] sm:$0xff]
    %v3214 = vld [vmem:[#allocation12 + $0xc34] sm:$0xff]
    %v3215 = vld [vmem:[#allocation12 + $0xc3c] sm:$0xff]
    %v3216 = vld [vmem:[#allocation12 + $0xc44] sm:$0xff]
    %v3217 = vld [vmem:[#allocation12 + $0xc4c] sm:$0xff]
    %v3218 = vld [vmem:[#allocation12 + $0xc54] sm:$0xff]
    %v3219 = vld [vmem:[#allocation12 + $0xc5c] sm:$0xff]
    %v3220 = vld [vmem:[#allocation12 + $0xc64] sm:$0xff]
    %v3221 = vld [vmem:[#allocation12 + $0xc6c] sm:$0xff]
    %v3222 = vld [vmem:[#allocation12 + $0xc74] sm:$0xf]
    %v3223 = vld [vmem:[#allocation12 + $0xc78] sm:$0xff]
    %v3224 = vld [vmem:[#allocation12 + $0xc80] sm:$0xff]
    %v3225 = vld [vmem:[#allocation12 + $0xc88] sm:$0xff]
    %v3226 = vld [vmem:[#allocation12 + $0xc90] sm:$0xff]
    %v3227 = vld [vmem:[#allocation12 + $0xc98] sm:$0xff]
    %v3228 = vld [vmem:[#allocation12 + $0xca0] sm:$0xff]
    %v3229 = vld [vmem:[#allocation12 + $0xca8] sm:$0xff]
    %v3230 = vld [vmem:[#allocation12 + $0xcb0] sm:$0xff]
    %v3231 = vld [vmem:[#allocation12 + $0xcb8] sm:$0xff]
    %v3232 = vld [vmem:[#allocation12 + $0xcc0] sm:$0xf]
    %v3233 = vld [vmem:[#allocation12 + $0xcc4] sm:$0xff]
    %v3234 = vld [vmem:[#allocation12 + $0xccc] sm:$0xff]
    %v3235 = vld [vmem:[#allocation12 + $0xcd4] sm:$0xff]
    %v3236 = vld [vmem:[#allocation12 + $0xcdc] sm:$0xff]
    %v3237 = vld [vmem:[#allocation12 + $0xce4] sm:$0xff]
    %v3238 = vld [vmem:[#allocation12 + $0xcec] sm:$0xff]
    %v3239 = vld [vmem:[#allocation12 + $0xcf4] sm:$0xff]
    %v3240 = vld [vmem:[#allocation12 + $0xcfc] sm:$0xff]
    %v3241 = vld [vmem:[#allocation12 + $0xd04] sm:$0xff]
    %v3242 = vld [vmem:[#allocation12 + $0xd0c] sm:$0xf]
    %v3243 = vld [vmem:[#allocation12 + $0xd10] sm:$0xff]
    %v3244 = vld [vmem:[#allocation12 + $0xd18] sm:$0xff]
    %v3245 = vld [vmem:[#allocation12 + $0xd20] sm:$0xff]
    %v3246 = vld [vmem:[#allocation12 + $0xd28] sm:$0xff]
    %v3247 = vld [vmem:[#allocation12 + $0xd30] sm:$0xff]
    %v3248 = vld [vmem:[#allocation12 + $0xd38] sm:$0xff]
    %v3249 = vld [vmem:[#allocation12 + $0xd40] sm:$0xff]
    %v3250 = vld [vmem:[#allocation12 + $0xd48] sm:$0xff]
    %v3251 = vld [vmem:[#allocation12 + $0xd50] sm:$0xff]
    %v3252 = vld [vmem:[#allocation12 + $0xd58] sm:$0xf]
    %v3253 = vld [vmem:[#allocation12 + $0xd5c] sm:$0xff]
    %v3254 = vld [vmem:[#allocation12 + $0xd64] sm:$0xff]
    %v3255 = vld [vmem:[#allocation12 + $0xd6c] sm:$0xff]
    %v3256 = vld [vmem:[#allocation12 + $0xd74] sm:$0xff]
    %v3257 = vld [vmem:[#allocation12 + $0xd7c] sm:$0xff]
    %v3258 = vld [vmem:[#allocation12 + $0xd84] sm:$0xff]
    %v3259 = vld [vmem:[#allocation12 + $0xd8c] sm:$0xff]
    %v3260 = vld [vmem:[#allocation12 + $0xd94] sm:$0xff]
    %v3261 = vld [vmem:[#allocation12 + $0xd9c] sm:$0xff]
    %v3262 = vld [vmem:[#allocation12 + $0xda4] sm:$0xf]
    %v3263 = vld [vmem:[#allocation12 + $0xda8] sm:$0xff]
    %v3264 = vld [vmem:[#allocation12 + $0xdb0] sm:$0xff]
    %v3265 = vld [vmem:[#allocation12 + $0xdb8] sm:$0xff]
    %v3266 = vld [vmem:[#allocation12 + $0xdc0] sm:$0xff]
    %v3267 = vld [vmem:[#allocation12 + $0xdc8] sm:$0xff]
    %v3268 = vld [vmem:[#allocation12 + $0xdd0] sm:$0xff]
    %v3269 = vld [vmem:[#allocation12 + $0xdd8] sm:$0xff]
    %v3270 = vld [vmem:[#allocation12 + $0xde0] sm:$0xff]
    %v3271 = vld [vmem:[#allocation12 + $0xde8] sm:$0xff]
    %v3272 = vld [vmem:[#allocation12 + $0xdf0] sm:$0xf]
    %v3273 = vld [vmem:[#allocation12 + $0xdf4] sm:$0xff]
    %v3274 = vld [vmem:[#allocation12 + $0xdfc] sm:$0xff]
    %v3275 = vld [vmem:[#allocation12 + $0xe04] sm:$0xff]
    %v3276 = vld [vmem:[#allocation12 + $0xe0c] sm:$0xff]
    %v3277 = vld [vmem:[#allocation12 + $0xe14] sm:$0xff]
    %v3278 = vld [vmem:[#allocation12 + $0xe1c] sm:$0xff]
    %v3279 = vld [vmem:[#allocation12 + $0xe24] sm:$0xff]
    %v3280 = vld [vmem:[#allocation12 + $0xe2c] sm:$0xff]
    %v3281 = vld [vmem:[#allocation12 + $0xe34] sm:$0xff]
    %v3282 = vld [vmem:[#allocation12 + $0xe3c] sm:$0xf]
    %v3283 = vld [vmem:[#allocation12 + $0xe40] sm:$0xff]
    %v3284 = vld [vmem:[#allocation12 + $0xe48] sm:$0xff]
    %v3285 = vld [vmem:[#allocation12 + $0xe50] sm:$0xff]
    %v3286 = vld [vmem:[#allocation12 + $0xe58] sm:$0xff]
    %v3287 = vld [vmem:[#allocation12 + $0xe60] sm:$0xff]
    %v3288 = vld [vmem:[#allocation12 + $0xe68] sm:$0xff]
    %v3289 = vld [vmem:[#allocation12 + $0xe70] sm:$0xff]
    %v3290 = vld [vmem:[#allocation12 + $0xe78] sm:$0xff]
    %v3291 = vld [vmem:[#allocation12 + $0xe80] sm:$0xff]
    %v3292 = vld [vmem:[#allocation12 + $0xe88] sm:$0xf]
    %v3293 = vld [vmem:[#allocation12 + $0xe8c] sm:$0xff]
    %v3294 = vld [vmem:[#allocation12 + $0xe94] sm:$0xff]
    %v3295 = vld [vmem:[#allocation12 + $0xe9c] sm:$0xff]
    %v3296 = vld [vmem:[#allocation12 + $0xea4] sm:$0xff]
    %v3297 = vld [vmem:[#allocation12 + $0xeac] sm:$0xff]
    %v3298 = vld [vmem:[#allocation12 + $0xeb4] sm:$0xff]
    %v3299 = vld [vmem:[#allocation12 + $0xebc] sm:$0xff]
    %v3300 = vld [vmem:[#allocation12 + $0xec4] sm:$0xff]
    %v3301 = vld [vmem:[#allocation12 + $0xecc] sm:$0xff]
    %v3302 = vld [vmem:[#allocation12 + $0xed4] sm:$0xf]
    %v3303 = vld [vmem:[#allocation12 + $0xed8] sm:$0xff]
    %v3304 = vld [vmem:[#allocation12 + $0xee0] sm:$0xff]
    %v3305 = vld [vmem:[#allocation12 + $0xee8] sm:$0xff]
    %v3306 = vld [vmem:[#allocation12 + $0xef0] sm:$0xff]
    %v3307 = vld [vmem:[#allocation12 + $0xef8] sm:$0xff]
    %v3308 = vld [vmem:[#allocation12 + $0xf00] sm:$0xff]
    %v3309 = vld [vmem:[#allocation12 + $0xf08] sm:$0xff]
    %v3310 = vld [vmem:[#allocation12 + $0xf10] sm:$0xff]
    %v3311 = vld [vmem:[#allocation12 + $0xf18] sm:$0xff]
    %v3312 = vld [vmem:[#allocation12 + $0xf20] sm:$0xf]
    %v3313 = vld [vmem:[#allocation12 + $0xf24] sm:$0xff]
    %v3314 = vld [vmem:[#allocation12 + $0xf2c] sm:$0xff]
    %v3315 = vld [vmem:[#allocation12 + $0xf34] sm:$0xff]
    %v3316 = vld [vmem:[#allocation12 + $0xf3c] sm:$0xff]
    %v3317 = vld [vmem:[#allocation12 + $0xf44] sm:$0xff]
    %v3318 = vld [vmem:[#allocation12 + $0xf4c] sm:$0xff]
    %v3319 = vld [vmem:[#allocation12 + $0xf54] sm:$0xff]
    %v3320 = vld [vmem:[#allocation12 + $0xf5c] sm:$0xff]
    %v3321 = vld [vmem:[#allocation12 + $0xf64] sm:$0xff]
    %v3322 = vld [vmem:[#allocation12 + $0xf6c] sm:$0xf]
    %v3323 = vld [vmem:[#allocation12 + $0xf70] sm:$0xff]
    %v3324 = vld [vmem:[#allocation12 + $0xf78] sm:$0xff]
    %v3325 = vld [vmem:[#allocation12 + $0xf80] sm:$0xff]
    %v3326 = vld [vmem:[#allocation12 + $0xf88] sm:$0xff]
    %v3327 = vld [vmem:[#allocation12 + $0xf90] sm:$0xff]
    %v3328 = vld [vmem:[#allocation12 + $0xf98] sm:$0xff]
    %v3329 = vld [vmem:[#allocation12 + $0xfa0] sm:$0xff]
    %v3330 = vld [vmem:[#allocation12 + $0xfa8] sm:$0xff]
    %v3331 = vld [vmem:[#allocation12 + $0xfb0] sm:$0xff]
    %v3332 = vld [vmem:[#allocation12 + $0xfb8] sm:$0xf]
    %v3333 = vld [vmem:[#allocation12 + $0xfbc] sm:$0xff]
    %v3334 = vld [vmem:[#allocation12 + $0xfc4] sm:$0xff]
    %v3335 = vld [vmem:[#allocation12 + $0xfcc] sm:$0xff]
    %v3336 = vld [vmem:[#allocation12 + $0xfd4] sm:$0xff]
    %v3337 = vld [vmem:[#allocation12 + $0xfdc] sm:$0xff]
    %v3338 = vld [vmem:[#allocation12 + $0xfe4] sm:$0xff]
    %v3339 = vld [vmem:[#allocation12 + $0xfec] sm:$0xff]
    %v3340 = vld [vmem:[#allocation12 + $0xff4] sm:$0xff]
    %v3341 = vld [vmem:[#allocation12 + $0xffc] sm:$0xff]
    %v3342 = vld [vmem:[#allocation12 + $0x1004] sm:$0xf]
    %v3343 = vld [vmem:[#allocation12 + $0x1008] sm:$0xff]
    %v3344 = vld [vmem:[#allocation12 + $0x1010] sm:$0xff]
    %v3345 = vld [vmem:[#allocation12 + $0x1018] sm:$0xff]
    %v3346 = vld [vmem:[#allocation12 + $0x1020] sm:$0xff]
    %v3347 = vld [vmem:[#allocation12 + $0x1028] sm:$0xff]
    %v3348 = vld [vmem:[#allocation12 + $0x1030] sm:$0xff]
    %v3349 = vld [vmem:[#allocation12 + $0x1038] sm:$0xff]
    %v3350 = vld [vmem:[#allocation12 + $0x1040] sm:$0xff]
    %v3351 = vld [vmem:[#allocation12 + $0x1048] sm:$0xff]
    %v3352 = vld [vmem:[#allocation12 + $0x1050] sm:$0xf]
    %v3353 = vld [vmem:[#allocation12 + $0x1054] sm:$0xff]
    %v3354 = vld [vmem:[#allocation12 + $0x105c] sm:$0xff]
    %v3355 = vld [vmem:[#allocation12 + $0x1064] sm:$0xff]
    %v3356 = vld [vmem:[#allocation12 + $0x106c] sm:$0xff]
    %v3357 = vld [vmem:[#allocation12 + $0x1074] sm:$0xff]
    %v3358 = vld [vmem:[#allocation12 + $0x107c] sm:$0xff]
    %v3359 = vld [vmem:[#allocation12 + $0x1084] sm:$0xff]
    %v3360 = vld [vmem:[#allocation12 + $0x108c] sm:$0xff]
    %v3361 = vld [vmem:[#allocation12 + $0x1094] sm:$0xff]
    %v3362 = vld [vmem:[#allocation12 + $0x109c] sm:$0xf]
    %v3363 = vld [vmem:[#allocation12 + $0x10a0] sm:$0xff]
    %v3364 = vld [vmem:[#allocation12 + $0x10a8] sm:$0xff]
    %v3365 = vld [vmem:[#allocation12 + $0x10b0] sm:$0xff]
    %v3366 = vld [vmem:[#allocation12 + $0x10b8] sm:$0xff]
    %v3367 = vld [vmem:[#allocation12 + $0x10c0] sm:$0xff]
    %v3368 = vld [vmem:[#allocation12 + $0x10c8] sm:$0xff]
    %v3369 = vld [vmem:[#allocation12 + $0x10d0] sm:$0xff]
    %v3370 = vld [vmem:[#allocation12 + $0x10d8] sm:$0xff]
    %v3371 = vld [vmem:[#allocation12 + $0x10e0] sm:$0xff]
    %v3372 = vld [vmem:[#allocation12 + $0x10e8] sm:$0xf]
    %v3373 = vld [vmem:[#allocation12 + $0x10ec] sm:$0xff]
    %v3374 = vld [vmem:[#allocation12 + $0x10f4] sm:$0xff]
    %v3375 = vld [vmem:[#allocation12 + $0x10fc] sm:$0xff]
    %v3376 = vld [vmem:[#allocation12 + $0x1104] sm:$0xff]
    %v3377 = vld [vmem:[#allocation12 + $0x110c] sm:$0xff]
    %v3378 = vld [vmem:[#allocation12 + $0x1114] sm:$0xff]
    %v3379 = vld [vmem:[#allocation12 + $0x111c] sm:$0xff]
    %v3380 = vld [vmem:[#allocation12 + $0x1124] sm:$0xff]
    %v3381 = vld [vmem:[#allocation12 + $0x112c] sm:$0xff]
    %v3382 = vld [vmem:[#allocation12 + $0x1134] sm:$0xf]
    %v3383 = vld [vmem:[#allocation12 + $0x1138] sm:$0xff]
    %v3384 = vld [vmem:[#allocation12 + $0x1140] sm:$0xff]
    %v3385 = vld [vmem:[#allocation12 + $0x1148] sm:$0xff]
    %v3386 = vld [vmem:[#allocation12 + $0x1150] sm:$0xff]
    %v3387 = vld [vmem:[#allocation12 + $0x1158] sm:$0xff]
    %v3388 = vld [vmem:[#allocation12 + $0x1160] sm:$0xff]
    %v3389 = vld [vmem:[#allocation12 + $0x1168] sm:$0xff]
    %v3390 = vld [vmem:[#allocation12 + $0x1170] sm:$0xff]
    %v3391 = vld [vmem:[#allocation12 + $0x1178] sm:$0xff]
    %v3392 = vld [vmem:[#allocation12 + $0x1180] sm:$0xf]
    %v3393 = vld [vmem:[#allocation12 + $0x1184] sm:$0xff]
    %v3394 = vld [vmem:[#allocation12 + $0x118c] sm:$0xff]
    %v3395 = vld [vmem:[#allocation12 + $0x1194] sm:$0xff]
    %v3396 = vld [vmem:[#allocation12 + $0x119c] sm:$0xff]
    %v3397 = vld [vmem:[#allocation12 + $0x11a4] sm:$0xff]
    %v3398 = vld [vmem:[#allocation12 + $0x11ac] sm:$0xff]
    %v3399 = vld [vmem:[#allocation12 + $0x11b4] sm:$0xff]
    %v3400 = vld [vmem:[#allocation12 + $0x11bc] sm:$0xff]
    %v3401 = vld [vmem:[#allocation12 + $0x11c4] sm:$0xff]
    %v3402 = vld [vmem:[#allocation12 + $0x11cc] sm:$0xf]
    %v3403 = vld [vmem:[#allocation12 + $0x11d0] sm:$0xff]
    %v3404 = vld [vmem:[#allocation12 + $0x11d8] sm:$0xff]
    %v3405 = vld [vmem:[#allocation12 + $0x11e0] sm:$0xff]
    %v3406 = vld [vmem:[#allocation12 + $0x11e8] sm:$0xff]
    %v3407 = vld [vmem:[#allocation12 + $0x11f0] sm:$0xff]
    %v3408 = vld [vmem:[#allocation12 + $0x11f8] sm:$0xff]
    %v3409 = vld [vmem:[#allocation12 + $0x1200] sm:$0xff]
    %v3410 = vld [vmem:[#allocation12 + $0x1208] sm:$0xff]
    %v3411 = vld [vmem:[#allocation12 + $0x1210] sm:$0xff]
    %v3412 = vld [vmem:[#allocation12 + $0x1218] sm:$0xf]
    %v3413 = vld [vmem:[#allocation12 + $0x121c] sm:$0xff]
    %v3414 = vld [vmem:[#allocation12 + $0x1224] sm:$0xff]
    %v3415 = vld [vmem:[#allocation12 + $0x122c] sm:$0xff]
    %v3416 = vld [vmem:[#allocation12 + $0x1234] sm:$0xff]
    %v3417 = vld [vmem:[#allocation12 + $0x123c] sm:$0xff]
    %v3418 = vld [vmem:[#allocation12 + $0x1244] sm:$0xff]
    %v3419 = vld [vmem:[#allocation12 + $0x124c] sm:$0xff]
    %v3420 = vld [vmem:[#allocation12 + $0x1254] sm:$0xff]
    %v3421 = vld [vmem:[#allocation12 + $0x125c] sm:$0xff]
    %v3422 = vld [vmem:[#allocation12 + $0x1264] sm:$0xf]
    %v3423 = vld [vmem:[#allocation12 + $0x1268] sm:$0xff]
    %v3424 = vld [vmem:[#allocation12 + $0x1270] sm:$0xff]
    %v3425 = vld [vmem:[#allocation12 + $0x1278] sm:$0xff]
    %v3426 = vld [vmem:[#allocation12 + $0x1280] sm:$0xff]
    %v3427 = vld [vmem:[#allocation12 + $0x1288] sm:$0xff]
    %v3428 = vld [vmem:[#allocation12 + $0x1290] sm:$0xff]
    %v3429 = vld [vmem:[#allocation12 + $0x1298] sm:$0xff]
    %v3430 = vld [vmem:[#allocation12 + $0x12a0] sm:$0xff]
    %v3431 = vld [vmem:[#allocation12 + $0x12a8] sm:$0xff]
    %v3432 = vld [vmem:[#allocation12 + $0x12b0] sm:$0xf]
    %v3433 = vld [vmem:[#allocation12 + $0x12b4] sm:$0xff]
    %v3434 = vld [vmem:[#allocation12 + $0x12bc] sm:$0xff]
    %v3435 = vld [vmem:[#allocation12 + $0x12c4] sm:$0xff]
    %v3436 = vld [vmem:[#allocation12 + $0x12cc] sm:$0xff]
    %v3437 = vld [vmem:[#allocation12 + $0x12d4] sm:$0xff]
    %v3438 = vld [vmem:[#allocation12 + $0x12dc] sm:$0xff]
    %v3439 = vld [vmem:[#allocation12 + $0x12e4] sm:$0xff]
    %v3440 = vld [vmem:[#allocation12 + $0x12ec] sm:$0xff]
    %v3441 = vld [vmem:[#allocation12 + $0x12f4] sm:$0xff]
    %v3442 = vld [vmem:[#allocation12 + $0x12fc] sm:$0xf]
    %v3443 = vld [vmem:[#allocation12 + $0x1300] sm:$0xff]
    %v3444 = vld [vmem:[#allocation12 + $0x1308] sm:$0xff]
    %v3445 = vld [vmem:[#allocation12 + $0x1310] sm:$0xff]
    %v3446 = vld [vmem:[#allocation12 + $0x1318] sm:$0xff]
    %v3447 = vld [vmem:[#allocation12 + $0x1320] sm:$0xff]
    %v3448 = vld [vmem:[#allocation12 + $0x1328] sm:$0xff]
    %v3449 = vld [vmem:[#allocation12 + $0x1330] sm:$0xff]
    %v3450 = vld [vmem:[#allocation12 + $0x1338] sm:$0xff]
    %v3451 = vld [vmem:[#allocation12 + $0x1340] sm:$0xff]
    %v3452 = vld [vmem:[#allocation12 + $0x1348] sm:$0xf]
    %v3453 = vld [vmem:[#allocation12 + $0x134c] sm:$0xff]
    %v3454 = vld [vmem:[#allocation12 + $0x1354] sm:$0xff]
    %v3455 = vld [vmem:[#allocation12 + $0x135c] sm:$0xff]
    %v3456 = vld [vmem:[#allocation12 + $0x1364] sm:$0xff]
    %v3457 = vld [vmem:[#allocation12 + $0x136c] sm:$0xff]
    %v3458 = vld [vmem:[#allocation12 + $0x1374] sm:$0xff]
    %v3459 = vld [vmem:[#allocation12 + $0x137c] sm:$0xff]
    %v3460 = vld [vmem:[#allocation12 + $0x1384] sm:$0xff]
    %v3461 = vld [vmem:[#allocation12 + $0x138c] sm:$0xff]
    %v3462 = vld [vmem:[#allocation12 + $0x1394] sm:$0xf]
    %v3463 = vld [vmem:[#allocation12 + $0x1398] sm:$0xff]
    %v3464 = vld [vmem:[#allocation12 + $0x13a0] sm:$0xff]
    %v3465 = vld [vmem:[#allocation12 + $0x13a8] sm:$0xff]
    %v3466 = vld [vmem:[#allocation12 + $0x13b0] sm:$0xff]
    %v3467 = vld [vmem:[#allocation12 + $0x13b8] sm:$0xff]
    %v3468 = vld [vmem:[#allocation12 + $0x13c0] sm:$0xff]
    %v3469 = vld [vmem:[#allocation12 + $0x13c8] sm:$0xff]
    %v3470 = vld [vmem:[#allocation12 + $0x13d0] sm:$0xff]
    %v3471 = vld [vmem:[#allocation12 + $0x13d8] sm:$0xff]
    %v3472 = vld [vmem:[#allocation12 + $0x13e0] sm:$0xf]
    %v3473 = vld [vmem:[#allocation12 + $0x13e4] sm:$0xff]
    %v3474 = vld [vmem:[#allocation12 + $0x13ec] sm:$0xff]
    %v3475 = vld [vmem:[#allocation12 + $0x13f4] sm:$0xff]
    %v3476 = vld [vmem:[#allocation12 + $0x13fc] sm:$0xff]
    %v3477 = vld [vmem:[#allocation12 + $0x1404] sm:$0xff]
    %v3478 = vld [vmem:[#allocation12 + $0x140c] sm:$0xff]
    %v3479 = vld [vmem:[#allocation12 + $0x1414] sm:$0xff]
    %v3480 = vld [vmem:[#allocation12 + $0x141c] sm:$0xff]
    %v3481 = vld [vmem:[#allocation12 + $0x1424] sm:$0xff]
    %v3482 = vld [vmem:[#allocation12 + $0x142c] sm:$0xf]
    %v3483 = vld [vmem:[#allocation12 + $0x1430] sm:$0xff]
    %v3484 = vld [vmem:[#allocation12 + $0x1438] sm:$0xff]
    %v3485 = vld [vmem:[#allocation12 + $0x1440] sm:$0xff]
    %v3486 = vld [vmem:[#allocation12 + $0x1448] sm:$0xff]
    %v3487 = vld [vmem:[#allocation12 + $0x1450] sm:$0xff]
    %v3488 = vld [vmem:[#allocation12 + $0x1458] sm:$0xff]
    %v3489 = vld [vmem:[#allocation12 + $0x1460] sm:$0xff]
    %v3490 = vld [vmem:[#allocation12 + $0x1468] sm:$0xff]
    %v3491 = vld [vmem:[#allocation12 + $0x1470] sm:$0xff]
    %v3492 = vld [vmem:[#allocation12 + $0x1478] sm:$0xf]
    %v3493 = vld [vmem:[#allocation12 + $0x147c] sm:$0xff]
    %v3494 = vld [vmem:[#allocation12 + $0x1484] sm:$0xff]
    %v3495 = vld [vmem:[#allocation12 + $0x148c] sm:$0xff]
    %v3496 = vld [vmem:[#allocation12 + $0x1494] sm:$0xff]
    %v3497 = vld [vmem:[#allocation12 + $0x149c] sm:$0xff]
    %v3498 = vld [vmem:[#allocation12 + $0x14a4] sm:$0xff]
    %v3499 = vld [vmem:[#allocation12 + $0x14ac] sm:$0xff]
    %v3500 = vld [vmem:[#allocation12 + $0x14b4] sm:$0xff]
    %v3501 = vld [vmem:[#allocation12 + $0x14bc] sm:$0xff]
    %v3502 = vld [vmem:[#allocation12 + $0x14c4] sm:$0xf]
    %v3503 = vld [vmem:[#allocation12 + $0x14c8] sm:$0xff]
    %v3504 = vld [vmem:[#allocation12 + $0x14d0] sm:$0xff]
    %v3505 = vld [vmem:[#allocation12 + $0x14d8] sm:$0xff]
    %v3506 = vld [vmem:[#allocation12 + $0x14e0] sm:$0xff]
    %v3507 = vld [vmem:[#allocation12 + $0x14e8] sm:$0xff]
    %v3508 = vld [vmem:[#allocation12 + $0x14f0] sm:$0xff]
    %v3509 = vld [vmem:[#allocation12 + $0x14f8] sm:$0xff]
    %v3510 = vld [vmem:[#allocation12 + $0x1500] sm:$0xff]
    %v3511 = vld [vmem:[#allocation12 + $0x1508] sm:$0xff]
    %v3512 = vld [vmem:[#allocation12 + $0x1510] sm:$0xf]
    %v3513 = vld [vmem:[#allocation12 + $0x1514] sm:$0xff]
    %v3514 = vld [vmem:[#allocation12 + $0x151c] sm:$0xff]
    %v3515 = vld [vmem:[#allocation12 + $0x1524] sm:$0xff]
    %v3516 = vld [vmem:[#allocation12 + $0x152c] sm:$0xff]
    %v3517 = vld [vmem:[#allocation12 + $0x1534] sm:$0xff]
    %v3518 = vld [vmem:[#allocation12 + $0x153c] sm:$0xff]
    %v3519 = vld [vmem:[#allocation12 + $0x1544] sm:$0xff]
    %v3520 = vld [vmem:[#allocation12 + $0x154c] sm:$0xff]
    %v3521 = vld [vmem:[#allocation12 + $0x1554] sm:$0xff]
    %v3522 = vld [vmem:[#allocation12 + $0x155c] sm:$0xf]
    %v3523 = vld [vmem:[#allocation12 + $0x1560] sm:$0xff]
    %v3524 = vld [vmem:[#allocation12 + $0x1568] sm:$0xff]
    %v3525 = vld [vmem:[#allocation12 + $0x1570] sm:$0xff]
    %v3526 = vld [vmem:[#allocation12 + $0x1578] sm:$0xff]
    %v3527 = vld [vmem:[#allocation12 + $0x1580] sm:$0xff]
    %v3528 = vld [vmem:[#allocation12 + $0x1588] sm:$0xff]
    %v3529 = vld [vmem:[#allocation12 + $0x1590] sm:$0xff]
    %v3530 = vld [vmem:[#allocation12 + $0x1598] sm:$0xff]
    %v3531 = vld [vmem:[#allocation12 + $0x15a0] sm:$0xff]
    %v3532 = vld [vmem:[#allocation12 + $0x15a8] sm:$0xf]
    %v3533 = vld [vmem:[#allocation12 + $0x15ac] sm:$0xff]
    %v3534 = vld [vmem:[#allocation12 + $0x15b4] sm:$0xff]
    %v3535 = vld [vmem:[#allocation12 + $0x15bc] sm:$0xff]
    %v3536 = vld [vmem:[#allocation12 + $0x15c4] sm:$0xff]
    %v3537 = vld [vmem:[#allocation12 + $0x15cc] sm:$0xff]
    %v3538 = vld [vmem:[#allocation12 + $0x15d4] sm:$0xff]
    %v3539 = vld [vmem:[#allocation12 + $0x15dc] sm:$0xff]
    %v3540 = vld [vmem:[#allocation12 + $0x15e4] sm:$0xff]
    %v3541 = vld [vmem:[#allocation12 + $0x15ec] sm:$0xff]
    %v3542 = vld [vmem:[#allocation12 + $0x15f4] sm:$0xf]
    %v3543 = vld [vmem:[#allocation12 + $0x15f8] sm:$0xff]
    %v3544 = vld [vmem:[#allocation12 + $0x1600] sm:$0xff]
    %v3545 = vld [vmem:[#allocation12 + $0x1608] sm:$0xff]
    %v3546 = vld [vmem:[#allocation12 + $0x1610] sm:$0xff]
    %v3547 = vld [vmem:[#allocation12 + $0x1618] sm:$0xff]
    %v3548 = vld [vmem:[#allocation12 + $0x1620] sm:$0xff]
    %v3549 = vld [vmem:[#allocation12 + $0x1628] sm:$0xff]
    %v3550 = vld [vmem:[#allocation12 + $0x1630] sm:$0xff]
    %v3551 = vld [vmem:[#allocation12 + $0x1638] sm:$0xff]
    %v3552 = vld [vmem:[#allocation12 + $0x1640] sm:$0xf]
    %v3553 = vld [vmem:[#allocation12 + $0x1644] sm:$0xff]
    %v3554 = vld [vmem:[#allocation12 + $0x164c] sm:$0xff]
    %v3555 = vld [vmem:[#allocation12 + $0x1654] sm:$0xff]
    %v3556 = vld [vmem:[#allocation12 + $0x165c] sm:$0xff]
    %v3557 = vld [vmem:[#allocation12 + $0x1664] sm:$0xff]
    %v3558 = vld [vmem:[#allocation12 + $0x166c] sm:$0xff]
    %v3559 = vld [vmem:[#allocation12 + $0x1674] sm:$0xff]
    %v3560 = vld [vmem:[#allocation12 + $0x167c] sm:$0xff]
    %v3561 = vld [vmem:[#allocation12 + $0x1684] sm:$0xff]
    %v3562 = vld [vmem:[#allocation12 + $0x168c] sm:$0xf]
    %v3563 = vld [vmem:[#allocation12 + $0x1690] sm:$0xff]
    %v3564 = vld [vmem:[#allocation12 + $0x1698] sm:$0xff]
    %v3565 = vld [vmem:[#allocation12 + $0x16a0] sm:$0xff]
    %v3566 = vld [vmem:[#allocation12 + $0x16a8] sm:$0xff]
    %v3567 = vld [vmem:[#allocation12 + $0x16b0] sm:$0xff]
    %v3568 = vld [vmem:[#allocation12 + $0x16b8] sm:$0xff]
    %v3569 = vld [vmem:[#allocation12 + $0x16c0] sm:$0xff]
    %v3570 = vld [vmem:[#allocation12 + $0x16c8] sm:$0xff]
    %v3571 = vld [vmem:[#allocation12 + $0x16d0] sm:$0xff]
    %v3572 = vld [vmem:[#allocation12 + $0x16d8] sm:$0xf]
    %v3573 = vld [vmem:[#allocation12 + $0x16dc] sm:$0xff]
    %v3574 = vld [vmem:[#allocation12 + $0x16e4] sm:$0xff]
    %v3575 = vld [vmem:[#allocation12 + $0x16ec] sm:$0xff]
    %v3576 = vld [vmem:[#allocation12 + $0x16f4] sm:$0xff]
    %v3577 = vld [vmem:[#allocation12 + $0x16fc] sm:$0xff]
    %v3578 = vld [vmem:[#allocation12 + $0x1704] sm:$0xff]
    %v3579 = vld [vmem:[#allocation12 + $0x170c] sm:$0xff]
    %v3580 = vld [vmem:[#allocation12 + $0x1714] sm:$0xff]
    %v3581 = vld [vmem:[#allocation12 + $0x171c] sm:$0xff]
    %v3582 = vld [vmem:[#allocation12 + $0x1724] sm:$0xf]
    %v3583 = vld [vmem:[#allocation12 + $0x1728] sm:$0xff]
    %v3584 = vld [vmem:[#allocation12 + $0x1730] sm:$0xff]
    %v3585 = vld [vmem:[#allocation12 + $0x1738] sm:$0xff]
    %v3586 = vld [vmem:[#allocation12 + $0x1740] sm:$0xff]
    %v3587 = vld [vmem:[#allocation12 + $0x1748] sm:$0xff]
    %v3588 = vld [vmem:[#allocation12 + $0x1750] sm:$0xff]
    %v3589 = vld [vmem:[#allocation12 + $0x1758] sm:$0xff]
    %v3590 = vld [vmem:[#allocation12 + $0x1760] sm:$0xff]
    %v3591 = vld [vmem:[#allocation12 + $0x1768] sm:$0xff]
    %v3592 = vld [vmem:[#allocation12 + $0x1770] sm:$0xf]
    %v3593 = vld [vmem:[#allocation12 + $0x1774] sm:$0xff]
    %v3594 = vld [vmem:[#allocation12 + $0x177c] sm:$0xff]
    %v3595 = vld [vmem:[#allocation12 + $0x1784] sm:$0xff]
    %v3596 = vld [vmem:[#allocation12 + $0x178c] sm:$0xff]
    %v3597 = vld [vmem:[#allocation12 + $0x1794] sm:$0xff]
    %v3598 = vld [vmem:[#allocation12 + $0x179c] sm:$0xff]
    %v3599 = vld [vmem:[#allocation12 + $0x17a4] sm:$0xff]
    %v3600 = vld [vmem:[#allocation12 + $0x17ac] sm:$0xff]
    %v3601 = vld [vmem:[#allocation12 + $0x17b4] sm:$0xff]
    %v3602 = vld [vmem:[#allocation12 + $0x17bc] sm:$0xf]
    %v3603 = vld [vmem:[#allocation12 + $0x17c0] sm:$0xff]
    %v3604 = vld [vmem:[#allocation12 + $0x17c8] sm:$0xff]
    %v3605 = vld [vmem:[#allocation12 + $0x17d0] sm:$0xff]
    %v3606 = vld [vmem:[#allocation12 + $0x17d8] sm:$0xff]
    %v3607 = vld [vmem:[#allocation12 + $0x17e0] sm:$0xff]
    %v3608 = vld [vmem:[#allocation12 + $0x17e8] sm:$0xff]
    %v3609 = vld [vmem:[#allocation12 + $0x17f0] sm:$0xff]
    %v3610 = vld [vmem:[#allocation12 + $0x17f8] sm:$0xff]
    %v3611 = vld [vmem:[#allocation12 + $0x1800] sm:$0xff]
    %v3612 = vld [vmem:[#allocation12 + $0x1808] sm:$0xf]
    %v3613 = vld [vmem:[#allocation12 + $0x180c] sm:$0xff]
    %v3614 = vld [vmem:[#allocation12 + $0x1814] sm:$0xff]
    %v3615 = vld [vmem:[#allocation12 + $0x181c] sm:$0xff]
    %v3616 = vld [vmem:[#allocation12 + $0x1824] sm:$0xff]
    %v3617 = vld [vmem:[#allocation12 + $0x182c] sm:$0xff]
    %v3618 = vld [vmem:[#allocation12 + $0x1834] sm:$0xff]
    %v3619 = vld [vmem:[#allocation12 + $0x183c] sm:$0xff]
    %v3620 = vld [vmem:[#allocation12 + $0x1844] sm:$0xff]
    %v3621 = vld [vmem:[#allocation12 + $0x184c] sm:$0xff]
    %v3622 = vld [vmem:[#allocation12 + $0x1854] sm:$0xf]
    %v3623 = vld [vmem:[#allocation12 + $0x1858] sm:$0xff]
    %v3624 = vld [vmem:[#allocation12 + $0x1860] sm:$0xff]
    %v3625 = vld [vmem:[#allocation12 + $0x1868] sm:$0xff]
    %v3626 = vld [vmem:[#allocation12 + $0x1870] sm:$0xff]
    %v3627 = vld [vmem:[#allocation12 + $0x1878] sm:$0xff]
    %v3628 = vld [vmem:[#allocation12 + $0x1880] sm:$0xff]
    %v3629 = vld [vmem:[#allocation12 + $0x1888] sm:$0xff]
    %v3630 = vld [vmem:[#allocation12 + $0x1890] sm:$0xff]
    %v3631 = vld [vmem:[#allocation12 + $0x1898] sm:$0xff]
    %v3632 = vld [vmem:[#allocation12 + $0x18a0] sm:$0xf]
    %v3633 = vld [vmem:[#allocation12 + $0x18a4] sm:$0xff]
    %v3634 = vld [vmem:[#allocation12 + $0x18ac] sm:$0xff]
    %v3635 = vld [vmem:[#allocation12 + $0x18b4] sm:$0xff]
    %v3636 = vld [vmem:[#allocation12 + $0x18bc] sm:$0xff]
    %v3637 = vld [vmem:[#allocation12 + $0x18c4] sm:$0xff]
    %v3638 = vld [vmem:[#allocation12 + $0x18cc] sm:$0xff]
    %v3639 = vld [vmem:[#allocation12 + $0x18d4] sm:$0xff]
    %v3640 = vld [vmem:[#allocation12 + $0x18dc] sm:$0xff]
    %v3641 = vld [vmem:[#allocation12 + $0x18e4] sm:$0xff]
    %v3642 = vld [vmem:[#allocation12 + $0x18ec] sm:$0xf]
    %v3643 = vld [vmem:[#allocation12 + $0x18f0] sm:$0xff]
    %v3644 = vld [vmem:[#allocation12 + $0x18f8] sm:$0xff]
    %v3645 = vld [vmem:[#allocation12 + $0x1900] sm:$0xff]
    %v3646 = vld [vmem:[#allocation12 + $0x1908] sm:$0xff]
    %v3647 = vld [vmem:[#allocation12 + $0x1910] sm:$0xff]
    %v3648 = vld [vmem:[#allocation12 + $0x1918] sm:$0xff]
    %v3649 = vld [vmem:[#allocation12 + $0x1920] sm:$0xff]
    %v3650 = vld [vmem:[#allocation12 + $0x1928] sm:$0xff]
    %v3651 = vld [vmem:[#allocation12 + $0x1930] sm:$0xff]
    %v3652 = vld [vmem:[#allocation12 + $0x1938] sm:$0xf]
    %v3653 = vld [vmem:[#allocation12 + $0x193c] sm:$0xff]
    %v3654 = vld [vmem:[#allocation12 + $0x1944] sm:$0xff]
    %v3655 = vld [vmem:[#allocation12 + $0x194c] sm:$0xff]
    %v3656 = vld [vmem:[#allocation12 + $0x1954] sm:$0xff]
    %v3657 = vld [vmem:[#allocation12 + $0x195c] sm:$0xff]
    %v3658 = vld [vmem:[#allocation12 + $0x1964] sm:$0xff]
    %v3659 = vld [vmem:[#allocation12 + $0x196c] sm:$0xff]
    %v3660 = vld [vmem:[#allocation12 + $0x1974] sm:$0xff]
    %v3661 = vld [vmem:[#allocation12 + $0x197c] sm:$0xff]
    %v3662 = vld [vmem:[#allocation12 + $0x1984] sm:$0xf]
    %v3663 = vld [vmem:[#allocation12 + $0x1988] sm:$0xff]
    %v3664 = vld [vmem:[#allocation12 + $0x1990] sm:$0xff]
    %v3665 = vld [vmem:[#allocation12 + $0x1998] sm:$0xff]
    %v3666 = vld [vmem:[#allocation12 + $0x19a0] sm:$0xff]
    %v3667 = vld [vmem:[#allocation12 + $0x19a8] sm:$0xff]
    %v3668 = vld [vmem:[#allocation12 + $0x19b0] sm:$0xff]
    %v3669 = vld [vmem:[#allocation12 + $0x19b8] sm:$0xff]
    %v3670 = vld [vmem:[#allocation12 + $0x19c0] sm:$0xff]
    %v3671 = vld [vmem:[#allocation12 + $0x19c8] sm:$0xff]
    %v3672 = vld [vmem:[#allocation12 + $0x19d0] sm:$0xf]
    %v3673 = vld [vmem:[#allocation12 + $0x19d4] sm:$0xff]
    %v3674 = vld [vmem:[#allocation12 + $0x19dc] sm:$0xff]
    %v3675 = vld [vmem:[#allocation12 + $0x19e4] sm:$0xff]
    %v3676 = vld [vmem:[#allocation12 + $0x19ec] sm:$0xff]
    %v3677 = vld [vmem:[#allocation12 + $0x19f4] sm:$0xff]
    %v3678 = vld [vmem:[#allocation12 + $0x19fc] sm:$0xff]
    %v3679 = vld [vmem:[#allocation12 + $0x1a04] sm:$0xff]
    %v3680 = vld [vmem:[#allocation12 + $0x1a0c] sm:$0xff]
    %v3681 = vld [vmem:[#allocation12 + $0x1a14] sm:$0xff]
    %v3682 = vld [vmem:[#allocation12 + $0x1a1c] sm:$0xf]
    %v3683 = vld [vmem:[#allocation12 + $0x1a20] sm:$0xff]
    %v3684 = vld [vmem:[#allocation12 + $0x1a28] sm:$0xff]
    %v3685 = vld [vmem:[#allocation12 + $0x1a30] sm:$0xff]
    %v3686 = vld [vmem:[#allocation12 + $0x1a38] sm:$0xff]
    %v3687 = vld [vmem:[#allocation12 + $0x1a40] sm:$0xff]
    %v3688 = vld [vmem:[#allocation12 + $0x1a48] sm:$0xff]
    %v3689 = vld [vmem:[#allocation12 + $0x1a50] sm:$0xff]
    %v3690 = vld [vmem:[#allocation12 + $0x1a58] sm:$0xff]
    %v3691 = vld [vmem:[#allocation12 + $0x1a60] sm:$0xff]
    %v3692 = vld [vmem:[#allocation12 + $0x1a68] sm:$0xf]
    %v3693 = vld [vmem:[#allocation12 + $0x1a6c] sm:$0xff]
    %v3694 = vld [vmem:[#allocation12 + $0x1a74] sm:$0xff]
    %v3695 = vld [vmem:[#allocation12 + $0x1a7c] sm:$0xff]
    %v3696 = vld [vmem:[#allocation12 + $0x1a84] sm:$0xff]
    %v3697 = vld [vmem:[#allocation12 + $0x1a8c] sm:$0xff]
    %v3698 = vld [vmem:[#allocation12 + $0x1a94] sm:$0xff]
    %v3699 = vld [vmem:[#allocation12 + $0x1a9c] sm:$0xff]
    %v3700 = vld [vmem:[#allocation12 + $0x1aa4] sm:$0xff]
    %v3701 = vld [vmem:[#allocation12 + $0x1aac] sm:$0xff]
    %v3702 = vld [vmem:[#allocation12 + $0x1ab4] sm:$0xf]
    %v3703 = vld [vmem:[#allocation12 + $0x1ab8] sm:$0xff]
    %v3704 = vld [vmem:[#allocation12 + $0x1ac0] sm:$0xff]
    %v3705 = vld [vmem:[#allocation12 + $0x1ac8] sm:$0xff]
    %v3706 = vld [vmem:[#allocation12 + $0x1ad0] sm:$0xff]
    %v3707 = vld [vmem:[#allocation12 + $0x1ad8] sm:$0xff]
    %v3708 = vld [vmem:[#allocation12 + $0x1ae0] sm:$0xff]
    %v3709 = vld [vmem:[#allocation12 + $0x1ae8] sm:$0xff]
    %v3710 = vld [vmem:[#allocation12 + $0x1af0] sm:$0xff]
    %v3711 = vld [vmem:[#allocation12 + $0x1af8] sm:$0xff]
    %v3712 = vld [vmem:[#allocation12 + $0x1b00] sm:$0xf]
    %v3713 = vld [vmem:[#allocation12 + $0x1b04] sm:$0xff]
    %v3714 = vld [vmem:[#allocation12 + $0x1b0c] sm:$0xff]
    %v3715 = vld [vmem:[#allocation12 + $0x1b14] sm:$0xff]
    %v3716 = vld [vmem:[#allocation12 + $0x1b1c] sm:$0xff]
    %v3717 = vld [vmem:[#allocation12 + $0x1b24] sm:$0xff]
    %v3718 = vld [vmem:[#allocation12 + $0x1b2c] sm:$0xff]
    %v3719 = vld [vmem:[#allocation12 + $0x1b34] sm:$0xff]
    %v3720 = vld [vmem:[#allocation12 + $0x1b3c] sm:$0xff]
    %v3721 = vld [vmem:[#allocation12 + $0x1b44] sm:$0xff]
    %v3722 = vld [vmem:[#allocation12 + $0x1b4c] sm:$0xf]
    %v3723 = vld [vmem:[#allocation12 + $0x1b50] sm:$0xff]
    %v3724 = vld [vmem:[#allocation12 + $0x1b58] sm:$0xff]
    %v3725 = vld [vmem:[#allocation12 + $0x1b60] sm:$0xff]
    %v3726 = vld [vmem:[#allocation12 + $0x1b68] sm:$0xff]
    %v3727 = vld [vmem:[#allocation12 + $0x1b70] sm:$0xff]
    %v3728 = vld [vmem:[#allocation12 + $0x1b78] sm:$0xff]
    %v3729 = vld [vmem:[#allocation12 + $0x1b80] sm:$0xff]
    %v3730 = vld [vmem:[#allocation12 + $0x1b88] sm:$0xff]
    %v3731 = vld [vmem:[#allocation12 + $0x1b90] sm:$0xff]
    %v3732 = vld [vmem:[#allocation12 + $0x1b98] sm:$0xf]
    %v3733 = vld [vmem:[#allocation12 + $0x1b9c] sm:$0xff]
    %v3734 = vld [vmem:[#allocation12 + $0x1ba4] sm:$0xff]
    %v3735 = vld [vmem:[#allocation12 + $0x1bac] sm:$0xff]
    %v3736 = vld [vmem:[#allocation12 + $0x1bb4] sm:$0xff]
    %v3737 = vld [vmem:[#allocation12 + $0x1bbc] sm:$0xff]
    %v3738 = vld [vmem:[#allocation12 + $0x1bc4] sm:$0xff]
    %v3739 = vld [vmem:[#allocation12 + $0x1bcc] sm:$0xff]
    %v3740 = vld [vmem:[#allocation12 + $0x1bd4] sm:$0xff]
    %v3741 = vld [vmem:[#allocation12 + $0x1bdc] sm:$0xff]
    %v3742 = vld [vmem:[#allocation12 + $0x1be4] sm:$0xf]
    %v3743 = vld [vmem:[#allocation12 + $0x1be8] sm:$0xff]
    %v3744 = vld [vmem:[#allocation12 + $0x1bf0] sm:$0xff]
    %v3745 = vld [vmem:[#allocation12 + $0x1bf8] sm:$0xff]
    %v3746 = vld [vmem:[#allocation12 + $0x1c00] sm:$0xff]
    %v3747 = vld [vmem:[#allocation12 + $0x1c08] sm:$0xff]
    %v3748 = vld [vmem:[#allocation12 + $0x1c10] sm:$0xff]
    %v3749 = vld [vmem:[#allocation12 + $0x1c18] sm:$0xff]
    %v3750 = vld [vmem:[#allocation12 + $0x1c20] sm:$0xff]
    %v3751 = vld [vmem:[#allocation12 + $0x1c28] sm:$0xff]
    %v3752 = vld [vmem:[#allocation12 + $0x1c30] sm:$0xf]
    %v3753 = vld [vmem:[#allocation12 + $0x1c34] sm:$0xff]
    %v3754 = vld [vmem:[#allocation12 + $0x1c3c] sm:$0xff]
    %v3755 = vld [vmem:[#allocation12 + $0x1c44] sm:$0xff]
    %v3756 = vld [vmem:[#allocation12 + $0x1c4c] sm:$0xff]
    %v3757 = vld [vmem:[#allocation12 + $0x1c54] sm:$0xff]
    %v3758 = vld [vmem:[#allocation12 + $0x1c5c] sm:$0xff]
    %v3759 = vld [vmem:[#allocation12 + $0x1c64] sm:$0xff]
    %v3760 = vld [vmem:[#allocation12 + $0x1c6c] sm:$0xff]
    %v3761 = vld [vmem:[#allocation12 + $0x1c74] sm:$0xff]
    %v3762 = vld [vmem:[#allocation12 + $0x1c7c] sm:$0xf]
    %v3763 = vld [vmem:[#allocation12 + $0x1c80] sm:$0xff]
    %v3764 = vld [vmem:[#allocation12 + $0x1c88] sm:$0xff]
    %v3765 = vld [vmem:[#allocation12 + $0x1c90] sm:$0xff]
    %v3766 = vld [vmem:[#allocation12 + $0x1c98] sm:$0xff]
    %v3767 = vld [vmem:[#allocation12 + $0x1ca0] sm:$0xff]
    %v3768 = vld [vmem:[#allocation12 + $0x1ca8] sm:$0xff]
    %v3769 = vld [vmem:[#allocation12 + $0x1cb0] sm:$0xff]
    %v3770 = vld [vmem:[#allocation12 + $0x1cb8] sm:$0xff]
    %v3771 = vld [vmem:[#allocation12 + $0x1cc0] sm:$0xff]
    %v3772 = vld [vmem:[#allocation12 + $0x1cc8] sm:$0xf]
    %v3773 = vld [vmem:[#allocation12 + $0x1ccc] sm:$0xff]
    %v3774 = vld [vmem:[#allocation12 + $0x1cd4] sm:$0xff]
    %v3775 = vld [vmem:[#allocation12 + $0x1cdc] sm:$0xff]
    %v3776 = vld [vmem:[#allocation12 + $0x1ce4] sm:$0xff]
    %v3777 = vld [vmem:[#allocation12 + $0x1cec] sm:$0xff]
    %v3778 = vld [vmem:[#allocation12 + $0x1cf4] sm:$0xff]
    %v3779 = vld [vmem:[#allocation12 + $0x1cfc] sm:$0xff]
    %v3780 = vld [vmem:[#allocation12 + $0x1d04] sm:$0xff]
    %v3781 = vld [vmem:[#allocation12 + $0x1d0c] sm:$0xff]
    %v3782 = vld [vmem:[#allocation12 + $0x1d14] sm:$0xf]
    %v3783 = vld [vmem:[#allocation12 + $0x1d18] sm:$0xff]
    %v3784 = vld [vmem:[#allocation12 + $0x1d20] sm:$0xff]
    %v3785 = vld [vmem:[#allocation12 + $0x1d28] sm:$0xff]
    %v3786 = vld [vmem:[#allocation12 + $0x1d30] sm:$0xff]
    %v3787 = vld [vmem:[#allocation12 + $0x1d38] sm:$0xff]
    %v3788 = vld [vmem:[#allocation12 + $0x1d40] sm:$0xff]
    %v3789 = vld [vmem:[#allocation12 + $0x1d48] sm:$0xff]
    %v3790 = vld [vmem:[#allocation12 + $0x1d50] sm:$0xff]
    %v3791 = vld [vmem:[#allocation12 + $0x1d58] sm:$0xff]
    %v3792 = vld [vmem:[#allocation12 + $0x1d60] sm:$0xf]
    %v3793 = vld [vmem:[#allocation12 + $0x1d64] sm:$0xff]
    %v3794 = vld [vmem:[#allocation12 + $0x1d6c] sm:$0xff]
    %v3795 = vld [vmem:[#allocation12 + $0x1d74] sm:$0xff]
    %v3796 = vld [vmem:[#allocation12 + $0x1d7c] sm:$0xff]
    %v3797 = vld [vmem:[#allocation12 + $0x1d84] sm:$0xff]
    %v3798 = vld [vmem:[#allocation12 + $0x1d8c] sm:$0xff]
    %v3799 = vld [vmem:[#allocation12 + $0x1d94] sm:$0xff]
    %v3800 = vld [vmem:[#allocation12 + $0x1d9c] sm:$0xff]
    %v3801 = vld [vmem:[#allocation12 + $0x1da4] sm:$0xff]
    %v3802 = vld [vmem:[#allocation12 + $0x1dac] sm:$0xf]
    %v3803 = vld [vmem:[#allocation12 + $0x1db0] sm:$0xff]
    %v3804 = vld [vmem:[#allocation12 + $0x1db8] sm:$0xff]
    %v3805 = vld [vmem:[#allocation12 + $0x1dc0] sm:$0xff]
    %v3806 = vld [vmem:[#allocation12 + $0x1dc8] sm:$0xff]
    %v3807 = vld [vmem:[#allocation12 + $0x1dd0] sm:$0xff]
    %v3808 = vld [vmem:[#allocation12 + $0x1dd8] sm:$0xff]
    %v3809 = vld [vmem:[#allocation12 + $0x1de0] sm:$0xff]
    %v3810 = vld [vmem:[#allocation12 + $0x1de8] sm:$0xff]
    %v3811 = vld [vmem:[#allocation12 + $0x1df0] sm:$0xff]
    %v3812 = vld [vmem:[#allocation12 + $0x1df8] sm:$0xf]
    %v3813 = vld [vmem:[#allocation12 + $0x1dfc] sm:$0xff]
    %v3814 = vld [vmem:[#allocation12 + $0x1e04] sm:$0xff]
    %v3815 = vld [vmem:[#allocation12 + $0x1e0c] sm:$0xff]
    %v3816 = vld [vmem:[#allocation12 + $0x1e14] sm:$0xff]
    %v3817 = vld [vmem:[#allocation12 + $0x1e1c] sm:$0xff]
    %v3818 = vld [vmem:[#allocation12 + $0x1e24] sm:$0xff]
    %v3819 = vld [vmem:[#allocation12 + $0x1e2c] sm:$0xff]
    %v3820 = vld [vmem:[#allocation12 + $0x1e34] sm:$0xff]
    %v3821 = vld [vmem:[#allocation12 + $0x1e3c] sm:$0xff]
    %v3822 = vld [vmem:[#allocation12 + $0x1e44] sm:$0xf]
    %v3823 = vld [vmem:[#allocation12 + $0x1e48] sm:$0xff]
    %v3824 = vld [vmem:[#allocation12 + $0x1e50] sm:$0xff]
    %v3825 = vld [vmem:[#allocation12 + $0x1e58] sm:$0xff]
    %v3826 = vld [vmem:[#allocation12 + $0x1e60] sm:$0xff]
    %v3827 = vld [vmem:[#allocation12 + $0x1e68] sm:$0xff]
    %v3828 = vld [vmem:[#allocation12 + $0x1e70] sm:$0xff]
    %v3829 = vld [vmem:[#allocation12 + $0x1e78] sm:$0xff]
    %v3830 = vld [vmem:[#allocation12 + $0x1e80] sm:$0xff]
    %v3831 = vld [vmem:[#allocation12 + $0x1e88] sm:$0xff]
    %v3832 = vld [vmem:[#allocation12 + $0x1e90] sm:$0xf]
    %v3833 = vld [vmem:[#allocation12 + $0x1e94] sm:$0xff]
    %v3834 = vld [vmem:[#allocation12 + $0x1e9c] sm:$0xff]
    %v3835 = vld [vmem:[#allocation12 + $0x1ea4] sm:$0xff]
    %v3836 = vld [vmem:[#allocation12 + $0x1eac] sm:$0xff]
    %v3837 = vld [vmem:[#allocation12 + $0x1eb4] sm:$0xff]
    %v3838 = vld [vmem:[#allocation12 + $0x1ebc] sm:$0xff]
    %v3839 = vld [vmem:[#allocation12 + $0x1ec4] sm:$0xff]
    %v3840 = vld [vmem:[#allocation12 + $0x1ecc] sm:$0xff]
    %v3841 = vld [vmem:[#allocation12 + $0x1ed4] sm:$0xff]
    %v3842 = vld [vmem:[#allocation12 + $0x1edc] sm:$0xf]
    %v3843 = vld [vmem:[#allocation12 + $0x1ee0] sm:$0xff]
    %v3844 = vld [vmem:[#allocation12 + $0x1ee8] sm:$0xff]
    %v3845 = vld [vmem:[#allocation12 + $0x1ef0] sm:$0xff]
    %v3846 = vld [vmem:[#allocation12 + $0x1ef8] sm:$0xff]
    %v3847 = vld [vmem:[#allocation12 + $0x1f00] sm:$0xff]
    %v3848 = vld [vmem:[#allocation12 + $0x1f08] sm:$0xff]
    %v3849 = vld [vmem:[#allocation12 + $0x1f10] sm:$0xff]
    %v3850 = vld [vmem:[#allocation12 + $0x1f18] sm:$0xff]
    %v3851 = vld [vmem:[#allocation12 + $0x1f20] sm:$0xff]
    %v3852 = vld [vmem:[#allocation12 + $0x1f28] sm:$0xf]
    %v3853 = vld [vmem:[#allocation12 + $0x1f2c] sm:$0xff]
    %v3854 = vld [vmem:[#allocation12 + $0x1f34] sm:$0xff]
    %v3855 = vld [vmem:[#allocation12 + $0x1f3c] sm:$0xff]
    %v3856 = vld [vmem:[#allocation12 + $0x1f44] sm:$0xff]
    %v3857 = vld [vmem:[#allocation12 + $0x1f4c] sm:$0xff]
    %v3858 = vld [vmem:[#allocation12 + $0x1f54] sm:$0xff]
    %v3859 = vld [vmem:[#allocation12 + $0x1f5c] sm:$0xff]
    %v3860 = vld [vmem:[#allocation12 + $0x1f64] sm:$0xff]
    %v3861 = vld [vmem:[#allocation12 + $0x1f6c] sm:$0xff]
    %v3862 = vld [vmem:[#allocation12 + $0x1f74] sm:$0xf]
    %v3863 = vld [vmem:[#allocation12 + $0x1f78] sm:$0xff]
    %v3864 = vld [vmem:[#allocation12 + $0x1f80] sm:$0xff]
    %v3865 = vld [vmem:[#allocation12 + $0x1f88] sm:$0xff]
    %v3866 = vld [vmem:[#allocation12 + $0x1f90] sm:$0xff]
    %v3867 = vld [vmem:[#allocation12 + $0x1f98] sm:$0xff]
    %v3868 = vld [vmem:[#allocation12 + $0x1fa0] sm:$0xff]
    %v3869 = vld [vmem:[#allocation12 + $0x1fa8] sm:$0xff]
    %v3870 = vld [vmem:[#allocation12 + $0x1fb0] sm:$0xff]
    %v3871 = vld [vmem:[#allocation12 + $0x1fb8] sm:$0xff]
    %v3872 = vld [vmem:[#allocation12 + $0x1fc0] sm:$0xf]
    %v3873 = vld [vmem:[#allocation12 + $0x1fc4] sm:$0xff]
    %v3874 = vld [vmem:[#allocation12 + $0x1fcc] sm:$0xff]
    %v3875 = vld [vmem:[#allocation12 + $0x1fd4] sm:$0xff]
    %v3876 = vld [vmem:[#allocation12 + $0x1fdc] sm:$0xff]
    %v3877 = vld [vmem:[#allocation12 + $0x1fe4] sm:$0xff]
    %v3878 = vld [vmem:[#allocation12 + $0x1fec] sm:$0xff]
    %v3879 = vld [vmem:[#allocation12 + $0x1ff4] sm:$0xff]
    %v3880 = vld [vmem:[#allocation12 + $0x1ffc] sm:$0xff]
    %v3881 = vld [vmem:[#allocation12 + $0x2004] sm:$0xff]
    %v3882 = vld [vmem:[#allocation12 + $0x200c] sm:$0xf]
    %v3883 = vld [vmem:[#allocation12 + $0x2010] sm:$0xff]
    %v3884 = vld [vmem:[#allocation12 + $0x2018] sm:$0xff]
    %v3885 = vld [vmem:[#allocation12 + $0x2020] sm:$0xff]
    %v3886 = vld [vmem:[#allocation12 + $0x2028] sm:$0xff]
    %v3887 = vld [vmem:[#allocation12 + $0x2030] sm:$0xff]
    %v3888 = vld [vmem:[#allocation12 + $0x2038] sm:$0xff]
    %v3889 = vld [vmem:[#allocation12 + $0x2040] sm:$0xff]
    %v3890 = vld [vmem:[#allocation12 + $0x2048] sm:$0xff]
    %v3891 = vld [vmem:[#allocation12 + $0x2050] sm:$0xff]
    %v3892 = vld [vmem:[#allocation12 + $0x2058] sm:$0xf]
    %v3893 = vld [vmem:[#allocation12 + $0x205c] sm:$0xff]
    %v3894 = vld [vmem:[#allocation12 + $0x2064] sm:$0xff]
    %v3895 = vld [vmem:[#allocation12 + $0x206c] sm:$0xff]
    %v3896 = vld [vmem:[#allocation12 + $0x2074] sm:$0xff]
    %v3897 = vld [vmem:[#allocation12 + $0x207c] sm:$0xff]
    %v3898 = vld [vmem:[#allocation12 + $0x2084] sm:$0xff]
    %v3899 = vld [vmem:[#allocation12 + $0x208c] sm:$0xff]
    %v3900 = vld [vmem:[#allocation12 + $0x2094] sm:$0xff]
    %v3901 = vld [vmem:[#allocation12 + $0x209c] sm:$0xff]
    %v3902 = vld [vmem:[#allocation12 + $0x20a4] sm:$0xf]
    %v3903 = vld [vmem:[#allocation12 + $0x20a8] sm:$0xff]
    %v3904 = vld [vmem:[#allocation12 + $0x20b0] sm:$0xff]
    %v3905 = vld [vmem:[#allocation12 + $0x20b8] sm:$0xff]
    %v3906 = vld [vmem:[#allocation12 + $0x20c0] sm:$0xff]
    %v3907 = vld [vmem:[#allocation12 + $0x20c8] sm:$0xff]
    %v3908 = vld [vmem:[#allocation12 + $0x20d0] sm:$0xff]
    %v3909 = vld [vmem:[#allocation12 + $0x20d8] sm:$0xff]
    %v3910 = vld [vmem:[#allocation12 + $0x20e0] sm:$0xff]
    %v3911 = vld [vmem:[#allocation12 + $0x20e8] sm:$0xff]
    %v3912 = vld [vmem:[#allocation12 + $0x20f0] sm:$0xf]
    %v3913 = vld [vmem:[#allocation12 + $0x20f4] sm:$0xff]
    %v3914 = vld [vmem:[#allocation12 + $0x20fc] sm:$0xff]
    %v3915 = vld [vmem:[#allocation12 + $0x2104] sm:$0xff]
    %v3916 = vld [vmem:[#allocation12 + $0x210c] sm:$0xff]
    %v3917 = vld [vmem:[#allocation12 + $0x2114] sm:$0xff]
    %v3918 = vld [vmem:[#allocation12 + $0x211c] sm:$0xff]
    %v3919 = vld [vmem:[#allocation12 + $0x2124] sm:$0xff]
    %v3920 = vld [vmem:[#allocation12 + $0x212c] sm:$0xff]
    %v3921 = vld [vmem:[#allocation12 + $0x2134] sm:$0xff]
    %v3922 = vld [vmem:[#allocation12 + $0x213c] sm:$0xf]
    %v3923 = vld [vmem:[#allocation12 + $0x2140] sm:$0xff]
    %v3924 = vld [vmem:[#allocation12 + $0x2148] sm:$0xff]
    %v3925 = vld [vmem:[#allocation12 + $0x2150] sm:$0xff]
    %v3926 = vld [vmem:[#allocation12 + $0x2158] sm:$0xff]
    %v3927 = vld [vmem:[#allocation12 + $0x2160] sm:$0xff]
    %v3928 = vld [vmem:[#allocation12 + $0x2168] sm:$0xff]
    %v3929 = vld [vmem:[#allocation12 + $0x2170] sm:$0xff]
    %v3930 = vld [vmem:[#allocation12 + $0x2178] sm:$0xff]
    %v3931 = vld [vmem:[#allocation12 + $0x2180] sm:$0xff]
    %v3932 = vld [vmem:[#allocation12 + $0x2188] sm:$0xf]
    %v3933 = vld [vmem:[#allocation12 + $0x218c] sm:$0xff]
    %v3934 = vld [vmem:[#allocation12 + $0x2194] sm:$0xff]
    %v3935 = vld [vmem:[#allocation12 + $0x219c] sm:$0xff]
    %v3936 = vld [vmem:[#allocation12 + $0x21a4] sm:$0xff]
    %v3937 = vld [vmem:[#allocation12 + $0x21ac] sm:$0xff]
    %v3938 = vld [vmem:[#allocation12 + $0x21b4] sm:$0xff]
    %v3939 = vld [vmem:[#allocation12 + $0x21bc] sm:$0xff]
    %v3940 = vld [vmem:[#allocation12 + $0x21c4] sm:$0xff]
    %v3941 = vld [vmem:[#allocation12 + $0x21cc] sm:$0xff]
    %v3942 = vld [vmem:[#allocation12 + $0x21d4] sm:$0xf]
    %v3943 = vld [vmem:[#allocation12 + $0x21d8] sm:$0xff]
    %v3944 = vld [vmem:[#allocation12 + $0x21e0] sm:$0xff]
    %v3945 = vld [vmem:[#allocation12 + $0x21e8] sm:$0xff]
    %v3946 = vld [vmem:[#allocation12 + $0x21f0] sm:$0xff]
    %v3947 = vld [vmem:[#allocation12 + $0x21f8] sm:$0xff]
    %v3948 = vld [vmem:[#allocation12 + $0x2200] sm:$0xff]
    %v3949 = vld [vmem:[#allocation12 + $0x2208] sm:$0xff]
    %v3950 = vld [vmem:[#allocation12 + $0x2210] sm:$0xff]
    %v3951 = vld [vmem:[#allocation12 + $0x2218] sm:$0xff]
    %v3952 = vld [vmem:[#allocation12 + $0x2220] sm:$0xf]
    %v3953 = vld [vmem:[#allocation12 + $0x2224] sm:$0xff]
    %v3954 = vld [vmem:[#allocation12 + $0x222c] sm:$0xff]
    %v3955 = vld [vmem:[#allocation12 + $0x2234] sm:$0xff]
    %v3956 = vld [vmem:[#allocation12 + $0x223c] sm:$0xff]
    %v3957 = vld [vmem:[#allocation12 + $0x2244] sm:$0xff]
    %v3958 = vld [vmem:[#allocation12 + $0x224c] sm:$0xff]
    %v3959 = vld [vmem:[#allocation12 + $0x2254] sm:$0xff]
    %v3960 = vld [vmem:[#allocation12 + $0x225c] sm:$0xff]
    %v3961 = vld [vmem:[#allocation12 + $0x2264] sm:$0xff]
    %v3962 = vld [vmem:[#allocation12 + $0x226c] sm:$0xf]
    %v3963 = vld [vmem:[#allocation12 + $0x2270] sm:$0xff]
    %v3964 = vld [vmem:[#allocation12 + $0x2278] sm:$0xff]
    %v3965 = vld [vmem:[#allocation12 + $0x2280] sm:$0xff]
    %v3966 = vld [vmem:[#allocation12 + $0x2288] sm:$0xff]
    %v3967 = vld [vmem:[#allocation12 + $0x2290] sm:$0xff]
    %v3968 = vld [vmem:[#allocation12 + $0x2298] sm:$0xff]
    %v3969 = vld [vmem:[#allocation12 + $0x22a0] sm:$0xff]
    %v3970 = vld [vmem:[#allocation12 + $0x22a8] sm:$0xff]
    %v3971 = vld [vmem:[#allocation12 + $0x22b0] sm:$0xff]
    %v3972 = vld [vmem:[#allocation12 + $0x22b8] sm:$0xf]
    %v3973 = vld [vmem:[#allocation12 + $0x22bc] sm:$0xff]
    %v3974 = vld [vmem:[#allocation12 + $0x22c4] sm:$0xff]
    %v3975 = vld [vmem:[#allocation12 + $0x22cc] sm:$0xff]
    %v3976 = vld [vmem:[#allocation12 + $0x22d4] sm:$0xff]
    %v3977 = vld [vmem:[#allocation12 + $0x22dc] sm:$0xff]
    %v3978 = vld [vmem:[#allocation12 + $0x22e4] sm:$0xff]
    %v3979 = vld [vmem:[#allocation12 + $0x22ec] sm:$0xff]
    %v3980 = vld [vmem:[#allocation12 + $0x22f4] sm:$0xff]
    %v3981 = vld [vmem:[#allocation12 + $0x22fc] sm:$0xff]
    %v3982 = vld [vmem:[#allocation12 + $0x2304] sm:$0xf]
    %v3983 = vld [vmem:[#allocation12 + $0x2308] sm:$0xff]
    %v3984 = vld [vmem:[#allocation12 + $0x2310] sm:$0xff]
    %v3985 = vld [vmem:[#allocation12 + $0x2318] sm:$0xff]
    %v3986 = vld [vmem:[#allocation12 + $0x2320] sm:$0xff]
    %v3987 = vld [vmem:[#allocation12 + $0x2328] sm:$0xff]
    %v3988 = vld [vmem:[#allocation12 + $0x2330] sm:$0xff]
    %v3989 = vld [vmem:[#allocation12 + $0x2338] sm:$0xff]
    %v3990 = vld [vmem:[#allocation12 + $0x2340] sm:$0xff]
    %v3991 = vld [vmem:[#allocation12 + $0x2348] sm:$0xff]
    %v3992 = vld [vmem:[#allocation12 + $0x2350] sm:$0xf]
    %v3993 = vld [vmem:[#allocation12 + $0x2354] sm:$0xff]
    %v3994 = vld [vmem:[#allocation12 + $0x235c] sm:$0xff]
    %v3995 = vld [vmem:[#allocation12 + $0x2364] sm:$0xff]
    %v3996 = vld [vmem:[#allocation12 + $0x236c] sm:$0xff]
    %v3997 = vld [vmem:[#allocation12 + $0x2374] sm:$0xff]
    %v3998 = vld [vmem:[#allocation12 + $0x237c] sm:$0xff]
    %v3999 = vld [vmem:[#allocation12 + $0x2384] sm:$0xff]
    %v4000 = vld [vmem:[#allocation12 + $0x238c] sm:$0xff]
    %v4001 = vld [vmem:[#allocation12 + $0x2394] sm:$0xff]
    %v4002 = vld [vmem:[#allocation12 + $0x239c] sm:$0xf]
    %v4003 = vld [vmem:[#allocation12 + $0x23a0] sm:$0xff]
    %v4004 = vld [vmem:[#allocation12 + $0x23a8] sm:$0xff]
    %v4005 = vld [vmem:[#allocation12 + $0x23b0] sm:$0xff]
    %v4006 = vld [vmem:[#allocation12 + $0x23b8] sm:$0xff]
    %v4007 = vld [vmem:[#allocation12 + $0x23c0] sm:$0xff]
    %v4008 = vld [vmem:[#allocation12 + $0x23c8] sm:$0xff]
    %v4009 = vld [vmem:[#allocation12 + $0x23d0] sm:$0xff]
    %v4010 = vld [vmem:[#allocation12 + $0x23d8] sm:$0xff]
    %v4011 = vld [vmem:[#allocation12 + $0x23e0] sm:$0xff]
    %v4012 = vld [vmem:[#allocation12 + $0x23e8] sm:$0xf]
    %v4013 = vld [vmem:[#allocation12 + $0x23ec] sm:$0xff]
    %v4014 = vld [vmem:[#allocation12 + $0x23f4] sm:$0xff]
    %v4015 = vld [vmem:[#allocation12 + $0x23fc] sm:$0xff]
    %v4016 = vld [vmem:[#allocation12 + $0x2404] sm:$0xff]
    %v4017 = vld [vmem:[#allocation12 + $0x240c] sm:$0xff]
    %v4018 = vld [vmem:[#allocation12 + $0x2414] sm:$0xff]
    %v4019 = vld [vmem:[#allocation12 + $0x241c] sm:$0xff]
    %v4020 = vld [vmem:[#allocation12 + $0x2424] sm:$0xff]
    %v4021 = vld [vmem:[#allocation12 + $0x242c] sm:$0xff]
    %v4022 = vld [vmem:[#allocation12 + $0x2434] sm:$0xf]
    %v4023 = vld [vmem:[#allocation12 + $0x2438] sm:$0xff]
    %v4024 = vld [vmem:[#allocation12 + $0x2440] sm:$0xff]
    %v4025 = vld [vmem:[#allocation12 + $0x2448] sm:$0xff]
    %v4026 = vld [vmem:[#allocation12 + $0x2450] sm:$0xff]
    %v4027 = vld [vmem:[#allocation12 + $0x2458] sm:$0xff]
    %v4028 = vld [vmem:[#allocation12 + $0x2460] sm:$0xff]
    %v4029 = vld [vmem:[#allocation12 + $0x2468] sm:$0xff]
    %v4030 = vld [vmem:[#allocation12 + $0x2470] sm:$0xff]
    %v4031 = vld [vmem:[#allocation12 + $0x2478] sm:$0xff]
    %v4032 = vld [vmem:[#allocation12 + $0x2480] sm:$0xf]
    %v4033 = vld [vmem:[#allocation12 + $0x2484] sm:$0xff]
    %v4034 = vld [vmem:[#allocation12 + $0x248c] sm:$0xff]
    %v4035 = vld [vmem:[#allocation12 + $0x2494] sm:$0xff]
    %v4036 = vld [vmem:[#allocation12 + $0x249c] sm:$0xff]
    %v4037 = vld [vmem:[#allocation12 + $0x24a4] sm:$0xff]
    %v4038 = vld [vmem:[#allocation12 + $0x24ac] sm:$0xff]
    %v4039 = vld [vmem:[#allocation12 + $0x24b4] sm:$0xff]
    %v4040 = vld [vmem:[#allocation12 + $0x24bc] sm:$0xff]
    %v4041 = vld [vmem:[#allocation12 + $0x24c4] sm:$0xff]
    %v4042 = vld [vmem:[#allocation12 + $0x24cc] sm:$0xf]
    %v4043 = vld [vmem:[#allocation12 + $0x24d0] sm:$0xff]
    %v4044 = vld [vmem:[#allocation12 + $0x24d8] sm:$0xff]
    %v4045 = vld [vmem:[#allocation12 + $0x24e0] sm:$0xff]
    %v4046 = vld [vmem:[#allocation12 + $0x24e8] sm:$0xff]
    %v4047 = vld [vmem:[#allocation12 + $0x24f0] sm:$0xff]
    %v4048 = vld [vmem:[#allocation12 + $0x24f8] sm:$0xff]
    %v4049 = vld [vmem:[#allocation12 + $0x2500] sm:$0xff]
    %v4050 = vld [vmem:[#allocation12 + $0x2508] sm:$0xff]
    %v4051 = vld [vmem:[#allocation12 + $0x2510] sm:$0xff]
    %v4052 = vld [vmem:[#allocation12 + $0x2518] sm:$0xf]
    %v4053 = vld [vmem:[#allocation12 + $0x251c] sm:$0xff]
    %v4054 = vld [vmem:[#allocation12 + $0x2524] sm:$0xff]
    %v4055 = vld [vmem:[#allocation12 + $0x252c] sm:$0xff]
    %v4056 = vld [vmem:[#allocation12 + $0x2534] sm:$0xff]
    %v4057 = vld [vmem:[#allocation12 + $0x253c] sm:$0xff]
    %v4058 = vld [vmem:[#allocation12 + $0x2544] sm:$0xff]
    %v4059 = vld [vmem:[#allocation12 + $0x254c] sm:$0xff]
    %v4060 = vld [vmem:[#allocation12 + $0x2554] sm:$0xff]
    %v4061 = vld [vmem:[#allocation12 + $0x255c] sm:$0xff]
    %v4062 = vld [vmem:[#allocation12 + $0x2564] sm:$0xf]
    %v4063 = vld [vmem:[#allocation12 + $0x2568] sm:$0xff]
    %v4064 = vld [vmem:[#allocation12 + $0x2570] sm:$0xff]
    %v4065 = vld [vmem:[#allocation12 + $0x2578] sm:$0xff]
    %v4066 = vld [vmem:[#allocation12 + $0x2580] sm:$0xff]
    %v4067 = vld [vmem:[#allocation12 + $0x2588] sm:$0xff]
    %v4068 = vld [vmem:[#allocation12 + $0x2590] sm:$0xff]
    %v4069 = vld [vmem:[#allocation12 + $0x2598] sm:$0xff]
    %v4070 = vld [vmem:[#allocation12 + $0x25a0] sm:$0xff]
    %v4071 = vld [vmem:[#allocation12 + $0x25a8] sm:$0xff]
    %v4072 = vld [vmem:[#allocation12 + $0x25b0] sm:$0xf]
    %v4073 = vld [vmem:[#allocation12 + $0x25b4] sm:$0xff]
    %v4074 = vld [vmem:[#allocation12 + $0x25bc] sm:$0xff]
    %v4075 = vld [vmem:[#allocation12 + $0x25c4] sm:$0xff]
    %v4076 = vld [vmem:[#allocation12 + $0x25cc] sm:$0xff]
    %v4077 = vld [vmem:[#allocation12 + $0x25d4] sm:$0xff]
    %v4078 = vld [vmem:[#allocation12 + $0x25dc] sm:$0xff]
    %v4079 = vld [vmem:[#allocation12 + $0x25e4] sm:$0xff]
    %v4080 = vld [vmem:[#allocation12 + $0x25ec] sm:$0xff]
    %v4081 = vld [vmem:[#allocation12 + $0x25f4] sm:$0xff]
    %v4082 = vld [vmem:[#allocation12 + $0x25fc] sm:$0xf]
    %v4083 = vld [vmem:[#allocation13] sm:$0xff]
    %v4084 = vld [vmem:[#allocation13 + $0x8] sm:$0xff]
    %v4085 = vld [vmem:[#allocation13 + $0x10] sm:$0x7]
    %v4089 = vperm.slane %v4083, 0
    %v4090 = vperm.slane %v4083, 1
    %v4091 = vperm.slane %v4083, 2
    %v4092 = vperm.slane %v4083, 3
    %v4093 = vperm.slane %v4083, 4
    %v4094 = vperm.slane %v4083, 5
    %v4095 = vperm.slane %v4083, 6
    %v4096 = vperm.slane %v4083, 7
    %v4097 = vperm.slane %v4084, 0
    %v4098 = vperm.slane %v4084, 1
    %v4099 = vperm.slane %v4084, 2
    %v4100 = vperm.slane %v4084, 3
    %v4101 = vperm.slane %v4084, 4
    %v4102 = vperm.slane %v4084, 5
    %v4103 = vperm.slane %v4084, 6
    %v4104 = vperm.slane %v4084, 7
    %v4105 = vperm.slane %v4085, 0
    %v4106 = vperm.slane %v4085, 1
    %v4107 = vperm.slane %v4085, 2
    %v5407 = vunpack.c.l.b16 %v2803
    %v5408 = vunpack.c.h.b16 %v2803
    %v5409 = vunpack.c.l.b16 %v2804
    %v5410 = vunpack.c.h.b16 %v2804
    %v5411 = vunpack.c.l.b16 %v2805
    %v5412 = vunpack.c.h.b16 %v2805
    %v5413 = vunpack.c.l.b16 %v2806
    %v5414 = vunpack.c.h.b16 %v2806
    %v5415 = vunpack.c.l.b16 %v2807
    %v5416 = vunpack.c.h.b16 %v2807
    %v5417 = vunpack.c.l.b16 %v2808
    %v5418 = vunpack.c.h.b16 %v2808
    %v5419 = vunpack.c.l.b16 %v2809
    %v5420 = vunpack.c.h.b16 %v2809
    %v5421 = vunpack.c.l.b16 %v2810
    %v5422 = vunpack.c.h.b16 %v2810
    %v5423 = vunpack.c.l.b16 %v2811
    %v5424 = vunpack.c.h.b16 %v2811
    %v5425 = vunpack.c.l.b16 %v2812
    %v5426 = vunpack.c.l.b16 %v2813
    %v5427 = vunpack.c.h.b16 %v2813
    %v5428 = vunpack.c.l.b16 %v2814
    %v5429 = vunpack.c.h.b16 %v2814
    %v5430 = vunpack.c.l.b16 %v2815
    %v5431 = vunpack.c.h.b16 %v2815
    %v5432 = vunpack.c.l.b16 %v2816
    %v5433 = vunpack.c.h.b16 %v2816
    %v5434 = vunpack.c.l.b16 %v2817
    %v5435 = vunpack.c.h.b16 %v2817
    %v5436 = vunpack.c.l.b16 %v2818
    %v5437 = vunpack.c.h.b16 %v2818
    %v5438 = vunpack.c.l.b16 %v2819
    %v5439 = vunpack.c.h.b16 %v2819
    %v5440 = vunpack.c.l.b16 %v2820
    %v5441 = vunpack.c.h.b16 %v2820
    %v5442 = vunpack.c.l.b16 %v2821
    %v5443 = vunpack.c.h.b16 %v2821
    %v5444 = vunpack.c.l.b16 %v2822
    %v5445 = vunpack.c.l.b16 %v2823
    %v5446 = vunpack.c.h.b16 %v2823
    %v5447 = vunpack.c.l.b16 %v2824
    %v5448 = vunpack.c.h.b16 %v2824
    %v5449 = vunpack.c.l.b16 %v2825
    %v5450 = vunpack.c.h.b16 %v2825
    %v5451 = vunpack.c.l.b16 %v2826
    %v5452 = vunpack.c.h.b16 %v2826
    %v5453 = vunpack.c.l.b16 %v2827
    %v5454 = vunpack.c.h.b16 %v2827
    %v5455 = vunpack.c.l.b16 %v2828
    %v5456 = vunpack.c.h.b16 %v2828
    %v5457 = vunpack.c.l.b16 %v2829
    %v5458 = vunpack.c.h.b16 %v2829
    %v5459 = vunpack.c.l.b16 %v2830
    %v5460 = vunpack.c.h.b16 %v2830
    %v5461 = vunpack.c.l.b16 %v2831
    %v5462 = vunpack.c.h.b16 %v2831
    %v5463 = vunpack.c.l.b16 %v2832
    %v5464 = vunpack.c.l.b16 %v2833
    %v5465 = vunpack.c.h.b16 %v2833
    %v5466 = vunpack.c.l.b16 %v2834
    %v5467 = vunpack.c.h.b16 %v2834
    %v5468 = vunpack.c.l.b16 %v2835
    %v5469 = vunpack.c.h.b16 %v2835
    %v5470 = vunpack.c.l.b16 %v2836
    %v5471 = vunpack.c.h.b16 %v2836
    %v5472 = vunpack.c.l.b16 %v2837
    %v5473 = vunpack.c.h.b16 %v2837
    %v5474 = vunpack.c.l.b16 %v2838
    %v5475 = vunpack.c.h.b16 %v2838
    %v5476 = vunpack.c.l.b16 %v2839
    %v5477 = vunpack.c.h.b16 %v2839
    %v5478 = vunpack.c.l.b16 %v2840
    %v5479 = vunpack.c.h.b16 %v2840
    %v5480 = vunpack.c.l.b16 %v2841
    %v5481 = vunpack.c.h.b16 %v2841
    %v5482 = vunpack.c.l.b16 %v2842
    %v5483 = vunpack.c.l.b16 %v2843
    %v5484 = vunpack.c.h.b16 %v2843
    %v5485 = vunpack.c.l.b16 %v2844
    %v5486 = vunpack.c.h.b16 %v2844
    %v5487 = vunpack.c.l.b16 %v2845
    %v5488 = vunpack.c.h.b16 %v2845
    %v5489 = vunpack.c.l.b16 %v2846
    %v5490 = vunpack.c.h.b16 %v2846
    %v5491 = vunpack.c.l.b16 %v2847
    %v5492 = vunpack.c.h.b16 %v2847
    %v5493 = vunpack.c.l.b16 %v2848
    %v5494 = vunpack.c.h.b16 %v2848
    %v5495 = vunpack.c.l.b16 %v2849
    %v5496 = vunpack.c.h.b16 %v2849
    %v5497 = vunpack.c.l.b16 %v2850
    %v5498 = vunpack.c.h.b16 %v2850
    %v5499 = vunpack.c.l.b16 %v2851
    %v5500 = vunpack.c.h.b16 %v2851
    %v5501 = vunpack.c.l.b16 %v2852
    %v5502 = vunpack.c.l.b16 %v2853
    %v5503 = vunpack.c.h.b16 %v2853
    %v5504 = vunpack.c.l.b16 %v2854
    %v5505 = vunpack.c.h.b16 %v2854
    %v5506 = vunpack.c.l.b16 %v2855
    %v5507 = vunpack.c.h.b16 %v2855
    %v5508 = vunpack.c.l.b16 %v2856
    %v5509 = vunpack.c.h.b16 %v2856
    %v5510 = vunpack.c.l.b16 %v2857
    %v5511 = vunpack.c.h.b16 %v2857
    %v5512 = vunpack.c.l.b16 %v2858
    %v5513 = vunpack.c.h.b16 %v2858
    %v5514 = vunpack.c.l.b16 %v2859
    %v5515 = vunpack.c.h.b16 %v2859
    %v5516 = vunpack.c.l.b16 %v2860
    %v5517 = vunpack.c.h.b16 %v2860
    %v5518 = vunpack.c.l.b16 %v2861
    %v5519 = vunpack.c.h.b16 %v2861
    %v5520 = vunpack.c.l.b16 %v2862
    %v5521 = vunpack.c.l.b16 %v2863
    %v5522 = vunpack.c.h.b16 %v2863
    %v5523 = vunpack.c.l.b16 %v2864
    %v5524 = vunpack.c.h.b16 %v2864
    %v5525 = vunpack.c.l.b16 %v2865
    %v5526 = vunpack.c.h.b16 %v2865
    %v5527 = vunpack.c.l.b16 %v2866
    %v5528 = vunpack.c.h.b16 %v2866
    %v5529 = vunpack.c.l.b16 %v2867
    %v5530 = vunpack.c.h.b16 %v2867
    %v5531 = vunpack.c.l.b16 %v2868
    %v5532 = vunpack.c.h.b16 %v2868
    %v5533 = vunpack.c.l.b16 %v2869
    %v5534 = vunpack.c.h.b16 %v2869
    %v5535 = vunpack.c.l.b16 %v2870
    %v5536 = vunpack.c.h.b16 %v2870
    %v5537 = vunpack.c.l.b16 %v2871
    %v5538 = vunpack.c.h.b16 %v2871
    %v5539 = vunpack.c.l.b16 %v2872
    %v5540 = vunpack.c.l.b16 %v2873
    %v5541 = vunpack.c.h.b16 %v2873
    %v5542 = vunpack.c.l.b16 %v2874
    %v5543 = vunpack.c.h.b16 %v2874
    %v5544 = vunpack.c.l.b16 %v2875
    %v5545 = vunpack.c.h.b16 %v2875
    %v5546 = vunpack.c.l.b16 %v2876
    %v5547 = vunpack.c.h.b16 %v2876
    %v5548 = vunpack.c.l.b16 %v2877
    %v5549 = vunpack.c.h.b16 %v2877
    %v5550 = vunpack.c.l.b16 %v2878
    %v5551 = vunpack.c.h.b16 %v2878
    %v5552 = vunpack.c.l.b16 %v2879
    %v5553 = vunpack.c.h.b16 %v2879
    %v5554 = vunpack.c.l.b16 %v2880
    %v5555 = vunpack.c.h.b16 %v2880
    %v5556 = vunpack.c.l.b16 %v2881
    %v5557 = vunpack.c.h.b16 %v2881
    %v5558 = vunpack.c.l.b16 %v2882
    %v5559 = vunpack.c.l.b16 %v2883
    %v5560 = vunpack.c.h.b16 %v2883
    %v5561 = vunpack.c.l.b16 %v2884
    %v5562 = vunpack.c.h.b16 %v2884
    %v5563 = vunpack.c.l.b16 %v2885
    %v5564 = vunpack.c.h.b16 %v2885
    %v5565 = vunpack.c.l.b16 %v2886
    %v5566 = vunpack.c.h.b16 %v2886
    %v5567 = vunpack.c.l.b16 %v2887
    %v5568 = vunpack.c.h.b16 %v2887
    %v5569 = vunpack.c.l.b16 %v2888
    %v5570 = vunpack.c.h.b16 %v2888
    %v5571 = vunpack.c.l.b16 %v2889
    %v5572 = vunpack.c.h.b16 %v2889
    %v5573 = vunpack.c.l.b16 %v2890
    %v5574 = vunpack.c.h.b16 %v2890
    %v5575 = vunpack.c.l.b16 %v2891
    %v5576 = vunpack.c.h.b16 %v2891
    %v5577 = vunpack.c.l.b16 %v2892
    %v5578 = vunpack.c.l.b16 %v2893
    %v5579 = vunpack.c.h.b16 %v2893
    %v5580 = vunpack.c.l.b16 %v2894
    %v5581 = vunpack.c.h.b16 %v2894
    %v5582 = vunpack.c.l.b16 %v2895
    %v5583 = vunpack.c.h.b16 %v2895
    %v5584 = vunpack.c.l.b16 %v2896
    %v5585 = vunpack.c.h.b16 %v2896
    %v5586 = vunpack.c.l.b16 %v2897
    %v5587 = vunpack.c.h.b16 %v2897
    %v5588 = vunpack.c.l.b16 %v2898
    %v5589 = vunpack.c.h.b16 %v2898
    %v5590 = vunpack.c.l.b16 %v2899
    %v5591 = vunpack.c.h.b16 %v2899
    %v5592 = vunpack.c.l.b16 %v2900
    %v5593 = vunpack.c.h.b16 %v2900
    %v5594 = vunpack.c.l.b16 %v2901
    %v5595 = vunpack.c.h.b16 %v2901
    %v5596 = vunpack.c.l.b16 %v2902
    %v5597 = vunpack.c.l.b16 %v2903
    %v5598 = vunpack.c.h.b16 %v2903
    %v5599 = vunpack.c.l.b16 %v2904
    %v5600 = vunpack.c.h.b16 %v2904
    %v5601 = vunpack.c.l.b16 %v2905
    %v5602 = vunpack.c.h.b16 %v2905
    %v5603 = vunpack.c.l.b16 %v2906
    %v5604 = vunpack.c.h.b16 %v2906
    %v5605 = vunpack.c.l.b16 %v2907
    %v5606 = vunpack.c.h.b16 %v2907
    %v5607 = vunpack.c.l.b16 %v2908
    %v5608 = vunpack.c.h.b16 %v2908
    %v5609 = vunpack.c.l.b16 %v2909
    %v5610 = vunpack.c.h.b16 %v2909
    %v5611 = vunpack.c.l.b16 %v2910
    %v5612 = vunpack.c.h.b16 %v2910
    %v5613 = vunpack.c.l.b16 %v2911
    %v5614 = vunpack.c.h.b16 %v2911
    %v5615 = vunpack.c.l.b16 %v2912
    %v5616 = vunpack.c.l.b16 %v2913
    %v5617 = vunpack.c.h.b16 %v2913
    %v5618 = vunpack.c.l.b16 %v2914
    %v5619 = vunpack.c.h.b16 %v2914
    %v5620 = vunpack.c.l.b16 %v2915
    %v5621 = vunpack.c.h.b16 %v2915
    %v5622 = vunpack.c.l.b16 %v2916
    %v5623 = vunpack.c.h.b16 %v2916
    %v5624 = vunpack.c.l.b16 %v2917
    %v5625 = vunpack.c.h.b16 %v2917
    %v5626 = vunpack.c.l.b16 %v2918
    %v5627 = vunpack.c.h.b16 %v2918
    %v5628 = vunpack.c.l.b16 %v2919
    %v5629 = vunpack.c.h.b16 %v2919
    %v5630 = vunpack.c.l.b16 %v2920
    %v5631 = vunpack.c.h.b16 %v2920
    %v5632 = vunpack.c.l.b16 %v2921
    %v5633 = vunpack.c.h.b16 %v2921
    %v5634 = vunpack.c.l.b16 %v2922
    %v5635 = vunpack.c.l.b16 %v2923
    %v5636 = vunpack.c.h.b16 %v2923
    %v5637 = vunpack.c.l.b16 %v2924
    %v5638 = vunpack.c.h.b16 %v2924
    %v5639 = vunpack.c.l.b16 %v2925
    %v5640 = vunpack.c.h.b16 %v2925
    %v5641 = vunpack.c.l.b16 %v2926
    %v5642 = vunpack.c.h.b16 %v2926
    %v5643 = vunpack.c.l.b16 %v2927
    %v5644 = vunpack.c.h.b16 %v2927
    %v5645 = vunpack.c.l.b16 %v2928
    %v5646 = vunpack.c.h.b16 %v2928
    %v5647 = vunpack.c.l.b16 %v2929
    %v5648 = vunpack.c.h.b16 %v2929
    %v5649 = vunpack.c.l.b16 %v2930
    %v5650 = vunpack.c.h.b16 %v2930
    %v5651 = vunpack.c.l.b16 %v2931
    %v5652 = vunpack.c.h.b16 %v2931
    %v5653 = vunpack.c.l.b16 %v2932
    %v5654 = vunpack.c.l.b16 %v2933
    %v5655 = vunpack.c.h.b16 %v2933
    %v5656 = vunpack.c.l.b16 %v2934
    %v5657 = vunpack.c.h.b16 %v2934
    %v5658 = vunpack.c.l.b16 %v2935
    %v5659 = vunpack.c.h.b16 %v2935
    %v5660 = vunpack.c.l.b16 %v2936
    %v5661 = vunpack.c.h.b16 %v2936
    %v5662 = vunpack.c.l.b16 %v2937
    %v5663 = vunpack.c.h.b16 %v2937
    %v5664 = vunpack.c.l.b16 %v2938
    %v5665 = vunpack.c.h.b16 %v2938
    %v5666 = vunpack.c.l.b16 %v2939
    %v5667 = vunpack.c.h.b16 %v2939
    %v5668 = vunpack.c.l.b16 %v2940
    %v5669 = vunpack.c.h.b16 %v2940
    %v5670 = vunpack.c.l.b16 %v2941
    %v5671 = vunpack.c.h.b16 %v2941
    %v5672 = vunpack.c.l.b16 %v2942
    %v5673 = vunpack.c.l.b16 %v2943
    %v5674 = vunpack.c.h.b16 %v2943
    %v5675 = vunpack.c.l.b16 %v2944
    %v5676 = vunpack.c.h.b16 %v2944
    %v5677 = vunpack.c.l.b16 %v2945
    %v5678 = vunpack.c.h.b16 %v2945
    %v5679 = vunpack.c.l.b16 %v2946
    %v5680 = vunpack.c.h.b16 %v2946
    %v5681 = vunpack.c.l.b16 %v2947
    %v5682 = vunpack.c.h.b16 %v2947
    %v5683 = vunpack.c.l.b16 %v2948
    %v5684 = vunpack.c.h.b16 %v2948
    %v5685 = vunpack.c.l.b16 %v2949
    %v5686 = vunpack.c.h.b16 %v2949
    %v5687 = vunpack.c.l.b16 %v2950
    %v5688 = vunpack.c.h.b16 %v2950
    %v5689 = vunpack.c.l.b16 %v2951
    %v5690 = vunpack.c.h.b16 %v2951
    %v5691 = vunpack.c.l.b16 %v2952
    %v5692 = vunpack.c.l.b16 %v2953
    %v5693 = vunpack.c.h.b16 %v2953
    %v5694 = vunpack.c.l.b16 %v2954
    %v5695 = vunpack.c.h.b16 %v2954
    %v5696 = vunpack.c.l.b16 %v2955
    %v5697 = vunpack.c.h.b16 %v2955
    %v5698 = vunpack.c.l.b16 %v2956
    %v5699 = vunpack.c.h.b16 %v2956
    %v5700 = vunpack.c.l.b16 %v2957
    %v5701 = vunpack.c.h.b16 %v2957
    %v5702 = vunpack.c.l.b16 %v2958
    %v5703 = vunpack.c.h.b16 %v2958
    %v5704 = vunpack.c.l.b16 %v2959
    %v5705 = vunpack.c.h.b16 %v2959
    %v5706 = vunpack.c.l.b16 %v2960
    %v5707 = vunpack.c.h.b16 %v2960
    %v5708 = vunpack.c.l.b16 %v2961
    %v5709 = vunpack.c.h.b16 %v2961
    %v5710 = vunpack.c.l.b16 %v2962
    %v5711 = vunpack.c.l.b16 %v2963
    %v5712 = vunpack.c.h.b16 %v2963
    %v5713 = vunpack.c.l.b16 %v2964
    %v5714 = vunpack.c.h.b16 %v2964
    %v5715 = vunpack.c.l.b16 %v2965
    %v5716 = vunpack.c.h.b16 %v2965
    %v5717 = vunpack.c.l.b16 %v2966
    %v5718 = vunpack.c.h.b16 %v2966
    %v5719 = vunpack.c.l.b16 %v2967
    %v5720 = vunpack.c.h.b16 %v2967
    %v5721 = vunpack.c.l.b16 %v2968
    %v5722 = vunpack.c.h.b16 %v2968
    %v5723 = vunpack.c.l.b16 %v2969
    %v5724 = vunpack.c.h.b16 %v2969
    %v5725 = vunpack.c.l.b16 %v2970
    %v5726 = vunpack.c.h.b16 %v2970
    %v5727 = vunpack.c.l.b16 %v2971
    %v5728 = vunpack.c.h.b16 %v2971
    %v5729 = vunpack.c.l.b16 %v2972
    %v5730 = vunpack.c.l.b16 %v2973
    %v5731 = vunpack.c.h.b16 %v2973
    %v5732 = vunpack.c.l.b16 %v2974
    %v5733 = vunpack.c.h.b16 %v2974
    %v5734 = vunpack.c.l.b16 %v2975
    %v5735 = vunpack.c.h.b16 %v2975
    %v5736 = vunpack.c.l.b16 %v2976
    %v5737 = vunpack.c.h.b16 %v2976
    %v5738 = vunpack.c.l.b16 %v2977
    %v5739 = vunpack.c.h.b16 %v2977
    %v5740 = vunpack.c.l.b16 %v2978
    %v5741 = vunpack.c.h.b16 %v2978
    %v5742 = vunpack.c.l.b16 %v2979
    %v5743 = vunpack.c.h.b16 %v2979
    %v5744 = vunpack.c.l.b16 %v2980
    %v5745 = vunpack.c.h.b16 %v2980
    %v5746 = vunpack.c.l.b16 %v2981
    %v5747 = vunpack.c.h.b16 %v2981
    %v5748 = vunpack.c.l.b16 %v2982
    %v5749 = vunpack.c.l.b16 %v2983
    %v5750 = vunpack.c.h.b16 %v2983
    %v5751 = vunpack.c.l.b16 %v2984
    %v5752 = vunpack.c.h.b16 %v2984
    %v5753 = vunpack.c.l.b16 %v2985
    %v5754 = vunpack.c.h.b16 %v2985
    %v5755 = vunpack.c.l.b16 %v2986
    %v5756 = vunpack.c.h.b16 %v2986
    %v5757 = vunpack.c.l.b16 %v2987
    %v5758 = vunpack.c.h.b16 %v2987
    %v5759 = vunpack.c.l.b16 %v2988
    %v5760 = vunpack.c.h.b16 %v2988
    %v5761 = vunpack.c.l.b16 %v2989
    %v5762 = vunpack.c.h.b16 %v2989
    %v5763 = vunpack.c.l.b16 %v2990
    %v5764 = vunpack.c.h.b16 %v2990
    %v5765 = vunpack.c.l.b16 %v2991
    %v5766 = vunpack.c.h.b16 %v2991
    %v5767 = vunpack.c.l.b16 %v2992
    %v5768 = vunpack.c.l.b16 %v2993
    %v5769 = vunpack.c.h.b16 %v2993
    %v5770 = vunpack.c.l.b16 %v2994
    %v5771 = vunpack.c.h.b16 %v2994
    %v5772 = vunpack.c.l.b16 %v2995
    %v5773 = vunpack.c.h.b16 %v2995
    %v5774 = vunpack.c.l.b16 %v2996
    %v5775 = vunpack.c.h.b16 %v2996
    %v5776 = vunpack.c.l.b16 %v2997
    %v5777 = vunpack.c.h.b16 %v2997
    %v5778 = vunpack.c.l.b16 %v2998
    %v5779 = vunpack.c.h.b16 %v2998
    %v5780 = vunpack.c.l.b16 %v2999
    %v5781 = vunpack.c.h.b16 %v2999
    %v5782 = vunpack.c.l.b16 %v3000
    %v5783 = vunpack.c.h.b16 %v3000
    %v5784 = vunpack.c.l.b16 %v3001
    %v5785 = vunpack.c.h.b16 %v3001
    %v5786 = vunpack.c.l.b16 %v3002
    %v5787 = vunpack.c.l.b16 %v3003
    %v5788 = vunpack.c.h.b16 %v3003
    %v5789 = vunpack.c.l.b16 %v3004
    %v5790 = vunpack.c.h.b16 %v3004
    %v5791 = vunpack.c.l.b16 %v3005
    %v5792 = vunpack.c.h.b16 %v3005
    %v5793 = vunpack.c.l.b16 %v3006
    %v5794 = vunpack.c.h.b16 %v3006
    %v5795 = vunpack.c.l.b16 %v3007
    %v5796 = vunpack.c.h.b16 %v3007
    %v5797 = vunpack.c.l.b16 %v3008
    %v5798 = vunpack.c.h.b16 %v3008
    %v5799 = vunpack.c.l.b16 %v3009
    %v5800 = vunpack.c.h.b16 %v3009
    %v5801 = vunpack.c.l.b16 %v3010
    %v5802 = vunpack.c.h.b16 %v3010
    %v5803 = vunpack.c.l.b16 %v3011
    %v5804 = vunpack.c.h.b16 %v3011
    %v5805 = vunpack.c.l.b16 %v3012
    %v5806 = vunpack.c.l.b16 %v3013
    %v5807 = vunpack.c.h.b16 %v3013
    %v5808 = vunpack.c.l.b16 %v3014
    %v5809 = vunpack.c.h.b16 %v3014
    %v5810 = vunpack.c.l.b16 %v3015
    %v5811 = vunpack.c.h.b16 %v3015
    %v5812 = vunpack.c.l.b16 %v3016
    %v5813 = vunpack.c.h.b16 %v3016
    %v5814 = vunpack.c.l.b16 %v3017
    %v5815 = vunpack.c.h.b16 %v3017
    %v5816 = vunpack.c.l.b16 %v3018
    %v5817 = vunpack.c.h.b16 %v3018
    %v5818 = vunpack.c.l.b16 %v3019
    %v5819 = vunpack.c.h.b16 %v3019
    %v5820 = vunpack.c.l.b16 %v3020
    %v5821 = vunpack.c.h.b16 %v3020
    %v5822 = vunpack.c.l.b16 %v3021
    %v5823 = vunpack.c.h.b16 %v3021
    %v5824 = vunpack.c.l.b16 %v3022
    %v5825 = vunpack.c.l.b16 %v3023
    %v5826 = vunpack.c.h.b16 %v3023
    %v5827 = vunpack.c.l.b16 %v3024
    %v5828 = vunpack.c.h.b16 %v3024
    %v5829 = vunpack.c.l.b16 %v3025
    %v5830 = vunpack.c.h.b16 %v3025
    %v5831 = vunpack.c.l.b16 %v3026
    %v5832 = vunpack.c.h.b16 %v3026
    %v5833 = vunpack.c.l.b16 %v3027
    %v5834 = vunpack.c.h.b16 %v3027
    %v5835 = vunpack.c.l.b16 %v3028
    %v5836 = vunpack.c.h.b16 %v3028
    %v5837 = vunpack.c.l.b16 %v3029
    %v5838 = vunpack.c.h.b16 %v3029
    %v5839 = vunpack.c.l.b16 %v3030
    %v5840 = vunpack.c.h.b16 %v3030
    %v5841 = vunpack.c.l.b16 %v3031
    %v5842 = vunpack.c.h.b16 %v3031
    %v5843 = vunpack.c.l.b16 %v3032
    %v5844 = vunpack.c.l.b16 %v3033
    %v5845 = vunpack.c.h.b16 %v3033
    %v5846 = vunpack.c.l.b16 %v3034
    %v5847 = vunpack.c.h.b16 %v3034
    %v5848 = vunpack.c.l.b16 %v3035
    %v5849 = vunpack.c.h.b16 %v3035
    %v5850 = vunpack.c.l.b16 %v3036
    %v5851 = vunpack.c.h.b16 %v3036
    %v5852 = vunpack.c.l.b16 %v3037
    %v5853 = vunpack.c.h.b16 %v3037
    %v5854 = vunpack.c.l.b16 %v3038
    %v5855 = vunpack.c.h.b16 %v3038
    %v5856 = vunpack.c.l.b16 %v3039
    %v5857 = vunpack.c.h.b16 %v3039
    %v5858 = vunpack.c.l.b16 %v3040
    %v5859 = vunpack.c.h.b16 %v3040
    %v5860 = vunpack.c.l.b16 %v3041
    %v5861 = vunpack.c.h.b16 %v3041
    %v5862 = vunpack.c.l.b16 %v3042
    %v5863 = vunpack.c.l.b16 %v3043
    %v5864 = vunpack.c.h.b16 %v3043
    %v5865 = vunpack.c.l.b16 %v3044
    %v5866 = vunpack.c.h.b16 %v3044
    %v5867 = vunpack.c.l.b16 %v3045
    %v5868 = vunpack.c.h.b16 %v3045
    %v5869 = vunpack.c.l.b16 %v3046
    %v5870 = vunpack.c.h.b16 %v3046
    %v5871 = vunpack.c.l.b16 %v3047
    %v5872 = vunpack.c.h.b16 %v3047
    %v5873 = vunpack.c.l.b16 %v3048
    %v5874 = vunpack.c.h.b16 %v3048
    %v5875 = vunpack.c.l.b16 %v3049
    %v5876 = vunpack.c.h.b16 %v3049
    %v5877 = vunpack.c.l.b16 %v3050
    %v5878 = vunpack.c.h.b16 %v3050
    %v5879 = vunpack.c.l.b16 %v3051
    %v5880 = vunpack.c.h.b16 %v3051
    %v5881 = vunpack.c.l.b16 %v3052
    %v5882 = vunpack.c.l.b16 %v3053
    %v5883 = vunpack.c.h.b16 %v3053
    %v5884 = vunpack.c.l.b16 %v3054
    %v5885 = vunpack.c.h.b16 %v3054
    %v5886 = vunpack.c.l.b16 %v3055
    %v5887 = vunpack.c.h.b16 %v3055
    %v5888 = vunpack.c.l.b16 %v3056
    %v5889 = vunpack.c.h.b16 %v3056
    %v5890 = vunpack.c.l.b16 %v3057
    %v5891 = vunpack.c.h.b16 %v3057
    %v5892 = vunpack.c.l.b16 %v3058
    %v5893 = vunpack.c.h.b16 %v3058
    %v5894 = vunpack.c.l.b16 %v3059
    %v5895 = vunpack.c.h.b16 %v3059
    %v5896 = vunpack.c.l.b16 %v3060
    %v5897 = vunpack.c.h.b16 %v3060
    %v5898 = vunpack.c.l.b16 %v3061
    %v5899 = vunpack.c.h.b16 %v3061
    %v5900 = vunpack.c.l.b16 %v3062
    %v5901 = vunpack.c.l.b16 %v3063
    %v5902 = vunpack.c.h.b16 %v3063
    %v5903 = vunpack.c.l.b16 %v3064
    %v5904 = vunpack.c.h.b16 %v3064
    %v5905 = vunpack.c.l.b16 %v3065
    %v5906 = vunpack.c.h.b16 %v3065
    %v5907 = vunpack.c.l.b16 %v3066
    %v5908 = vunpack.c.h.b16 %v3066
    %v5909 = vunpack.c.l.b16 %v3067
    %v5910 = vunpack.c.h.b16 %v3067
    %v5911 = vunpack.c.l.b16 %v3068
    %v5912 = vunpack.c.h.b16 %v3068
    %v5913 = vunpack.c.l.b16 %v3069
    %v5914 = vunpack.c.h.b16 %v3069
    %v5915 = vunpack.c.l.b16 %v3070
    %v5916 = vunpack.c.h.b16 %v3070
    %v5917 = vunpack.c.l.b16 %v3071
    %v5918 = vunpack.c.h.b16 %v3071
    %v5919 = vunpack.c.l.b16 %v3072
    %v5920 = vunpack.c.l.b16 %v3073
    %v5921 = vunpack.c.h.b16 %v3073
    %v5922 = vunpack.c.l.b16 %v3074
    %v5923 = vunpack.c.h.b16 %v3074
    %v5924 = vunpack.c.l.b16 %v3075
    %v5925 = vunpack.c.h.b16 %v3075
    %v5926 = vunpack.c.l.b16 %v3076
    %v5927 = vunpack.c.h.b16 %v3076
    %v5928 = vunpack.c.l.b16 %v3077
    %v5929 = vunpack.c.h.b16 %v3077
    %v5930 = vunpack.c.l.b16 %v3078
    %v5931 = vunpack.c.h.b16 %v3078
    %v5932 = vunpack.c.l.b16 %v3079
    %v5933 = vunpack.c.h.b16 %v3079
    %v5934 = vunpack.c.l.b16 %v3080
    %v5935 = vunpack.c.h.b16 %v3080
    %v5936 = vunpack.c.l.b16 %v3081
    %v5937 = vunpack.c.h.b16 %v3081
    %v5938 = vunpack.c.l.b16 %v3082
    %v5939 = vunpack.c.l.b16 %v3083
    %v5940 = vunpack.c.h.b16 %v3083
    %v5941 = vunpack.c.l.b16 %v3084
    %v5942 = vunpack.c.h.b16 %v3084
    %v5943 = vunpack.c.l.b16 %v3085
    %v5944 = vunpack.c.h.b16 %v3085
    %v5945 = vunpack.c.l.b16 %v3086
    %v5946 = vunpack.c.h.b16 %v3086
    %v5947 = vunpack.c.l.b16 %v3087
    %v5948 = vunpack.c.h.b16 %v3087
    %v5949 = vunpack.c.l.b16 %v3088
    %v5950 = vunpack.c.h.b16 %v3088
    %v5951 = vunpack.c.l.b16 %v3089
    %v5952 = vunpack.c.h.b16 %v3089
    %v5953 = vunpack.c.l.b16 %v3090
    %v5954 = vunpack.c.h.b16 %v3090
    %v5955 = vunpack.c.l.b16 %v3091
    %v5956 = vunpack.c.h.b16 %v3091
    %v5957 = vunpack.c.l.b16 %v3092
    %v5958 = vunpack.c.l.b16 %v3093
    %v5959 = vunpack.c.h.b16 %v3093
    %v5960 = vunpack.c.l.b16 %v3094
    %v5961 = vunpack.c.h.b16 %v3094
    %v5962 = vunpack.c.l.b16 %v3095
    %v5963 = vunpack.c.h.b16 %v3095
    %v5964 = vunpack.c.l.b16 %v3096
    %v5965 = vunpack.c.h.b16 %v3096
    %v5966 = vunpack.c.l.b16 %v3097
    %v5967 = vunpack.c.h.b16 %v3097
    %v5968 = vunpack.c.l.b16 %v3098
    %v5969 = vunpack.c.h.b16 %v3098
    %v5970 = vunpack.c.l.b16 %v3099
    %v5971 = vunpack.c.h.b16 %v3099
    %v5972 = vunpack.c.l.b16 %v3100
    %v5973 = vunpack.c.h.b16 %v3100
    %v5974 = vunpack.c.l.b16 %v3101
    %v5975 = vunpack.c.h.b16 %v3101
    %v5976 = vunpack.c.l.b16 %v3102
    %v5977 = vunpack.c.l.b16 %v3103
    %v5978 = vunpack.c.h.b16 %v3103
    %v5979 = vunpack.c.l.b16 %v3104
    %v5980 = vunpack.c.h.b16 %v3104
    %v5981 = vunpack.c.l.b16 %v3105
    %v5982 = vunpack.c.h.b16 %v3105
    %v5983 = vunpack.c.l.b16 %v3106
    %v5984 = vunpack.c.h.b16 %v3106
    %v5985 = vunpack.c.l.b16 %v3107
    %v5986 = vunpack.c.h.b16 %v3107
    %v5987 = vunpack.c.l.b16 %v3108
    %v5988 = vunpack.c.h.b16 %v3108
    %v5989 = vunpack.c.l.b16 %v3109
    %v5990 = vunpack.c.h.b16 %v3109
    %v5991 = vunpack.c.l.b16 %v3110
    %v5992 = vunpack.c.h.b16 %v3110
    %v5993 = vunpack.c.l.b16 %v3111
    %v5994 = vunpack.c.h.b16 %v3111
    %v5995 = vunpack.c.l.b16 %v3112
    %v5996 = vunpack.c.l.b16 %v3113
    %v5997 = vunpack.c.h.b16 %v3113
    %v5998 = vunpack.c.l.b16 %v3114
    %v5999 = vunpack.c.h.b16 %v3114
    %v6000 = vunpack.c.l.b16 %v3115
    %v6001 = vunpack.c.h.b16 %v3115
    %v6002 = vunpack.c.l.b16 %v3116
    %v6003 = vunpack.c.h.b16 %v3116
    %v6004 = vunpack.c.l.b16 %v3117
    %v6005 = vunpack.c.h.b16 %v3117
    %v6006 = vunpack.c.l.b16 %v3118
    %v6007 = vunpack.c.h.b16 %v3118
    %v6008 = vunpack.c.l.b16 %v3119
    %v6009 = vunpack.c.h.b16 %v3119
    %v6010 = vunpack.c.l.b16 %v3120
    %v6011 = vunpack.c.h.b16 %v3120
    %v6012 = vunpack.c.l.b16 %v3121
    %v6013 = vunpack.c.h.b16 %v3121
    %v6014 = vunpack.c.l.b16 %v3122
    %v6015 = vunpack.c.l.b16 %v3123
    %v6016 = vunpack.c.h.b16 %v3123
    %v6017 = vunpack.c.l.b16 %v3124
    %v6018 = vunpack.c.h.b16 %v3124
    %v6019 = vunpack.c.l.b16 %v3125
    %v6020 = vunpack.c.h.b16 %v3125
    %v6021 = vunpack.c.l.b16 %v3126
    %v6022 = vunpack.c.h.b16 %v3126
    %v6023 = vunpack.c.l.b16 %v3127
    %v6024 = vunpack.c.h.b16 %v3127
    %v6025 = vunpack.c.l.b16 %v3128
    %v6026 = vunpack.c.h.b16 %v3128
    %v6027 = vunpack.c.l.b16 %v3129
    %v6028 = vunpack.c.h.b16 %v3129
    %v6029 = vunpack.c.l.b16 %v3130
    %v6030 = vunpack.c.h.b16 %v3130
    %v6031 = vunpack.c.l.b16 %v3131
    %v6032 = vunpack.c.h.b16 %v3131
    %v6033 = vunpack.c.l.b16 %v3132
    %v6034 = vunpack.c.l.b16 %v3133
    %v6035 = vunpack.c.h.b16 %v3133
    %v6036 = vunpack.c.l.b16 %v3134
    %v6037 = vunpack.c.h.b16 %v3134
    %v6038 = vunpack.c.l.b16 %v3135
    %v6039 = vunpack.c.h.b16 %v3135
    %v6040 = vunpack.c.l.b16 %v3136
    %v6041 = vunpack.c.h.b16 %v3136
    %v6042 = vunpack.c.l.b16 %v3137
    %v6043 = vunpack.c.h.b16 %v3137
    %v6044 = vunpack.c.l.b16 %v3138
    %v6045 = vunpack.c.h.b16 %v3138
    %v6046 = vunpack.c.l.b16 %v3139
    %v6047 = vunpack.c.h.b16 %v3139
    %v6048 = vunpack.c.l.b16 %v3140
    %v6049 = vunpack.c.h.b16 %v3140
    %v6050 = vunpack.c.l.b16 %v3141
    %v6051 = vunpack.c.h.b16 %v3141
    %v6052 = vunpack.c.l.b16 %v3142
    %v6053 = vunpack.c.l.b16 %v3143
    %v6054 = vunpack.c.h.b16 %v3143
    %v6055 = vunpack.c.l.b16 %v3144
    %v6056 = vunpack.c.h.b16 %v3144
    %v6057 = vunpack.c.l.b16 %v3145
    %v6058 = vunpack.c.h.b16 %v3145
    %v6059 = vunpack.c.l.b16 %v3146
    %v6060 = vunpack.c.h.b16 %v3146
    %v6061 = vunpack.c.l.b16 %v3147
    %v6062 = vunpack.c.h.b16 %v3147
    %v6063 = vunpack.c.l.b16 %v3148
    %v6064 = vunpack.c.h.b16 %v3148
    %v6065 = vunpack.c.l.b16 %v3149
    %v6066 = vunpack.c.h.b16 %v3149
    %v6067 = vunpack.c.l.b16 %v3150
    %v6068 = vunpack.c.h.b16 %v3150
    %v6069 = vunpack.c.l.b16 %v3151
    %v6070 = vunpack.c.h.b16 %v3151
    %v6071 = vunpack.c.l.b16 %v3152
    %v6072 = vunpack.c.l.b16 %v3153
    %v6073 = vunpack.c.h.b16 %v3153
    %v6074 = vunpack.c.l.b16 %v3154
    %v6075 = vunpack.c.h.b16 %v3154
    %v6076 = vunpack.c.l.b16 %v3155
    %v6077 = vunpack.c.h.b16 %v3155
    %v6078 = vunpack.c.l.b16 %v3156
    %v6079 = vunpack.c.h.b16 %v3156
    %v6080 = vunpack.c.l.b16 %v3157
    %v6081 = vunpack.c.h.b16 %v3157
    %v6082 = vunpack.c.l.b16 %v3158
    %v6083 = vunpack.c.h.b16 %v3158
    %v6084 = vunpack.c.l.b16 %v3159
    %v6085 = vunpack.c.h.b16 %v3159
    %v6086 = vunpack.c.l.b16 %v3160
    %v6087 = vunpack.c.h.b16 %v3160
    %v6088 = vunpack.c.l.b16 %v3161
    %v6089 = vunpack.c.h.b16 %v3161
    %v6090 = vunpack.c.l.b16 %v3162
    %v6091 = vunpack.c.l.b16 %v3163
    %v6092 = vunpack.c.h.b16 %v3163
    %v6093 = vunpack.c.l.b16 %v3164
    %v6094 = vunpack.c.h.b16 %v3164
    %v6095 = vunpack.c.l.b16 %v3165
    %v6096 = vunpack.c.h.b16 %v3165
    %v6097 = vunpack.c.l.b16 %v3166
    %v6098 = vunpack.c.h.b16 %v3166
    %v6099 = vunpack.c.l.b16 %v3167
    %v6100 = vunpack.c.h.b16 %v3167
    %v6101 = vunpack.c.l.b16 %v3168
    %v6102 = vunpack.c.h.b16 %v3168
    %v6103 = vunpack.c.l.b16 %v3169
    %v6104 = vunpack.c.h.b16 %v3169
    %v6105 = vunpack.c.l.b16 %v3170
    %v6106 = vunpack.c.h.b16 %v3170
    %v6107 = vunpack.c.l.b16 %v3171
    %v6108 = vunpack.c.h.b16 %v3171
    %v6109 = vunpack.c.l.b16 %v3172
    %v6110 = vunpack.c.l.b16 %v3173
    %v6111 = vunpack.c.h.b16 %v3173
    %v6112 = vunpack.c.l.b16 %v3174
    %v6113 = vunpack.c.h.b16 %v3174
    %v6114 = vunpack.c.l.b16 %v3175
    %v6115 = vunpack.c.h.b16 %v3175
    %v6116 = vunpack.c.l.b16 %v3176
    %v6117 = vunpack.c.h.b16 %v3176
    %v6118 = vunpack.c.l.b16 %v3177
    %v6119 = vunpack.c.h.b16 %v3177
    %v6120 = vunpack.c.l.b16 %v3178
    %v6121 = vunpack.c.h.b16 %v3178
    %v6122 = vunpack.c.l.b16 %v3179
    %v6123 = vunpack.c.h.b16 %v3179
    %v6124 = vunpack.c.l.b16 %v3180
    %v6125 = vunpack.c.h.b16 %v3180
    %v6126 = vunpack.c.l.b16 %v3181
    %v6127 = vunpack.c.h.b16 %v3181
    %v6128 = vunpack.c.l.b16 %v3182
    %v6129 = vunpack.c.l.b16 %v3183
    %v6130 = vunpack.c.h.b16 %v3183
    %v6131 = vunpack.c.l.b16 %v3184
    %v6132 = vunpack.c.h.b16 %v3184
    %v6133 = vunpack.c.l.b16 %v3185
    %v6134 = vunpack.c.h.b16 %v3185
    %v6135 = vunpack.c.l.b16 %v3186
    %v6136 = vunpack.c.h.b16 %v3186
    %v6137 = vunpack.c.l.b16 %v3187
    %v6138 = vunpack.c.h.b16 %v3187
    %v6139 = vunpack.c.l.b16 %v3188
    %v6140 = vunpack.c.h.b16 %v3188
    %v6141 = vunpack.c.l.b16 %v3189
    %v6142 = vunpack.c.h.b16 %v3189
    %v6143 = vunpack.c.l.b16 %v3190
    %v6144 = vunpack.c.h.b16 %v3190
    %v6145 = vunpack.c.l.b16 %v3191
    %v6146 = vunpack.c.h.b16 %v3191
    %v6147 = vunpack.c.l.b16 %v3192
    %v6148 = vunpack.c.l.b16 %v3193
    %v6149 = vunpack.c.h.b16 %v3193
    %v6150 = vunpack.c.l.b16 %v3194
    %v6151 = vunpack.c.h.b16 %v3194
    %v6152 = vunpack.c.l.b16 %v3195
    %v6153 = vunpack.c.h.b16 %v3195
    %v6154 = vunpack.c.l.b16 %v3196
    %v6155 = vunpack.c.h.b16 %v3196
    %v6156 = vunpack.c.l.b16 %v3197
    %v6157 = vunpack.c.h.b16 %v3197
    %v6158 = vunpack.c.l.b16 %v3198
    %v6159 = vunpack.c.h.b16 %v3198
    %v6160 = vunpack.c.l.b16 %v3199
    %v6161 = vunpack.c.h.b16 %v3199
    %v6162 = vunpack.c.l.b16 %v3200
    %v6163 = vunpack.c.h.b16 %v3200
    %v6164 = vunpack.c.l.b16 %v3201
    %v6165 = vunpack.c.h.b16 %v3201
    %v6166 = vunpack.c.l.b16 %v3202
    %v6167 = vunpack.c.l.b16 %v3203
    %v6168 = vunpack.c.h.b16 %v3203
    %v6169 = vunpack.c.l.b16 %v3204
    %v6170 = vunpack.c.h.b16 %v3204
    %v6171 = vunpack.c.l.b16 %v3205
    %v6172 = vunpack.c.h.b16 %v3205
    %v6173 = vunpack.c.l.b16 %v3206
    %v6174 = vunpack.c.h.b16 %v3206
    %v6175 = vunpack.c.l.b16 %v3207
    %v6176 = vunpack.c.h.b16 %v3207
    %v6177 = vunpack.c.l.b16 %v3208
    %v6178 = vunpack.c.h.b16 %v3208
    %v6179 = vunpack.c.l.b16 %v3209
    %v6180 = vunpack.c.h.b16 %v3209
    %v6181 = vunpack.c.l.b16 %v3210
    %v6182 = vunpack.c.h.b16 %v3210
    %v6183 = vunpack.c.l.b16 %v3211
    %v6184 = vunpack.c.h.b16 %v3211
    %v6185 = vunpack.c.l.b16 %v3212
    %v6186 = vunpack.c.l.b16 %v3213
    %v6187 = vunpack.c.h.b16 %v3213
    %v6188 = vunpack.c.l.b16 %v3214
    %v6189 = vunpack.c.h.b16 %v3214
    %v6190 = vunpack.c.l.b16 %v3215
    %v6191 = vunpack.c.h.b16 %v3215
    %v6192 = vunpack.c.l.b16 %v3216
    %v6193 = vunpack.c.h.b16 %v3216
    %v6194 = vunpack.c.l.b16 %v3217
    %v6195 = vunpack.c.h.b16 %v3217
    %v6196 = vunpack.c.l.b16 %v3218
    %v6197 = vunpack.c.h.b16 %v3218
    %v6198 = vunpack.c.l.b16 %v3219
    %v6199 = vunpack.c.h.b16 %v3219
    %v6200 = vunpack.c.l.b16 %v3220
    %v6201 = vunpack.c.h.b16 %v3220
    %v6202 = vunpack.c.l.b16 %v3221
    %v6203 = vunpack.c.h.b16 %v3221
    %v6204 = vunpack.c.l.b16 %v3222
    %v6205 = vunpack.c.l.b16 %v3223
    %v6206 = vunpack.c.h.b16 %v3223
    %v6207 = vunpack.c.l.b16 %v3224
    %v6208 = vunpack.c.h.b16 %v3224
    %v6209 = vunpack.c.l.b16 %v3225
    %v6210 = vunpack.c.h.b16 %v3225
    %v6211 = vunpack.c.l.b16 %v3226
    %v6212 = vunpack.c.h.b16 %v3226
    %v6213 = vunpack.c.l.b16 %v3227
    %v6214 = vunpack.c.h.b16 %v3227
    %v6215 = vunpack.c.l.b16 %v3228
    %v6216 = vunpack.c.h.b16 %v3228
    %v6217 = vunpack.c.l.b16 %v3229
    %v6218 = vunpack.c.h.b16 %v3229
    %v6219 = vunpack.c.l.b16 %v3230
    %v6220 = vunpack.c.h.b16 %v3230
    %v6221 = vunpack.c.l.b16 %v3231
    %v6222 = vunpack.c.h.b16 %v3231
    %v6223 = vunpack.c.l.b16 %v3232
    %v6224 = vunpack.c.l.b16 %v3233
    %v6225 = vunpack.c.h.b16 %v3233
    %v6226 = vunpack.c.l.b16 %v3234
    %v6227 = vunpack.c.h.b16 %v3234
    %v6228 = vunpack.c.l.b16 %v3235
    %v6229 = vunpack.c.h.b16 %v3235
    %v6230 = vunpack.c.l.b16 %v3236
    %v6231 = vunpack.c.h.b16 %v3236
    %v6232 = vunpack.c.l.b16 %v3237
    %v6233 = vunpack.c.h.b16 %v3237
    %v6234 = vunpack.c.l.b16 %v3238
    %v6235 = vunpack.c.h.b16 %v3238
    %v6236 = vunpack.c.l.b16 %v3239
    %v6237 = vunpack.c.h.b16 %v3239
    %v6238 = vunpack.c.l.b16 %v3240
    %v6239 = vunpack.c.h.b16 %v3240
    %v6240 = vunpack.c.l.b16 %v3241
    %v6241 = vunpack.c.h.b16 %v3241
    %v6242 = vunpack.c.l.b16 %v3242
    %v6243 = vunpack.c.l.b16 %v3243
    %v6244 = vunpack.c.h.b16 %v3243
    %v6245 = vunpack.c.l.b16 %v3244
    %v6246 = vunpack.c.h.b16 %v3244
    %v6247 = vunpack.c.l.b16 %v3245
    %v6248 = vunpack.c.h.b16 %v3245
    %v6249 = vunpack.c.l.b16 %v3246
    %v6250 = vunpack.c.h.b16 %v3246
    %v6251 = vunpack.c.l.b16 %v3247
    %v6252 = vunpack.c.h.b16 %v3247
    %v6253 = vunpack.c.l.b16 %v3248
    %v6254 = vunpack.c.h.b16 %v3248
    %v6255 = vunpack.c.l.b16 %v3249
    %v6256 = vunpack.c.h.b16 %v3249
    %v6257 = vunpack.c.l.b16 %v3250
    %v6258 = vunpack.c.h.b16 %v3250
    %v6259 = vunpack.c.l.b16 %v3251
    %v6260 = vunpack.c.h.b16 %v3251
    %v6261 = vunpack.c.l.b16 %v3252
    %v6262 = vunpack.c.l.b16 %v3253
    %v6263 = vunpack.c.h.b16 %v3253
    %v6264 = vunpack.c.l.b16 %v3254
    %v6265 = vunpack.c.h.b16 %v3254
    %v6266 = vunpack.c.l.b16 %v3255
    %v6267 = vunpack.c.h.b16 %v3255
    %v6268 = vunpack.c.l.b16 %v3256
    %v6269 = vunpack.c.h.b16 %v3256
    %v6270 = vunpack.c.l.b16 %v3257
    %v6271 = vunpack.c.h.b16 %v3257
    %v6272 = vunpack.c.l.b16 %v3258
    %v6273 = vunpack.c.h.b16 %v3258
    %v6274 = vunpack.c.l.b16 %v3259
    %v6275 = vunpack.c.h.b16 %v3259
    %v6276 = vunpack.c.l.b16 %v3260
    %v6277 = vunpack.c.h.b16 %v3260
    %v6278 = vunpack.c.l.b16 %v3261
    %v6279 = vunpack.c.h.b16 %v3261
    %v6280 = vunpack.c.l.b16 %v3262
    %v6281 = vunpack.c.l.b16 %v3263
    %v6282 = vunpack.c.h.b16 %v3263
    %v6283 = vunpack.c.l.b16 %v3264
    %v6284 = vunpack.c.h.b16 %v3264
    %v6285 = vunpack.c.l.b16 %v3265
    %v6286 = vunpack.c.h.b16 %v3265
    %v6287 = vunpack.c.l.b16 %v3266
    %v6288 = vunpack.c.h.b16 %v3266
    %v6289 = vunpack.c.l.b16 %v3267
    %v6290 = vunpack.c.h.b16 %v3267
    %v6291 = vunpack.c.l.b16 %v3268
    %v6292 = vunpack.c.h.b16 %v3268
    %v6293 = vunpack.c.l.b16 %v3269
    %v6294 = vunpack.c.h.b16 %v3269
    %v6295 = vunpack.c.l.b16 %v3270
    %v6296 = vunpack.c.h.b16 %v3270
    %v6297 = vunpack.c.l.b16 %v3271
    %v6298 = vunpack.c.h.b16 %v3271
    %v6299 = vunpack.c.l.b16 %v3272
    %v6300 = vunpack.c.l.b16 %v3273
    %v6301 = vunpack.c.h.b16 %v3273
    %v6302 = vunpack.c.l.b16 %v3274
    %v6303 = vunpack.c.h.b16 %v3274
    %v6304 = vunpack.c.l.b16 %v3275
    %v6305 = vunpack.c.h.b16 %v3275
    %v6306 = vunpack.c.l.b16 %v3276
    %v6307 = vunpack.c.h.b16 %v3276
    %v6308 = vunpack.c.l.b16 %v3277
    %v6309 = vunpack.c.h.b16 %v3277
    %v6310 = vunpack.c.l.b16 %v3278
    %v6311 = vunpack.c.h.b16 %v3278
    %v6312 = vunpack.c.l.b16 %v3279
    %v6313 = vunpack.c.h.b16 %v3279
    %v6314 = vunpack.c.l.b16 %v3280
    %v6315 = vunpack.c.h.b16 %v3280
    %v6316 = vunpack.c.l.b16 %v3281
    %v6317 = vunpack.c.h.b16 %v3281
    %v6318 = vunpack.c.l.b16 %v3282
    %v6319 = vunpack.c.l.b16 %v3283
    %v6320 = vunpack.c.h.b16 %v3283
    %v6321 = vunpack.c.l.b16 %v3284
    %v6322 = vunpack.c.h.b16 %v3284
    %v6323 = vunpack.c.l.b16 %v3285
    %v6324 = vunpack.c.h.b16 %v3285
    %v6325 = vunpack.c.l.b16 %v3286
    %v6326 = vunpack.c.h.b16 %v3286
    %v6327 = vunpack.c.l.b16 %v3287
    %v6328 = vunpack.c.h.b16 %v3287
    %v6329 = vunpack.c.l.b16 %v3288
    %v6330 = vunpack.c.h.b16 %v3288
    %v6331 = vunpack.c.l.b16 %v3289
    %v6332 = vunpack.c.h.b16 %v3289
    %v6333 = vunpack.c.l.b16 %v3290
    %v6334 = vunpack.c.h.b16 %v3290
    %v6335 = vunpack.c.l.b16 %v3291
    %v6336 = vunpack.c.h.b16 %v3291
    %v6337 = vunpack.c.l.b16 %v3292
    %v6338 = vunpack.c.l.b16 %v3293
    %v6339 = vunpack.c.h.b16 %v3293
    %v6340 = vunpack.c.l.b16 %v3294
    %v6341 = vunpack.c.h.b16 %v3294
    %v6342 = vunpack.c.l.b16 %v3295
    %v6343 = vunpack.c.h.b16 %v3295
    %v6344 = vunpack.c.l.b16 %v3296
    %v6345 = vunpack.c.h.b16 %v3296
    %v6346 = vunpack.c.l.b16 %v3297
    %v6347 = vunpack.c.h.b16 %v3297
    %v6348 = vunpack.c.l.b16 %v3298
    %v6349 = vunpack.c.h.b16 %v3298
    %v6350 = vunpack.c.l.b16 %v3299
    %v6351 = vunpack.c.h.b16 %v3299
    %v6352 = vunpack.c.l.b16 %v3300
    %v6353 = vunpack.c.h.b16 %v3300
    %v6354 = vunpack.c.l.b16 %v3301
    %v6355 = vunpack.c.h.b16 %v3301
    %v6356 = vunpack.c.l.b16 %v3302
    %v6357 = vunpack.c.l.b16 %v3303
    %v6358 = vunpack.c.h.b16 %v3303
    %v6359 = vunpack.c.l.b16 %v3304
    %v6360 = vunpack.c.h.b16 %v3304
    %v6361 = vunpack.c.l.b16 %v3305
    %v6362 = vunpack.c.h.b16 %v3305
    %v6363 = vunpack.c.l.b16 %v3306
    %v6364 = vunpack.c.h.b16 %v3306
    %v6365 = vunpack.c.l.b16 %v3307
    %v6366 = vunpack.c.h.b16 %v3307
    %v6367 = vunpack.c.l.b16 %v3308
    %v6368 = vunpack.c.h.b16 %v3308
    %v6369 = vunpack.c.l.b16 %v3309
    %v6370 = vunpack.c.h.b16 %v3309
    %v6371 = vunpack.c.l.b16 %v3310
    %v6372 = vunpack.c.h.b16 %v3310
    %v6373 = vunpack.c.l.b16 %v3311
    %v6374 = vunpack.c.h.b16 %v3311
    %v6375 = vunpack.c.l.b16 %v3312
    %v6376 = vunpack.c.l.b16 %v3313
    %v6377 = vunpack.c.h.b16 %v3313
    %v6378 = vunpack.c.l.b16 %v3314
    %v6379 = vunpack.c.h.b16 %v3314
    %v6380 = vunpack.c.l.b16 %v3315
    %v6381 = vunpack.c.h.b16 %v3315
    %v6382 = vunpack.c.l.b16 %v3316
    %v6383 = vunpack.c.h.b16 %v3316
    %v6384 = vunpack.c.l.b16 %v3317
    %v6385 = vunpack.c.h.b16 %v3317
    %v6386 = vunpack.c.l.b16 %v3318
    %v6387 = vunpack.c.h.b16 %v3318
    %v6388 = vunpack.c.l.b16 %v3319
    %v6389 = vunpack.c.h.b16 %v3319
    %v6390 = vunpack.c.l.b16 %v3320
    %v6391 = vunpack.c.h.b16 %v3320
    %v6392 = vunpack.c.l.b16 %v3321
    %v6393 = vunpack.c.h.b16 %v3321
    %v6394 = vunpack.c.l.b16 %v3322
    %v6395 = vunpack.c.l.b16 %v3323
    %v6396 = vunpack.c.h.b16 %v3323
    %v6397 = vunpack.c.l.b16 %v3324
    %v6398 = vunpack.c.h.b16 %v3324
    %v6399 = vunpack.c.l.b16 %v3325
    %v6400 = vunpack.c.h.b16 %v3325
    %v6401 = vunpack.c.l.b16 %v3326
    %v6402 = vunpack.c.h.b16 %v3326
    %v6403 = vunpack.c.l.b16 %v3327
    %v6404 = vunpack.c.h.b16 %v3327
    %v6405 = vunpack.c.l.b16 %v3328
    %v6406 = vunpack.c.h.b16 %v3328
    %v6407 = vunpack.c.l.b16 %v3329
    %v6408 = vunpack.c.h.b16 %v3329
    %v6409 = vunpack.c.l.b16 %v3330
    %v6410 = vunpack.c.h.b16 %v3330
    %v6411 = vunpack.c.l.b16 %v3331
    %v6412 = vunpack.c.h.b16 %v3331
    %v6413 = vunpack.c.l.b16 %v3332
    %v6414 = vunpack.c.l.b16 %v3333
    %v6415 = vunpack.c.h.b16 %v3333
    %v6416 = vunpack.c.l.b16 %v3334
    %v6417 = vunpack.c.h.b16 %v3334
    %v6418 = vunpack.c.l.b16 %v3335
    %v6419 = vunpack.c.h.b16 %v3335
    %v6420 = vunpack.c.l.b16 %v3336
    %v6421 = vunpack.c.h.b16 %v3336
    %v6422 = vunpack.c.l.b16 %v3337
    %v6423 = vunpack.c.h.b16 %v3337
    %v6424 = vunpack.c.l.b16 %v3338
    %v6425 = vunpack.c.h.b16 %v3338
    %v6426 = vunpack.c.l.b16 %v3339
    %v6427 = vunpack.c.h.b16 %v3339
    %v6428 = vunpack.c.l.b16 %v3340
    %v6429 = vunpack.c.h.b16 %v3340
    %v6430 = vunpack.c.l.b16 %v3341
    %v6431 = vunpack.c.h.b16 %v3341
    %v6432 = vunpack.c.l.b16 %v3342
    %v6433 = vunpack.c.l.b16 %v3343
    %v6434 = vunpack.c.h.b16 %v3343
    %v6435 = vunpack.c.l.b16 %v3344
    %v6436 = vunpack.c.h.b16 %v3344
    %v6437 = vunpack.c.l.b16 %v3345
    %v6438 = vunpack.c.h.b16 %v3345
    %v6439 = vunpack.c.l.b16 %v3346
    %v6440 = vunpack.c.h.b16 %v3346
    %v6441 = vunpack.c.l.b16 %v3347
    %v6442 = vunpack.c.h.b16 %v3347
    %v6443 = vunpack.c.l.b16 %v3348
    %v6444 = vunpack.c.h.b16 %v3348
    %v6445 = vunpack.c.l.b16 %v3349
    %v6446 = vunpack.c.h.b16 %v3349
    %v6447 = vunpack.c.l.b16 %v3350
    %v6448 = vunpack.c.h.b16 %v3350
    %v6449 = vunpack.c.l.b16 %v3351
    %v6450 = vunpack.c.h.b16 %v3351
    %v6451 = vunpack.c.l.b16 %v3352
    %v6452 = vunpack.c.l.b16 %v3353
    %v6453 = vunpack.c.h.b16 %v3353
    %v6454 = vunpack.c.l.b16 %v3354
    %v6455 = vunpack.c.h.b16 %v3354
    %v6456 = vunpack.c.l.b16 %v3355
    %v6457 = vunpack.c.h.b16 %v3355
    %v6458 = vunpack.c.l.b16 %v3356
    %v6459 = vunpack.c.h.b16 %v3356
    %v6460 = vunpack.c.l.b16 %v3357
    %v6461 = vunpack.c.h.b16 %v3357
    %v6462 = vunpack.c.l.b16 %v3358
    %v6463 = vunpack.c.h.b16 %v3358
    %v6464 = vunpack.c.l.b16 %v3359
    %v6465 = vunpack.c.h.b16 %v3359
    %v6466 = vunpack.c.l.b16 %v3360
    %v6467 = vunpack.c.h.b16 %v3360
    %v6468 = vunpack.c.l.b16 %v3361
    %v6469 = vunpack.c.h.b16 %v3361
    %v6470 = vunpack.c.l.b16 %v3362
    %v6471 = vunpack.c.l.b16 %v3363
    %v6472 = vunpack.c.h.b16 %v3363
    %v6473 = vunpack.c.l.b16 %v3364
    %v6474 = vunpack.c.h.b16 %v3364
    %v6475 = vunpack.c.l.b16 %v3365
    %v6476 = vunpack.c.h.b16 %v3365
    %v6477 = vunpack.c.l.b16 %v3366
    %v6478 = vunpack.c.h.b16 %v3366
    %v6479 = vunpack.c.l.b16 %v3367
    %v6480 = vunpack.c.h.b16 %v3367
    %v6481 = vunpack.c.l.b16 %v3368
    %v6482 = vunpack.c.h.b16 %v3368
    %v6483 = vunpack.c.l.b16 %v3369
    %v6484 = vunpack.c.h.b16 %v3369
    %v6485 = vunpack.c.l.b16 %v3370
    %v6486 = vunpack.c.h.b16 %v3370
    %v6487 = vunpack.c.l.b16 %v3371
    %v6488 = vunpack.c.h.b16 %v3371
    %v6489 = vunpack.c.l.b16 %v3372
    %v6490 = vunpack.c.l.b16 %v3373
    %v6491 = vunpack.c.h.b16 %v3373
    %v6492 = vunpack.c.l.b16 %v3374
    %v6493 = vunpack.c.h.b16 %v3374
    %v6494 = vunpack.c.l.b16 %v3375
    %v6495 = vunpack.c.h.b16 %v3375
    %v6496 = vunpack.c.l.b16 %v3376
    %v6497 = vunpack.c.h.b16 %v3376
    %v6498 = vunpack.c.l.b16 %v3377
    %v6499 = vunpack.c.h.b16 %v3377
    %v6500 = vunpack.c.l.b16 %v3378
    %v6501 = vunpack.c.h.b16 %v3378
    %v6502 = vunpack.c.l.b16 %v3379
    %v6503 = vunpack.c.h.b16 %v3379
    %v6504 = vunpack.c.l.b16 %v3380
    %v6505 = vunpack.c.h.b16 %v3380
    %v6506 = vunpack.c.l.b16 %v3381
    %v6507 = vunpack.c.h.b16 %v3381
    %v6508 = vunpack.c.l.b16 %v3382
    %v6509 = vunpack.c.l.b16 %v3383
    %v6510 = vunpack.c.h.b16 %v3383
    %v6511 = vunpack.c.l.b16 %v3384
    %v6512 = vunpack.c.h.b16 %v3384
    %v6513 = vunpack.c.l.b16 %v3385
    %v6514 = vunpack.c.h.b16 %v3385
    %v6515 = vunpack.c.l.b16 %v3386
    %v6516 = vunpack.c.h.b16 %v3386
    %v6517 = vunpack.c.l.b16 %v3387
    %v6518 = vunpack.c.h.b16 %v3387
    %v6519 = vunpack.c.l.b16 %v3388
    %v6520 = vunpack.c.h.b16 %v3388
    %v6521 = vunpack.c.l.b16 %v3389
    %v6522 = vunpack.c.h.b16 %v3389
    %v6523 = vunpack.c.l.b16 %v3390
    %v6524 = vunpack.c.h.b16 %v3390
    %v6525 = vunpack.c.l.b16 %v3391
    %v6526 = vunpack.c.h.b16 %v3391
    %v6527 = vunpack.c.l.b16 %v3392
    %v6528 = vunpack.c.l.b16 %v3393
    %v6529 = vunpack.c.h.b16 %v3393
    %v6530 = vunpack.c.l.b16 %v3394
    %v6531 = vunpack.c.h.b16 %v3394
    %v6532 = vunpack.c.l.b16 %v3395
    %v6533 = vunpack.c.h.b16 %v3395
    %v6534 = vunpack.c.l.b16 %v3396
    %v6535 = vunpack.c.h.b16 %v3396
    %v6536 = vunpack.c.l.b16 %v3397
    %v6537 = vunpack.c.h.b16 %v3397
    %v6538 = vunpack.c.l.b16 %v3398
    %v6539 = vunpack.c.h.b16 %v3398
    %v6540 = vunpack.c.l.b16 %v3399
    %v6541 = vunpack.c.h.b16 %v3399
    %v6542 = vunpack.c.l.b16 %v3400
    %v6543 = vunpack.c.h.b16 %v3400
    %v6544 = vunpack.c.l.b16 %v3401
    %v6545 = vunpack.c.h.b16 %v3401
    %v6546 = vunpack.c.l.b16 %v3402
    %v6547 = vunpack.c.l.b16 %v3403
    %v6548 = vunpack.c.h.b16 %v3403
    %v6549 = vunpack.c.l.b16 %v3404
    %v6550 = vunpack.c.h.b16 %v3404
    %v6551 = vunpack.c.l.b16 %v3405
    %v6552 = vunpack.c.h.b16 %v3405
    %v6553 = vunpack.c.l.b16 %v3406
    %v6554 = vunpack.c.h.b16 %v3406
    %v6555 = vunpack.c.l.b16 %v3407
    %v6556 = vunpack.c.h.b16 %v3407
    %v6557 = vunpack.c.l.b16 %v3408
    %v6558 = vunpack.c.h.b16 %v3408
    %v6559 = vunpack.c.l.b16 %v3409
    %v6560 = vunpack.c.h.b16 %v3409
    %v6561 = vunpack.c.l.b16 %v3410
    %v6562 = vunpack.c.h.b16 %v3410
    %v6563 = vunpack.c.l.b16 %v3411
    %v6564 = vunpack.c.h.b16 %v3411
    %v6565 = vunpack.c.l.b16 %v3412
    %v6566 = vunpack.c.l.b16 %v3413
    %v6567 = vunpack.c.h.b16 %v3413
    %v6568 = vunpack.c.l.b16 %v3414
    %v6569 = vunpack.c.h.b16 %v3414
    %v6570 = vunpack.c.l.b16 %v3415
    %v6571 = vunpack.c.h.b16 %v3415
    %v6572 = vunpack.c.l.b16 %v3416
    %v6573 = vunpack.c.h.b16 %v3416
    %v6574 = vunpack.c.l.b16 %v3417
    %v6575 = vunpack.c.h.b16 %v3417
    %v6576 = vunpack.c.l.b16 %v3418
    %v6577 = vunpack.c.h.b16 %v3418
    %v6578 = vunpack.c.l.b16 %v3419
    %v6579 = vunpack.c.h.b16 %v3419
    %v6580 = vunpack.c.l.b16 %v3420
    %v6581 = vunpack.c.h.b16 %v3420
    %v6582 = vunpack.c.l.b16 %v3421
    %v6583 = vunpack.c.h.b16 %v3421
    %v6584 = vunpack.c.l.b16 %v3422
    %v6585 = vunpack.c.l.b16 %v3423
    %v6586 = vunpack.c.h.b16 %v3423
    %v6587 = vunpack.c.l.b16 %v3424
    %v6588 = vunpack.c.h.b16 %v3424
    %v6589 = vunpack.c.l.b16 %v3425
    %v6590 = vunpack.c.h.b16 %v3425
    %v6591 = vunpack.c.l.b16 %v3426
    %v6592 = vunpack.c.h.b16 %v3426
    %v6593 = vunpack.c.l.b16 %v3427
    %v6594 = vunpack.c.h.b16 %v3427
    %v6595 = vunpack.c.l.b16 %v3428
    %v6596 = vunpack.c.h.b16 %v3428
    %v6597 = vunpack.c.l.b16 %v3429
    %v6598 = vunpack.c.h.b16 %v3429
    %v6599 = vunpack.c.l.b16 %v3430
    %v6600 = vunpack.c.h.b16 %v3430
    %v6601 = vunpack.c.l.b16 %v3431
    %v6602 = vunpack.c.h.b16 %v3431
    %v6603 = vunpack.c.l.b16 %v3432
    %v6604 = vunpack.c.l.b16 %v3433
    %v6605 = vunpack.c.h.b16 %v3433
    %v6606 = vunpack.c.l.b16 %v3434
    %v6607 = vunpack.c.h.b16 %v3434
    %v6608 = vunpack.c.l.b16 %v3435
    %v6609 = vunpack.c.h.b16 %v3435
    %v6610 = vunpack.c.l.b16 %v3436
    %v6611 = vunpack.c.h.b16 %v3436
    %v6612 = vunpack.c.l.b16 %v3437
    %v6613 = vunpack.c.h.b16 %v3437
    %v6614 = vunpack.c.l.b16 %v3438
    %v6615 = vunpack.c.h.b16 %v3438
    %v6616 = vunpack.c.l.b16 %v3439
    %v6617 = vunpack.c.h.b16 %v3439
    %v6618 = vunpack.c.l.b16 %v3440
    %v6619 = vunpack.c.h.b16 %v3440
    %v6620 = vunpack.c.l.b16 %v3441
    %v6621 = vunpack.c.h.b16 %v3441
    %v6622 = vunpack.c.l.b16 %v3442
    %v6623 = vunpack.c.l.b16 %v3443
    %v6624 = vunpack.c.h.b16 %v3443
    %v6625 = vunpack.c.l.b16 %v3444
    %v6626 = vunpack.c.h.b16 %v3444
    %v6627 = vunpack.c.l.b16 %v3445
    %v6628 = vunpack.c.h.b16 %v3445
    %v6629 = vunpack.c.l.b16 %v3446
    %v6630 = vunpack.c.h.b16 %v3446
    %v6631 = vunpack.c.l.b16 %v3447
    %v6632 = vunpack.c.h.b16 %v3447
    %v6633 = vunpack.c.l.b16 %v3448
    %v6634 = vunpack.c.h.b16 %v3448
    %v6635 = vunpack.c.l.b16 %v3449
    %v6636 = vunpack.c.h.b16 %v3449
    %v6637 = vunpack.c.l.b16 %v3450
    %v6638 = vunpack.c.h.b16 %v3450
    %v6639 = vunpack.c.l.b16 %v3451
    %v6640 = vunpack.c.h.b16 %v3451
    %v6641 = vunpack.c.l.b16 %v3452
    %v6642 = vunpack.c.l.b16 %v3453
    %v6643 = vunpack.c.h.b16 %v3453
    %v6644 = vunpack.c.l.b16 %v3454
    %v6645 = vunpack.c.h.b16 %v3454
    %v6646 = vunpack.c.l.b16 %v3455
    %v6647 = vunpack.c.h.b16 %v3455
    %v6648 = vunpack.c.l.b16 %v3456
    %v6649 = vunpack.c.h.b16 %v3456
    %v6650 = vunpack.c.l.b16 %v3457
    %v6651 = vunpack.c.h.b16 %v3457
    %v6652 = vunpack.c.l.b16 %v3458
    %v6653 = vunpack.c.h.b16 %v3458
    %v6654 = vunpack.c.l.b16 %v3459
    %v6655 = vunpack.c.h.b16 %v3459
    %v6656 = vunpack.c.l.b16 %v3460
    %v6657 = vunpack.c.h.b16 %v3460
    %v6658 = vunpack.c.l.b16 %v3461
    %v6659 = vunpack.c.h.b16 %v3461
    %v6660 = vunpack.c.l.b16 %v3462
    %v6661 = vunpack.c.l.b16 %v3463
    %v6662 = vunpack.c.h.b16 %v3463
    %v6663 = vunpack.c.l.b16 %v3464
    %v6664 = vunpack.c.h.b16 %v3464
    %v6665 = vunpack.c.l.b16 %v3465
    %v6666 = vunpack.c.h.b16 %v3465
    %v6667 = vunpack.c.l.b16 %v3466
    %v6668 = vunpack.c.h.b16 %v3466
    %v6669 = vunpack.c.l.b16 %v3467
    %v6670 = vunpack.c.h.b16 %v3467
    %v6671 = vunpack.c.l.b16 %v3468
    %v6672 = vunpack.c.h.b16 %v3468
    %v6673 = vunpack.c.l.b16 %v3469
    %v6674 = vunpack.c.h.b16 %v3469
    %v6675 = vunpack.c.l.b16 %v3470
    %v6676 = vunpack.c.h.b16 %v3470
    %v6677 = vunpack.c.l.b16 %v3471
    %v6678 = vunpack.c.h.b16 %v3471
    %v6679 = vunpack.c.l.b16 %v3472
    %v6680 = vunpack.c.l.b16 %v3473
    %v6681 = vunpack.c.h.b16 %v3473
    %v6682 = vunpack.c.l.b16 %v3474
    %v6683 = vunpack.c.h.b16 %v3474
    %v6684 = vunpack.c.l.b16 %v3475
    %v6685 = vunpack.c.h.b16 %v3475
    %v6686 = vunpack.c.l.b16 %v3476
    %v6687 = vunpack.c.h.b16 %v3476
    %v6688 = vunpack.c.l.b16 %v3477
    %v6689 = vunpack.c.h.b16 %v3477
    %v6690 = vunpack.c.l.b16 %v3478
    %v6691 = vunpack.c.h.b16 %v3478
    %v6692 = vunpack.c.l.b16 %v3479
    %v6693 = vunpack.c.h.b16 %v3479
    %v6694 = vunpack.c.l.b16 %v3480
    %v6695 = vunpack.c.h.b16 %v3480
    %v6696 = vunpack.c.l.b16 %v3481
    %v6697 = vunpack.c.h.b16 %v3481
    %v6698 = vunpack.c.l.b16 %v3482
    %v6699 = vunpack.c.l.b16 %v3483
    %v6700 = vunpack.c.h.b16 %v3483
    %v6701 = vunpack.c.l.b16 %v3484
    %v6702 = vunpack.c.h.b16 %v3484
    %v6703 = vunpack.c.l.b16 %v3485
    %v6704 = vunpack.c.h.b16 %v3485
    %v6705 = vunpack.c.l.b16 %v3486
    %v6706 = vunpack.c.h.b16 %v3486
    %v6707 = vunpack.c.l.b16 %v3487
    %v6708 = vunpack.c.h.b16 %v3487
    %v6709 = vunpack.c.l.b16 %v3488
    %v6710 = vunpack.c.h.b16 %v3488
    %v6711 = vunpack.c.l.b16 %v3489
    %v6712 = vunpack.c.h.b16 %v3489
    %v6713 = vunpack.c.l.b16 %v3490
    %v6714 = vunpack.c.h.b16 %v3490
    %v6715 = vunpack.c.l.b16 %v3491
    %v6716 = vunpack.c.h.b16 %v3491
    %v6717 = vunpack.c.l.b16 %v3492
    %v6718 = vunpack.c.l.b16 %v3493
    %v6719 = vunpack.c.h.b16 %v3493
    %v6720 = vunpack.c.l.b16 %v3494
    %v6721 = vunpack.c.h.b16 %v3494
    %v6722 = vunpack.c.l.b16 %v3495
    %v6723 = vunpack.c.h.b16 %v3495
    %v6724 = vunpack.c.l.b16 %v3496
    %v6725 = vunpack.c.h.b16 %v3496
    %v6726 = vunpack.c.l.b16 %v3497
    %v6727 = vunpack.c.h.b16 %v3497
    %v6728 = vunpack.c.l.b16 %v3498
    %v6729 = vunpack.c.h.b16 %v3498
    %v6730 = vunpack.c.l.b16 %v3499
    %v6731 = vunpack.c.h.b16 %v3499
    %v6732 = vunpack.c.l.b16 %v3500
    %v6733 = vunpack.c.h.b16 %v3500
    %v6734 = vunpack.c.l.b16 %v3501
    %v6735 = vunpack.c.h.b16 %v3501
    %v6736 = vunpack.c.l.b16 %v3502
    %v6737 = vunpack.c.l.b16 %v3503
    %v6738 = vunpack.c.h.b16 %v3503
    %v6739 = vunpack.c.l.b16 %v3504
    %v6740 = vunpack.c.h.b16 %v3504
    %v6741 = vunpack.c.l.b16 %v3505
    %v6742 = vunpack.c.h.b16 %v3505
    %v6743 = vunpack.c.l.b16 %v3506
    %v6744 = vunpack.c.h.b16 %v3506
    %v6745 = vunpack.c.l.b16 %v3507
    %v6746 = vunpack.c.h.b16 %v3507
    %v6747 = vunpack.c.l.b16 %v3508
    %v6748 = vunpack.c.h.b16 %v3508
    %v6749 = vunpack.c.l.b16 %v3509
    %v6750 = vunpack.c.h.b16 %v3509
    %v6751 = vunpack.c.l.b16 %v3510
    %v6752 = vunpack.c.h.b16 %v3510
    %v6753 = vunpack.c.l.b16 %v3511
    %v6754 = vunpack.c.h.b16 %v3511
    %v6755 = vunpack.c.l.b16 %v3512
    %v6756 = vunpack.c.l.b16 %v3513
    %v6757 = vunpack.c.h.b16 %v3513
    %v6758 = vunpack.c.l.b16 %v3514
    %v6759 = vunpack.c.h.b16 %v3514
    %v6760 = vunpack.c.l.b16 %v3515
    %v6761 = vunpack.c.h.b16 %v3515
    %v6762 = vunpack.c.l.b16 %v3516
    %v6763 = vunpack.c.h.b16 %v3516
    %v6764 = vunpack.c.l.b16 %v3517
    %v6765 = vunpack.c.h.b16 %v3517
    %v6766 = vunpack.c.l.b16 %v3518
    %v6767 = vunpack.c.h.b16 %v3518
    %v6768 = vunpack.c.l.b16 %v3519
    %v6769 = vunpack.c.h.b16 %v3519
    %v6770 = vunpack.c.l.b16 %v3520
    %v6771 = vunpack.c.h.b16 %v3520
    %v6772 = vunpack.c.l.b16 %v3521
    %v6773 = vunpack.c.h.b16 %v3521
    %v6774 = vunpack.c.l.b16 %v3522
    %v6775 = vunpack.c.l.b16 %v3523
    %v6776 = vunpack.c.h.b16 %v3523
    %v6777 = vunpack.c.l.b16 %v3524
    %v6778 = vunpack.c.h.b16 %v3524
    %v6779 = vunpack.c.l.b16 %v3525
    %v6780 = vunpack.c.h.b16 %v3525
    %v6781 = vunpack.c.l.b16 %v3526
    %v6782 = vunpack.c.h.b16 %v3526
    %v6783 = vunpack.c.l.b16 %v3527
    %v6784 = vunpack.c.h.b16 %v3527
    %v6785 = vunpack.c.l.b16 %v3528
    %v6786 = vunpack.c.h.b16 %v3528
    %v6787 = vunpack.c.l.b16 %v3529
    %v6788 = vunpack.c.h.b16 %v3529
    %v6789 = vunpack.c.l.b16 %v3530
    %v6790 = vunpack.c.h.b16 %v3530
    %v6791 = vunpack.c.l.b16 %v3531
    %v6792 = vunpack.c.h.b16 %v3531
    %v6793 = vunpack.c.l.b16 %v3532
    %v6794 = vunpack.c.l.b16 %v3533
    %v6795 = vunpack.c.h.b16 %v3533
    %v6796 = vunpack.c.l.b16 %v3534
    %v6797 = vunpack.c.h.b16 %v3534
    %v6798 = vunpack.c.l.b16 %v3535
    %v6799 = vunpack.c.h.b16 %v3535
    %v6800 = vunpack.c.l.b16 %v3536
    %v6801 = vunpack.c.h.b16 %v3536
    %v6802 = vunpack.c.l.b16 %v3537
    %v6803 = vunpack.c.h.b16 %v3537
    %v6804 = vunpack.c.l.b16 %v3538
    %v6805 = vunpack.c.h.b16 %v3538
    %v6806 = vunpack.c.l.b16 %v3539
    %v6807 = vunpack.c.h.b16 %v3539
    %v6808 = vunpack.c.l.b16 %v3540
    %v6809 = vunpack.c.h.b16 %v3540
    %v6810 = vunpack.c.l.b16 %v3541
    %v6811 = vunpack.c.h.b16 %v3541
    %v6812 = vunpack.c.l.b16 %v3542
    %v6813 = vunpack.c.l.b16 %v3543
    %v6814 = vunpack.c.h.b16 %v3543
    %v6815 = vunpack.c.l.b16 %v3544
    %v6816 = vunpack.c.h.b16 %v3544
    %v6817 = vunpack.c.l.b16 %v3545
    %v6818 = vunpack.c.h.b16 %v3545
    %v6819 = vunpack.c.l.b16 %v3546
    %v6820 = vunpack.c.h.b16 %v3546
    %v6821 = vunpack.c.l.b16 %v3547
    %v6822 = vunpack.c.h.b16 %v3547
    %v6823 = vunpack.c.l.b16 %v3548
    %v6824 = vunpack.c.h.b16 %v3548
    %v6825 = vunpack.c.l.b16 %v3549
    %v6826 = vunpack.c.h.b16 %v3549
    %v6827 = vunpack.c.l.b16 %v3550
    %v6828 = vunpack.c.h.b16 %v3550
    %v6829 = vunpack.c.l.b16 %v3551
    %v6830 = vunpack.c.h.b16 %v3551
    %v6831 = vunpack.c.l.b16 %v3552
    %v6832 = vunpack.c.l.b16 %v3553
    %v6833 = vunpack.c.h.b16 %v3553
    %v6834 = vunpack.c.l.b16 %v3554
    %v6835 = vunpack.c.h.b16 %v3554
    %v6836 = vunpack.c.l.b16 %v3555
    %v6837 = vunpack.c.h.b16 %v3555
    %v6838 = vunpack.c.l.b16 %v3556
    %v6839 = vunpack.c.h.b16 %v3556
    %v6840 = vunpack.c.l.b16 %v3557
    %v6841 = vunpack.c.h.b16 %v3557
    %v6842 = vunpack.c.l.b16 %v3558
    %v6843 = vunpack.c.h.b16 %v3558
    %v6844 = vunpack.c.l.b16 %v3559
    %v6845 = vunpack.c.h.b16 %v3559
    %v6846 = vunpack.c.l.b16 %v3560
    %v6847 = vunpack.c.h.b16 %v3560
    %v6848 = vunpack.c.l.b16 %v3561
    %v6849 = vunpack.c.h.b16 %v3561
    %v6850 = vunpack.c.l.b16 %v3562
    %v6851 = vunpack.c.l.b16 %v3563
    %v6852 = vunpack.c.h.b16 %v3563
    %v6853 = vunpack.c.l.b16 %v3564
    %v6854 = vunpack.c.h.b16 %v3564
    %v6855 = vunpack.c.l.b16 %v3565
    %v6856 = vunpack.c.h.b16 %v3565
    %v6857 = vunpack.c.l.b16 %v3566
    %v6858 = vunpack.c.h.b16 %v3566
    %v6859 = vunpack.c.l.b16 %v3567
    %v6860 = vunpack.c.h.b16 %v3567
    %v6861 = vunpack.c.l.b16 %v3568
    %v6862 = vunpack.c.h.b16 %v3568
    %v6863 = vunpack.c.l.b16 %v3569
    %v6864 = vunpack.c.h.b16 %v3569
    %v6865 = vunpack.c.l.b16 %v3570
    %v6866 = vunpack.c.h.b16 %v3570
    %v6867 = vunpack.c.l.b16 %v3571
    %v6868 = vunpack.c.h.b16 %v3571
    %v6869 = vunpack.c.l.b16 %v3572
    %v6870 = vunpack.c.l.b16 %v3573
    %v6871 = vunpack.c.h.b16 %v3573
    %v6872 = vunpack.c.l.b16 %v3574
    %v6873 = vunpack.c.h.b16 %v3574
    %v6874 = vunpack.c.l.b16 %v3575
    %v6875 = vunpack.c.h.b16 %v3575
    %v6876 = vunpack.c.l.b16 %v3576
    %v6877 = vunpack.c.h.b16 %v3576
    %v6878 = vunpack.c.l.b16 %v3577
    %v6879 = vunpack.c.h.b16 %v3577
    %v6880 = vunpack.c.l.b16 %v3578
    %v6881 = vunpack.c.h.b16 %v3578
    %v6882 = vunpack.c.l.b16 %v3579
    %v6883 = vunpack.c.h.b16 %v3579
    %v6884 = vunpack.c.l.b16 %v3580
    %v6885 = vunpack.c.h.b16 %v3580
    %v6886 = vunpack.c.l.b16 %v3581
    %v6887 = vunpack.c.h.b16 %v3581
    %v6888 = vunpack.c.l.b16 %v3582
    %v6889 = vunpack.c.l.b16 %v3583
    %v6890 = vunpack.c.h.b16 %v3583
    %v6891 = vunpack.c.l.b16 %v3584
    %v6892 = vunpack.c.h.b16 %v3584
    %v6893 = vunpack.c.l.b16 %v3585
    %v6894 = vunpack.c.h.b16 %v3585
    %v6895 = vunpack.c.l.b16 %v3586
    %v6896 = vunpack.c.h.b16 %v3586
    %v6897 = vunpack.c.l.b16 %v3587
    %v6898 = vunpack.c.h.b16 %v3587
    %v6899 = vunpack.c.l.b16 %v3588
    %v6900 = vunpack.c.h.b16 %v3588
    %v6901 = vunpack.c.l.b16 %v3589
    %v6902 = vunpack.c.h.b16 %v3589
    %v6903 = vunpack.c.l.b16 %v3590
    %v6904 = vunpack.c.h.b16 %v3590
    %v6905 = vunpack.c.l.b16 %v3591
    %v6906 = vunpack.c.h.b16 %v3591
    %v6907 = vunpack.c.l.b16 %v3592
    %v6908 = vunpack.c.l.b16 %v3593
    %v6909 = vunpack.c.h.b16 %v3593
    %v6910 = vunpack.c.l.b16 %v3594
    %v6911 = vunpack.c.h.b16 %v3594
    %v6912 = vunpack.c.l.b16 %v3595
    %v6913 = vunpack.c.h.b16 %v3595
    %v6914 = vunpack.c.l.b16 %v3596
    %v6915 = vunpack.c.h.b16 %v3596
    %v6916 = vunpack.c.l.b16 %v3597
    %v6917 = vunpack.c.h.b16 %v3597
    %v6918 = vunpack.c.l.b16 %v3598
    %v6919 = vunpack.c.h.b16 %v3598
    %v6920 = vunpack.c.l.b16 %v3599
    %v6921 = vunpack.c.h.b16 %v3599
    %v6922 = vunpack.c.l.b16 %v3600
    %v6923 = vunpack.c.h.b16 %v3600
    %v6924 = vunpack.c.l.b16 %v3601
    %v6925 = vunpack.c.h.b16 %v3601
    %v6926 = vunpack.c.l.b16 %v3602
    %v6927 = vunpack.c.l.b16 %v3603
    %v6928 = vunpack.c.h.b16 %v3603
    %v6929 = vunpack.c.l.b16 %v3604
    %v6930 = vunpack.c.h.b16 %v3604
    %v6931 = vunpack.c.l.b16 %v3605
    %v6932 = vunpack.c.h.b16 %v3605
    %v6933 = vunpack.c.l.b16 %v3606
    %v6934 = vunpack.c.h.b16 %v3606
    %v6935 = vunpack.c.l.b16 %v3607
    %v6936 = vunpack.c.h.b16 %v3607
    %v6937 = vunpack.c.l.b16 %v3608
    %v6938 = vunpack.c.h.b16 %v3608
    %v6939 = vunpack.c.l.b16 %v3609
    %v6940 = vunpack.c.h.b16 %v3609
    %v6941 = vunpack.c.l.b16 %v3610
    %v6942 = vunpack.c.h.b16 %v3610
    %v6943 = vunpack.c.l.b16 %v3611
    %v6944 = vunpack.c.h.b16 %v3611
    %v6945 = vunpack.c.l.b16 %v3612
    %v6946 = vunpack.c.l.b16 %v3613
    %v6947 = vunpack.c.h.b16 %v3613
    %v6948 = vunpack.c.l.b16 %v3614
    %v6949 = vunpack.c.h.b16 %v3614
    %v6950 = vunpack.c.l.b16 %v3615
    %v6951 = vunpack.c.h.b16 %v3615
    %v6952 = vunpack.c.l.b16 %v3616
    %v6953 = vunpack.c.h.b16 %v3616
    %v6954 = vunpack.c.l.b16 %v3617
    %v6955 = vunpack.c.h.b16 %v3617
    %v6956 = vunpack.c.l.b16 %v3618
    %v6957 = vunpack.c.h.b16 %v3618
    %v6958 = vunpack.c.l.b16 %v3619
    %v6959 = vunpack.c.h.b16 %v3619
    %v6960 = vunpack.c.l.b16 %v3620
    %v6961 = vunpack.c.h.b16 %v3620
    %v6962 = vunpack.c.l.b16 %v3621
    %v6963 = vunpack.c.h.b16 %v3621
    %v6964 = vunpack.c.l.b16 %v3622
    %v6965 = vunpack.c.l.b16 %v3623
    %v6966 = vunpack.c.h.b16 %v3623
    %v6967 = vunpack.c.l.b16 %v3624
    %v6968 = vunpack.c.h.b16 %v3624
    %v6969 = vunpack.c.l.b16 %v3625
    %v6970 = vunpack.c.h.b16 %v3625
    %v6971 = vunpack.c.l.b16 %v3626
    %v6972 = vunpack.c.h.b16 %v3626
    %v6973 = vunpack.c.l.b16 %v3627
    %v6974 = vunpack.c.h.b16 %v3627
    %v6975 = vunpack.c.l.b16 %v3628
    %v6976 = vunpack.c.h.b16 %v3628
    %v6977 = vunpack.c.l.b16 %v3629
    %v6978 = vunpack.c.h.b16 %v3629
    %v6979 = vunpack.c.l.b16 %v3630
    %v6980 = vunpack.c.h.b16 %v3630
    %v6981 = vunpack.c.l.b16 %v3631
    %v6982 = vunpack.c.h.b16 %v3631
    %v6983 = vunpack.c.l.b16 %v3632
    %v6984 = vunpack.c.l.b16 %v3633
    %v6985 = vunpack.c.h.b16 %v3633
    %v6986 = vunpack.c.l.b16 %v3634
    %v6987 = vunpack.c.h.b16 %v3634
    %v6988 = vunpack.c.l.b16 %v3635
    %v6989 = vunpack.c.h.b16 %v3635
    %v6990 = vunpack.c.l.b16 %v3636
    %v6991 = vunpack.c.h.b16 %v3636
    %v6992 = vunpack.c.l.b16 %v3637
    %v6993 = vunpack.c.h.b16 %v3637
    %v6994 = vunpack.c.l.b16 %v3638
    %v6995 = vunpack.c.h.b16 %v3638
    %v6996 = vunpack.c.l.b16 %v3639
    %v6997 = vunpack.c.h.b16 %v3639
    %v6998 = vunpack.c.l.b16 %v3640
    %v6999 = vunpack.c.h.b16 %v3640
    %v7000 = vunpack.c.l.b16 %v3641
    %v7001 = vunpack.c.h.b16 %v3641
    %v7002 = vunpack.c.l.b16 %v3642
    %v7003 = vunpack.c.l.b16 %v3643
    %v7004 = vunpack.c.h.b16 %v3643
    %v7005 = vunpack.c.l.b16 %v3644
    %v7006 = vunpack.c.h.b16 %v3644
    %v7007 = vunpack.c.l.b16 %v3645
    %v7008 = vunpack.c.h.b16 %v3645
    %v7009 = vunpack.c.l.b16 %v3646
    %v7010 = vunpack.c.h.b16 %v3646
    %v7011 = vunpack.c.l.b16 %v3647
    %v7012 = vunpack.c.h.b16 %v3647
    %v7013 = vunpack.c.l.b16 %v3648
    %v7014 = vunpack.c.h.b16 %v3648
    %v7015 = vunpack.c.l.b16 %v3649
    %v7016 = vunpack.c.h.b16 %v3649
    %v7017 = vunpack.c.l.b16 %v3650
    %v7018 = vunpack.c.h.b16 %v3650
    %v7019 = vunpack.c.l.b16 %v3651
    %v7020 = vunpack.c.h.b16 %v3651
    %v7021 = vunpack.c.l.b16 %v3652
    %v7022 = vunpack.c.l.b16 %v3653
    %v7023 = vunpack.c.h.b16 %v3653
    %v7024 = vunpack.c.l.b16 %v3654
    %v7025 = vunpack.c.h.b16 %v3654
    %v7026 = vunpack.c.l.b16 %v3655
    %v7027 = vunpack.c.h.b16 %v3655
    %v7028 = vunpack.c.l.b16 %v3656
    %v7029 = vunpack.c.h.b16 %v3656
    %v7030 = vunpack.c.l.b16 %v3657
    %v7031 = vunpack.c.h.b16 %v3657
    %v7032 = vunpack.c.l.b16 %v3658
    %v7033 = vunpack.c.h.b16 %v3658
    %v7034 = vunpack.c.l.b16 %v3659
    %v7035 = vunpack.c.h.b16 %v3659
    %v7036 = vunpack.c.l.b16 %v3660
    %v7037 = vunpack.c.h.b16 %v3660
    %v7038 = vunpack.c.l.b16 %v3661
    %v7039 = vunpack.c.h.b16 %v3661
    %v7040 = vunpack.c.l.b16 %v3662
    %v7041 = vunpack.c.l.b16 %v3663
    %v7042 = vunpack.c.h.b16 %v3663
    %v7043 = vunpack.c.l.b16 %v3664
    %v7044 = vunpack.c.h.b16 %v3664
    %v7045 = vunpack.c.l.b16 %v3665
    %v7046 = vunpack.c.h.b16 %v3665
    %v7047 = vunpack.c.l.b16 %v3666
    %v7048 = vunpack.c.h.b16 %v3666
    %v7049 = vunpack.c.l.b16 %v3667
    %v7050 = vunpack.c.h.b16 %v3667
    %v7051 = vunpack.c.l.b16 %v3668
    %v7052 = vunpack.c.h.b16 %v3668
    %v7053 = vunpack.c.l.b16 %v3669
    %v7054 = vunpack.c.h.b16 %v3669
    %v7055 = vunpack.c.l.b16 %v3670
    %v7056 = vunpack.c.h.b16 %v3670
    %v7057 = vunpack.c.l.b16 %v3671
    %v7058 = vunpack.c.h.b16 %v3671
    %v7059 = vunpack.c.l.b16 %v3672
    %v7060 = vunpack.c.l.b16 %v3673
    %v7061 = vunpack.c.h.b16 %v3673
    %v7062 = vunpack.c.l.b16 %v3674
    %v7063 = vunpack.c.h.b16 %v3674
    %v7064 = vunpack.c.l.b16 %v3675
    %v7065 = vunpack.c.h.b16 %v3675
    %v7066 = vunpack.c.l.b16 %v3676
    %v7067 = vunpack.c.h.b16 %v3676
    %v7068 = vunpack.c.l.b16 %v3677
    %v7069 = vunpack.c.h.b16 %v3677
    %v7070 = vunpack.c.l.b16 %v3678
    %v7071 = vunpack.c.h.b16 %v3678
    %v7072 = vunpack.c.l.b16 %v3679
    %v7073 = vunpack.c.h.b16 %v3679
    %v7074 = vunpack.c.l.b16 %v3680
    %v7075 = vunpack.c.h.b16 %v3680
    %v7076 = vunpack.c.l.b16 %v3681
    %v7077 = vunpack.c.h.b16 %v3681
    %v7078 = vunpack.c.l.b16 %v3682
    %v7079 = vunpack.c.l.b16 %v3683
    %v7080 = vunpack.c.h.b16 %v3683
    %v7081 = vunpack.c.l.b16 %v3684
    %v7082 = vunpack.c.h.b16 %v3684
    %v7083 = vunpack.c.l.b16 %v3685
    %v7084 = vunpack.c.h.b16 %v3685
    %v7085 = vunpack.c.l.b16 %v3686
    %v7086 = vunpack.c.h.b16 %v3686
    %v7087 = vunpack.c.l.b16 %v3687
    %v7088 = vunpack.c.h.b16 %v3687
    %v7089 = vunpack.c.l.b16 %v3688
    %v7090 = vunpack.c.h.b16 %v3688
    %v7091 = vunpack.c.l.b16 %v3689
    %v7092 = vunpack.c.h.b16 %v3689
    %v7093 = vunpack.c.l.b16 %v3690
    %v7094 = vunpack.c.h.b16 %v3690
    %v7095 = vunpack.c.l.b16 %v3691
    %v7096 = vunpack.c.h.b16 %v3691
    %v7097 = vunpack.c.l.b16 %v3692
    %v7098 = vunpack.c.l.b16 %v3693
    %v7099 = vunpack.c.h.b16 %v3693
    %v7100 = vunpack.c.l.b16 %v3694
    %v7101 = vunpack.c.h.b16 %v3694
    %v7102 = vunpack.c.l.b16 %v3695
    %v7103 = vunpack.c.h.b16 %v3695
    %v7104 = vunpack.c.l.b16 %v3696
    %v7105 = vunpack.c.h.b16 %v3696
    %v7106 = vunpack.c.l.b16 %v3697
    %v7107 = vunpack.c.h.b16 %v3697
    %v7108 = vunpack.c.l.b16 %v3698
    %v7109 = vunpack.c.h.b16 %v3698
    %v7110 = vunpack.c.l.b16 %v3699
    %v7111 = vunpack.c.h.b16 %v3699
    %v7112 = vunpack.c.l.b16 %v3700
    %v7113 = vunpack.c.h.b16 %v3700
    %v7114 = vunpack.c.l.b16 %v3701
    %v7115 = vunpack.c.h.b16 %v3701
    %v7116 = vunpack.c.l.b16 %v3702
    %v7117 = vunpack.c.l.b16 %v3703
    %v7118 = vunpack.c.h.b16 %v3703
    %v7119 = vunpack.c.l.b16 %v3704
    %v7120 = vunpack.c.h.b16 %v3704
    %v7121 = vunpack.c.l.b16 %v3705
    %v7122 = vunpack.c.h.b16 %v3705
    %v7123 = vunpack.c.l.b16 %v3706
    %v7124 = vunpack.c.h.b16 %v3706
    %v7125 = vunpack.c.l.b16 %v3707
    %v7126 = vunpack.c.h.b16 %v3707
    %v7127 = vunpack.c.l.b16 %v3708
    %v7128 = vunpack.c.h.b16 %v3708
    %v7129 = vunpack.c.l.b16 %v3709
    %v7130 = vunpack.c.h.b16 %v3709
    %v7131 = vunpack.c.l.b16 %v3710
    %v7132 = vunpack.c.h.b16 %v3710
    %v7133 = vunpack.c.l.b16 %v3711
    %v7134 = vunpack.c.h.b16 %v3711
    %v7135 = vunpack.c.l.b16 %v3712
    %v7136 = vunpack.c.l.b16 %v3713
    %v7137 = vunpack.c.h.b16 %v3713
    %v7138 = vunpack.c.l.b16 %v3714
    %v7139 = vunpack.c.h.b16 %v3714
    %v7140 = vunpack.c.l.b16 %v3715
    %v7141 = vunpack.c.h.b16 %v3715
    %v7142 = vunpack.c.l.b16 %v3716
    %v7143 = vunpack.c.h.b16 %v3716
    %v7144 = vunpack.c.l.b16 %v3717
    %v7145 = vunpack.c.h.b16 %v3717
    %v7146 = vunpack.c.l.b16 %v3718
    %v7147 = vunpack.c.h.b16 %v3718
    %v7148 = vunpack.c.l.b16 %v3719
    %v7149 = vunpack.c.h.b16 %v3719
    %v7150 = vunpack.c.l.b16 %v3720
    %v7151 = vunpack.c.h.b16 %v3720
    %v7152 = vunpack.c.l.b16 %v3721
    %v7153 = vunpack.c.h.b16 %v3721
    %v7154 = vunpack.c.l.b16 %v3722
    %v7155 = vunpack.c.l.b16 %v3723
    %v7156 = vunpack.c.h.b16 %v3723
    %v7157 = vunpack.c.l.b16 %v3724
    %v7158 = vunpack.c.h.b16 %v3724
    %v7159 = vunpack.c.l.b16 %v3725
    %v7160 = vunpack.c.h.b16 %v3725
    %v7161 = vunpack.c.l.b16 %v3726
    %v7162 = vunpack.c.h.b16 %v3726
    %v7163 = vunpack.c.l.b16 %v3727
    %v7164 = vunpack.c.h.b16 %v3727
    %v7165 = vunpack.c.l.b16 %v3728
    %v7166 = vunpack.c.h.b16 %v3728
    %v7167 = vunpack.c.l.b16 %v3729
    %v7168 = vunpack.c.h.b16 %v3729
    %v7169 = vunpack.c.l.b16 %v3730
    %v7170 = vunpack.c.h.b16 %v3730
    %v7171 = vunpack.c.l.b16 %v3731
    %v7172 = vunpack.c.h.b16 %v3731
    %v7173 = vunpack.c.l.b16 %v3732
    %v7174 = vunpack.c.l.b16 %v3733
    %v7175 = vunpack.c.h.b16 %v3733
    %v7176 = vunpack.c.l.b16 %v3734
    %v7177 = vunpack.c.h.b16 %v3734
    %v7178 = vunpack.c.l.b16 %v3735
    %v7179 = vunpack.c.h.b16 %v3735
    %v7180 = vunpack.c.l.b16 %v3736
    %v7181 = vunpack.c.h.b16 %v3736
    %v7182 = vunpack.c.l.b16 %v3737
    %v7183 = vunpack.c.h.b16 %v3737
    %v7184 = vunpack.c.l.b16 %v3738
    %v7185 = vunpack.c.h.b16 %v3738
    %v7186 = vunpack.c.l.b16 %v3739
    %v7187 = vunpack.c.h.b16 %v3739
    %v7188 = vunpack.c.l.b16 %v3740
    %v7189 = vunpack.c.h.b16 %v3740
    %v7190 = vunpack.c.l.b16 %v3741
    %v7191 = vunpack.c.h.b16 %v3741
    %v7192 = vunpack.c.l.b16 %v3742
    %v7193 = vunpack.c.l.b16 %v3743
    %v7194 = vunpack.c.h.b16 %v3743
    %v7195 = vunpack.c.l.b16 %v3744
    %v7196 = vunpack.c.h.b16 %v3744
    %v7197 = vunpack.c.l.b16 %v3745
    %v7198 = vunpack.c.h.b16 %v3745
    %v7199 = vunpack.c.l.b16 %v3746
    %v7200 = vunpack.c.h.b16 %v3746
    %v7201 = vunpack.c.l.b16 %v3747
    %v7202 = vunpack.c.h.b16 %v3747
    %v7203 = vunpack.c.l.b16 %v3748
    %v7204 = vunpack.c.h.b16 %v3748
    %v7205 = vunpack.c.l.b16 %v3749
    %v7206 = vunpack.c.h.b16 %v3749
    %v7207 = vunpack.c.l.b16 %v3750
    %v7208 = vunpack.c.h.b16 %v3750
    %v7209 = vunpack.c.l.b16 %v3751
    %v7210 = vunpack.c.h.b16 %v3751
    %v7211 = vunpack.c.l.b16 %v3752
    %v7212 = vunpack.c.l.b16 %v3753
    %v7213 = vunpack.c.h.b16 %v3753
    %v7214 = vunpack.c.l.b16 %v3754
    %v7215 = vunpack.c.h.b16 %v3754
    %v7216 = vunpack.c.l.b16 %v3755
    %v7217 = vunpack.c.h.b16 %v3755
    %v7218 = vunpack.c.l.b16 %v3756
    %v7219 = vunpack.c.h.b16 %v3756
    %v7220 = vunpack.c.l.b16 %v3757
    %v7221 = vunpack.c.h.b16 %v3757
    %v7222 = vunpack.c.l.b16 %v3758
    %v7223 = vunpack.c.h.b16 %v3758
    %v7224 = vunpack.c.l.b16 %v3759
    %v7225 = vunpack.c.h.b16 %v3759
    %v7226 = vunpack.c.l.b16 %v3760
    %v7227 = vunpack.c.h.b16 %v3760
    %v7228 = vunpack.c.l.b16 %v3761
    %v7229 = vunpack.c.h.b16 %v3761
    %v7230 = vunpack.c.l.b16 %v3762
    %v7231 = vunpack.c.l.b16 %v3763
    %v7232 = vunpack.c.h.b16 %v3763
    %v7233 = vunpack.c.l.b16 %v3764
    %v7234 = vunpack.c.h.b16 %v3764
    %v7235 = vunpack.c.l.b16 %v3765
    %v7236 = vunpack.c.h.b16 %v3765
    %v7237 = vunpack.c.l.b16 %v3766
    %v7238 = vunpack.c.h.b16 %v3766
    %v7239 = vunpack.c.l.b16 %v3767
    %v7240 = vunpack.c.h.b16 %v3767
    %v7241 = vunpack.c.l.b16 %v3768
    %v7242 = vunpack.c.h.b16 %v3768
    %v7243 = vunpack.c.l.b16 %v3769
    %v7244 = vunpack.c.h.b16 %v3769
    %v7245 = vunpack.c.l.b16 %v3770
    %v7246 = vunpack.c.h.b16 %v3770
    %v7247 = vunpack.c.l.b16 %v3771
    %v7248 = vunpack.c.h.b16 %v3771
    %v7249 = vunpack.c.l.b16 %v3772
    %v7250 = vunpack.c.l.b16 %v3773
    %v7251 = vunpack.c.h.b16 %v3773
    %v7252 = vunpack.c.l.b16 %v3774
    %v7253 = vunpack.c.h.b16 %v3774
    %v7254 = vunpack.c.l.b16 %v3775
    %v7255 = vunpack.c.h.b16 %v3775
    %v7256 = vunpack.c.l.b16 %v3776
    %v7257 = vunpack.c.h.b16 %v3776
    %v7258 = vunpack.c.l.b16 %v3777
    %v7259 = vunpack.c.h.b16 %v3777
    %v7260 = vunpack.c.l.b16 %v3778
    %v7261 = vunpack.c.h.b16 %v3778
    %v7262 = vunpack.c.l.b16 %v3779
    %v7263 = vunpack.c.h.b16 %v3779
    %v7264 = vunpack.c.l.b16 %v3780
    %v7265 = vunpack.c.h.b16 %v3780
    %v7266 = vunpack.c.l.b16 %v3781
    %v7267 = vunpack.c.h.b16 %v3781
    %v7268 = vunpack.c.l.b16 %v3782
    %v7269 = vunpack.c.l.b16 %v3783
    %v7270 = vunpack.c.h.b16 %v3783
    %v7271 = vunpack.c.l.b16 %v3784
    %v7272 = vunpack.c.h.b16 %v3784
    %v7273 = vunpack.c.l.b16 %v3785
    %v7274 = vunpack.c.h.b16 %v3785
    %v7275 = vunpack.c.l.b16 %v3786
    %v7276 = vunpack.c.h.b16 %v3786
    %v7277 = vunpack.c.l.b16 %v3787
    %v7278 = vunpack.c.h.b16 %v3787
    %v7279 = vunpack.c.l.b16 %v3788
    %v7280 = vunpack.c.h.b16 %v3788
    %v7281 = vunpack.c.l.b16 %v3789
    %v7282 = vunpack.c.h.b16 %v3789
    %v7283 = vunpack.c.l.b16 %v3790
    %v7284 = vunpack.c.h.b16 %v3790
    %v7285 = vunpack.c.l.b16 %v3791
    %v7286 = vunpack.c.h.b16 %v3791
    %v7287 = vunpack.c.l.b16 %v3792
    %v7288 = vunpack.c.l.b16 %v3793
    %v7289 = vunpack.c.h.b16 %v3793
    %v7290 = vunpack.c.l.b16 %v3794
    %v7291 = vunpack.c.h.b16 %v3794
    %v7292 = vunpack.c.l.b16 %v3795
    %v7293 = vunpack.c.h.b16 %v3795
    %v7294 = vunpack.c.l.b16 %v3796
    %v7295 = vunpack.c.h.b16 %v3796
    %v7296 = vunpack.c.l.b16 %v3797
    %v7297 = vunpack.c.h.b16 %v3797
    %v7298 = vunpack.c.l.b16 %v3798
    %v7299 = vunpack.c.h.b16 %v3798
    %v7300 = vunpack.c.l.b16 %v3799
    %v7301 = vunpack.c.h.b16 %v3799
    %v7302 = vunpack.c.l.b16 %v3800
    %v7303 = vunpack.c.h.b16 %v3800
    %v7304 = vunpack.c.l.b16 %v3801
    %v7305 = vunpack.c.h.b16 %v3801
    %v7306 = vunpack.c.l.b16 %v3802
    %v7307 = vunpack.c.l.b16 %v3803
    %v7308 = vunpack.c.h.b16 %v3803
    %v7309 = vunpack.c.l.b16 %v3804
    %v7310 = vunpack.c.h.b16 %v3804
    %v7311 = vunpack.c.l.b16 %v3805
    %v7312 = vunpack.c.h.b16 %v3805
    %v7313 = vunpack.c.l.b16 %v3806
    %v7314 = vunpack.c.h.b16 %v3806
    %v7315 = vunpack.c.l.b16 %v3807
    %v7316 = vunpack.c.h.b16 %v3807
    %v7317 = vunpack.c.l.b16 %v3808
    %v7318 = vunpack.c.h.b16 %v3808
    %v7319 = vunpack.c.l.b16 %v3809
    %v7320 = vunpack.c.h.b16 %v3809
    %v7321 = vunpack.c.l.b16 %v3810
    %v7322 = vunpack.c.h.b16 %v3810
    %v7323 = vunpack.c.l.b16 %v3811
    %v7324 = vunpack.c.h.b16 %v3811
    %v7325 = vunpack.c.l.b16 %v3812
    %v7326 = vunpack.c.l.b16 %v3813
    %v7327 = vunpack.c.h.b16 %v3813
    %v7328 = vunpack.c.l.b16 %v3814
    %v7329 = vunpack.c.h.b16 %v3814
    %v7330 = vunpack.c.l.b16 %v3815
    %v7331 = vunpack.c.h.b16 %v3815
    %v7332 = vunpack.c.l.b16 %v3816
    %v7333 = vunpack.c.h.b16 %v3816
    %v7334 = vunpack.c.l.b16 %v3817
    %v7335 = vunpack.c.h.b16 %v3817
    %v7336 = vunpack.c.l.b16 %v3818
    %v7337 = vunpack.c.h.b16 %v3818
    %v7338 = vunpack.c.l.b16 %v3819
    %v7339 = vunpack.c.h.b16 %v3819
    %v7340 = vunpack.c.l.b16 %v3820
    %v7341 = vunpack.c.h.b16 %v3820
    %v7342 = vunpack.c.l.b16 %v3821
    %v7343 = vunpack.c.h.b16 %v3821
    %v7344 = vunpack.c.l.b16 %v3822
    %v7345 = vunpack.c.l.b16 %v3823
    %v7346 = vunpack.c.h.b16 %v3823
    %v7347 = vunpack.c.l.b16 %v3824
    %v7348 = vunpack.c.h.b16 %v3824
    %v7349 = vunpack.c.l.b16 %v3825
    %v7350 = vunpack.c.h.b16 %v3825
    %v7351 = vunpack.c.l.b16 %v3826
    %v7352 = vunpack.c.h.b16 %v3826
    %v7353 = vunpack.c.l.b16 %v3827
    %v7354 = vunpack.c.h.b16 %v3827
    %v7355 = vunpack.c.l.b16 %v3828
    %v7356 = vunpack.c.h.b16 %v3828
    %v7357 = vunpack.c.l.b16 %v3829
    %v7358 = vunpack.c.h.b16 %v3829
    %v7359 = vunpack.c.l.b16 %v3830
    %v7360 = vunpack.c.h.b16 %v3830
    %v7361 = vunpack.c.l.b16 %v3831
    %v7362 = vunpack.c.h.b16 %v3831
    %v7363 = vunpack.c.l.b16 %v3832
    %v7364 = vunpack.c.l.b16 %v3833
    %v7365 = vunpack.c.h.b16 %v3833
    %v7366 = vunpack.c.l.b16 %v3834
    %v7367 = vunpack.c.h.b16 %v3834
    %v7368 = vunpack.c.l.b16 %v3835
    %v7369 = vunpack.c.h.b16 %v3835
    %v7370 = vunpack.c.l.b16 %v3836
    %v7371 = vunpack.c.h.b16 %v3836
    %v7372 = vunpack.c.l.b16 %v3837
    %v7373 = vunpack.c.h.b16 %v3837
    %v7374 = vunpack.c.l.b16 %v3838
    %v7375 = vunpack.c.h.b16 %v3838
    %v7376 = vunpack.c.l.b16 %v3839
    %v7377 = vunpack.c.h.b16 %v3839
    %v7378 = vunpack.c.l.b16 %v3840
    %v7379 = vunpack.c.h.b16 %v3840
    %v7380 = vunpack.c.l.b16 %v3841
    %v7381 = vunpack.c.h.b16 %v3841
    %v7382 = vunpack.c.l.b16 %v3842
    %v7383 = vunpack.c.l.b16 %v3843
    %v7384 = vunpack.c.h.b16 %v3843
    %v7385 = vunpack.c.l.b16 %v3844
    %v7386 = vunpack.c.h.b16 %v3844
    %v7387 = vunpack.c.l.b16 %v3845
    %v7388 = vunpack.c.h.b16 %v3845
    %v7389 = vunpack.c.l.b16 %v3846
    %v7390 = vunpack.c.h.b16 %v3846
    %v7391 = vunpack.c.l.b16 %v3847
    %v7392 = vunpack.c.h.b16 %v3847
    %v7393 = vunpack.c.l.b16 %v3848
    %v7394 = vunpack.c.h.b16 %v3848
    %v7395 = vunpack.c.l.b16 %v3849
    %v7396 = vunpack.c.h.b16 %v3849
    %v7397 = vunpack.c.l.b16 %v3850
    %v7398 = vunpack.c.h.b16 %v3850
    %v7399 = vunpack.c.l.b16 %v3851
    %v7400 = vunpack.c.h.b16 %v3851
    %v7401 = vunpack.c.l.b16 %v3852
    %v7402 = vunpack.c.l.b16 %v3853
    %v7403 = vunpack.c.h.b16 %v3853
    %v7404 = vunpack.c.l.b16 %v3854
    %v7405 = vunpack.c.h.b16 %v3854
    %v7406 = vunpack.c.l.b16 %v3855
    %v7407 = vunpack.c.h.b16 %v3855
    %v7408 = vunpack.c.l.b16 %v3856
    %v7409 = vunpack.c.h.b16 %v3856
    %v7410 = vunpack.c.l.b16 %v3857
    %v7411 = vunpack.c.h.b16 %v3857
    %v7412 = vunpack.c.l.b16 %v3858
    %v7413 = vunpack.c.h.b16 %v3858
    %v7414 = vunpack.c.l.b16 %v3859
    %v7415 = vunpack.c.h.b16 %v3859
    %v7416 = vunpack.c.l.b16 %v3860
    %v7417 = vunpack.c.h.b16 %v3860
    %v7418 = vunpack.c.l.b16 %v3861
    %v7419 = vunpack.c.h.b16 %v3861
    %v7420 = vunpack.c.l.b16 %v3862
    %v7421 = vunpack.c.l.b16 %v3863
    %v7422 = vunpack.c.h.b16 %v3863
    %v7423 = vunpack.c.l.b16 %v3864
    %v7424 = vunpack.c.h.b16 %v3864
    %v7425 = vunpack.c.l.b16 %v3865
    %v7426 = vunpack.c.h.b16 %v3865
    %v7427 = vunpack.c.l.b16 %v3866
    %v7428 = vunpack.c.h.b16 %v3866
    %v7429 = vunpack.c.l.b16 %v3867
    %v7430 = vunpack.c.h.b16 %v3867
    %v7431 = vunpack.c.l.b16 %v3868
    %v7432 = vunpack.c.h.b16 %v3868
    %v7433 = vunpack.c.l.b16 %v3869
    %v7434 = vunpack.c.h.b16 %v3869
    %v7435 = vunpack.c.l.b16 %v3870
    %v7436 = vunpack.c.h.b16 %v3870
    %v7437 = vunpack.c.l.b16 %v3871
    %v7438 = vunpack.c.h.b16 %v3871
    %v7439 = vunpack.c.l.b16 %v3872
    %v7440 = vunpack.c.l.b16 %v3873
    %v7441 = vunpack.c.h.b16 %v3873
    %v7442 = vunpack.c.l.b16 %v3874
    %v7443 = vunpack.c.h.b16 %v3874
    %v7444 = vunpack.c.l.b16 %v3875
    %v7445 = vunpack.c.h.b16 %v3875
    %v7446 = vunpack.c.l.b16 %v3876
    %v7447 = vunpack.c.h.b16 %v3876
    %v7448 = vunpack.c.l.b16 %v3877
    %v7449 = vunpack.c.h.b16 %v3877
    %v7450 = vunpack.c.l.b16 %v3878
    %v7451 = vunpack.c.h.b16 %v3878
    %v7452 = vunpack.c.l.b16 %v3879
    %v7453 = vunpack.c.h.b16 %v3879
    %v7454 = vunpack.c.l.b16 %v3880
    %v7455 = vunpack.c.h.b16 %v3880
    %v7456 = vunpack.c.l.b16 %v3881
    %v7457 = vunpack.c.h.b16 %v3881
    %v7458 = vunpack.c.l.b16 %v3882
    %v7459 = vunpack.c.l.b16 %v3883
    %v7460 = vunpack.c.h.b16 %v3883
    %v7461 = vunpack.c.l.b16 %v3884
    %v7462 = vunpack.c.h.b16 %v3884
    %v7463 = vunpack.c.l.b16 %v3885
    %v7464 = vunpack.c.h.b16 %v3885
    %v7465 = vunpack.c.l.b16 %v3886
    %v7466 = vunpack.c.h.b16 %v3886
    %v7467 = vunpack.c.l.b16 %v3887
    %v7468 = vunpack.c.h.b16 %v3887
    %v7469 = vunpack.c.l.b16 %v3888
    %v7470 = vunpack.c.h.b16 %v3888
    %v7471 = vunpack.c.l.b16 %v3889
    %v7472 = vunpack.c.h.b16 %v3889
    %v7473 = vunpack.c.l.b16 %v3890
    %v7474 = vunpack.c.h.b16 %v3890
    %v7475 = vunpack.c.l.b16 %v3891
    %v7476 = vunpack.c.h.b16 %v3891
    %v7477 = vunpack.c.l.b16 %v3892
    %v7478 = vunpack.c.l.b16 %v3893
    %v7479 = vunpack.c.h.b16 %v3893
    %v7480 = vunpack.c.l.b16 %v3894
    %v7481 = vunpack.c.h.b16 %v3894
    %v7482 = vunpack.c.l.b16 %v3895
    %v7483 = vunpack.c.h.b16 %v3895
    %v7484 = vunpack.c.l.b16 %v3896
    %v7485 = vunpack.c.h.b16 %v3896
    %v7486 = vunpack.c.l.b16 %v3897
    %v7487 = vunpack.c.h.b16 %v3897
    %v7488 = vunpack.c.l.b16 %v3898
    %v7489 = vunpack.c.h.b16 %v3898
    %v7490 = vunpack.c.l.b16 %v3899
    %v7491 = vunpack.c.h.b16 %v3899
    %v7492 = vunpack.c.l.b16 %v3900
    %v7493 = vunpack.c.h.b16 %v3900
    %v7494 = vunpack.c.l.b16 %v3901
    %v7495 = vunpack.c.h.b16 %v3901
    %v7496 = vunpack.c.l.b16 %v3902
    %v7497 = vunpack.c.l.b16 %v3903
    %v7498 = vunpack.c.h.b16 %v3903
    %v7499 = vunpack.c.l.b16 %v3904
    %v7500 = vunpack.c.h.b16 %v3904
    %v7501 = vunpack.c.l.b16 %v3905
    %v7502 = vunpack.c.h.b16 %v3905
    %v7503 = vunpack.c.l.b16 %v3906
    %v7504 = vunpack.c.h.b16 %v3906
    %v7505 = vunpack.c.l.b16 %v3907
    %v7506 = vunpack.c.h.b16 %v3907
    %v7507 = vunpack.c.l.b16 %v3908
    %v7508 = vunpack.c.h.b16 %v3908
    %v7509 = vunpack.c.l.b16 %v3909
    %v7510 = vunpack.c.h.b16 %v3909
    %v7511 = vunpack.c.l.b16 %v3910
    %v7512 = vunpack.c.h.b16 %v3910
    %v7513 = vunpack.c.l.b16 %v3911
    %v7514 = vunpack.c.h.b16 %v3911
    %v7515 = vunpack.c.l.b16 %v3912
    %v7516 = vunpack.c.l.b16 %v3913
    %v7517 = vunpack.c.h.b16 %v3913
    %v7518 = vunpack.c.l.b16 %v3914
    %v7519 = vunpack.c.h.b16 %v3914
    %v7520 = vunpack.c.l.b16 %v3915
    %v7521 = vunpack.c.h.b16 %v3915
    %v7522 = vunpack.c.l.b16 %v3916
    %v7523 = vunpack.c.h.b16 %v3916
    %v7524 = vunpack.c.l.b16 %v3917
    %v7525 = vunpack.c.h.b16 %v3917
    %v7526 = vunpack.c.l.b16 %v3918
    %v7527 = vunpack.c.h.b16 %v3918
    %v7528 = vunpack.c.l.b16 %v3919
    %v7529 = vunpack.c.h.b16 %v3919
    %v7530 = vunpack.c.l.b16 %v3920
    %v7531 = vunpack.c.h.b16 %v3920
    %v7532 = vunpack.c.l.b16 %v3921
    %v7533 = vunpack.c.h.b16 %v3921
    %v7534 = vunpack.c.l.b16 %v3922
    %v7535 = vunpack.c.l.b16 %v3923
    %v7536 = vunpack.c.h.b16 %v3923
    %v7537 = vunpack.c.l.b16 %v3924
    %v7538 = vunpack.c.h.b16 %v3924
    %v7539 = vunpack.c.l.b16 %v3925
    %v7540 = vunpack.c.h.b16 %v3925
    %v7541 = vunpack.c.l.b16 %v3926
    %v7542 = vunpack.c.h.b16 %v3926
    %v7543 = vunpack.c.l.b16 %v3927
    %v7544 = vunpack.c.h.b16 %v3927
    %v7545 = vunpack.c.l.b16 %v3928
    %v7546 = vunpack.c.h.b16 %v3928
    %v7547 = vunpack.c.l.b16 %v3929
    %v7548 = vunpack.c.h.b16 %v3929
    %v7549 = vunpack.c.l.b16 %v3930
    %v7550 = vunpack.c.h.b16 %v3930
    %v7551 = vunpack.c.l.b16 %v3931
    %v7552 = vunpack.c.h.b16 %v3931
    %v7553 = vunpack.c.l.b16 %v3932
    %v7554 = vunpack.c.l.b16 %v3933
    %v7555 = vunpack.c.h.b16 %v3933
    %v7556 = vunpack.c.l.b16 %v3934
    %v7557 = vunpack.c.h.b16 %v3934
    %v7558 = vunpack.c.l.b16 %v3935
    %v7559 = vunpack.c.h.b16 %v3935
    %v7560 = vunpack.c.l.b16 %v3936
    %v7561 = vunpack.c.h.b16 %v3936
    %v7562 = vunpack.c.l.b16 %v3937
    %v7563 = vunpack.c.h.b16 %v3937
    %v7564 = vunpack.c.l.b16 %v3938
    %v7565 = vunpack.c.h.b16 %v3938
    %v7566 = vunpack.c.l.b16 %v3939
    %v7567 = vunpack.c.h.b16 %v3939
    %v7568 = vunpack.c.l.b16 %v3940
    %v7569 = vunpack.c.h.b16 %v3940
    %v7570 = vunpack.c.l.b16 %v3941
    %v7571 = vunpack.c.h.b16 %v3941
    %v7572 = vunpack.c.l.b16 %v3942
    %v7573 = vunpack.c.l.b16 %v3943
    %v7574 = vunpack.c.h.b16 %v3943
    %v7575 = vunpack.c.l.b16 %v3944
    %v7576 = vunpack.c.h.b16 %v3944
    %v7577 = vunpack.c.l.b16 %v3945
    %v7578 = vunpack.c.h.b16 %v3945
    %v7579 = vunpack.c.l.b16 %v3946
    %v7580 = vunpack.c.h.b16 %v3946
    %v7581 = vunpack.c.l.b16 %v3947
    %v7582 = vunpack.c.h.b16 %v3947
    %v7583 = vunpack.c.l.b16 %v3948
    %v7584 = vunpack.c.h.b16 %v3948
    %v7585 = vunpack.c.l.b16 %v3949
    %v7586 = vunpack.c.h.b16 %v3949
    %v7587 = vunpack.c.l.b16 %v3950
    %v7588 = vunpack.c.h.b16 %v3950
    %v7589 = vunpack.c.l.b16 %v3951
    %v7590 = vunpack.c.h.b16 %v3951
    %v7591 = vunpack.c.l.b16 %v3952
    %v7592 = vunpack.c.l.b16 %v3953
    %v7593 = vunpack.c.h.b16 %v3953
    %v7594 = vunpack.c.l.b16 %v3954
    %v7595 = vunpack.c.h.b16 %v3954
    %v7596 = vunpack.c.l.b16 %v3955
    %v7597 = vunpack.c.h.b16 %v3955
    %v7598 = vunpack.c.l.b16 %v3956
    %v7599 = vunpack.c.h.b16 %v3956
    %v7600 = vunpack.c.l.b16 %v3957
    %v7601 = vunpack.c.h.b16 %v3957
    %v7602 = vunpack.c.l.b16 %v3958
    %v7603 = vunpack.c.h.b16 %v3958
    %v7604 = vunpack.c.l.b16 %v3959
    %v7605 = vunpack.c.h.b16 %v3959
    %v7606 = vunpack.c.l.b16 %v3960
    %v7607 = vunpack.c.h.b16 %v3960
    %v7608 = vunpack.c.l.b16 %v3961
    %v7609 = vunpack.c.h.b16 %v3961
    %v7610 = vunpack.c.l.b16 %v3962
    %v7611 = vunpack.c.l.b16 %v3963
    %v7612 = vunpack.c.h.b16 %v3963
    %v7613 = vunpack.c.l.b16 %v3964
    %v7614 = vunpack.c.h.b16 %v3964
    %v7615 = vunpack.c.l.b16 %v3965
    %v7616 = vunpack.c.h.b16 %v3965
    %v7617 = vunpack.c.l.b16 %v3966
    %v7618 = vunpack.c.h.b16 %v3966
    %v7619 = vunpack.c.l.b16 %v3967
    %v7620 = vunpack.c.h.b16 %v3967
    %v7621 = vunpack.c.l.b16 %v3968
    %v7622 = vunpack.c.h.b16 %v3968
    %v7623 = vunpack.c.l.b16 %v3969
    %v7624 = vunpack.c.h.b16 %v3969
    %v7625 = vunpack.c.l.b16 %v3970
    %v7626 = vunpack.c.h.b16 %v3970
    %v7627 = vunpack.c.l.b16 %v3971
    %v7628 = vunpack.c.h.b16 %v3971
    %v7629 = vunpack.c.l.b16 %v3972
    %v7630 = vunpack.c.l.b16 %v3973
    %v7631 = vunpack.c.h.b16 %v3973
    %v7632 = vunpack.c.l.b16 %v3974
    %v7633 = vunpack.c.h.b16 %v3974
    %v7634 = vunpack.c.l.b16 %v3975
    %v7635 = vunpack.c.h.b16 %v3975
    %v7636 = vunpack.c.l.b16 %v3976
    %v7637 = vunpack.c.h.b16 %v3976
    %v7638 = vunpack.c.l.b16 %v3977
    %v7639 = vunpack.c.h.b16 %v3977
    %v7640 = vunpack.c.l.b16 %v3978
    %v7641 = vunpack.c.h.b16 %v3978
    %v7642 = vunpack.c.l.b16 %v3979
    %v7643 = vunpack.c.h.b16 %v3979
    %v7644 = vunpack.c.l.b16 %v3980
    %v7645 = vunpack.c.h.b16 %v3980
    %v7646 = vunpack.c.l.b16 %v3981
    %v7647 = vunpack.c.h.b16 %v3981
    %v7648 = vunpack.c.l.b16 %v3982
    %v7649 = vunpack.c.l.b16 %v3983
    %v7650 = vunpack.c.h.b16 %v3983
    %v7651 = vunpack.c.l.b16 %v3984
    %v7652 = vunpack.c.h.b16 %v3984
    %v7653 = vunpack.c.l.b16 %v3985
    %v7654 = vunpack.c.h.b16 %v3985
    %v7655 = vunpack.c.l.b16 %v3986
    %v7656 = vunpack.c.h.b16 %v3986
    %v7657 = vunpack.c.l.b16 %v3987
    %v7658 = vunpack.c.h.b16 %v3987
    %v7659 = vunpack.c.l.b16 %v3988
    %v7660 = vunpack.c.h.b16 %v3988
    %v7661 = vunpack.c.l.b16 %v3989
    %v7662 = vunpack.c.h.b16 %v3989
    %v7663 = vunpack.c.l.b16 %v3990
    %v7664 = vunpack.c.h.b16 %v3990
    %v7665 = vunpack.c.l.b16 %v3991
    %v7666 = vunpack.c.h.b16 %v3991
    %v7667 = vunpack.c.l.b16 %v3992
    %v7668 = vunpack.c.l.b16 %v3993
    %v7669 = vunpack.c.h.b16 %v3993
    %v7670 = vunpack.c.l.b16 %v3994
    %v7671 = vunpack.c.h.b16 %v3994
    %v7672 = vunpack.c.l.b16 %v3995
    %v7673 = vunpack.c.h.b16 %v3995
    %v7674 = vunpack.c.l.b16 %v3996
    %v7675 = vunpack.c.h.b16 %v3996
    %v7676 = vunpack.c.l.b16 %v3997
    %v7677 = vunpack.c.h.b16 %v3997
    %v7678 = vunpack.c.l.b16 %v3998
    %v7679 = vunpack.c.h.b16 %v3998
    %v7680 = vunpack.c.l.b16 %v3999
    %v7681 = vunpack.c.h.b16 %v3999
    %v7682 = vunpack.c.l.b16 %v4000
    %v7683 = vunpack.c.h.b16 %v4000
    %v7684 = vunpack.c.l.b16 %v4001
    %v7685 = vunpack.c.h.b16 %v4001
    %v7686 = vunpack.c.l.b16 %v4002
    %v7687 = vunpack.c.l.b16 %v4003
    %v7688 = vunpack.c.h.b16 %v4003
    %v7689 = vunpack.c.l.b16 %v4004
    %v7690 = vunpack.c.h.b16 %v4004
    %v7691 = vunpack.c.l.b16 %v4005
    %v7692 = vunpack.c.h.b16 %v4005
    %v7693 = vunpack.c.l.b16 %v4006
    %v7694 = vunpack.c.h.b16 %v4006
    %v7695 = vunpack.c.l.b16 %v4007
    %v7696 = vunpack.c.h.b16 %v4007
    %v7697 = vunpack.c.l.b16 %v4008
    %v7698 = vunpack.c.h.b16 %v4008
    %v7699 = vunpack.c.l.b16 %v4009
    %v7700 = vunpack.c.h.b16 %v4009
    %v7701 = vunpack.c.l.b16 %v4010
    %v7702 = vunpack.c.h.b16 %v4010
    %v7703 = vunpack.c.l.b16 %v4011
    %v7704 = vunpack.c.h.b16 %v4011
    %v7705 = vunpack.c.l.b16 %v4012
    %v7706 = vunpack.c.l.b16 %v4013
    %v7707 = vunpack.c.h.b16 %v4013
    %v7708 = vunpack.c.l.b16 %v4014
    %v7709 = vunpack.c.h.b16 %v4014
    %v7710 = vunpack.c.l.b16 %v4015
    %v7711 = vunpack.c.h.b16 %v4015
    %v7712 = vunpack.c.l.b16 %v4016
    %v7713 = vunpack.c.h.b16 %v4016
    %v7714 = vunpack.c.l.b16 %v4017
    %v7715 = vunpack.c.h.b16 %v4017
    %v7716 = vunpack.c.l.b16 %v4018
    %v7717 = vunpack.c.h.b16 %v4018
    %v7718 = vunpack.c.l.b16 %v4019
    %v7719 = vunpack.c.h.b16 %v4019
    %v7720 = vunpack.c.l.b16 %v4020
    %v7721 = vunpack.c.h.b16 %v4020
    %v7722 = vunpack.c.l.b16 %v4021
    %v7723 = vunpack.c.h.b16 %v4021
    %v7724 = vunpack.c.l.b16 %v4022
    %v7725 = vunpack.c.l.b16 %v4023
    %v7726 = vunpack.c.h.b16 %v4023
    %v7727 = vunpack.c.l.b16 %v4024
    %v7728 = vunpack.c.h.b16 %v4024
    %v7729 = vunpack.c.l.b16 %v4025
    %v7730 = vunpack.c.h.b16 %v4025
    %v7731 = vunpack.c.l.b16 %v4026
    %v7732 = vunpack.c.h.b16 %v4026
    %v7733 = vunpack.c.l.b16 %v4027
    %v7734 = vunpack.c.h.b16 %v4027
    %v7735 = vunpack.c.l.b16 %v4028
    %v7736 = vunpack.c.h.b16 %v4028
    %v7737 = vunpack.c.l.b16 %v4029
    %v7738 = vunpack.c.h.b16 %v4029
    %v7739 = vunpack.c.l.b16 %v4030
    %v7740 = vunpack.c.h.b16 %v4030
    %v7741 = vunpack.c.l.b16 %v4031
    %v7742 = vunpack.c.h.b16 %v4031
    %v7743 = vunpack.c.l.b16 %v4032
    %v7744 = vunpack.c.l.b16 %v4033
    %v7745 = vunpack.c.h.b16 %v4033
    %v7746 = vunpack.c.l.b16 %v4034
    %v7747 = vunpack.c.h.b16 %v4034
    %v7748 = vunpack.c.l.b16 %v4035
    %v7749 = vunpack.c.h.b16 %v4035
    %v7750 = vunpack.c.l.b16 %v4036
    %v7751 = vunpack.c.h.b16 %v4036
    %v7752 = vunpack.c.l.b16 %v4037
    %v7753 = vunpack.c.h.b16 %v4037
    %v7754 = vunpack.c.l.b16 %v4038
    %v7755 = vunpack.c.h.b16 %v4038
    %v7756 = vunpack.c.l.b16 %v4039
    %v7757 = vunpack.c.h.b16 %v4039
    %v7758 = vunpack.c.l.b16 %v4040
    %v7759 = vunpack.c.h.b16 %v4040
    %v7760 = vunpack.c.l.b16 %v4041
    %v7761 = vunpack.c.h.b16 %v4041
    %v7762 = vunpack.c.l.b16 %v4042
    %v7763 = vunpack.c.l.b16 %v4043
    %v7764 = vunpack.c.h.b16 %v4043
    %v7765 = vunpack.c.l.b16 %v4044
    %v7766 = vunpack.c.h.b16 %v4044
    %v7767 = vunpack.c.l.b16 %v4045
    %v7768 = vunpack.c.h.b16 %v4045
    %v7769 = vunpack.c.l.b16 %v4046
    %v7770 = vunpack.c.h.b16 %v4046
    %v7771 = vunpack.c.l.b16 %v4047
    %v7772 = vunpack.c.h.b16 %v4047
    %v7773 = vunpack.c.l.b16 %v4048
    %v7774 = vunpack.c.h.b16 %v4048
    %v7775 = vunpack.c.l.b16 %v4049
    %v7776 = vunpack.c.h.b16 %v4049
    %v7777 = vunpack.c.l.b16 %v4050
    %v7778 = vunpack.c.h.b16 %v4050
    %v7779 = vunpack.c.l.b16 %v4051
    %v7780 = vunpack.c.h.b16 %v4051
    %v7781 = vunpack.c.l.b16 %v4052
    %v7782 = vunpack.c.l.b16 %v4053
    %v7783 = vunpack.c.h.b16 %v4053
    %v7784 = vunpack.c.l.b16 %v4054
    %v7785 = vunpack.c.h.b16 %v4054
    %v7786 = vunpack.c.l.b16 %v4055
    %v7787 = vunpack.c.h.b16 %v4055
    %v7788 = vunpack.c.l.b16 %v4056
    %v7789 = vunpack.c.h.b16 %v4056
    %v7790 = vunpack.c.l.b16 %v4057
    %v7791 = vunpack.c.h.b16 %v4057
    %v7792 = vunpack.c.l.b16 %v4058
    %v7793 = vunpack.c.h.b16 %v4058
    %v7794 = vunpack.c.l.b16 %v4059
    %v7795 = vunpack.c.h.b16 %v4059
    %v7796 = vunpack.c.l.b16 %v4060
    %v7797 = vunpack.c.h.b16 %v4060
    %v7798 = vunpack.c.l.b16 %v4061
    %v7799 = vunpack.c.h.b16 %v4061
    %v7800 = vunpack.c.l.b16 %v4062
    %v7801 = vunpack.c.l.b16 %v4063
    %v7802 = vunpack.c.h.b16 %v4063
    %v7803 = vunpack.c.l.b16 %v4064
    %v7804 = vunpack.c.h.b16 %v4064
    %v7805 = vunpack.c.l.b16 %v4065
    %v7806 = vunpack.c.h.b16 %v4065
    %v7807 = vunpack.c.l.b16 %v4066
    %v7808 = vunpack.c.h.b16 %v4066
    %v7809 = vunpack.c.l.b16 %v4067
    %v7810 = vunpack.c.h.b16 %v4067
    %v7811 = vunpack.c.l.b16 %v4068
    %v7812 = vunpack.c.h.b16 %v4068
    %v7813 = vunpack.c.l.b16 %v4069
    %v7814 = vunpack.c.h.b16 %v4069
    %v7815 = vunpack.c.l.b16 %v4070
    %v7816 = vunpack.c.h.b16 %v4070
    %v7817 = vunpack.c.l.b16 %v4071
    %v7818 = vunpack.c.h.b16 %v4071
    %v7819 = vunpack.c.l.b16 %v4072
    %v7820 = vunpack.c.l.b16 %v4073
    %v7821 = vunpack.c.h.b16 %v4073
    %v7822 = vunpack.c.l.b16 %v4074
    %v7823 = vunpack.c.h.b16 %v4074
    %v7824 = vunpack.c.l.b16 %v4075
    %v7825 = vunpack.c.h.b16 %v4075
    %v7826 = vunpack.c.l.b16 %v4076
    %v7827 = vunpack.c.h.b16 %v4076
    %v7828 = vunpack.c.l.b16 %v4077
    %v7829 = vunpack.c.h.b16 %v4077
    %v7830 = vunpack.c.l.b16 %v4078
    %v7831 = vunpack.c.h.b16 %v4078
    %v7832 = vunpack.c.l.b16 %v4079
    %v7833 = vunpack.c.h.b16 %v4079
    %v7834 = vunpack.c.l.b16 %v4080
    %v7835 = vunpack.c.h.b16 %v4080
    %v7836 = vunpack.c.l.b16 %v4081
    %v7837 = vunpack.c.h.b16 %v4081
    %v7838 = vunpack.c.l.b16 %v4082
    %v7839 = vpack.c.b16 %v5426, %v5407
    %v7840 = vpack.c.b16 %v5427, %v5408
    %v7841 = vpack.c.b16 %v5428, %v5409
    %v7842 = vpack.c.b16 %v5429, %v5410
    %v7843 = vpack.c.b16 %v5430, %v5411
    %v7844 = vpack.c.b16 %v5431, %v5412
    %v7845 = vpack.c.b16 %v5432, %v5413
    %v7846 = vpack.c.b16 %v5433, %v5414
    %v7847 = vpack.c.b16 %v5434, %v5415
    %v7848 = vpack.c.b16 %v5435, %v5416
    %v7849 = vpack.c.b16 %v5436, %v5417
    %v7850 = vpack.c.b16 %v5437, %v5418
    %v7851 = vpack.c.b16 %v5438, %v5419
    %v7852 = vpack.c.b16 %v5439, %v5420
    %v7853 = vpack.c.b16 %v5440, %v5421
    %v7854 = vpack.c.b16 %v5441, %v5422
    %v7855 = vpack.c.b16 %v5442, %v5423
    %v7856 = vpack.c.b16 %v5443, %v5424
    %v7857 = vpack.c.b16 %v5444, %v5425
    %v7858 = vpack.c.b16 %v5464, %v5445
    %v7859 = vpack.c.b16 %v5465, %v5446
    %v7860 = vpack.c.b16 %v5466, %v5447
    %v7861 = vpack.c.b16 %v5467, %v5448
    %v7862 = vpack.c.b16 %v5468, %v5449
    %v7863 = vpack.c.b16 %v5469, %v5450
    %v7864 = vpack.c.b16 %v5470, %v5451
    %v7865 = vpack.c.b16 %v5471, %v5452
    %v7866 = vpack.c.b16 %v5472, %v5453
    %v7867 = vpack.c.b16 %v5473, %v5454
    %v7868 = vpack.c.b16 %v5474, %v5455
    %v7869 = vpack.c.b16 %v5475, %v5456
    %v7870 = vpack.c.b16 %v5476, %v5457
    %v7871 = vpack.c.b16 %v5477, %v5458
    %v7872 = vpack.c.b16 %v5478, %v5459
    %v7873 = vpack.c.b16 %v5479, %v5460
    %v7874 = vpack.c.b16 %v5480, %v5461
    %v7875 = vpack.c.b16 %v5481, %v5462
    %v7876 = vpack.c.b16 %v5482, %v5463
    %v7877 = vpack.c.b16 %v5502, %v5483
    %v7878 = vpack.c.b16 %v5503, %v5484
    %v7879 = vpack.c.b16 %v5504, %v5485
    %v7880 = vpack.c.b16 %v5505, %v5486
    %v7881 = vpack.c.b16 %v5506, %v5487
    %v7882 = vpack.c.b16 %v5507, %v5488
    %v7883 = vpack.c.b16 %v5508, %v5489
    %v7884 = vpack.c.b16 %v5509, %v5490
    %v7885 = vpack.c.b16 %v5510, %v5491
    %v7886 = vpack.c.b16 %v5511, %v5492
    %v7887 = vpack.c.b16 %v5512, %v5493
    %v7888 = vpack.c.b16 %v5513, %v5494
    %v7889 = vpack.c.b16 %v5514, %v5495
    %v7890 = vpack.c.b16 %v5515, %v5496
    %v7891 = vpack.c.b16 %v5516, %v5497
    %v7892 = vpack.c.b16 %v5517, %v5498
    %v7893 = vpack.c.b16 %v5518, %v5499
    %v7894 = vpack.c.b16 %v5519, %v5500
    %v7895 = vpack.c.b16 %v5520, %v5501
    %v7896 = vpack.c.b16 %v5540, %v5521
    %v7897 = vpack.c.b16 %v5541, %v5522
    %v7898 = vpack.c.b16 %v5542, %v5523
    %v7899 = vpack.c.b16 %v5543, %v5524
    %v7900 = vpack.c.b16 %v5544, %v5525
    %v7901 = vpack.c.b16 %v5545, %v5526
    %v7902 = vpack.c.b16 %v5546, %v5527
    %v7903 = vpack.c.b16 %v5547, %v5528
    %v7904 = vpack.c.b16 %v5548, %v5529
    %v7905 = vpack.c.b16 %v5549, %v5530
    %v7906 = vpack.c.b16 %v5550, %v5531
    %v7907 = vpack.c.b16 %v5551, %v5532
    %v7908 = vpack.c.b16 %v5552, %v5533
    %v7909 = vpack.c.b16 %v5553, %v5534
    %v7910 = vpack.c.b16 %v5554, %v5535
    %v7911 = vpack.c.b16 %v5555, %v5536
    %v7912 = vpack.c.b16 %v5556, %v5537
    %v7913 = vpack.c.b16 %v5557, %v5538
    %v7914 = vpack.c.b16 %v5558, %v5539
    %v7915 = vpack.c.b16 %v5578, %v5559
    %v7916 = vpack.c.b16 %v5579, %v5560
    %v7917 = vpack.c.b16 %v5580, %v5561
    %v7918 = vpack.c.b16 %v5581, %v5562
    %v7919 = vpack.c.b16 %v5582, %v5563
    %v7920 = vpack.c.b16 %v5583, %v5564
    %v7921 = vpack.c.b16 %v5584, %v5565
    %v7922 = vpack.c.b16 %v5585, %v5566
    %v7923 = vpack.c.b16 %v5586, %v5567
    %v7924 = vpack.c.b16 %v5587, %v5568
    %v7925 = vpack.c.b16 %v5588, %v5569
    %v7926 = vpack.c.b16 %v5589, %v5570
    %v7927 = vpack.c.b16 %v5590, %v5571
    %v7928 = vpack.c.b16 %v5591, %v5572
    %v7929 = vpack.c.b16 %v5592, %v5573
    %v7930 = vpack.c.b16 %v5593, %v5574
    %v7931 = vpack.c.b16 %v5594, %v5575
    %v7932 = vpack.c.b16 %v5595, %v5576
    %v7933 = vpack.c.b16 %v5596, %v5577
    %v7934 = vpack.c.b16 %v5616, %v5597
    %v7935 = vpack.c.b16 %v5617, %v5598
    %v7936 = vpack.c.b16 %v5618, %v5599
    %v7937 = vpack.c.b16 %v5619, %v5600
    %v7938 = vpack.c.b16 %v5620, %v5601
    %v7939 = vpack.c.b16 %v5621, %v5602
    %v7940 = vpack.c.b16 %v5622, %v5603
    %v7941 = vpack.c.b16 %v5623, %v5604
    %v7942 = vpack.c.b16 %v5624, %v5605
    %v7943 = vpack.c.b16 %v5625, %v5606
    %v7944 = vpack.c.b16 %v5626, %v5607
    %v7945 = vpack.c.b16 %v5627, %v5608
    %v7946 = vpack.c.b16 %v5628, %v5609
    %v7947 = vpack.c.b16 %v5629, %v5610
    %v7948 = vpack.c.b16 %v5630, %v5611
    %v7949 = vpack.c.b16 %v5631, %v5612
    %v7950 = vpack.c.b16 %v5632, %v5613
    %v7951 = vpack.c.b16 %v5633, %v5614
    %v7952 = vpack.c.b16 %v5634, %v5615
    %v7953 = vpack.c.b16 %v5654, %v5635
    %v7954 = vpack.c.b16 %v5655, %v5636
    %v7955 = vpack.c.b16 %v5656, %v5637
    %v7956 = vpack.c.b16 %v5657, %v5638
    %v7957 = vpack.c.b16 %v5658, %v5639
    %v7958 = vpack.c.b16 %v5659, %v5640
    %v7959 = vpack.c.b16 %v5660, %v5641
    %v7960 = vpack.c.b16 %v5661, %v5642
    %v7961 = vpack.c.b16 %v5662, %v5643
    %v7962 = vpack.c.b16 %v5663, %v5644
    %v7963 = vpack.c.b16 %v5664, %v5645
    %v7964 = vpack.c.b16 %v5665, %v5646
    %v7965 = vpack.c.b16 %v5666, %v5647
    %v7966 = vpack.c.b16 %v5667, %v5648
    %v7967 = vpack.c.b16 %v5668, %v5649
    %v7968 = vpack.c.b16 %v5669, %v5650
    %v7969 = vpack.c.b16 %v5670, %v5651
    %v7970 = vpack.c.b16 %v5671, %v5652
    %v7971 = vpack.c.b16 %v5672, %v5653
    %v7972 = vpack.c.b16 %v5692, %v5673
    %v7973 = vpack.c.b16 %v5693, %v5674
    %v7974 = vpack.c.b16 %v5694, %v5675
    %v7975 = vpack.c.b16 %v5695, %v5676
    %v7976 = vpack.c.b16 %v5696, %v5677
    %v7977 = vpack.c.b16 %v5697, %v5678
    %v7978 = vpack.c.b16 %v5698, %v5679
    %v7979 = vpack.c.b16 %v5699, %v5680
    %v7980 = vpack.c.b16 %v5700, %v5681
    %v7981 = vpack.c.b16 %v5701, %v5682
    %v7982 = vpack.c.b16 %v5702, %v5683
    %v7983 = vpack.c.b16 %v5703, %v5684
    %v7984 = vpack.c.b16 %v5704, %v5685
    %v7985 = vpack.c.b16 %v5705, %v5686
    %v7986 = vpack.c.b16 %v5706, %v5687
    %v7987 = vpack.c.b16 %v5707, %v5688
    %v7988 = vpack.c.b16 %v5708, %v5689
    %v7989 = vpack.c.b16 %v5709, %v5690
    %v7990 = vpack.c.b16 %v5710, %v5691
    %v7991 = vpack.c.b16 %v5730, %v5711
    %v7992 = vpack.c.b16 %v5731, %v5712
    %v7993 = vpack.c.b16 %v5732, %v5713
    %v7994 = vpack.c.b16 %v5733, %v5714
    %v7995 = vpack.c.b16 %v5734, %v5715
    %v7996 = vpack.c.b16 %v5735, %v5716
    %v7997 = vpack.c.b16 %v5736, %v5717
    %v7998 = vpack.c.b16 %v5737, %v5718
    %v7999 = vpack.c.b16 %v5738, %v5719
    %v8000 = vpack.c.b16 %v5739, %v5720
    %v8001 = vpack.c.b16 %v5740, %v5721
    %v8002 = vpack.c.b16 %v5741, %v5722
    %v8003 = vpack.c.b16 %v5742, %v5723
    %v8004 = vpack.c.b16 %v5743, %v5724
    %v8005 = vpack.c.b16 %v5744, %v5725
    %v8006 = vpack.c.b16 %v5745, %v5726
    %v8007 = vpack.c.b16 %v5746, %v5727
    %v8008 = vpack.c.b16 %v5747, %v5728
    %v8009 = vpack.c.b16 %v5748, %v5729
    %v8010 = vpack.c.b16 %v5768, %v5749
    %v8011 = vpack.c.b16 %v5769, %v5750
    %v8012 = vpack.c.b16 %v5770, %v5751
    %v8013 = vpack.c.b16 %v5771, %v5752
    %v8014 = vpack.c.b16 %v5772, %v5753
    %v8015 = vpack.c.b16 %v5773, %v5754
    %v8016 = vpack.c.b16 %v5774, %v5755
    %v8017 = vpack.c.b16 %v5775, %v5756
    %v8018 = vpack.c.b16 %v5776, %v5757
    %v8019 = vpack.c.b16 %v5777, %v5758
    %v8020 = vpack.c.b16 %v5778, %v5759
    %v8021 = vpack.c.b16 %v5779, %v5760
    %v8022 = vpack.c.b16 %v5780, %v5761
    %v8023 = vpack.c.b16 %v5781, %v5762
    %v8024 = vpack.c.b16 %v5782, %v5763
    %v8025 = vpack.c.b16 %v5783, %v5764
    %v8026 = vpack.c.b16 %v5784, %v5765
    %v8027 = vpack.c.b16 %v5785, %v5766
    %v8028 = vpack.c.b16 %v5786, %v5767
    %v8029 = vpack.c.b16 %v5806, %v5787
    %v8030 = vpack.c.b16 %v5807, %v5788
    %v8031 = vpack.c.b16 %v5808, %v5789
    %v8032 = vpack.c.b16 %v5809, %v5790
    %v8033 = vpack.c.b16 %v5810, %v5791
    %v8034 = vpack.c.b16 %v5811, %v5792
    %v8035 = vpack.c.b16 %v5812, %v5793
    %v8036 = vpack.c.b16 %v5813, %v5794
    %v8037 = vpack.c.b16 %v5814, %v5795
    %v8038 = vpack.c.b16 %v5815, %v5796
    %v8039 = vpack.c.b16 %v5816, %v5797
    %v8040 = vpack.c.b16 %v5817, %v5798
    %v8041 = vpack.c.b16 %v5818, %v5799
    %v8042 = vpack.c.b16 %v5819, %v5800
    %v8043 = vpack.c.b16 %v5820, %v5801
    %v8044 = vpack.c.b16 %v5821, %v5802
    %v8045 = vpack.c.b16 %v5822, %v5803
    %v8046 = vpack.c.b16 %v5823, %v5804
    %v8047 = vpack.c.b16 %v5824, %v5805
    %v8048 = vpack.c.b16 %v5844, %v5825
    %v8049 = vpack.c.b16 %v5845, %v5826
    %v8050 = vpack.c.b16 %v5846, %v5827
    %v8051 = vpack.c.b16 %v5847, %v5828
    %v8052 = vpack.c.b16 %v5848, %v5829
    %v8053 = vpack.c.b16 %v5849, %v5830
    %v8054 = vpack.c.b16 %v5850, %v5831
    %v8055 = vpack.c.b16 %v5851, %v5832
    %v8056 = vpack.c.b16 %v5852, %v5833
    %v8057 = vpack.c.b16 %v5853, %v5834
    %v8058 = vpack.c.b16 %v5854, %v5835
    %v8059 = vpack.c.b16 %v5855, %v5836
    %v8060 = vpack.c.b16 %v5856, %v5837
    %v8061 = vpack.c.b16 %v5857, %v5838
    %v8062 = vpack.c.b16 %v5858, %v5839
    %v8063 = vpack.c.b16 %v5859, %v5840
    %v8064 = vpack.c.b16 %v5860, %v5841
    %v8065 = vpack.c.b16 %v5861, %v5842
    %v8066 = vpack.c.b16 %v5862, %v5843
    %v8067 = vpack.c.b16 %v5882, %v5863
    %v8068 = vpack.c.b16 %v5883, %v5864
    %v8069 = vpack.c.b16 %v5884, %v5865
    %v8070 = vpack.c.b16 %v5885, %v5866
    %v8071 = vpack.c.b16 %v5886, %v5867
    %v8072 = vpack.c.b16 %v5887, %v5868
    %v8073 = vpack.c.b16 %v5888, %v5869
    %v8074 = vpack.c.b16 %v5889, %v5870
    %v8075 = vpack.c.b16 %v5890, %v5871
    %v8076 = vpack.c.b16 %v5891, %v5872
    %v8077 = vpack.c.b16 %v5892, %v5873
    %v8078 = vpack.c.b16 %v5893, %v5874
    %v8079 = vpack.c.b16 %v5894, %v5875
    %v8080 = vpack.c.b16 %v5895, %v5876
    %v8081 = vpack.c.b16 %v5896, %v5877
    %v8082 = vpack.c.b16 %v5897, %v5878
    %v8083 = vpack.c.b16 %v5898, %v5879
    %v8084 = vpack.c.b16 %v5899, %v5880
    %v8085 = vpack.c.b16 %v5900, %v5881
    %v8086 = vpack.c.b16 %v5920, %v5901
    %v8087 = vpack.c.b16 %v5921, %v5902
    %v8088 = vpack.c.b16 %v5922, %v5903
    %v8089 = vpack.c.b16 %v5923, %v5904
    %v8090 = vpack.c.b16 %v5924, %v5905
    %v8091 = vpack.c.b16 %v5925, %v5906
    %v8092 = vpack.c.b16 %v5926, %v5907
    %v8093 = vpack.c.b16 %v5927, %v5908
    %v8094 = vpack.c.b16 %v5928, %v5909
    %v8095 = vpack.c.b16 %v5929, %v5910
    %v8096 = vpack.c.b16 %v5930, %v5911
    %v8097 = vpack.c.b16 %v5931, %v5912
    %v8098 = vpack.c.b16 %v5932, %v5913
    %v8099 = vpack.c.b16 %v5933, %v5914
    %v8100 = vpack.c.b16 %v5934, %v5915
    %v8101 = vpack.c.b16 %v5935, %v5916
    %v8102 = vpack.c.b16 %v5936, %v5917
    %v8103 = vpack.c.b16 %v5937, %v5918
    %v8104 = vpack.c.b16 %v5938, %v5919
    %v8105 = vpack.c.b16 %v5958, %v5939
    %v8106 = vpack.c.b16 %v5959, %v5940
    %v8107 = vpack.c.b16 %v5960, %v5941
    %v8108 = vpack.c.b16 %v5961, %v5942
    %v8109 = vpack.c.b16 %v5962, %v5943
    %v8110 = vpack.c.b16 %v5963, %v5944
    %v8111 = vpack.c.b16 %v5964, %v5945
    %v8112 = vpack.c.b16 %v5965, %v5946
    %v8113 = vpack.c.b16 %v5966, %v5947
    %v8114 = vpack.c.b16 %v5967, %v5948
    %v8115 = vpack.c.b16 %v5968, %v5949
    %v8116 = vpack.c.b16 %v5969, %v5950
    %v8117 = vpack.c.b16 %v5970, %v5951
    %v8118 = vpack.c.b16 %v5971, %v5952
    %v8119 = vpack.c.b16 %v5972, %v5953
    %v8120 = vpack.c.b16 %v5973, %v5954
    %v8121 = vpack.c.b16 %v5974, %v5955
    %v8122 = vpack.c.b16 %v5975, %v5956
    %v8123 = vpack.c.b16 %v5976, %v5957
    %v8124 = vpack.c.b16 %v5996, %v5977
    %v8125 = vpack.c.b16 %v5997, %v5978
    %v8126 = vpack.c.b16 %v5998, %v5979
    %v8127 = vpack.c.b16 %v5999, %v5980
    %v8128 = vpack.c.b16 %v6000, %v5981
    %v8129 = vpack.c.b16 %v6001, %v5982
    %v8130 = vpack.c.b16 %v6002, %v5983
    %v8131 = vpack.c.b16 %v6003, %v5984
    %v8132 = vpack.c.b16 %v6004, %v5985
    %v8133 = vpack.c.b16 %v6005, %v5986
    %v8134 = vpack.c.b16 %v6006, %v5987
    %v8135 = vpack.c.b16 %v6007, %v5988
    %v8136 = vpack.c.b16 %v6008, %v5989
    %v8137 = vpack.c.b16 %v6009, %v5990
    %v8138 = vpack.c.b16 %v6010, %v5991
    %v8139 = vpack.c.b16 %v6011, %v5992
    %v8140 = vpack.c.b16 %v6012, %v5993
    %v8141 = vpack.c.b16 %v6013, %v5994
    %v8142 = vpack.c.b16 %v6014, %v5995
    %v8143 = vpack.c.b16 %v6034, %v6015
    %v8144 = vpack.c.b16 %v6035, %v6016
    %v8145 = vpack.c.b16 %v6036, %v6017
    %v8146 = vpack.c.b16 %v6037, %v6018
    %v8147 = vpack.c.b16 %v6038, %v6019
    %v8148 = vpack.c.b16 %v6039, %v6020
    %v8149 = vpack.c.b16 %v6040, %v6021
    %v8150 = vpack.c.b16 %v6041, %v6022
    %v8151 = vpack.c.b16 %v6042, %v6023
    %v8152 = vpack.c.b16 %v6043, %v6024
    %v8153 = vpack.c.b16 %v6044, %v6025
    %v8154 = vpack.c.b16 %v6045, %v6026
    %v8155 = vpack.c.b16 %v6046, %v6027
    %v8156 = vpack.c.b16 %v6047, %v6028
    %v8157 = vpack.c.b16 %v6048, %v6029
    %v8158 = vpack.c.b16 %v6049, %v6030
    %v8159 = vpack.c.b16 %v6050, %v6031
    %v8160 = vpack.c.b16 %v6051, %v6032
    %v8161 = vpack.c.b16 %v6052, %v6033
    %v8162 = vpack.c.b16 %v6072, %v6053
    %v8163 = vpack.c.b16 %v6073, %v6054
    %v8164 = vpack.c.b16 %v6074, %v6055
    %v8165 = vpack.c.b16 %v6075, %v6056
    %v8166 = vpack.c.b16 %v6076, %v6057
    %v8167 = vpack.c.b16 %v6077, %v6058
    %v8168 = vpack.c.b16 %v6078, %v6059
    %v8169 = vpack.c.b16 %v6079, %v6060
    %v8170 = vpack.c.b16 %v6080, %v6061
    %v8171 = vpack.c.b16 %v6081, %v6062
    %v8172 = vpack.c.b16 %v6082, %v6063
    %v8173 = vpack.c.b16 %v6083, %v6064
    %v8174 = vpack.c.b16 %v6084, %v6065
    %v8175 = vpack.c.b16 %v6085, %v6066
    %v8176 = vpack.c.b16 %v6086, %v6067
    %v8177 = vpack.c.b16 %v6087, %v6068
    %v8178 = vpack.c.b16 %v6088, %v6069
    %v8179 = vpack.c.b16 %v6089, %v6070
    %v8180 = vpack.c.b16 %v6090, %v6071
    %v8181 = vpack.c.b16 %v6110, %v6091
    %v8182 = vpack.c.b16 %v6111, %v6092
    %v8183 = vpack.c.b16 %v6112, %v6093
    %v8184 = vpack.c.b16 %v6113, %v6094
    %v8185 = vpack.c.b16 %v6114, %v6095
    %v8186 = vpack.c.b16 %v6115, %v6096
    %v8187 = vpack.c.b16 %v6116, %v6097
    %v8188 = vpack.c.b16 %v6117, %v6098
    %v8189 = vpack.c.b16 %v6118, %v6099
    %v8190 = vpack.c.b16 %v6119, %v6100
    %v8191 = vpack.c.b16 %v6120, %v6101
    %v8192 = vpack.c.b16 %v6121, %v6102
    %v8193 = vpack.c.b16 %v6122, %v6103
    %v8194 = vpack.c.b16 %v6123, %v6104
    %v8195 = vpack.c.b16 %v6124, %v6105
    %v8196 = vpack.c.b16 %v6125, %v6106
    %v8197 = vpack.c.b16 %v6126, %v6107
    %v8198 = vpack.c.b16 %v6127, %v6108
    %v8199 = vpack.c.b16 %v6128, %v6109
    %v8200 = vpack.c.b16 %v6148, %v6129
    %v8201 = vpack.c.b16 %v6149, %v6130
    %v8202 = vpack.c.b16 %v6150, %v6131
    %v8203 = vpack.c.b16 %v6151, %v6132
    %v8204 = vpack.c.b16 %v6152, %v6133
    %v8205 = vpack.c.b16 %v6153, %v6134
    %v8206 = vpack.c.b16 %v6154, %v6135
    %v8207 = vpack.c.b16 %v6155, %v6136
    %v8208 = vpack.c.b16 %v6156, %v6137
    %v8209 = vpack.c.b16 %v6157, %v6138
    %v8210 = vpack.c.b16 %v6158, %v6139
    %v8211 = vpack.c.b16 %v6159, %v6140
    %v8212 = vpack.c.b16 %v6160, %v6141
    %v8213 = vpack.c.b16 %v6161, %v6142
    %v8214 = vpack.c.b16 %v6162, %v6143
    %v8215 = vpack.c.b16 %v6163, %v6144
    %v8216 = vpack.c.b16 %v6164, %v6145
    %v8217 = vpack.c.b16 %v6165, %v6146
    %v8218 = vpack.c.b16 %v6166, %v6147
    %v8219 = vpack.c.b16 %v6186, %v6167
    %v8220 = vpack.c.b16 %v6187, %v6168
    %v8221 = vpack.c.b16 %v6188, %v6169
    %v8222 = vpack.c.b16 %v6189, %v6170
    %v8223 = vpack.c.b16 %v6190, %v6171
    %v8224 = vpack.c.b16 %v6191, %v6172
    %v8225 = vpack.c.b16 %v6192, %v6173
    %v8226 = vpack.c.b16 %v6193, %v6174
    %v8227 = vpack.c.b16 %v6194, %v6175
    %v8228 = vpack.c.b16 %v6195, %v6176
    %v8229 = vpack.c.b16 %v6196, %v6177
    %v8230 = vpack.c.b16 %v6197, %v6178
    %v8231 = vpack.c.b16 %v6198, %v6179
    %v8232 = vpack.c.b16 %v6199, %v6180
    %v8233 = vpack.c.b16 %v6200, %v6181
    %v8234 = vpack.c.b16 %v6201, %v6182
    %v8235 = vpack.c.b16 %v6202, %v6183
    %v8236 = vpack.c.b16 %v6203, %v6184
    %v8237 = vpack.c.b16 %v6204, %v6185
    %v8238 = vpack.c.b16 %v6224, %v6205
    %v8239 = vpack.c.b16 %v6225, %v6206
    %v8240 = vpack.c.b16 %v6226, %v6207
    %v8241 = vpack.c.b16 %v6227, %v6208
    %v8242 = vpack.c.b16 %v6228, %v6209
    %v8243 = vpack.c.b16 %v6229, %v6210
    %v8244 = vpack.c.b16 %v6230, %v6211
    %v8245 = vpack.c.b16 %v6231, %v6212
    %v8246 = vpack.c.b16 %v6232, %v6213
    %v8247 = vpack.c.b16 %v6233, %v6214
    %v8248 = vpack.c.b16 %v6234, %v6215
    %v8249 = vpack.c.b16 %v6235, %v6216
    %v8250 = vpack.c.b16 %v6236, %v6217
    %v8251 = vpack.c.b16 %v6237, %v6218
    %v8252 = vpack.c.b16 %v6238, %v6219
    %v8253 = vpack.c.b16 %v6239, %v6220
    %v8254 = vpack.c.b16 %v6240, %v6221
    %v8255 = vpack.c.b16 %v6241, %v6222
    %v8256 = vpack.c.b16 %v6242, %v6223
    %v8257 = vpack.c.b16 %v6262, %v6243
    %v8258 = vpack.c.b16 %v6263, %v6244
    %v8259 = vpack.c.b16 %v6264, %v6245
    %v8260 = vpack.c.b16 %v6265, %v6246
    %v8261 = vpack.c.b16 %v6266, %v6247
    %v8262 = vpack.c.b16 %v6267, %v6248
    %v8263 = vpack.c.b16 %v6268, %v6249
    %v8264 = vpack.c.b16 %v6269, %v6250
    %v8265 = vpack.c.b16 %v6270, %v6251
    %v8266 = vpack.c.b16 %v6271, %v6252
    %v8267 = vpack.c.b16 %v6272, %v6253
    %v8268 = vpack.c.b16 %v6273, %v6254
    %v8269 = vpack.c.b16 %v6274, %v6255
    %v8270 = vpack.c.b16 %v6275, %v6256
    %v8271 = vpack.c.b16 %v6276, %v6257
    %v8272 = vpack.c.b16 %v6277, %v6258
    %v8273 = vpack.c.b16 %v6278, %v6259
    %v8274 = vpack.c.b16 %v6279, %v6260
    %v8275 = vpack.c.b16 %v6280, %v6261
    %v8276 = vpack.c.b16 %v6300, %v6281
    %v8277 = vpack.c.b16 %v6301, %v6282
    %v8278 = vpack.c.b16 %v6302, %v6283
    %v8279 = vpack.c.b16 %v6303, %v6284
    %v8280 = vpack.c.b16 %v6304, %v6285
    %v8281 = vpack.c.b16 %v6305, %v6286
    %v8282 = vpack.c.b16 %v6306, %v6287
    %v8283 = vpack.c.b16 %v6307, %v6288
    %v8284 = vpack.c.b16 %v6308, %v6289
    %v8285 = vpack.c.b16 %v6309, %v6290
    %v8286 = vpack.c.b16 %v6310, %v6291
    %v8287 = vpack.c.b16 %v6311, %v6292
    %v8288 = vpack.c.b16 %v6312, %v6293
    %v8289 = vpack.c.b16 %v6313, %v6294
    %v8290 = vpack.c.b16 %v6314, %v6295
    %v8291 = vpack.c.b16 %v6315, %v6296
    %v8292 = vpack.c.b16 %v6316, %v6297
    %v8293 = vpack.c.b16 %v6317, %v6298
    %v8294 = vpack.c.b16 %v6318, %v6299
    %v8295 = vpack.c.b16 %v6338, %v6319
    %v8296 = vpack.c.b16 %v6339, %v6320
    %v8297 = vpack.c.b16 %v6340, %v6321
    %v8298 = vpack.c.b16 %v6341, %v6322
    %v8299 = vpack.c.b16 %v6342, %v6323
    %v8300 = vpack.c.b16 %v6343, %v6324
    %v8301 = vpack.c.b16 %v6344, %v6325
    %v8302 = vpack.c.b16 %v6345, %v6326
    %v8303 = vpack.c.b16 %v6346, %v6327
    %v8304 = vpack.c.b16 %v6347, %v6328
    %v8305 = vpack.c.b16 %v6348, %v6329
    %v8306 = vpack.c.b16 %v6349, %v6330
    %v8307 = vpack.c.b16 %v6350, %v6331
    %v8308 = vpack.c.b16 %v6351, %v6332
    %v8309 = vpack.c.b16 %v6352, %v6333
    %v8310 = vpack.c.b16 %v6353, %v6334
    %v8311 = vpack.c.b16 %v6354, %v6335
    %v8312 = vpack.c.b16 %v6355, %v6336
    %v8313 = vpack.c.b16 %v6356, %v6337
    %v8314 = vpack.c.b16 %v6376, %v6357
    %v8315 = vpack.c.b16 %v6377, %v6358
    %v8316 = vpack.c.b16 %v6378, %v6359
    %v8317 = vpack.c.b16 %v6379, %v6360
    %v8318 = vpack.c.b16 %v6380, %v6361
    %v8319 = vpack.c.b16 %v6381, %v6362
    %v8320 = vpack.c.b16 %v6382, %v6363
    %v8321 = vpack.c.b16 %v6383, %v6364
    %v8322 = vpack.c.b16 %v6384, %v6365
    %v8323 = vpack.c.b16 %v6385, %v6366
    %v8324 = vpack.c.b16 %v6386, %v6367
    %v8325 = vpack.c.b16 %v6387, %v6368
    %v8326 = vpack.c.b16 %v6388, %v6369
    %v8327 = vpack.c.b16 %v6389, %v6370
    %v8328 = vpack.c.b16 %v6390, %v6371
    %v8329 = vpack.c.b16 %v6391, %v6372
    %v8330 = vpack.c.b16 %v6392, %v6373
    %v8331 = vpack.c.b16 %v6393, %v6374
    %v8332 = vpack.c.b16 %v6394, %v6375
    %v8333 = vpack.c.b16 %v6414, %v6395
    %v8334 = vpack.c.b16 %v6415, %v6396
    %v8335 = vpack.c.b16 %v6416, %v6397
    %v8336 = vpack.c.b16 %v6417, %v6398
    %v8337 = vpack.c.b16 %v6418, %v6399
    %v8338 = vpack.c.b16 %v6419, %v6400
    %v8339 = vpack.c.b16 %v6420, %v6401
    %v8340 = vpack.c.b16 %v6421, %v6402
    %v8341 = vpack.c.b16 %v6422, %v6403
    %v8342 = vpack.c.b16 %v6423, %v6404
    %v8343 = vpack.c.b16 %v6424, %v6405
    %v8344 = vpack.c.b16 %v6425, %v6406
    %v8345 = vpack.c.b16 %v6426, %v6407
    %v8346 = vpack.c.b16 %v6427, %v6408
    %v8347 = vpack.c.b16 %v6428, %v6409
    %v8348 = vpack.c.b16 %v6429, %v6410
    %v8349 = vpack.c.b16 %v6430, %v6411
    %v8350 = vpack.c.b16 %v6431, %v6412
    %v8351 = vpack.c.b16 %v6432, %v6413
    %v8352 = vpack.c.b16 %v6452, %v6433
    %v8353 = vpack.c.b16 %v6453, %v6434
    %v8354 = vpack.c.b16 %v6454, %v6435
    %v8355 = vpack.c.b16 %v6455, %v6436
    %v8356 = vpack.c.b16 %v6456, %v6437
    %v8357 = vpack.c.b16 %v6457, %v6438
    %v8358 = vpack.c.b16 %v6458, %v6439
    %v8359 = vpack.c.b16 %v6459, %v6440
    %v8360 = vpack.c.b16 %v6460, %v6441
    %v8361 = vpack.c.b16 %v6461, %v6442
    %v8362 = vpack.c.b16 %v6462, %v6443
    %v8363 = vpack.c.b16 %v6463, %v6444
    %v8364 = vpack.c.b16 %v6464, %v6445
    %v8365 = vpack.c.b16 %v6465, %v6446
    %v8366 = vpack.c.b16 %v6466, %v6447
    %v8367 = vpack.c.b16 %v6467, %v6448
    %v8368 = vpack.c.b16 %v6468, %v6449
    %v8369 = vpack.c.b16 %v6469, %v6450
    %v8370 = vpack.c.b16 %v6470, %v6451
    %v8371 = vpack.c.b16 %v6490, %v6471
    %v8372 = vpack.c.b16 %v6491, %v6472
    %v8373 = vpack.c.b16 %v6492, %v6473
    %v8374 = vpack.c.b16 %v6493, %v6474
    %v8375 = vpack.c.b16 %v6494, %v6475
    %v8376 = vpack.c.b16 %v6495, %v6476
    %v8377 = vpack.c.b16 %v6496, %v6477
    %v8378 = vpack.c.b16 %v6497, %v6478
    %v8379 = vpack.c.b16 %v6498, %v6479
    %v8380 = vpack.c.b16 %v6499, %v6480
    %v8381 = vpack.c.b16 %v6500, %v6481
    %v8382 = vpack.c.b16 %v6501, %v6482
    %v8383 = vpack.c.b16 %v6502, %v6483
    %v8384 = vpack.c.b16 %v6503, %v6484
    %v8385 = vpack.c.b16 %v6504, %v6485
    %v8386 = vpack.c.b16 %v6505, %v6486
    %v8387 = vpack.c.b16 %v6506, %v6487
    %v8388 = vpack.c.b16 %v6507, %v6488
    %v8389 = vpack.c.b16 %v6508, %v6489
    %v8390 = vpack.c.b16 %v6528, %v6509
    %v8391 = vpack.c.b16 %v6529, %v6510
    %v8392 = vpack.c.b16 %v6530, %v6511
    %v8393 = vpack.c.b16 %v6531, %v6512
    %v8394 = vpack.c.b16 %v6532, %v6513
    %v8395 = vpack.c.b16 %v6533, %v6514
    %v8396 = vpack.c.b16 %v6534, %v6515
    %v8397 = vpack.c.b16 %v6535, %v6516
    %v8398 = vpack.c.b16 %v6536, %v6517
    %v8399 = vpack.c.b16 %v6537, %v6518
    %v8400 = vpack.c.b16 %v6538, %v6519
    %v8401 = vpack.c.b16 %v6539, %v6520
    %v8402 = vpack.c.b16 %v6540, %v6521
    %v8403 = vpack.c.b16 %v6541, %v6522
    %v8404 = vpack.c.b16 %v6542, %v6523
    %v8405 = vpack.c.b16 %v6543, %v6524
    %v8406 = vpack.c.b16 %v6544, %v6525
    %v8407 = vpack.c.b16 %v6545, %v6526
    %v8408 = vpack.c.b16 %v6546, %v6527
    %v8409 = vpack.c.b16 %v6566, %v6547
    %v8410 = vpack.c.b16 %v6567, %v6548
    %v8411 = vpack.c.b16 %v6568, %v6549
    %v8412 = vpack.c.b16 %v6569, %v6550
    %v8413 = vpack.c.b16 %v6570, %v6551
    %v8414 = vpack.c.b16 %v6571, %v6552
    %v8415 = vpack.c.b16 %v6572, %v6553
    %v8416 = vpack.c.b16 %v6573, %v6554
    %v8417 = vpack.c.b16 %v6574, %v6555
    %v8418 = vpack.c.b16 %v6575, %v6556
    %v8419 = vpack.c.b16 %v6576, %v6557
    %v8420 = vpack.c.b16 %v6577, %v6558
    %v8421 = vpack.c.b16 %v6578, %v6559
    %v8422 = vpack.c.b16 %v6579, %v6560
    %v8423 = vpack.c.b16 %v6580, %v6561
    %v8424 = vpack.c.b16 %v6581, %v6562
    %v8425 = vpack.c.b16 %v6582, %v6563
    %v8426 = vpack.c.b16 %v6583, %v6564
    %v8427 = vpack.c.b16 %v6584, %v6565
    %v8428 = vpack.c.b16 %v6604, %v6585
    %v8429 = vpack.c.b16 %v6605, %v6586
    %v8430 = vpack.c.b16 %v6606, %v6587
    %v8431 = vpack.c.b16 %v6607, %v6588
    %v8432 = vpack.c.b16 %v6608, %v6589
    %v8433 = vpack.c.b16 %v6609, %v6590
    %v8434 = vpack.c.b16 %v6610, %v6591
    %v8435 = vpack.c.b16 %v6611, %v6592
    %v8436 = vpack.c.b16 %v6612, %v6593
    %v8437 = vpack.c.b16 %v6613, %v6594
    %v8438 = vpack.c.b16 %v6614, %v6595
    %v8439 = vpack.c.b16 %v6615, %v6596
    %v8440 = vpack.c.b16 %v6616, %v6597
    %v8441 = vpack.c.b16 %v6617, %v6598
    %v8442 = vpack.c.b16 %v6618, %v6599
    %v8443 = vpack.c.b16 %v6619, %v6600
    %v8444 = vpack.c.b16 %v6620, %v6601
    %v8445 = vpack.c.b16 %v6621, %v6602
    %v8446 = vpack.c.b16 %v6622, %v6603
    %v8447 = vpack.c.b16 %v6642, %v6623
    %v8448 = vpack.c.b16 %v6643, %v6624
    %v8449 = vpack.c.b16 %v6644, %v6625
    %v8450 = vpack.c.b16 %v6645, %v6626
    %v8451 = vpack.c.b16 %v6646, %v6627
    %v8452 = vpack.c.b16 %v6647, %v6628
    %v8453 = vpack.c.b16 %v6648, %v6629
    %v8454 = vpack.c.b16 %v6649, %v6630
    %v8455 = vpack.c.b16 %v6650, %v6631
    %v8456 = vpack.c.b16 %v6651, %v6632
    %v8457 = vpack.c.b16 %v6652, %v6633
    %v8458 = vpack.c.b16 %v6653, %v6634
    %v8459 = vpack.c.b16 %v6654, %v6635
    %v8460 = vpack.c.b16 %v6655, %v6636
    %v8461 = vpack.c.b16 %v6656, %v6637
    %v8462 = vpack.c.b16 %v6657, %v6638
    %v8463 = vpack.c.b16 %v6658, %v6639
    %v8464 = vpack.c.b16 %v6659, %v6640
    %v8465 = vpack.c.b16 %v6660, %v6641
    %v8466 = vpack.c.b16 %v6680, %v6661
    %v8467 = vpack.c.b16 %v6681, %v6662
    %v8468 = vpack.c.b16 %v6682, %v6663
    %v8469 = vpack.c.b16 %v6683, %v6664
    %v8470 = vpack.c.b16 %v6684, %v6665
    %v8471 = vpack.c.b16 %v6685, %v6666
    %v8472 = vpack.c.b16 %v6686, %v6667
    %v8473 = vpack.c.b16 %v6687, %v6668
    %v8474 = vpack.c.b16 %v6688, %v6669
    %v8475 = vpack.c.b16 %v6689, %v6670
    %v8476 = vpack.c.b16 %v6690, %v6671
    %v8477 = vpack.c.b16 %v6691, %v6672
    %v8478 = vpack.c.b16 %v6692, %v6673
    %v8479 = vpack.c.b16 %v6693, %v6674
    %v8480 = vpack.c.b16 %v6694, %v6675
    %v8481 = vpack.c.b16 %v6695, %v6676
    %v8482 = vpack.c.b16 %v6696, %v6677
    %v8483 = vpack.c.b16 %v6697, %v6678
    %v8484 = vpack.c.b16 %v6698, %v6679
    %v8485 = vpack.c.b16 %v6718, %v6699
    %v8486 = vpack.c.b16 %v6719, %v6700
    %v8487 = vpack.c.b16 %v6720, %v6701
    %v8488 = vpack.c.b16 %v6721, %v6702
    %v8489 = vpack.c.b16 %v6722, %v6703
    %v8490 = vpack.c.b16 %v6723, %v6704
    %v8491 = vpack.c.b16 %v6724, %v6705
    %v8492 = vpack.c.b16 %v6725, %v6706
    %v8493 = vpack.c.b16 %v6726, %v6707
    %v8494 = vpack.c.b16 %v6727, %v6708
    %v8495 = vpack.c.b16 %v6728, %v6709
    %v8496 = vpack.c.b16 %v6729, %v6710
    %v8497 = vpack.c.b16 %v6730, %v6711
    %v8498 = vpack.c.b16 %v6731, %v6712
    %v8499 = vpack.c.b16 %v6732, %v6713
    %v8500 = vpack.c.b16 %v6733, %v6714
    %v8501 = vpack.c.b16 %v6734, %v6715
    %v8502 = vpack.c.b16 %v6735, %v6716
    %v8503 = vpack.c.b16 %v6736, %v6717
    %v8504 = vpack.c.b16 %v6756, %v6737
    %v8505 = vpack.c.b16 %v6757, %v6738
    %v8506 = vpack.c.b16 %v6758, %v6739
    %v8507 = vpack.c.b16 %v6759, %v6740
    %v8508 = vpack.c.b16 %v6760, %v6741
    %v8509 = vpack.c.b16 %v6761, %v6742
    %v8510 = vpack.c.b16 %v6762, %v6743
    %v8511 = vpack.c.b16 %v6763, %v6744
    %v8512 = vpack.c.b16 %v6764, %v6745
    %v8513 = vpack.c.b16 %v6765, %v6746
    %v8514 = vpack.c.b16 %v6766, %v6747
    %v8515 = vpack.c.b16 %v6767, %v6748
    %v8516 = vpack.c.b16 %v6768, %v6749
    %v8517 = vpack.c.b16 %v6769, %v6750
    %v8518 = vpack.c.b16 %v6770, %v6751
    %v8519 = vpack.c.b16 %v6771, %v6752
    %v8520 = vpack.c.b16 %v6772, %v6753
    %v8521 = vpack.c.b16 %v6773, %v6754
    %v8522 = vpack.c.b16 %v6774, %v6755
    %v8523 = vpack.c.b16 %v6794, %v6775
    %v8524 = vpack.c.b16 %v6795, %v6776
    %v8525 = vpack.c.b16 %v6796, %v6777
    %v8526 = vpack.c.b16 %v6797, %v6778
    %v8527 = vpack.c.b16 %v6798, %v6779
    %v8528 = vpack.c.b16 %v6799, %v6780
    %v8529 = vpack.c.b16 %v6800, %v6781
    %v8530 = vpack.c.b16 %v6801, %v6782
    %v8531 = vpack.c.b16 %v6802, %v6783
    %v8532 = vpack.c.b16 %v6803, %v6784
    %v8533 = vpack.c.b16 %v6804, %v6785
    %v8534 = vpack.c.b16 %v6805, %v6786
    %v8535 = vpack.c.b16 %v6806, %v6787
    %v8536 = vpack.c.b16 %v6807, %v6788
    %v8537 = vpack.c.b16 %v6808, %v6789
    %v8538 = vpack.c.b16 %v6809, %v6790
    %v8539 = vpack.c.b16 %v6810, %v6791
    %v8540 = vpack.c.b16 %v6811, %v6792
    %v8541 = vpack.c.b16 %v6812, %v6793
    %v8542 = vpack.c.b16 %v6832, %v6813
    %v8543 = vpack.c.b16 %v6833, %v6814
    %v8544 = vpack.c.b16 %v6834, %v6815
    %v8545 = vpack.c.b16 %v6835, %v6816
    %v8546 = vpack.c.b16 %v6836, %v6817
    %v8547 = vpack.c.b16 %v6837, %v6818
    %v8548 = vpack.c.b16 %v6838, %v6819
    %v8549 = vpack.c.b16 %v6839, %v6820
    %v8550 = vpack.c.b16 %v6840, %v6821
    %v8551 = vpack.c.b16 %v6841, %v6822
    %v8552 = vpack.c.b16 %v6842, %v6823
    %v8553 = vpack.c.b16 %v6843, %v6824
    %v8554 = vpack.c.b16 %v6844, %v6825
    %v8555 = vpack.c.b16 %v6845, %v6826
    %v8556 = vpack.c.b16 %v6846, %v6827
    %v8557 = vpack.c.b16 %v6847, %v6828
    %v8558 = vpack.c.b16 %v6848, %v6829
    %v8559 = vpack.c.b16 %v6849, %v6830
    %v8560 = vpack.c.b16 %v6850, %v6831
    %v8561 = vpack.c.b16 %v6870, %v6851
    %v8562 = vpack.c.b16 %v6871, %v6852
    %v8563 = vpack.c.b16 %v6872, %v6853
    %v8564 = vpack.c.b16 %v6873, %v6854
    %v8565 = vpack.c.b16 %v6874, %v6855
    %v8566 = vpack.c.b16 %v6875, %v6856
    %v8567 = vpack.c.b16 %v6876, %v6857
    %v8568 = vpack.c.b16 %v6877, %v6858
    %v8569 = vpack.c.b16 %v6878, %v6859
    %v8570 = vpack.c.b16 %v6879, %v6860
    %v8571 = vpack.c.b16 %v6880, %v6861
    %v8572 = vpack.c.b16 %v6881, %v6862
    %v8573 = vpack.c.b16 %v6882, %v6863
    %v8574 = vpack.c.b16 %v6883, %v6864
    %v8575 = vpack.c.b16 %v6884, %v6865
    %v8576 = vpack.c.b16 %v6885, %v6866
    %v8577 = vpack.c.b16 %v6886, %v6867
    %v8578 = vpack.c.b16 %v6887, %v6868
    %v8579 = vpack.c.b16 %v6888, %v6869
    %v8580 = vpack.c.b16 %v6908, %v6889
    %v8581 = vpack.c.b16 %v6909, %v6890
    %v8582 = vpack.c.b16 %v6910, %v6891
    %v8583 = vpack.c.b16 %v6911, %v6892
    %v8584 = vpack.c.b16 %v6912, %v6893
    %v8585 = vpack.c.b16 %v6913, %v6894
    %v8586 = vpack.c.b16 %v6914, %v6895
    %v8587 = vpack.c.b16 %v6915, %v6896
    %v8588 = vpack.c.b16 %v6916, %v6897
    %v8589 = vpack.c.b16 %v6917, %v6898
    %v8590 = vpack.c.b16 %v6918, %v6899
    %v8591 = vpack.c.b16 %v6919, %v6900
    %v8592 = vpack.c.b16 %v6920, %v6901
    %v8593 = vpack.c.b16 %v6921, %v6902
    %v8594 = vpack.c.b16 %v6922, %v6903
    %v8595 = vpack.c.b16 %v6923, %v6904
    %v8596 = vpack.c.b16 %v6924, %v6905
    %v8597 = vpack.c.b16 %v6925, %v6906
    %v8598 = vpack.c.b16 %v6926, %v6907
    %v8599 = vpack.c.b16 %v6946, %v6927
    %v8600 = vpack.c.b16 %v6947, %v6928
    %v8601 = vpack.c.b16 %v6948, %v6929
    %v8602 = vpack.c.b16 %v6949, %v6930
    %v8603 = vpack.c.b16 %v6950, %v6931
    %v8604 = vpack.c.b16 %v6951, %v6932
    %v8605 = vpack.c.b16 %v6952, %v6933
    %v8606 = vpack.c.b16 %v6953, %v6934
    %v8607 = vpack.c.b16 %v6954, %v6935
    %v8608 = vpack.c.b16 %v6955, %v6936
    %v8609 = vpack.c.b16 %v6956, %v6937
    %v8610 = vpack.c.b16 %v6957, %v6938
    %v8611 = vpack.c.b16 %v6958, %v6939
    %v8612 = vpack.c.b16 %v6959, %v6940
    %v8613 = vpack.c.b16 %v6960, %v6941
    %v8614 = vpack.c.b16 %v6961, %v6942
    %v8615 = vpack.c.b16 %v6962, %v6943
    %v8616 = vpack.c.b16 %v6963, %v6944
    %v8617 = vpack.c.b16 %v6964, %v6945
    %v8618 = vpack.c.b16 %v6984, %v6965
    %v8619 = vpack.c.b16 %v6985, %v6966
    %v8620 = vpack.c.b16 %v6986, %v6967
    %v8621 = vpack.c.b16 %v6987, %v6968
    %v8622 = vpack.c.b16 %v6988, %v6969
    %v8623 = vpack.c.b16 %v6989, %v6970
    %v8624 = vpack.c.b16 %v6990, %v6971
    %v8625 = vpack.c.b16 %v6991, %v6972
    %v8626 = vpack.c.b16 %v6992, %v6973
    %v8627 = vpack.c.b16 %v6993, %v6974
    %v8628 = vpack.c.b16 %v6994, %v6975
    %v8629 = vpack.c.b16 %v6995, %v6976
    %v8630 = vpack.c.b16 %v6996, %v6977
    %v8631 = vpack.c.b16 %v6997, %v6978
    %v8632 = vpack.c.b16 %v6998, %v6979
    %v8633 = vpack.c.b16 %v6999, %v6980
    %v8634 = vpack.c.b16 %v7000, %v6981
    %v8635 = vpack.c.b16 %v7001, %v6982
    %v8636 = vpack.c.b16 %v7002, %v6983
    %v8637 = vpack.c.b16 %v7022, %v7003
    %v8638 = vpack.c.b16 %v7023, %v7004
    %v8639 = vpack.c.b16 %v7024, %v7005
    %v8640 = vpack.c.b16 %v7025, %v7006
    %v8641 = vpack.c.b16 %v7026, %v7007
    %v8642 = vpack.c.b16 %v7027, %v7008
    %v8643 = vpack.c.b16 %v7028, %v7009
    %v8644 = vpack.c.b16 %v7029, %v7010
    %v8645 = vpack.c.b16 %v7030, %v7011
    %v8646 = vpack.c.b16 %v7031, %v7012
    %v8647 = vpack.c.b16 %v7032, %v7013
    %v8648 = vpack.c.b16 %v7033, %v7014
    %v8649 = vpack.c.b16 %v7034, %v7015
    %v8650 = vpack.c.b16 %v7035, %v7016
    %v8651 = vpack.c.b16 %v7036, %v7017
    %v8652 = vpack.c.b16 %v7037, %v7018
    %v8653 = vpack.c.b16 %v7038, %v7019
    %v8654 = vpack.c.b16 %v7039, %v7020
    %v8655 = vpack.c.b16 %v7040, %v7021
    %v8656 = vpack.c.b16 %v7060, %v7041
    %v8657 = vpack.c.b16 %v7061, %v7042
    %v8658 = vpack.c.b16 %v7062, %v7043
    %v8659 = vpack.c.b16 %v7063, %v7044
    %v8660 = vpack.c.b16 %v7064, %v7045
    %v8661 = vpack.c.b16 %v7065, %v7046
    %v8662 = vpack.c.b16 %v7066, %v7047
    %v8663 = vpack.c.b16 %v7067, %v7048
    %v8664 = vpack.c.b16 %v7068, %v7049
    %v8665 = vpack.c.b16 %v7069, %v7050
    %v8666 = vpack.c.b16 %v7070, %v7051
    %v8667 = vpack.c.b16 %v7071, %v7052
    %v8668 = vpack.c.b16 %v7072, %v7053
    %v8669 = vpack.c.b16 %v7073, %v7054
    %v8670 = vpack.c.b16 %v7074, %v7055
    %v8671 = vpack.c.b16 %v7075, %v7056
    %v8672 = vpack.c.b16 %v7076, %v7057
    %v8673 = vpack.c.b16 %v7077, %v7058
    %v8674 = vpack.c.b16 %v7078, %v7059
    %v8675 = vpack.c.b16 %v7098, %v7079
    %v8676 = vpack.c.b16 %v7099, %v7080
    %v8677 = vpack.c.b16 %v7100, %v7081
    %v8678 = vpack.c.b16 %v7101, %v7082
    %v8679 = vpack.c.b16 %v7102, %v7083
    %v8680 = vpack.c.b16 %v7103, %v7084
    %v8681 = vpack.c.b16 %v7104, %v7085
    %v8682 = vpack.c.b16 %v7105, %v7086
    %v8683 = vpack.c.b16 %v7106, %v7087
    %v8684 = vpack.c.b16 %v7107, %v7088
    %v8685 = vpack.c.b16 %v7108, %v7089
    %v8686 = vpack.c.b16 %v7109, %v7090
    %v8687 = vpack.c.b16 %v7110, %v7091
    %v8688 = vpack.c.b16 %v7111, %v7092
    %v8689 = vpack.c.b16 %v7112, %v7093
    %v8690 = vpack.c.b16 %v7113, %v7094
    %v8691 = vpack.c.b16 %v7114, %v7095
    %v8692 = vpack.c.b16 %v7115, %v7096
    %v8693 = vpack.c.b16 %v7116, %v7097
    %v8694 = vpack.c.b16 %v7136, %v7117
    %v8695 = vpack.c.b16 %v7137, %v7118
    %v8696 = vpack.c.b16 %v7138, %v7119
    %v8697 = vpack.c.b16 %v7139, %v7120
    %v8698 = vpack.c.b16 %v7140, %v7121
    %v8699 = vpack.c.b16 %v7141, %v7122
    %v8700 = vpack.c.b16 %v7142, %v7123
    %v8701 = vpack.c.b16 %v7143, %v7124
    %v8702 = vpack.c.b16 %v7144, %v7125
    %v8703 = vpack.c.b16 %v7145, %v7126
    %v8704 = vpack.c.b16 %v7146, %v7127
    %v8705 = vpack.c.b16 %v7147, %v7128
    %v8706 = vpack.c.b16 %v7148, %v7129
    %v8707 = vpack.c.b16 %v7149, %v7130
    %v8708 = vpack.c.b16 %v7150, %v7131
    %v8709 = vpack.c.b16 %v7151, %v7132
    %v8710 = vpack.c.b16 %v7152, %v7133
    %v8711 = vpack.c.b16 %v7153, %v7134
    %v8712 = vpack.c.b16 %v7154, %v7135
    %v8713 = vpack.c.b16 %v7174, %v7155
    %v8714 = vpack.c.b16 %v7175, %v7156
    %v8715 = vpack.c.b16 %v7176, %v7157
    %v8716 = vpack.c.b16 %v7177, %v7158
    %v8717 = vpack.c.b16 %v7178, %v7159
    %v8718 = vpack.c.b16 %v7179, %v7160
    %v8719 = vpack.c.b16 %v7180, %v7161
    %v8720 = vpack.c.b16 %v7181, %v7162
    %v8721 = vpack.c.b16 %v7182, %v7163
    %v8722 = vpack.c.b16 %v7183, %v7164
    %v8723 = vpack.c.b16 %v7184, %v7165
    %v8724 = vpack.c.b16 %v7185, %v7166
    %v8725 = vpack.c.b16 %v7186, %v7167
    %v8726 = vpack.c.b16 %v7187, %v7168
    %v8727 = vpack.c.b16 %v7188, %v7169
    %v8728 = vpack.c.b16 %v7189, %v7170
    %v8729 = vpack.c.b16 %v7190, %v7171
    %v8730 = vpack.c.b16 %v7191, %v7172
    %v8731 = vpack.c.b16 %v7192, %v7173
    %v8732 = vpack.c.b16 %v7212, %v7193
    %v8733 = vpack.c.b16 %v7213, %v7194
    %v8734 = vpack.c.b16 %v7214, %v7195
    %v8735 = vpack.c.b16 %v7215, %v7196
    %v8736 = vpack.c.b16 %v7216, %v7197
    %v8737 = vpack.c.b16 %v7217, %v7198
    %v8738 = vpack.c.b16 %v7218, %v7199
    %v8739 = vpack.c.b16 %v7219, %v7200
    %v8740 = vpack.c.b16 %v7220, %v7201
    %v8741 = vpack.c.b16 %v7221, %v7202
    %v8742 = vpack.c.b16 %v7222, %v7203
    %v8743 = vpack.c.b16 %v7223, %v7204
    %v8744 = vpack.c.b16 %v7224, %v7205
    %v8745 = vpack.c.b16 %v7225, %v7206
    %v8746 = vpack.c.b16 %v7226, %v7207
    %v8747 = vpack.c.b16 %v7227, %v7208
    %v8748 = vpack.c.b16 %v7228, %v7209
    %v8749 = vpack.c.b16 %v7229, %v7210
    %v8750 = vpack.c.b16 %v7230, %v7211
    %v8751 = vpack.c.b16 %v7250, %v7231
    %v8752 = vpack.c.b16 %v7251, %v7232
    %v8753 = vpack.c.b16 %v7252, %v7233
    %v8754 = vpack.c.b16 %v7253, %v7234
    %v8755 = vpack.c.b16 %v7254, %v7235
    %v8756 = vpack.c.b16 %v7255, %v7236
    %v8757 = vpack.c.b16 %v7256, %v7237
    %v8758 = vpack.c.b16 %v7257, %v7238
    %v8759 = vpack.c.b16 %v7258, %v7239
    %v8760 = vpack.c.b16 %v7259, %v7240
    %v8761 = vpack.c.b16 %v7260, %v7241
    %v8762 = vpack.c.b16 %v7261, %v7242
    %v8763 = vpack.c.b16 %v7262, %v7243
    %v8764 = vpack.c.b16 %v7263, %v7244
    %v8765 = vpack.c.b16 %v7264, %v7245
    %v8766 = vpack.c.b16 %v7265, %v7246
    %v8767 = vpack.c.b16 %v7266, %v7247
    %v8768 = vpack.c.b16 %v7267, %v7248
    %v8769 = vpack.c.b16 %v7268, %v7249
    %v8770 = vpack.c.b16 %v7288, %v7269
    %v8771 = vpack.c.b16 %v7289, %v7270
    %v8772 = vpack.c.b16 %v7290, %v7271
    %v8773 = vpack.c.b16 %v7291, %v7272
    %v8774 = vpack.c.b16 %v7292, %v7273
    %v8775 = vpack.c.b16 %v7293, %v7274
    %v8776 = vpack.c.b16 %v7294, %v7275
    %v8777 = vpack.c.b16 %v7295, %v7276
    %v8778 = vpack.c.b16 %v7296, %v7277
    %v8779 = vpack.c.b16 %v7297, %v7278
    %v8780 = vpack.c.b16 %v7298, %v7279
    %v8781 = vpack.c.b16 %v7299, %v7280
    %v8782 = vpack.c.b16 %v7300, %v7281
    %v8783 = vpack.c.b16 %v7301, %v7282
    %v8784 = vpack.c.b16 %v7302, %v7283
    %v8785 = vpack.c.b16 %v7303, %v7284
    %v8786 = vpack.c.b16 %v7304, %v7285
    %v8787 = vpack.c.b16 %v7305, %v7286
    %v8788 = vpack.c.b16 %v7306, %v7287
    %v8789 = vpack.c.b16 %v7326, %v7307
    %v8790 = vpack.c.b16 %v7327, %v7308
    %v8791 = vpack.c.b16 %v7328, %v7309
    %v8792 = vpack.c.b16 %v7329, %v7310
    %v8793 = vpack.c.b16 %v7330, %v7311
    %v8794 = vpack.c.b16 %v7331, %v7312
    %v8795 = vpack.c.b16 %v7332, %v7313
    %v8796 = vpack.c.b16 %v7333, %v7314
    %v8797 = vpack.c.b16 %v7334, %v7315
    %v8798 = vpack.c.b16 %v7335, %v7316
    %v8799 = vpack.c.b16 %v7336, %v7317
    %v8800 = vpack.c.b16 %v7337, %v7318
    %v8801 = vpack.c.b16 %v7338, %v7319
    %v8802 = vpack.c.b16 %v7339, %v7320
    %v8803 = vpack.c.b16 %v7340, %v7321
    %v8804 = vpack.c.b16 %v7341, %v7322
    %v8805 = vpack.c.b16 %v7342, %v7323
    %v8806 = vpack.c.b16 %v7343, %v7324
    %v8807 = vpack.c.b16 %v7344, %v7325
    %v8808 = vpack.c.b16 %v7364, %v7345
    %v8809 = vpack.c.b16 %v7365, %v7346
    %v8810 = vpack.c.b16 %v7366, %v7347
    %v8811 = vpack.c.b16 %v7367, %v7348
    %v8812 = vpack.c.b16 %v7368, %v7349
    %v8813 = vpack.c.b16 %v7369, %v7350
    %v8814 = vpack.c.b16 %v7370, %v7351
    %v8815 = vpack.c.b16 %v7371, %v7352
    %v8816 = vpack.c.b16 %v7372, %v7353
    %v8817 = vpack.c.b16 %v7373, %v7354
    %v8818 = vpack.c.b16 %v7374, %v7355
    %v8819 = vpack.c.b16 %v7375, %v7356
    %v8820 = vpack.c.b16 %v7376, %v7357
    %v8821 = vpack.c.b16 %v7377, %v7358
    %v8822 = vpack.c.b16 %v7378, %v7359
    %v8823 = vpack.c.b16 %v7379, %v7360
    %v8824 = vpack.c.b16 %v7380, %v7361
    %v8825 = vpack.c.b16 %v7381, %v7362
    %v8826 = vpack.c.b16 %v7382, %v7363
    %v8827 = vpack.c.b16 %v7402, %v7383
    %v8828 = vpack.c.b16 %v7403, %v7384
    %v8829 = vpack.c.b16 %v7404, %v7385
    %v8830 = vpack.c.b16 %v7405, %v7386
    %v8831 = vpack.c.b16 %v7406, %v7387
    %v8832 = vpack.c.b16 %v7407, %v7388
    %v8833 = vpack.c.b16 %v7408, %v7389
    %v8834 = vpack.c.b16 %v7409, %v7390
    %v8835 = vpack.c.b16 %v7410, %v7391
    %v8836 = vpack.c.b16 %v7411, %v7392
    %v8837 = vpack.c.b16 %v7412, %v7393
    %v8838 = vpack.c.b16 %v7413, %v7394
    %v8839 = vpack.c.b16 %v7414, %v7395
    %v8840 = vpack.c.b16 %v7415, %v7396
    %v8841 = vpack.c.b16 %v7416, %v7397
    %v8842 = vpack.c.b16 %v7417, %v7398
    %v8843 = vpack.c.b16 %v7418, %v7399
    %v8844 = vpack.c.b16 %v7419, %v7400
    %v8845 = vpack.c.b16 %v7420, %v7401
    %v8846 = vpack.c.b16 %v7440, %v7421
    %v8847 = vpack.c.b16 %v7441, %v7422
    %v8848 = vpack.c.b16 %v7442, %v7423
    %v8849 = vpack.c.b16 %v7443, %v7424
    %v8850 = vpack.c.b16 %v7444, %v7425
    %v8851 = vpack.c.b16 %v7445, %v7426
    %v8852 = vpack.c.b16 %v7446, %v7427
    %v8853 = vpack.c.b16 %v7447, %v7428
    %v8854 = vpack.c.b16 %v7448, %v7429
    %v8855 = vpack.c.b16 %v7449, %v7430
    %v8856 = vpack.c.b16 %v7450, %v7431
    %v8857 = vpack.c.b16 %v7451, %v7432
    %v8858 = vpack.c.b16 %v7452, %v7433
    %v8859 = vpack.c.b16 %v7453, %v7434
    %v8860 = vpack.c.b16 %v7454, %v7435
    %v8861 = vpack.c.b16 %v7455, %v7436
    %v8862 = vpack.c.b16 %v7456, %v7437
    %v8863 = vpack.c.b16 %v7457, %v7438
    %v8864 = vpack.c.b16 %v7458, %v7439
    %v8865 = vpack.c.b16 %v7478, %v7459
    %v8866 = vpack.c.b16 %v7479, %v7460
    %v8867 = vpack.c.b16 %v7480, %v7461
    %v8868 = vpack.c.b16 %v7481, %v7462
    %v8869 = vpack.c.b16 %v7482, %v7463
    %v8870 = vpack.c.b16 %v7483, %v7464
    %v8871 = vpack.c.b16 %v7484, %v7465
    %v8872 = vpack.c.b16 %v7485, %v7466
    %v8873 = vpack.c.b16 %v7486, %v7467
    %v8874 = vpack.c.b16 %v7487, %v7468
    %v8875 = vpack.c.b16 %v7488, %v7469
    %v8876 = vpack.c.b16 %v7489, %v7470
    %v8877 = vpack.c.b16 %v7490, %v7471
    %v8878 = vpack.c.b16 %v7491, %v7472
    %v8879 = vpack.c.b16 %v7492, %v7473
    %v8880 = vpack.c.b16 %v7493, %v7474
    %v8881 = vpack.c.b16 %v7494, %v7475
    %v8882 = vpack.c.b16 %v7495, %v7476
    %v8883 = vpack.c.b16 %v7496, %v7477
    %v8884 = vpack.c.b16 %v7516, %v7497
    %v8885 = vpack.c.b16 %v7517, %v7498
    %v8886 = vpack.c.b16 %v7518, %v7499
    %v8887 = vpack.c.b16 %v7519, %v7500
    %v8888 = vpack.c.b16 %v7520, %v7501
    %v8889 = vpack.c.b16 %v7521, %v7502
    %v8890 = vpack.c.b16 %v7522, %v7503
    %v8891 = vpack.c.b16 %v7523, %v7504
    %v8892 = vpack.c.b16 %v7524, %v7505
    %v8893 = vpack.c.b16 %v7525, %v7506
    %v8894 = vpack.c.b16 %v7526, %v7507
    %v8895 = vpack.c.b16 %v7527, %v7508
    %v8896 = vpack.c.b16 %v7528, %v7509
    %v8897 = vpack.c.b16 %v7529, %v7510
    %v8898 = vpack.c.b16 %v7530, %v7511
    %v8899 = vpack.c.b16 %v7531, %v7512
    %v8900 = vpack.c.b16 %v7532, %v7513
    %v8901 = vpack.c.b16 %v7533, %v7514
    %v8902 = vpack.c.b16 %v7534, %v7515
    %v8903 = vpack.c.b16 %v7554, %v7535
    %v8904 = vpack.c.b16 %v7555, %v7536
    %v8905 = vpack.c.b16 %v7556, %v7537
    %v8906 = vpack.c.b16 %v7557, %v7538
    %v8907 = vpack.c.b16 %v7558, %v7539
    %v8908 = vpack.c.b16 %v7559, %v7540
    %v8909 = vpack.c.b16 %v7560, %v7541
    %v8910 = vpack.c.b16 %v7561, %v7542
    %v8911 = vpack.c.b16 %v7562, %v7543
    %v8912 = vpack.c.b16 %v7563, %v7544
    %v8913 = vpack.c.b16 %v7564, %v7545
    %v8914 = vpack.c.b16 %v7565, %v7546
    %v8915 = vpack.c.b16 %v7566, %v7547
    %v8916 = vpack.c.b16 %v7567, %v7548
    %v8917 = vpack.c.b16 %v7568, %v7549
    %v8918 = vpack.c.b16 %v7569, %v7550
    %v8919 = vpack.c.b16 %v7570, %v7551
    %v8920 = vpack.c.b16 %v7571, %v7552
    %v8921 = vpack.c.b16 %v7572, %v7553
    %v8922 = vpack.c.b16 %v7592, %v7573
    %v8923 = vpack.c.b16 %v7593, %v7574
    %v8924 = vpack.c.b16 %v7594, %v7575
    %v8925 = vpack.c.b16 %v7595, %v7576
    %v8926 = vpack.c.b16 %v7596, %v7577
    %v8927 = vpack.c.b16 %v7597, %v7578
    %v8928 = vpack.c.b16 %v7598, %v7579
    %v8929 = vpack.c.b16 %v7599, %v7580
    %v8930 = vpack.c.b16 %v7600, %v7581
    %v8931 = vpack.c.b16 %v7601, %v7582
    %v8932 = vpack.c.b16 %v7602, %v7583
    %v8933 = vpack.c.b16 %v7603, %v7584
    %v8934 = vpack.c.b16 %v7604, %v7585
    %v8935 = vpack.c.b16 %v7605, %v7586
    %v8936 = vpack.c.b16 %v7606, %v7587
    %v8937 = vpack.c.b16 %v7607, %v7588
    %v8938 = vpack.c.b16 %v7608, %v7589
    %v8939 = vpack.c.b16 %v7609, %v7590
    %v8940 = vpack.c.b16 %v7610, %v7591
    %v8941 = vpack.c.b16 %v7630, %v7611
    %v8942 = vpack.c.b16 %v7631, %v7612
    %v8943 = vpack.c.b16 %v7632, %v7613
    %v8944 = vpack.c.b16 %v7633, %v7614
    %v8945 = vpack.c.b16 %v7634, %v7615
    %v8946 = vpack.c.b16 %v7635, %v7616
    %v8947 = vpack.c.b16 %v7636, %v7617
    %v8948 = vpack.c.b16 %v7637, %v7618
    %v8949 = vpack.c.b16 %v7638, %v7619
    %v8950 = vpack.c.b16 %v7639, %v7620
    %v8951 = vpack.c.b16 %v7640, %v7621
    %v8952 = vpack.c.b16 %v7641, %v7622
    %v8953 = vpack.c.b16 %v7642, %v7623
    %v8954 = vpack.c.b16 %v7643, %v7624
    %v8955 = vpack.c.b16 %v7644, %v7625
    %v8956 = vpack.c.b16 %v7645, %v7626
    %v8957 = vpack.c.b16 %v7646, %v7627
    %v8958 = vpack.c.b16 %v7647, %v7628
    %v8959 = vpack.c.b16 %v7648, %v7629
    %v8960 = vpack.c.b16 %v7668, %v7649
    %v8961 = vpack.c.b16 %v7669, %v7650
    %v8962 = vpack.c.b16 %v7670, %v7651
    %v8963 = vpack.c.b16 %v7671, %v7652
    %v8964 = vpack.c.b16 %v7672, %v7653
    %v8965 = vpack.c.b16 %v7673, %v7654
    %v8966 = vpack.c.b16 %v7674, %v7655
    %v8967 = vpack.c.b16 %v7675, %v7656
    %v8968 = vpack.c.b16 %v7676, %v7657
    %v8969 = vpack.c.b16 %v7677, %v7658
    %v8970 = vpack.c.b16 %v7678, %v7659
    %v8971 = vpack.c.b16 %v7679, %v7660
    %v8972 = vpack.c.b16 %v7680, %v7661
    %v8973 = vpack.c.b16 %v7681, %v7662
    %v8974 = vpack.c.b16 %v7682, %v7663
    %v8975 = vpack.c.b16 %v7683, %v7664
    %v8976 = vpack.c.b16 %v7684, %v7665
    %v8977 = vpack.c.b16 %v7685, %v7666
    %v8978 = vpack.c.b16 %v7686, %v7667
    %v8979 = vpack.c.b16 %v7706, %v7687
    %v8980 = vpack.c.b16 %v7707, %v7688
    %v8981 = vpack.c.b16 %v7708, %v7689
    %v8982 = vpack.c.b16 %v7709, %v7690
    %v8983 = vpack.c.b16 %v7710, %v7691
    %v8984 = vpack.c.b16 %v7711, %v7692
    %v8985 = vpack.c.b16 %v7712, %v7693
    %v8986 = vpack.c.b16 %v7713, %v7694
    %v8987 = vpack.c.b16 %v7714, %v7695
    %v8988 = vpack.c.b16 %v7715, %v7696
    %v8989 = vpack.c.b16 %v7716, %v7697
    %v8990 = vpack.c.b16 %v7717, %v7698
    %v8991 = vpack.c.b16 %v7718, %v7699
    %v8992 = vpack.c.b16 %v7719, %v7700
    %v8993 = vpack.c.b16 %v7720, %v7701
    %v8994 = vpack.c.b16 %v7721, %v7702
    %v8995 = vpack.c.b16 %v7722, %v7703
    %v8996 = vpack.c.b16 %v7723, %v7704
    %v8997 = vpack.c.b16 %v7724, %v7705
    %v8998 = vpack.c.b16 %v7744, %v7725
    %v8999 = vpack.c.b16 %v7745, %v7726
    %v9000 = vpack.c.b16 %v7746, %v7727
    %v9001 = vpack.c.b16 %v7747, %v7728
    %v9002 = vpack.c.b16 %v7748, %v7729
    %v9003 = vpack.c.b16 %v7749, %v7730
    %v9004 = vpack.c.b16 %v7750, %v7731
    %v9005 = vpack.c.b16 %v7751, %v7732
    %v9006 = vpack.c.b16 %v7752, %v7733
    %v9007 = vpack.c.b16 %v7753, %v7734
    %v9008 = vpack.c.b16 %v7754, %v7735
    %v9009 = vpack.c.b16 %v7755, %v7736
    %v9010 = vpack.c.b16 %v7756, %v7737
    %v9011 = vpack.c.b16 %v7757, %v7738
    %v9012 = vpack.c.b16 %v7758, %v7739
    %v9013 = vpack.c.b16 %v7759, %v7740
    %v9014 = vpack.c.b16 %v7760, %v7741
    %v9015 = vpack.c.b16 %v7761, %v7742
    %v9016 = vpack.c.b16 %v7762, %v7743
    %v9017 = vpack.c.b16 %v7782, %v7763
    %v9018 = vpack.c.b16 %v7783, %v7764
    %v9019 = vpack.c.b16 %v7784, %v7765
    %v9020 = vpack.c.b16 %v7785, %v7766
    %v9021 = vpack.c.b16 %v7786, %v7767
    %v9022 = vpack.c.b16 %v7787, %v7768
    %v9023 = vpack.c.b16 %v7788, %v7769
    %v9024 = vpack.c.b16 %v7789, %v7770
    %v9025 = vpack.c.b16 %v7790, %v7771
    %v9026 = vpack.c.b16 %v7791, %v7772
    %v9027 = vpack.c.b16 %v7792, %v7773
    %v9028 = vpack.c.b16 %v7793, %v7774
    %v9029 = vpack.c.b16 %v7794, %v7775
    %v9030 = vpack.c.b16 %v7795, %v7776
    %v9031 = vpack.c.b16 %v7796, %v7777
    %v9032 = vpack.c.b16 %v7797, %v7778
    %v9033 = vpack.c.b16 %v7798, %v7779
    %v9034 = vpack.c.b16 %v7799, %v7780
    %v9035 = vpack.c.b16 %v7800, %v7781
    %v9036 = vpack.c.b16 %v7820, %v7801
    %v9037 = vpack.c.b16 %v7821, %v7802
    %v9038 = vpack.c.b16 %v7822, %v7803
    %v9039 = vpack.c.b16 %v7823, %v7804
    %v9040 = vpack.c.b16 %v7824, %v7805
    %v9041 = vpack.c.b16 %v7825, %v7806
    %v9042 = vpack.c.b16 %v7826, %v7807
    %v9043 = vpack.c.b16 %v7827, %v7808
    %v9044 = vpack.c.b16 %v7828, %v7809
    %v9045 = vpack.c.b16 %v7829, %v7810
    %v9046 = vpack.c.b16 %v7830, %v7811
    %v9047 = vpack.c.b16 %v7831, %v7812
    %v9048 = vpack.c.b16 %v7832, %v7813
    %v9049 = vpack.c.b16 %v7833, %v7814
    %v9050 = vpack.c.b16 %v7834, %v7815
    %v9051 = vpack.c.b16 %v7835, %v7816
    %v9052 = vpack.c.b16 %v7836, %v7817
    %v9053 = vpack.c.b16 %v7837, %v7818
    %v9054 = vpack.c.b16 %v7838, %v7819
    %10271 = vmatpush.bf16.msra.mxu0 %v7972
    %10272 = vmatpush.bf16.msra.mxu0 %v7953
    %10273 = vmatpush.bf16.msra.mxu0 %v7934
    %10274 = vmatpush.bf16.msra.mxu0 %v7915
    %10275 = vmatpush.bf16.msra.mxu0 %v7896
    %10276 = vmatpush.bf16.msra.mxu0 %v7877
    %10277 = vmatpush.bf16.msra.mxu0 %v7858
    %10278 = vmatpush.bf16.msra.mxu0 %v7839
    %10279 = vmatmul.bf16.gmra.mxu0 %v2795
    %v10280 = vpop.f32.mrf.mxu0
    %v10281 = vadd.f32 %v4089, %v10280
    %v10282 = vpop.f32.mrf.mxu0
    %10283 = vdwg.mxu0
    %10284 = vmatpush.bf16.msra.mxu0 %v8124
    %10285 = vmatpush.bf16.msra.mxu0 %v8105
    %10286 = vmatpush.bf16.msra.mxu0 %v8086
    %10287 = vmatpush.bf16.msra.mxu0 %v8067
    %10288 = vmatpush.bf16.msra.mxu0 %v8048
    %10289 = vmatpush.bf16.msra.mxu0 %v8029
    %10290 = vmatpush.bf16.msra.mxu0 %v8010
    %10291 = vmatpush.bf16.msra.mxu0 %v7991
    %10292 = vmatmul.bf16.gmra.mxu0 %v2796
    %v10293 = vpop.f32.mrf.mxu0
    %v10294 = vadd.f32 %v10281, %v10293
    %v10295 = vpop.f32.mrf.mxu0
    %10296 = vdwg.mxu0
    %10297 = vmatpush.bf16.msra.mxu0 %v8276
    %10298 = vmatpush.bf16.msra.mxu0 %v8257
    %10299 = vmatpush.bf16.msra.mxu0 %v8238
    %10300 = vmatpush.bf16.msra.mxu0 %v8219
    %10301 = vmatpush.bf16.msra.mxu0 %v8200
    %10302 = vmatpush.bf16.msra.mxu0 %v8181
    %10303 = vmatpush.bf16.msra.mxu0 %v8162
    %10304 = vmatpush.bf16.msra.mxu0 %v8143
    %10305 = vmatmul.bf16.gmra.mxu0 %v2797
    %v10306 = vpop.f32.mrf.mxu0
    %v10307 = vadd.f32 %v10294, %v10306
    %v10308 = vpop.f32.mrf.mxu0
    %10309 = vdwg.mxu0
    %10310 = vmatpush.bf16.msra.mxu0 %v8428
    %10311 = vmatpush.bf16.msra.mxu0 %v8409
    %10312 = vmatpush.bf16.msra.mxu0 %v8390
    %10313 = vmatpush.bf16.msra.mxu0 %v8371
    %10314 = vmatpush.bf16.msra.mxu0 %v8352
    %10315 = vmatpush.bf16.msra.mxu0 %v8333
    %10316 = vmatpush.bf16.msra.mxu0 %v8314
    %10317 = vmatpush.bf16.msra.mxu0 %v8295
    %10318 = vmatmul.bf16.gmra.mxu0 %v2798
    %v10319 = vpop.f32.mrf.mxu0
    %v10320 = vadd.f32 %v10307, %v10319
    %v10321 = vpop.f32.mrf.mxu0
    %10322 = vdwg.mxu0
    %10323 = vmatpush.bf16.msra.mxu0 %v8580
    %10324 = vmatpush.bf16.msra.mxu0 %v8561
    %10325 = vmatpush.bf16.msra.mxu0 %v8542
    %10326 = vmatpush.bf16.msra.mxu0 %v8523
    %10327 = vmatpush.bf16.msra.mxu0 %v8504
    %10328 = vmatpush.bf16.msra.mxu0 %v8485
    %10329 = vmatpush.bf16.msra.mxu0 %v8466
    %10330 = vmatpush.bf16.msra.mxu0 %v8447
    %10331 = vmatmul.bf16.gmra.mxu0 %v2799
    %v10332 = vpop.f32.mrf.mxu0
    %v10333 = vadd.f32 %v10320, %v10332
    %v10334 = vpop.f32.mrf.mxu0
    %10335 = vdwg.mxu0
    %10336 = vmatpush.bf16.msra.mxu0 %v8732
    %10337 = vmatpush.bf16.msra.mxu0 %v8713
    %10338 = vmatpush.bf16.msra.mxu0 %v8694
    %10339 = vmatpush.bf16.msra.mxu0 %v8675
    %10340 = vmatpush.bf16.msra.mxu0 %v8656
    %10341 = vmatpush.bf16.msra.mxu0 %v8637
    %10342 = vmatpush.bf16.msra.mxu0 %v8618
    %10343 = vmatpush.bf16.msra.mxu0 %v8599
    %10344 = vmatmul.bf16.gmra.mxu0 %v2800
    %v10345 = vpop.f32.mrf.mxu0
    %v10346 = vadd.f32 %v10333, %v10345
    %v10347 = vpop.f32.mrf.mxu0
    %10348 = vdwg.mxu0
    %10349 = vmatpush.bf16.msra.mxu0 %v8884
    %10350 = vmatpush.bf16.msra.mxu0 %v8865
    %10351 = vmatpush.bf16.msra.mxu0 %v8846
    %10352 = vmatpush.bf16.msra.mxu0 %v8827
    %10353 = vmatpush.bf16.msra.mxu0 %v8808
    %10354 = vmatpush.bf16.msra.mxu0 %v8789
    %10355 = vmatpush.bf16.msra.mxu0 %v8770
    %10356 = vmatpush.bf16.msra.mxu0 %v8751
    %10357 = vmatmul.bf16.gmra.mxu0 %v2801
    %v10358 = vpop.f32.mrf.mxu0
    %v10359 = vadd.f32 %v10346, %v10358
    %v10360 = vpop.f32.mrf.mxu0
    %10361 = vdwg.mxu0
    %10362 = vmatpush.bf16.msra.mxu0 %v9036
    %10363 = vmatpush.bf16.msra.mxu0 %v9017
    %10364 = vmatpush.bf16.msra.mxu0 %v8998
    %10365 = vmatpush.bf16.msra.mxu0 %v8979
    %10366 = vmatpush.bf16.msra.mxu0 %v8960
    %10367 = vmatpush.bf16.msra.mxu0 %v8941
    %10368 = vmatpush.bf16.msra.mxu0 %v8922
    %10369 = vmatpush.bf16.msra.mxu0 %v8903
    %10370 = vmatmul.bf16.gmra.mxu0 %v2802
    %v10371 = vpop.f32.mrf.mxu0
    %v10372 = vadd.f32 %v10359, %v10371
    %v10373 = vpop.f32.mrf.mxu0
    %10374 = vdwg.mxu0
    %10375 = vmatpush.bf16.msra.mxu0 %v7973
    %10376 = vmatpush.bf16.msra.mxu0 %v7954
    %10377 = vmatpush.bf16.msra.mxu0 %v7935
    %10378 = vmatpush.bf16.msra.mxu0 %v7916
    %10379 = vmatpush.bf16.msra.mxu0 %v7897
    %10380 = vmatpush.bf16.msra.mxu0 %v7878
    %10381 = vmatpush.bf16.msra.mxu0 %v7859
    %10382 = vmatpush.bf16.msra.mxu0 %v7840
    %10383 = vmatmul.bf16.gmra.mxu0 %v2795
    %v10384 = vpop.f32.mrf.mxu0
    %v10385 = vadd.f32 %v4090, %v10384
    %v10386 = vpop.f32.mrf.mxu0
    %10387 = vdwg.mxu0
    %10388 = vmatpush.bf16.msra.mxu0 %v8125
    %10389 = vmatpush.bf16.msra.mxu0 %v8106
    %10390 = vmatpush.bf16.msra.mxu0 %v8087
    %10391 = vmatpush.bf16.msra.mxu0 %v8068
    %10392 = vmatpush.bf16.msra.mxu0 %v8049
    %10393 = vmatpush.bf16.msra.mxu0 %v8030
    %10394 = vmatpush.bf16.msra.mxu0 %v8011
    %10395 = vmatpush.bf16.msra.mxu0 %v7992
    %10396 = vmatmul.bf16.gmra.mxu0 %v2796
    %v10397 = vpop.f32.mrf.mxu0
    %v10398 = vadd.f32 %v10385, %v10397
    %v10399 = vpop.f32.mrf.mxu0
    %10400 = vdwg.mxu0
    %10401 = vmatpush.bf16.msra.mxu0 %v8277
    %10402 = vmatpush.bf16.msra.mxu0 %v8258
    %10403 = vmatpush.bf16.msra.mxu0 %v8239
    %10404 = vmatpush.bf16.msra.mxu0 %v8220
    %10405 = vmatpush.bf16.msra.mxu0 %v8201
    %10406 = vmatpush.bf16.msra.mxu0 %v8182
    %10407 = vmatpush.bf16.msra.mxu0 %v8163
    %10408 = vmatpush.bf16.msra.mxu0 %v8144
    %10409 = vmatmul.bf16.gmra.mxu0 %v2797
    %v10410 = vpop.f32.mrf.mxu0
    %v10411 = vadd.f32 %v10398, %v10410
    %v10412 = vpop.f32.mrf.mxu0
    %10413 = vdwg.mxu0
    %10414 = vmatpush.bf16.msra.mxu0 %v8429
    %10415 = vmatpush.bf16.msra.mxu0 %v8410
    %10416 = vmatpush.bf16.msra.mxu0 %v8391
    %10417 = vmatpush.bf16.msra.mxu0 %v8372
    %10418 = vmatpush.bf16.msra.mxu0 %v8353
    %10419 = vmatpush.bf16.msra.mxu0 %v8334
    %10420 = vmatpush.bf16.msra.mxu0 %v8315
    %10421 = vmatpush.bf16.msra.mxu0 %v8296
    %10422 = vmatmul.bf16.gmra.mxu0 %v2798
    %v10423 = vpop.f32.mrf.mxu0
    %v10424 = vadd.f32 %v10411, %v10423
    %v10425 = vpop.f32.mrf.mxu0
    %10426 = vdwg.mxu0
    %10427 = vmatpush.bf16.msra.mxu0 %v8581
    %10428 = vmatpush.bf16.msra.mxu0 %v8562
    %10429 = vmatpush.bf16.msra.mxu0 %v8543
    %10430 = vmatpush.bf16.msra.mxu0 %v8524
    %10431 = vmatpush.bf16.msra.mxu0 %v8505
    %10432 = vmatpush.bf16.msra.mxu0 %v8486
    %10433 = vmatpush.bf16.msra.mxu0 %v8467
    %10434 = vmatpush.bf16.msra.mxu0 %v8448
    %10435 = vmatmul.bf16.gmra.mxu0 %v2799
    %v10436 = vpop.f32.mrf.mxu0
    %v10437 = vadd.f32 %v10424, %v10436
    %v10438 = vpop.f32.mrf.mxu0
    %10439 = vdwg.mxu0
    %10440 = vmatpush.bf16.msra.mxu0 %v8733
    %10441 = vmatpush.bf16.msra.mxu0 %v8714
    %10442 = vmatpush.bf16.msra.mxu0 %v8695
    %10443 = vmatpush.bf16.msra.mxu0 %v8676
    %10444 = vmatpush.bf16.msra.mxu0 %v8657
    %10445 = vmatpush.bf16.msra.mxu0 %v8638
    %10446 = vmatpush.bf16.msra.mxu0 %v8619
    %10447 = vmatpush.bf16.msra.mxu0 %v8600
    %10448 = vmatmul.bf16.gmra.mxu0 %v2800
    %v10449 = vpop.f32.mrf.mxu0
    %v10450 = vadd.f32 %v10437, %v10449
    %v10451 = vpop.f32.mrf.mxu0
    %10452 = vdwg.mxu0
    %10453 = vmatpush.bf16.msra.mxu0 %v8885
    %10454 = vmatpush.bf16.msra.mxu0 %v8866
    %10455 = vmatpush.bf16.msra.mxu0 %v8847
    %10456 = vmatpush.bf16.msra.mxu0 %v8828
    %10457 = vmatpush.bf16.msra.mxu0 %v8809
    %10458 = vmatpush.bf16.msra.mxu0 %v8790
    %10459 = vmatpush.bf16.msra.mxu0 %v8771
    %10460 = vmatpush.bf16.msra.mxu0 %v8752
    %10461 = vmatmul.bf16.gmra.mxu0 %v2801
    %v10462 = vpop.f32.mrf.mxu0
    %v10463 = vadd.f32 %v10450, %v10462
    %v10464 = vpop.f32.mrf.mxu0
    %10465 = vdwg.mxu0
    %10466 = vmatpush.bf16.msra.mxu0 %v9037
    %10467 = vmatpush.bf16.msra.mxu0 %v9018
    %10468 = vmatpush.bf16.msra.mxu0 %v8999
    %10469 = vmatpush.bf16.msra.mxu0 %v8980
    %10470 = vmatpush.bf16.msra.mxu0 %v8961
    %10471 = vmatpush.bf16.msra.mxu0 %v8942
    %10472 = vmatpush.bf16.msra.mxu0 %v8923
    %10473 = vmatpush.bf16.msra.mxu0 %v8904
    %10474 = vmatmul.bf16.gmra.mxu0 %v2802
    %v10475 = vpop.f32.mrf.mxu0
    %v10476 = vadd.f32 %v10463, %v10475
    %v10477 = vpop.f32.mrf.mxu0
    %10478 = vdwg.mxu0
    %10479 = vmatpush.bf16.msra.mxu0 %v7974
    %10480 = vmatpush.bf16.msra.mxu0 %v7955
    %10481 = vmatpush.bf16.msra.mxu0 %v7936
    %10482 = vmatpush.bf16.msra.mxu0 %v7917
    %10483 = vmatpush.bf16.msra.mxu0 %v7898
    %10484 = vmatpush.bf16.msra.mxu0 %v7879
    %10485 = vmatpush.bf16.msra.mxu0 %v7860
    %10486 = vmatpush.bf16.msra.mxu0 %v7841
    %10487 = vmatmul.bf16.gmra.mxu0 %v2795
    %v10488 = vpop.f32.mrf.mxu0
    %v10489 = vadd.f32 %v4091, %v10488
    %v10490 = vpop.f32.mrf.mxu0
    %10491 = vdwg.mxu0
    %10492 = vmatpush.bf16.msra.mxu0 %v8126
    %10493 = vmatpush.bf16.msra.mxu0 %v8107
    %10494 = vmatpush.bf16.msra.mxu0 %v8088
    %10495 = vmatpush.bf16.msra.mxu0 %v8069
    %10496 = vmatpush.bf16.msra.mxu0 %v8050
    %10497 = vmatpush.bf16.msra.mxu0 %v8031
    %10498 = vmatpush.bf16.msra.mxu0 %v8012
    %10499 = vmatpush.bf16.msra.mxu0 %v7993
    %10500 = vmatmul.bf16.gmra.mxu0 %v2796
    %v10501 = vpop.f32.mrf.mxu0
    %v10502 = vadd.f32 %v10489, %v10501
    %v10503 = vpop.f32.mrf.mxu0
    %10504 = vdwg.mxu0
    %10505 = vmatpush.bf16.msra.mxu0 %v8278
    %10506 = vmatpush.bf16.msra.mxu0 %v8259
    %10507 = vmatpush.bf16.msra.mxu0 %v8240
    %10508 = vmatpush.bf16.msra.mxu0 %v8221
    %10509 = vmatpush.bf16.msra.mxu0 %v8202
    %10510 = vmatpush.bf16.msra.mxu0 %v8183
    %10511 = vmatpush.bf16.msra.mxu0 %v8164
    %10512 = vmatpush.bf16.msra.mxu0 %v8145
    %10513 = vmatmul.bf16.gmra.mxu0 %v2797
    %v10514 = vpop.f32.mrf.mxu0
    %v10515 = vadd.f32 %v10502, %v10514
    %v10516 = vpop.f32.mrf.mxu0
    %10517 = vdwg.mxu0
    %10518 = vmatpush.bf16.msra.mxu0 %v8430
    %10519 = vmatpush.bf16.msra.mxu0 %v8411
    %10520 = vmatpush.bf16.msra.mxu0 %v8392
    %10521 = vmatpush.bf16.msra.mxu0 %v8373
    %10522 = vmatpush.bf16.msra.mxu0 %v8354
    %10523 = vmatpush.bf16.msra.mxu0 %v8335
    %10524 = vmatpush.bf16.msra.mxu0 %v8316
    %10525 = vmatpush.bf16.msra.mxu0 %v8297
    %10526 = vmatmul.bf16.gmra.mxu0 %v2798
    %v10527 = vpop.f32.mrf.mxu0
    %v10528 = vadd.f32 %v10515, %v10527
    %v10529 = vpop.f32.mrf.mxu0
    %10530 = vdwg.mxu0
    %10531 = vmatpush.bf16.msra.mxu0 %v8582
    %10532 = vmatpush.bf16.msra.mxu0 %v8563
    %10533 = vmatpush.bf16.msra.mxu0 %v8544
    %10534 = vmatpush.bf16.msra.mxu0 %v8525
    %10535 = vmatpush.bf16.msra.mxu0 %v8506
    %10536 = vmatpush.bf16.msra.mxu0 %v8487
    %10537 = vmatpush.bf16.msra.mxu0 %v8468
    %10538 = vmatpush.bf16.msra.mxu0 %v8449
    %10539 = vmatmul.bf16.gmra.mxu0 %v2799
    %v10540 = vpop.f32.mrf.mxu0
    %v10541 = vadd.f32 %v10528, %v10540
    %v10542 = vpop.f32.mrf.mxu0
    %10543 = vdwg.mxu0
    %10544 = vmatpush.bf16.msra.mxu0 %v8734
    %10545 = vmatpush.bf16.msra.mxu0 %v8715
    %10546 = vmatpush.bf16.msra.mxu0 %v8696
    %10547 = vmatpush.bf16.msra.mxu0 %v8677
    %10548 = vmatpush.bf16.msra.mxu0 %v8658
    %10549 = vmatpush.bf16.msra.mxu0 %v8639
    %10550 = vmatpush.bf16.msra.mxu0 %v8620
    %10551 = vmatpush.bf16.msra.mxu0 %v8601
    %10552 = vmatmul.bf16.gmra.mxu0 %v2800
    %v10553 = vpop.f32.mrf.mxu0
    %v10554 = vadd.f32 %v10541, %v10553
    %v10555 = vpop.f32.mrf.mxu0
    %10556 = vdwg.mxu0
    %10557 = vmatpush.bf16.msra.mxu0 %v8886
    %10558 = vmatpush.bf16.msra.mxu0 %v8867
    %10559 = vmatpush.bf16.msra.mxu0 %v8848
    %10560 = vmatpush.bf16.msra.mxu0 %v8829
    %10561 = vmatpush.bf16.msra.mxu0 %v8810
    %10562 = vmatpush.bf16.msra.mxu0 %v8791
    %10563 = vmatpush.bf16.msra.mxu0 %v8772
    %10564 = vmatpush.bf16.msra.mxu0 %v8753
    %10565 = vmatmul.bf16.gmra.mxu0 %v2801
    %v10566 = vpop.f32.mrf.mxu0
    %v10567 = vadd.f32 %v10554, %v10566
    %v10568 = vpop.f32.mrf.mxu0
    %10569 = vdwg.mxu0
    %10570 = vmatpush.bf16.msra.mxu0 %v9038
    %10571 = vmatpush.bf16.msra.mxu0 %v9019
    %10572 = vmatpush.bf16.msra.mxu0 %v9000
    %10573 = vmatpush.bf16.msra.mxu0 %v8981
    %10574 = vmatpush.bf16.msra.mxu0 %v8962
    %10575 = vmatpush.bf16.msra.mxu0 %v8943
    %10576 = vmatpush.bf16.msra.mxu0 %v8924
    %10577 = vmatpush.bf16.msra.mxu0 %v8905
    %10578 = vmatmul.bf16.gmra.mxu0 %v2802
    %v10579 = vpop.f32.mrf.mxu0
    %v10580 = vadd.f32 %v10567, %v10579
    %v10581 = vpop.f32.mrf.mxu0
    %10582 = vdwg.mxu0
    %10583 = vmatpush.bf16.msra.mxu0 %v7975
    %10584 = vmatpush.bf16.msra.mxu0 %v7956
    %10585 = vmatpush.bf16.msra.mxu0 %v7937
    %10586 = vmatpush.bf16.msra.mxu0 %v7918
    %10587 = vmatpush.bf16.msra.mxu0 %v7899
    %10588 = vmatpush.bf16.msra.mxu0 %v7880
    %10589 = vmatpush.bf16.msra.mxu0 %v7861
    %10590 = vmatpush.bf16.msra.mxu0 %v7842
    %10591 = vmatmul.bf16.gmra.mxu0 %v2795
    %v10592 = vpop.f32.mrf.mxu0
    %v10593 = vadd.f32 %v4092, %v10592
    %v10594 = vpop.f32.mrf.mxu0
    %10595 = vdwg.mxu0
    %10596 = vmatpush.bf16.msra.mxu0 %v8127
    %10597 = vmatpush.bf16.msra.mxu0 %v8108
    %10598 = vmatpush.bf16.msra.mxu0 %v8089
    %10599 = vmatpush.bf16.msra.mxu0 %v8070
    %10600 = vmatpush.bf16.msra.mxu0 %v8051
    %10601 = vmatpush.bf16.msra.mxu0 %v8032
    %10602 = vmatpush.bf16.msra.mxu0 %v8013
    %10603 = vmatpush.bf16.msra.mxu0 %v7994
    %10604 = vmatmul.bf16.gmra.mxu0 %v2796
    %v10605 = vpop.f32.mrf.mxu0
    %v10606 = vadd.f32 %v10593, %v10605
    %v10607 = vpop.f32.mrf.mxu0
    %10608 = vdwg.mxu0
    %10609 = vmatpush.bf16.msra.mxu0 %v8279
    %10610 = vmatpush.bf16.msra.mxu0 %v8260
    %10611 = vmatpush.bf16.msra.mxu0 %v8241
    %10612 = vmatpush.bf16.msra.mxu0 %v8222
    %10613 = vmatpush.bf16.msra.mxu0 %v8203
    %10614 = vmatpush.bf16.msra.mxu0 %v8184
    %10615 = vmatpush.bf16.msra.mxu0 %v8165
    %10616 = vmatpush.bf16.msra.mxu0 %v8146
    %10617 = vmatmul.bf16.gmra.mxu0 %v2797
    %v10618 = vpop.f32.mrf.mxu0
    %v10619 = vadd.f32 %v10606, %v10618
    %v10620 = vpop.f32.mrf.mxu0
    %10621 = vdwg.mxu0
    %10622 = vmatpush.bf16.msra.mxu0 %v8431
    %10623 = vmatpush.bf16.msra.mxu0 %v8412
    %10624 = vmatpush.bf16.msra.mxu0 %v8393
    %10625 = vmatpush.bf16.msra.mxu0 %v8374
    %10626 = vmatpush.bf16.msra.mxu0 %v8355
    %10627 = vmatpush.bf16.msra.mxu0 %v8336
    %10628 = vmatpush.bf16.msra.mxu0 %v8317
    %10629 = vmatpush.bf16.msra.mxu0 %v8298
    %10630 = vmatmul.bf16.gmra.mxu0 %v2798
    %v10631 = vpop.f32.mrf.mxu0
    %v10632 = vadd.f32 %v10619, %v10631
    %v10633 = vpop.f32.mrf.mxu0
    %10634 = vdwg.mxu0
    %10635 = vmatpush.bf16.msra.mxu0 %v8583
    %10636 = vmatpush.bf16.msra.mxu0 %v8564
    %10637 = vmatpush.bf16.msra.mxu0 %v8545
    %10638 = vmatpush.bf16.msra.mxu0 %v8526
    %10639 = vmatpush.bf16.msra.mxu0 %v8507
    %10640 = vmatpush.bf16.msra.mxu0 %v8488
    %10641 = vmatpush.bf16.msra.mxu0 %v8469
    %10642 = vmatpush.bf16.msra.mxu0 %v8450
    %10643 = vmatmul.bf16.gmra.mxu0 %v2799
    %v10644 = vpop.f32.mrf.mxu0
    %v10645 = vadd.f32 %v10632, %v10644
    %v10646 = vpop.f32.mrf.mxu0
    %10647 = vdwg.mxu0
    %10648 = vmatpush.bf16.msra.mxu0 %v8735
    %10649 = vmatpush.bf16.msra.mxu0 %v8716
    %10650 = vmatpush.bf16.msra.mxu0 %v8697
    %10651 = vmatpush.bf16.msra.mxu0 %v8678
    %10652 = vmatpush.bf16.msra.mxu0 %v8659
    %10653 = vmatpush.bf16.msra.mxu0 %v8640
    %10654 = vmatpush.bf16.msra.mxu0 %v8621
    %10655 = vmatpush.bf16.msra.mxu0 %v8602
    %10656 = vmatmul.bf16.gmra.mxu0 %v2800
    %v10657 = vpop.f32.mrf.mxu0
    %v10658 = vadd.f32 %v10645, %v10657
    %v10659 = vpop.f32.mrf.mxu0
    %10660 = vdwg.mxu0
    %10661 = vmatpush.bf16.msra.mxu0 %v8887
    %10662 = vmatpush.bf16.msra.mxu0 %v8868
    %10663 = vmatpush.bf16.msra.mxu0 %v8849
    %10664 = vmatpush.bf16.msra.mxu0 %v8830
    %10665 = vmatpush.bf16.msra.mxu0 %v8811
    %10666 = vmatpush.bf16.msra.mxu0 %v8792
    %10667 = vmatpush.bf16.msra.mxu0 %v8773
    %10668 = vmatpush.bf16.msra.mxu0 %v8754
    %10669 = vmatmul.bf16.gmra.mxu0 %v2801
    %v10670 = vpop.f32.mrf.mxu0
    %v10671 = vadd.f32 %v10658, %v10670
    %v10672 = vpop.f32.mrf.mxu0
    %10673 = vdwg.mxu0
    %10674 = vmatpush.bf16.msra.mxu0 %v9039
    %10675 = vmatpush.bf16.msra.mxu0 %v9020
    %10676 = vmatpush.bf16.msra.mxu0 %v9001
    %10677 = vmatpush.bf16.msra.mxu0 %v8982
    %10678 = vmatpush.bf16.msra.mxu0 %v8963
    %10679 = vmatpush.bf16.msra.mxu0 %v8944
    %10680 = vmatpush.bf16.msra.mxu0 %v8925
    %10681 = vmatpush.bf16.msra.mxu0 %v8906
    %10682 = vmatmul.bf16.gmra.mxu0 %v2802
    %v10683 = vpop.f32.mrf.mxu0
    %v10684 = vadd.f32 %v10671, %v10683
    %v10685 = vpop.f32.mrf.mxu0
    %10686 = vdwg.mxu0
    %10687 = vmatpush.bf16.msra.mxu0 %v7976
    %10688 = vmatpush.bf16.msra.mxu0 %v7957
    %10689 = vmatpush.bf16.msra.mxu0 %v7938
    %10690 = vmatpush.bf16.msra.mxu0 %v7919
    %10691 = vmatpush.bf16.msra.mxu0 %v7900
    %10692 = vmatpush.bf16.msra.mxu0 %v7881
    %10693 = vmatpush.bf16.msra.mxu0 %v7862
    %10694 = vmatpush.bf16.msra.mxu0 %v7843
    %10695 = vmatmul.bf16.gmra.mxu0 %v2795
    %v10696 = vpop.f32.mrf.mxu0
    %v10697 = vadd.f32 %v4093, %v10696
    %v10698 = vpop.f32.mrf.mxu0
    %10699 = vdwg.mxu0
    %10700 = vmatpush.bf16.msra.mxu0 %v8128
    %10701 = vmatpush.bf16.msra.mxu0 %v8109
    %10702 = vmatpush.bf16.msra.mxu0 %v8090
    %10703 = vmatpush.bf16.msra.mxu0 %v8071
    %10704 = vmatpush.bf16.msra.mxu0 %v8052
    %10705 = vmatpush.bf16.msra.mxu0 %v8033
    %10706 = vmatpush.bf16.msra.mxu0 %v8014
    %10707 = vmatpush.bf16.msra.mxu0 %v7995
    %10708 = vmatmul.bf16.gmra.mxu0 %v2796
    %v10709 = vpop.f32.mrf.mxu0
    %v10710 = vadd.f32 %v10697, %v10709
    %v10711 = vpop.f32.mrf.mxu0
    %10712 = vdwg.mxu0
    %10713 = vmatpush.bf16.msra.mxu0 %v8280
    %10714 = vmatpush.bf16.msra.mxu0 %v8261
    %10715 = vmatpush.bf16.msra.mxu0 %v8242
    %10716 = vmatpush.bf16.msra.mxu0 %v8223
    %10717 = vmatpush.bf16.msra.mxu0 %v8204
    %10718 = vmatpush.bf16.msra.mxu0 %v8185
    %10719 = vmatpush.bf16.msra.mxu0 %v8166
    %10720 = vmatpush.bf16.msra.mxu0 %v8147
    %10721 = vmatmul.bf16.gmra.mxu0 %v2797
    %v10722 = vpop.f32.mrf.mxu0
    %v10723 = vadd.f32 %v10710, %v10722
    %v10724 = vpop.f32.mrf.mxu0
    %10725 = vdwg.mxu0
    %10726 = vmatpush.bf16.msra.mxu0 %v8432
    %10727 = vmatpush.bf16.msra.mxu0 %v8413
    %10728 = vmatpush.bf16.msra.mxu0 %v8394
    %10729 = vmatpush.bf16.msra.mxu0 %v8375
    %10730 = vmatpush.bf16.msra.mxu0 %v8356
    %10731 = vmatpush.bf16.msra.mxu0 %v8337
    %10732 = vmatpush.bf16.msra.mxu0 %v8318
    %10733 = vmatpush.bf16.msra.mxu0 %v8299
    %10734 = vmatmul.bf16.gmra.mxu0 %v2798
    %v10735 = vpop.f32.mrf.mxu0
    %v10736 = vadd.f32 %v10723, %v10735
    %v10737 = vpop.f32.mrf.mxu0
    %10738 = vdwg.mxu0
    %10739 = vmatpush.bf16.msra.mxu0 %v8584
    %10740 = vmatpush.bf16.msra.mxu0 %v8565
    %10741 = vmatpush.bf16.msra.mxu0 %v8546
    %10742 = vmatpush.bf16.msra.mxu0 %v8527
    %10743 = vmatpush.bf16.msra.mxu0 %v8508
    %10744 = vmatpush.bf16.msra.mxu0 %v8489
    %10745 = vmatpush.bf16.msra.mxu0 %v8470
    %10746 = vmatpush.bf16.msra.mxu0 %v8451
    %10747 = vmatmul.bf16.gmra.mxu0 %v2799
    %v10748 = vpop.f32.mrf.mxu0
    %v10749 = vadd.f32 %v10736, %v10748
    %v10750 = vpop.f32.mrf.mxu0
    %10751 = vdwg.mxu0
    %10752 = vmatpush.bf16.msra.mxu0 %v8736
    %10753 = vmatpush.bf16.msra.mxu0 %v8717
    %10754 = vmatpush.bf16.msra.mxu0 %v8698
    %10755 = vmatpush.bf16.msra.mxu0 %v8679
    %10756 = vmatpush.bf16.msra.mxu0 %v8660
    %10757 = vmatpush.bf16.msra.mxu0 %v8641
    %10758 = vmatpush.bf16.msra.mxu0 %v8622
    %10759 = vmatpush.bf16.msra.mxu0 %v8603
    %10760 = vmatmul.bf16.gmra.mxu0 %v2800
    %v10761 = vpop.f32.mrf.mxu0
    %v10762 = vadd.f32 %v10749, %v10761
    %v10763 = vpop.f32.mrf.mxu0
    %10764 = vdwg.mxu0
    %10765 = vmatpush.bf16.msra.mxu0 %v8888
    %10766 = vmatpush.bf16.msra.mxu0 %v8869
    %10767 = vmatpush.bf16.msra.mxu0 %v8850
    %10768 = vmatpush.bf16.msra.mxu0 %v8831
    %10769 = vmatpush.bf16.msra.mxu0 %v8812
    %10770 = vmatpush.bf16.msra.mxu0 %v8793
    %10771 = vmatpush.bf16.msra.mxu0 %v8774
    %10772 = vmatpush.bf16.msra.mxu0 %v8755
    %10773 = vmatmul.bf16.gmra.mxu0 %v2801
    %v10774 = vpop.f32.mrf.mxu0
    %v10775 = vadd.f32 %v10762, %v10774
    %v10776 = vpop.f32.mrf.mxu0
    %10777 = vdwg.mxu0
    %10778 = vmatpush.bf16.msra.mxu0 %v9040
    %10779 = vmatpush.bf16.msra.mxu0 %v9021
    %10780 = vmatpush.bf16.msra.mxu0 %v9002
    %10781 = vmatpush.bf16.msra.mxu0 %v8983
    %10782 = vmatpush.bf16.msra.mxu0 %v8964
    %10783 = vmatpush.bf16.msra.mxu0 %v8945
    %10784 = vmatpush.bf16.msra.mxu0 %v8926
    %10785 = vmatpush.bf16.msra.mxu0 %v8907
    %10786 = vmatmul.bf16.gmra.mxu0 %v2802
    %v10787 = vpop.f32.mrf.mxu0
    %v10788 = vadd.f32 %v10775, %v10787
    %v10789 = vpop.f32.mrf.mxu0
    %10790 = vdwg.mxu0
    %10791 = vmatpush.bf16.msra.mxu0 %v7977
    %10792 = vmatpush.bf16.msra.mxu0 %v7958
    %10793 = vmatpush.bf16.msra.mxu0 %v7939
    %10794 = vmatpush.bf16.msra.mxu0 %v7920
    %10795 = vmatpush.bf16.msra.mxu0 %v7901
    %10796 = vmatpush.bf16.msra.mxu0 %v7882
    %10797 = vmatpush.bf16.msra.mxu0 %v7863
    %10798 = vmatpush.bf16.msra.mxu0 %v7844
    %10799 = vmatmul.bf16.gmra.mxu0 %v2795
    %v10800 = vpop.f32.mrf.mxu0
    %v10801 = vadd.f32 %v4094, %v10800
    %v10802 = vpop.f32.mrf.mxu0
    %10803 = vdwg.mxu0
    %10804 = vmatpush.bf16.msra.mxu0 %v8129
    %10805 = vmatpush.bf16.msra.mxu0 %v8110
    %10806 = vmatpush.bf16.msra.mxu0 %v8091
    %10807 = vmatpush.bf16.msra.mxu0 %v8072
    %10808 = vmatpush.bf16.msra.mxu0 %v8053
    %10809 = vmatpush.bf16.msra.mxu0 %v8034
    %10810 = vmatpush.bf16.msra.mxu0 %v8015
    %10811 = vmatpush.bf16.msra.mxu0 %v7996
    %10812 = vmatmul.bf16.gmra.mxu0 %v2796
    %v10813 = vpop.f32.mrf.mxu0
    %v10814 = vadd.f32 %v10801, %v10813
    %v10815 = vpop.f32.mrf.mxu0
    %10816 = vdwg.mxu0
    %10817 = vmatpush.bf16.msra.mxu0 %v8281
    %10818 = vmatpush.bf16.msra.mxu0 %v8262
    %10819 = vmatpush.bf16.msra.mxu0 %v8243
    %10820 = vmatpush.bf16.msra.mxu0 %v8224
    %10821 = vmatpush.bf16.msra.mxu0 %v8205
    %10822 = vmatpush.bf16.msra.mxu0 %v8186
    %10823 = vmatpush.bf16.msra.mxu0 %v8167
    %10824 = vmatpush.bf16.msra.mxu0 %v8148
    %10825 = vmatmul.bf16.gmra.mxu0 %v2797
    %v10826 = vpop.f32.mrf.mxu0
    %v10827 = vadd.f32 %v10814, %v10826
    %v10828 = vpop.f32.mrf.mxu0
    %10829 = vdwg.mxu0
    %10830 = vmatpush.bf16.msra.mxu0 %v8433
    %10831 = vmatpush.bf16.msra.mxu0 %v8414
    %10832 = vmatpush.bf16.msra.mxu0 %v8395
    %10833 = vmatpush.bf16.msra.mxu0 %v8376
    %10834 = vmatpush.bf16.msra.mxu0 %v8357
    %10835 = vmatpush.bf16.msra.mxu0 %v8338
    %10836 = vmatpush.bf16.msra.mxu0 %v8319
    %10837 = vmatpush.bf16.msra.mxu0 %v8300
    %10838 = vmatmul.bf16.gmra.mxu0 %v2798
    %v10839 = vpop.f32.mrf.mxu0
    %v10840 = vadd.f32 %v10827, %v10839
    %v10841 = vpop.f32.mrf.mxu0
    %10842 = vdwg.mxu0
    %10843 = vmatpush.bf16.msra.mxu0 %v8585
    %10844 = vmatpush.bf16.msra.mxu0 %v8566
    %10845 = vmatpush.bf16.msra.mxu0 %v8547
    %10846 = vmatpush.bf16.msra.mxu0 %v8528
    %10847 = vmatpush.bf16.msra.mxu0 %v8509
    %10848 = vmatpush.bf16.msra.mxu0 %v8490
    %10849 = vmatpush.bf16.msra.mxu0 %v8471
    %10850 = vmatpush.bf16.msra.mxu0 %v8452
    %10851 = vmatmul.bf16.gmra.mxu0 %v2799
    %v10852 = vpop.f32.mrf.mxu0
    %v10853 = vadd.f32 %v10840, %v10852
    %v10854 = vpop.f32.mrf.mxu0
    %10855 = vdwg.mxu0
    %10856 = vmatpush.bf16.msra.mxu0 %v8737
    %10857 = vmatpush.bf16.msra.mxu0 %v8718
    %10858 = vmatpush.bf16.msra.mxu0 %v8699
    %10859 = vmatpush.bf16.msra.mxu0 %v8680
    %10860 = vmatpush.bf16.msra.mxu0 %v8661
    %10861 = vmatpush.bf16.msra.mxu0 %v8642
    %10862 = vmatpush.bf16.msra.mxu0 %v8623
    %10863 = vmatpush.bf16.msra.mxu0 %v8604
    %10864 = vmatmul.bf16.gmra.mxu0 %v2800
    %v10865 = vpop.f32.mrf.mxu0
    %v10866 = vadd.f32 %v10853, %v10865
    %v10867 = vpop.f32.mrf.mxu0
    %10868 = vdwg.mxu0
    %10869 = vmatpush.bf16.msra.mxu0 %v8889
    %10870 = vmatpush.bf16.msra.mxu0 %v8870
    %10871 = vmatpush.bf16.msra.mxu0 %v8851
    %10872 = vmatpush.bf16.msra.mxu0 %v8832
    %10873 = vmatpush.bf16.msra.mxu0 %v8813
    %10874 = vmatpush.bf16.msra.mxu0 %v8794
    %10875 = vmatpush.bf16.msra.mxu0 %v8775
    %10876 = vmatpush.bf16.msra.mxu0 %v8756
    %10877 = vmatmul.bf16.gmra.mxu0 %v2801
    %v10878 = vpop.f32.mrf.mxu0
    %v10879 = vadd.f32 %v10866, %v10878
    %v10880 = vpop.f32.mrf.mxu0
    %10881 = vdwg.mxu0
    %10882 = vmatpush.bf16.msra.mxu0 %v9041
    %10883 = vmatpush.bf16.msra.mxu0 %v9022
    %10884 = vmatpush.bf16.msra.mxu0 %v9003
    %10885 = vmatpush.bf16.msra.mxu0 %v8984
    %10886 = vmatpush.bf16.msra.mxu0 %v8965
    %10887 = vmatpush.bf16.msra.mxu0 %v8946
    %10888 = vmatpush.bf16.msra.mxu0 %v8927
    %10889 = vmatpush.bf16.msra.mxu0 %v8908
    %10890 = vmatmul.bf16.gmra.mxu0 %v2802
    %v10891 = vpop.f32.mrf.mxu0
    %v10892 = vadd.f32 %v10879, %v10891
    %v10893 = vpop.f32.mrf.mxu0
    %10894 = vdwg.mxu0
    %10895 = vmatpush.bf16.msra.mxu0 %v7978
    %10896 = vmatpush.bf16.msra.mxu0 %v7959
    %10897 = vmatpush.bf16.msra.mxu0 %v7940
    %10898 = vmatpush.bf16.msra.mxu0 %v7921
    %10899 = vmatpush.bf16.msra.mxu0 %v7902
    %10900 = vmatpush.bf16.msra.mxu0 %v7883
    %10901 = vmatpush.bf16.msra.mxu0 %v7864
    %10902 = vmatpush.bf16.msra.mxu0 %v7845
    %10903 = vmatmul.bf16.gmra.mxu0 %v2795
    %v10904 = vpop.f32.mrf.mxu0
    %v10905 = vadd.f32 %v4095, %v10904
    %v10906 = vpop.f32.mrf.mxu0
    %10907 = vdwg.mxu0
    %10908 = vmatpush.bf16.msra.mxu0 %v8130
    %10909 = vmatpush.bf16.msra.mxu0 %v8111
    %10910 = vmatpush.bf16.msra.mxu0 %v8092
    %10911 = vmatpush.bf16.msra.mxu0 %v8073
    %10912 = vmatpush.bf16.msra.mxu0 %v8054
    %10913 = vmatpush.bf16.msra.mxu0 %v8035
    %10914 = vmatpush.bf16.msra.mxu0 %v8016
    %10915 = vmatpush.bf16.msra.mxu0 %v7997
    %10916 = vmatmul.bf16.gmra.mxu0 %v2796
    %v10917 = vpop.f32.mrf.mxu0
    %v10918 = vadd.f32 %v10905, %v10917
    %v10919 = vpop.f32.mrf.mxu0
    %10920 = vdwg.mxu0
    %10921 = vmatpush.bf16.msra.mxu0 %v8282
    %10922 = vmatpush.bf16.msra.mxu0 %v8263
    %10923 = vmatpush.bf16.msra.mxu0 %v8244
    %10924 = vmatpush.bf16.msra.mxu0 %v8225
    %10925 = vmatpush.bf16.msra.mxu0 %v8206
    %10926 = vmatpush.bf16.msra.mxu0 %v8187
    %10927 = vmatpush.bf16.msra.mxu0 %v8168
    %10928 = vmatpush.bf16.msra.mxu0 %v8149
    %10929 = vmatmul.bf16.gmra.mxu0 %v2797
    %v10930 = vpop.f32.mrf.mxu0
    %v10931 = vadd.f32 %v10918, %v10930
    %v10932 = vpop.f32.mrf.mxu0
    %10933 = vdwg.mxu0
    %10934 = vmatpush.bf16.msra.mxu0 %v8434
    %10935 = vmatpush.bf16.msra.mxu0 %v8415
    %10936 = vmatpush.bf16.msra.mxu0 %v8396
    %10937 = vmatpush.bf16.msra.mxu0 %v8377
    %10938 = vmatpush.bf16.msra.mxu0 %v8358
    %10939 = vmatpush.bf16.msra.mxu0 %v8339
    %10940 = vmatpush.bf16.msra.mxu0 %v8320
    %10941 = vmatpush.bf16.msra.mxu0 %v8301
    %10942 = vmatmul.bf16.gmra.mxu0 %v2798
    %v10943 = vpop.f32.mrf.mxu0
    %v10944 = vadd.f32 %v10931, %v10943
    %v10945 = vpop.f32.mrf.mxu0
    %10946 = vdwg.mxu0
    %10947 = vmatpush.bf16.msra.mxu0 %v8586
    %10948 = vmatpush.bf16.msra.mxu0 %v8567
    %10949 = vmatpush.bf16.msra.mxu0 %v8548
    %10950 = vmatpush.bf16.msra.mxu0 %v8529
    %10951 = vmatpush.bf16.msra.mxu0 %v8510
    %10952 = vmatpush.bf16.msra.mxu0 %v8491
    %10953 = vmatpush.bf16.msra.mxu0 %v8472
    %10954 = vmatpush.bf16.msra.mxu0 %v8453
    %10955 = vmatmul.bf16.gmra.mxu0 %v2799
    %v10956 = vpop.f32.mrf.mxu0
    %v10957 = vadd.f32 %v10944, %v10956
    %v10958 = vpop.f32.mrf.mxu0
    %10959 = vdwg.mxu0
    %10960 = vmatpush.bf16.msra.mxu0 %v8738
    %10961 = vmatpush.bf16.msra.mxu0 %v8719
    %10962 = vmatpush.bf16.msra.mxu0 %v8700
    %10963 = vmatpush.bf16.msra.mxu0 %v8681
    %10964 = vmatpush.bf16.msra.mxu0 %v8662
    %10965 = vmatpush.bf16.msra.mxu0 %v8643
    %10966 = vmatpush.bf16.msra.mxu0 %v8624
    %10967 = vmatpush.bf16.msra.mxu0 %v8605
    %10968 = vmatmul.bf16.gmra.mxu0 %v2800
    %v10969 = vpop.f32.mrf.mxu0
    %v10970 = vadd.f32 %v10957, %v10969
    %v10971 = vpop.f32.mrf.mxu0
    %10972 = vdwg.mxu0
    %10973 = vmatpush.bf16.msra.mxu0 %v8890
    %10974 = vmatpush.bf16.msra.mxu0 %v8871
    %10975 = vmatpush.bf16.msra.mxu0 %v8852
    %10976 = vmatpush.bf16.msra.mxu0 %v8833
    %10977 = vmatpush.bf16.msra.mxu0 %v8814
    %10978 = vmatpush.bf16.msra.mxu0 %v8795
    %10979 = vmatpush.bf16.msra.mxu0 %v8776
    %10980 = vmatpush.bf16.msra.mxu0 %v8757
    %10981 = vmatmul.bf16.gmra.mxu0 %v2801
    %v10982 = vpop.f32.mrf.mxu0
    %v10983 = vadd.f32 %v10970, %v10982
    %v10984 = vpop.f32.mrf.mxu0
    %10985 = vdwg.mxu0
    %10986 = vmatpush.bf16.msra.mxu0 %v9042
    %10987 = vmatpush.bf16.msra.mxu0 %v9023
    %10988 = vmatpush.bf16.msra.mxu0 %v9004
    %10989 = vmatpush.bf16.msra.mxu0 %v8985
    %10990 = vmatpush.bf16.msra.mxu0 %v8966
    %10991 = vmatpush.bf16.msra.mxu0 %v8947
    %10992 = vmatpush.bf16.msra.mxu0 %v8928
    %10993 = vmatpush.bf16.msra.mxu0 %v8909
    %10994 = vmatmul.bf16.gmra.mxu0 %v2802
    %v10995 = vpop.f32.mrf.mxu0
    %v10996 = vadd.f32 %v10983, %v10995
    %v10997 = vpop.f32.mrf.mxu0
    %10998 = vdwg.mxu0
    %10999 = vmatpush.bf16.msra.mxu0 %v7979
    %11000 = vmatpush.bf16.msra.mxu0 %v7960
    %11001 = vmatpush.bf16.msra.mxu0 %v7941
    %11002 = vmatpush.bf16.msra.mxu0 %v7922
    %11003 = vmatpush.bf16.msra.mxu0 %v7903
    %11004 = vmatpush.bf16.msra.mxu0 %v7884
    %11005 = vmatpush.bf16.msra.mxu0 %v7865
    %11006 = vmatpush.bf16.msra.mxu0 %v7846
    %11007 = vmatmul.bf16.gmra.mxu0 %v2795
    %v11008 = vpop.f32.mrf.mxu0
    %v11009 = vadd.f32 %v4096, %v11008
    %v11010 = vpop.f32.mrf.mxu0
    %11011 = vdwg.mxu0
    %11012 = vmatpush.bf16.msra.mxu0 %v8131
    %11013 = vmatpush.bf16.msra.mxu0 %v8112
    %11014 = vmatpush.bf16.msra.mxu0 %v8093
    %11015 = vmatpush.bf16.msra.mxu0 %v8074
    %11016 = vmatpush.bf16.msra.mxu0 %v8055
    %11017 = vmatpush.bf16.msra.mxu0 %v8036
    %11018 = vmatpush.bf16.msra.mxu0 %v8017
    %11019 = vmatpush.bf16.msra.mxu0 %v7998
    %11020 = vmatmul.bf16.gmra.mxu0 %v2796
    %v11021 = vpop.f32.mrf.mxu0
    %v11022 = vadd.f32 %v11009, %v11021
    %v11023 = vpop.f32.mrf.mxu0
    %11024 = vdwg.mxu0
    %11025 = vmatpush.bf16.msra.mxu0 %v8283
    %11026 = vmatpush.bf16.msra.mxu0 %v8264
    %11027 = vmatpush.bf16.msra.mxu0 %v8245
    %11028 = vmatpush.bf16.msra.mxu0 %v8226
    %11029 = vmatpush.bf16.msra.mxu0 %v8207
    %11030 = vmatpush.bf16.msra.mxu0 %v8188
    %11031 = vmatpush.bf16.msra.mxu0 %v8169
    %11032 = vmatpush.bf16.msra.mxu0 %v8150
    %11033 = vmatmul.bf16.gmra.mxu0 %v2797
    %v11034 = vpop.f32.mrf.mxu0
    %v11035 = vadd.f32 %v11022, %v11034
    %v11036 = vpop.f32.mrf.mxu0
    %11037 = vdwg.mxu0
    %11038 = vmatpush.bf16.msra.mxu0 %v8435
    %11039 = vmatpush.bf16.msra.mxu0 %v8416
    %11040 = vmatpush.bf16.msra.mxu0 %v8397
    %11041 = vmatpush.bf16.msra.mxu0 %v8378
    %11042 = vmatpush.bf16.msra.mxu0 %v8359
    %11043 = vmatpush.bf16.msra.mxu0 %v8340
    %11044 = vmatpush.bf16.msra.mxu0 %v8321
    %11045 = vmatpush.bf16.msra.mxu0 %v8302
    %11046 = vmatmul.bf16.gmra.mxu0 %v2798
    %v11047 = vpop.f32.mrf.mxu0
    %v11048 = vadd.f32 %v11035, %v11047
    %v11049 = vpop.f32.mrf.mxu0
    %11050 = vdwg.mxu0
    %11051 = vmatpush.bf16.msra.mxu0 %v8587
    %11052 = vmatpush.bf16.msra.mxu0 %v8568
    %11053 = vmatpush.bf16.msra.mxu0 %v8549
    %11054 = vmatpush.bf16.msra.mxu0 %v8530
    %11055 = vmatpush.bf16.msra.mxu0 %v8511
    %11056 = vmatpush.bf16.msra.mxu0 %v8492
    %11057 = vmatpush.bf16.msra.mxu0 %v8473
    %11058 = vmatpush.bf16.msra.mxu0 %v8454
    %11059 = vmatmul.bf16.gmra.mxu0 %v2799
    %v11060 = vpop.f32.mrf.mxu0
    %v11061 = vadd.f32 %v11048, %v11060
    %v11062 = vpop.f32.mrf.mxu0
    %11063 = vdwg.mxu0
    %11064 = vmatpush.bf16.msra.mxu0 %v8739
    %11065 = vmatpush.bf16.msra.mxu0 %v8720
    %11066 = vmatpush.bf16.msra.mxu0 %v8701
    %11067 = vmatpush.bf16.msra.mxu0 %v8682
    %11068 = vmatpush.bf16.msra.mxu0 %v8663
    %11069 = vmatpush.bf16.msra.mxu0 %v8644
    %11070 = vmatpush.bf16.msra.mxu0 %v8625
    %11071 = vmatpush.bf16.msra.mxu0 %v8606
    %11072 = vmatmul.bf16.gmra.mxu0 %v2800
    %v11073 = vpop.f32.mrf.mxu0
    %v11074 = vadd.f32 %v11061, %v11073
    %v11075 = vpop.f32.mrf.mxu0
    %11076 = vdwg.mxu0
    %11077 = vmatpush.bf16.msra.mxu0 %v8891
    %11078 = vmatpush.bf16.msra.mxu0 %v8872
    %11079 = vmatpush.bf16.msra.mxu0 %v8853
    %11080 = vmatpush.bf16.msra.mxu0 %v8834
    %11081 = vmatpush.bf16.msra.mxu0 %v8815
    %11082 = vmatpush.bf16.msra.mxu0 %v8796
    %11083 = vmatpush.bf16.msra.mxu0 %v8777
    %11084 = vmatpush.bf16.msra.mxu0 %v8758
    %11085 = vmatmul.bf16.gmra.mxu0 %v2801
    %v11086 = vpop.f32.mrf.mxu0
    %v11087 = vadd.f32 %v11074, %v11086
    %v11088 = vpop.f32.mrf.mxu0
    %11089 = vdwg.mxu0
    %11090 = vmatpush.bf16.msra.mxu0 %v9043
    %11091 = vmatpush.bf16.msra.mxu0 %v9024
    %11092 = vmatpush.bf16.msra.mxu0 %v9005
    %11093 = vmatpush.bf16.msra.mxu0 %v8986
    %11094 = vmatpush.bf16.msra.mxu0 %v8967
    %11095 = vmatpush.bf16.msra.mxu0 %v8948
    %11096 = vmatpush.bf16.msra.mxu0 %v8929
    %11097 = vmatpush.bf16.msra.mxu0 %v8910
    %11098 = vmatmul.bf16.gmra.mxu0 %v2802
    %v11099 = vpop.f32.mrf.mxu0
    %v11100 = vadd.f32 %v11087, %v11099
    %v11101 = vpop.f32.mrf.mxu0
    %11102 = vdwg.mxu0
    %11103 = vmatpush.bf16.msra.mxu0 %v7980
    %11104 = vmatpush.bf16.msra.mxu0 %v7961
    %11105 = vmatpush.bf16.msra.mxu0 %v7942
    %11106 = vmatpush.bf16.msra.mxu0 %v7923
    %11107 = vmatpush.bf16.msra.mxu0 %v7904
    %11108 = vmatpush.bf16.msra.mxu0 %v7885
    %11109 = vmatpush.bf16.msra.mxu0 %v7866
    %11110 = vmatpush.bf16.msra.mxu0 %v7847
    %11111 = vmatmul.bf16.gmra.mxu0 %v2795
    %v11112 = vpop.f32.mrf.mxu0
    %v11113 = vadd.f32 %v4097, %v11112
    %v11114 = vpop.f32.mrf.mxu0
    %11115 = vdwg.mxu0
    %11116 = vmatpush.bf16.msra.mxu0 %v8132
    %11117 = vmatpush.bf16.msra.mxu0 %v8113
    %11118 = vmatpush.bf16.msra.mxu0 %v8094
    %11119 = vmatpush.bf16.msra.mxu0 %v8075
    %11120 = vmatpush.bf16.msra.mxu0 %v8056
    %11121 = vmatpush.bf16.msra.mxu0 %v8037
    %11122 = vmatpush.bf16.msra.mxu0 %v8018
    %11123 = vmatpush.bf16.msra.mxu0 %v7999
    %11124 = vmatmul.bf16.gmra.mxu0 %v2796
    %v11125 = vpop.f32.mrf.mxu0
    %v11126 = vadd.f32 %v11113, %v11125
    %v11127 = vpop.f32.mrf.mxu0
    %11128 = vdwg.mxu0
    %11129 = vmatpush.bf16.msra.mxu0 %v8284
    %11130 = vmatpush.bf16.msra.mxu0 %v8265
    %11131 = vmatpush.bf16.msra.mxu0 %v8246
    %11132 = vmatpush.bf16.msra.mxu0 %v8227
    %11133 = vmatpush.bf16.msra.mxu0 %v8208
    %11134 = vmatpush.bf16.msra.mxu0 %v8189
    %11135 = vmatpush.bf16.msra.mxu0 %v8170
    %11136 = vmatpush.bf16.msra.mxu0 %v8151
    %11137 = vmatmul.bf16.gmra.mxu0 %v2797
    %v11138 = vpop.f32.mrf.mxu0
    %v11139 = vadd.f32 %v11126, %v11138
    %v11140 = vpop.f32.mrf.mxu0
    %11141 = vdwg.mxu0
    %11142 = vmatpush.bf16.msra.mxu0 %v8436
    %11143 = vmatpush.bf16.msra.mxu0 %v8417
    %11144 = vmatpush.bf16.msra.mxu0 %v8398
    %11145 = vmatpush.bf16.msra.mxu0 %v8379
    %11146 = vmatpush.bf16.msra.mxu0 %v8360
    %11147 = vmatpush.bf16.msra.mxu0 %v8341
    %11148 = vmatpush.bf16.msra.mxu0 %v8322
    %11149 = vmatpush.bf16.msra.mxu0 %v8303
    %11150 = vmatmul.bf16.gmra.mxu0 %v2798
    %v11151 = vpop.f32.mrf.mxu0
    %v11152 = vadd.f32 %v11139, %v11151
    %v11153 = vpop.f32.mrf.mxu0
    %11154 = vdwg.mxu0
    %11155 = vmatpush.bf16.msra.mxu0 %v8588
    %11156 = vmatpush.bf16.msra.mxu0 %v8569
    %11157 = vmatpush.bf16.msra.mxu0 %v8550
    %11158 = vmatpush.bf16.msra.mxu0 %v8531
    %11159 = vmatpush.bf16.msra.mxu0 %v8512
    %11160 = vmatpush.bf16.msra.mxu0 %v8493
    %11161 = vmatpush.bf16.msra.mxu0 %v8474
    %11162 = vmatpush.bf16.msra.mxu0 %v8455
    %11163 = vmatmul.bf16.gmra.mxu0 %v2799
    %v11164 = vpop.f32.mrf.mxu0
    %v11165 = vadd.f32 %v11152, %v11164
    %v11166 = vpop.f32.mrf.mxu0
    %11167 = vdwg.mxu0
    %11168 = vmatpush.bf16.msra.mxu0 %v8740
    %11169 = vmatpush.bf16.msra.mxu0 %v8721
    %11170 = vmatpush.bf16.msra.mxu0 %v8702
    %11171 = vmatpush.bf16.msra.mxu0 %v8683
    %11172 = vmatpush.bf16.msra.mxu0 %v8664
    %11173 = vmatpush.bf16.msra.mxu0 %v8645
    %11174 = vmatpush.bf16.msra.mxu0 %v8626
    %11175 = vmatpush.bf16.msra.mxu0 %v8607
    %11176 = vmatmul.bf16.gmra.mxu0 %v2800
    %v11177 = vpop.f32.mrf.mxu0
    %v11178 = vadd.f32 %v11165, %v11177
    %v11179 = vpop.f32.mrf.mxu0
    %11180 = vdwg.mxu0
    %11181 = vmatpush.bf16.msra.mxu0 %v8892
    %11182 = vmatpush.bf16.msra.mxu0 %v8873
    %11183 = vmatpush.bf16.msra.mxu0 %v8854
    %11184 = vmatpush.bf16.msra.mxu0 %v8835
    %11185 = vmatpush.bf16.msra.mxu0 %v8816
    %11186 = vmatpush.bf16.msra.mxu0 %v8797
    %11187 = vmatpush.bf16.msra.mxu0 %v8778
    %11188 = vmatpush.bf16.msra.mxu0 %v8759
    %11189 = vmatmul.bf16.gmra.mxu0 %v2801
    %v11190 = vpop.f32.mrf.mxu0
    %v11191 = vadd.f32 %v11178, %v11190
    %v11192 = vpop.f32.mrf.mxu0
    %11193 = vdwg.mxu0
    %11194 = vmatpush.bf16.msra.mxu0 %v9044
    %11195 = vmatpush.bf16.msra.mxu0 %v9025
    %11196 = vmatpush.bf16.msra.mxu0 %v9006
    %11197 = vmatpush.bf16.msra.mxu0 %v8987
    %11198 = vmatpush.bf16.msra.mxu0 %v8968
    %11199 = vmatpush.bf16.msra.mxu0 %v8949
    %11200 = vmatpush.bf16.msra.mxu0 %v8930
    %11201 = vmatpush.bf16.msra.mxu0 %v8911
    %11202 = vmatmul.bf16.gmra.mxu0 %v2802
    %v11203 = vpop.f32.mrf.mxu0
    %v11204 = vadd.f32 %v11191, %v11203
    %v11205 = vpop.f32.mrf.mxu0
    %11206 = vdwg.mxu0
    %11207 = vmatpush.bf16.msra.mxu0 %v7981
    %11208 = vmatpush.bf16.msra.mxu0 %v7962
    %11209 = vmatpush.bf16.msra.mxu0 %v7943
    %11210 = vmatpush.bf16.msra.mxu0 %v7924
    %11211 = vmatpush.bf16.msra.mxu0 %v7905
    %11212 = vmatpush.bf16.msra.mxu0 %v7886
    %11213 = vmatpush.bf16.msra.mxu0 %v7867
    %11214 = vmatpush.bf16.msra.mxu0 %v7848
    %11215 = vmatmul.bf16.gmra.mxu0 %v2795
    %v11216 = vpop.f32.mrf.mxu0
    %v11217 = vadd.f32 %v4098, %v11216
    %v11218 = vpop.f32.mrf.mxu0
    %11219 = vdwg.mxu0
    %11220 = vmatpush.bf16.msra.mxu0 %v8133
    %11221 = vmatpush.bf16.msra.mxu0 %v8114
    %11222 = vmatpush.bf16.msra.mxu0 %v8095
    %11223 = vmatpush.bf16.msra.mxu0 %v8076
    %11224 = vmatpush.bf16.msra.mxu0 %v8057
    %11225 = vmatpush.bf16.msra.mxu0 %v8038
    %11226 = vmatpush.bf16.msra.mxu0 %v8019
    %11227 = vmatpush.bf16.msra.mxu0 %v8000
    %11228 = vmatmul.bf16.gmra.mxu0 %v2796
    %v11229 = vpop.f32.mrf.mxu0
    %v11230 = vadd.f32 %v11217, %v11229
    %v11231 = vpop.f32.mrf.mxu0
    %11232 = vdwg.mxu0
    %11233 = vmatpush.bf16.msra.mxu0 %v8285
    %11234 = vmatpush.bf16.msra.mxu0 %v8266
    %11235 = vmatpush.bf16.msra.mxu0 %v8247
    %11236 = vmatpush.bf16.msra.mxu0 %v8228
    %11237 = vmatpush.bf16.msra.mxu0 %v8209
    %11238 = vmatpush.bf16.msra.mxu0 %v8190
    %11239 = vmatpush.bf16.msra.mxu0 %v8171
    %11240 = vmatpush.bf16.msra.mxu0 %v8152
    %11241 = vmatmul.bf16.gmra.mxu0 %v2797
    %v11242 = vpop.f32.mrf.mxu0
    %v11243 = vadd.f32 %v11230, %v11242
    %v11244 = vpop.f32.mrf.mxu0
    %11245 = vdwg.mxu0
    %11246 = vmatpush.bf16.msra.mxu0 %v8437
    %11247 = vmatpush.bf16.msra.mxu0 %v8418
    %11248 = vmatpush.bf16.msra.mxu0 %v8399
    %11249 = vmatpush.bf16.msra.mxu0 %v8380
    %11250 = vmatpush.bf16.msra.mxu0 %v8361
    %11251 = vmatpush.bf16.msra.mxu0 %v8342
    %11252 = vmatpush.bf16.msra.mxu0 %v8323
    %11253 = vmatpush.bf16.msra.mxu0 %v8304
    %11254 = vmatmul.bf16.gmra.mxu0 %v2798
    %v11255 = vpop.f32.mrf.mxu0
    %v11256 = vadd.f32 %v11243, %v11255
    %v11257 = vpop.f32.mrf.mxu0
    %11258 = vdwg.mxu0
    %11259 = vmatpush.bf16.msra.mxu0 %v8589
    %11260 = vmatpush.bf16.msra.mxu0 %v8570
    %11261 = vmatpush.bf16.msra.mxu0 %v8551
    %11262 = vmatpush.bf16.msra.mxu0 %v8532
    %11263 = vmatpush.bf16.msra.mxu0 %v8513
    %11264 = vmatpush.bf16.msra.mxu0 %v8494
    %11265 = vmatpush.bf16.msra.mxu0 %v8475
    %11266 = vmatpush.bf16.msra.mxu0 %v8456
    %11267 = vmatmul.bf16.gmra.mxu0 %v2799
    %v11268 = vpop.f32.mrf.mxu0
    %v11269 = vadd.f32 %v11256, %v11268
    %v11270 = vpop.f32.mrf.mxu0
    %11271 = vdwg.mxu0
    %11272 = vmatpush.bf16.msra.mxu0 %v8741
    %11273 = vmatpush.bf16.msra.mxu0 %v8722
    %11274 = vmatpush.bf16.msra.mxu0 %v8703
    %11275 = vmatpush.bf16.msra.mxu0 %v8684
    %11276 = vmatpush.bf16.msra.mxu0 %v8665
    %11277 = vmatpush.bf16.msra.mxu0 %v8646
    %11278 = vmatpush.bf16.msra.mxu0 %v8627
    %11279 = vmatpush.bf16.msra.mxu0 %v8608
    %11280 = vmatmul.bf16.gmra.mxu0 %v2800
    %v11281 = vpop.f32.mrf.mxu0
    %v11282 = vadd.f32 %v11269, %v11281
    %v11283 = vpop.f32.mrf.mxu0
    %11284 = vdwg.mxu0
    %11285 = vmatpush.bf16.msra.mxu0 %v8893
    %11286 = vmatpush.bf16.msra.mxu0 %v8874
    %11287 = vmatpush.bf16.msra.mxu0 %v8855
    %11288 = vmatpush.bf16.msra.mxu0 %v8836
    %11289 = vmatpush.bf16.msra.mxu0 %v8817
    %11290 = vmatpush.bf16.msra.mxu0 %v8798
    %11291 = vmatpush.bf16.msra.mxu0 %v8779
    %11292 = vmatpush.bf16.msra.mxu0 %v8760
    %11293 = vmatmul.bf16.gmra.mxu0 %v2801
    %v11294 = vpop.f32.mrf.mxu0
    %v11295 = vadd.f32 %v11282, %v11294
    %v11296 = vpop.f32.mrf.mxu0
    %11297 = vdwg.mxu0
    %11298 = vmatpush.bf16.msra.mxu0 %v9045
    %11299 = vmatpush.bf16.msra.mxu0 %v9026
    %11300 = vmatpush.bf16.msra.mxu0 %v9007
    %11301 = vmatpush.bf16.msra.mxu0 %v8988
    %11302 = vmatpush.bf16.msra.mxu0 %v8969
    %11303 = vmatpush.bf16.msra.mxu0 %v8950
    %11304 = vmatpush.bf16.msra.mxu0 %v8931
    %11305 = vmatpush.bf16.msra.mxu0 %v8912
    %11306 = vmatmul.bf16.gmra.mxu0 %v2802
    %v11307 = vpop.f32.mrf.mxu0
    %v11308 = vadd.f32 %v11295, %v11307
    %v11309 = vpop.f32.mrf.mxu0
    %11310 = vdwg.mxu0
    %11311 = vmatpush.bf16.msra.mxu0 %v7982
    %11312 = vmatpush.bf16.msra.mxu0 %v7963
    %11313 = vmatpush.bf16.msra.mxu0 %v7944
    %11314 = vmatpush.bf16.msra.mxu0 %v7925
    %11315 = vmatpush.bf16.msra.mxu0 %v7906
    %11316 = vmatpush.bf16.msra.mxu0 %v7887
    %11317 = vmatpush.bf16.msra.mxu0 %v7868
    %11318 = vmatpush.bf16.msra.mxu0 %v7849
    %11319 = vmatmul.bf16.gmra.mxu0 %v2795
    %v11320 = vpop.f32.mrf.mxu0
    %v11321 = vadd.f32 %v4099, %v11320
    %v11322 = vpop.f32.mrf.mxu0
    %11323 = vdwg.mxu0
    %11324 = vmatpush.bf16.msra.mxu0 %v8134
    %11325 = vmatpush.bf16.msra.mxu0 %v8115
    %11326 = vmatpush.bf16.msra.mxu0 %v8096
    %11327 = vmatpush.bf16.msra.mxu0 %v8077
    %11328 = vmatpush.bf16.msra.mxu0 %v8058
    %11329 = vmatpush.bf16.msra.mxu0 %v8039
    %11330 = vmatpush.bf16.msra.mxu0 %v8020
    %11331 = vmatpush.bf16.msra.mxu0 %v8001
    %11332 = vmatmul.bf16.gmra.mxu0 %v2796
    %v11333 = vpop.f32.mrf.mxu0
    %v11334 = vadd.f32 %v11321, %v11333
    %v11335 = vpop.f32.mrf.mxu0
    %11336 = vdwg.mxu0
    %11337 = vmatpush.bf16.msra.mxu0 %v8286
    %11338 = vmatpush.bf16.msra.mxu0 %v8267
    %11339 = vmatpush.bf16.msra.mxu0 %v8248
    %11340 = vmatpush.bf16.msra.mxu0 %v8229
    %11341 = vmatpush.bf16.msra.mxu0 %v8210
    %11342 = vmatpush.bf16.msra.mxu0 %v8191
    %11343 = vmatpush.bf16.msra.mxu0 %v8172
    %11344 = vmatpush.bf16.msra.mxu0 %v8153
    %11345 = vmatmul.bf16.gmra.mxu0 %v2797
    %v11346 = vpop.f32.mrf.mxu0
    %v11347 = vadd.f32 %v11334, %v11346
    %v11348 = vpop.f32.mrf.mxu0
    %11349 = vdwg.mxu0
    %11350 = vmatpush.bf16.msra.mxu0 %v8438
    %11351 = vmatpush.bf16.msra.mxu0 %v8419
    %11352 = vmatpush.bf16.msra.mxu0 %v8400
    %11353 = vmatpush.bf16.msra.mxu0 %v8381
    %11354 = vmatpush.bf16.msra.mxu0 %v8362
    %11355 = vmatpush.bf16.msra.mxu0 %v8343
    %11356 = vmatpush.bf16.msra.mxu0 %v8324
    %11357 = vmatpush.bf16.msra.mxu0 %v8305
    %11358 = vmatmul.bf16.gmra.mxu0 %v2798
    %v11359 = vpop.f32.mrf.mxu0
    %v11360 = vadd.f32 %v11347, %v11359
    %v11361 = vpop.f32.mrf.mxu0
    %11362 = vdwg.mxu0
    %11363 = vmatpush.bf16.msra.mxu0 %v8590
    %11364 = vmatpush.bf16.msra.mxu0 %v8571
    %11365 = vmatpush.bf16.msra.mxu0 %v8552
    %11366 = vmatpush.bf16.msra.mxu0 %v8533
    %11367 = vmatpush.bf16.msra.mxu0 %v8514
    %11368 = vmatpush.bf16.msra.mxu0 %v8495
    %11369 = vmatpush.bf16.msra.mxu0 %v8476
    %11370 = vmatpush.bf16.msra.mxu0 %v8457
    %11371 = vmatmul.bf16.gmra.mxu0 %v2799
    %v11372 = vpop.f32.mrf.mxu0
    %v11373 = vadd.f32 %v11360, %v11372
    %v11374 = vpop.f32.mrf.mxu0
    %11375 = vdwg.mxu0
    %11376 = vmatpush.bf16.msra.mxu0 %v8742
    %11377 = vmatpush.bf16.msra.mxu0 %v8723
    %11378 = vmatpush.bf16.msra.mxu0 %v8704
    %11379 = vmatpush.bf16.msra.mxu0 %v8685
    %11380 = vmatpush.bf16.msra.mxu0 %v8666
    %11381 = vmatpush.bf16.msra.mxu0 %v8647
    %11382 = vmatpush.bf16.msra.mxu0 %v8628
    %11383 = vmatpush.bf16.msra.mxu0 %v8609
    %11384 = vmatmul.bf16.gmra.mxu0 %v2800
    %v11385 = vpop.f32.mrf.mxu0
    %v11386 = vadd.f32 %v11373, %v11385
    %v11387 = vpop.f32.mrf.mxu0
    %11388 = vdwg.mxu0
    %11389 = vmatpush.bf16.msra.mxu0 %v8894
    %11390 = vmatpush.bf16.msra.mxu0 %v8875
    %11391 = vmatpush.bf16.msra.mxu0 %v8856
    %11392 = vmatpush.bf16.msra.mxu0 %v8837
    %11393 = vmatpush.bf16.msra.mxu0 %v8818
    %11394 = vmatpush.bf16.msra.mxu0 %v8799
    %11395 = vmatpush.bf16.msra.mxu0 %v8780
    %11396 = vmatpush.bf16.msra.mxu0 %v8761
    %11397 = vmatmul.bf16.gmra.mxu0 %v2801
    %v11398 = vpop.f32.mrf.mxu0
    %v11399 = vadd.f32 %v11386, %v11398
    %v11400 = vpop.f32.mrf.mxu0
    %11401 = vdwg.mxu0
    %11402 = vmatpush.bf16.msra.mxu0 %v9046
    %11403 = vmatpush.bf16.msra.mxu0 %v9027
    %11404 = vmatpush.bf16.msra.mxu0 %v9008
    %11405 = vmatpush.bf16.msra.mxu0 %v8989
    %11406 = vmatpush.bf16.msra.mxu0 %v8970
    %11407 = vmatpush.bf16.msra.mxu0 %v8951
    %11408 = vmatpush.bf16.msra.mxu0 %v8932
    %11409 = vmatpush.bf16.msra.mxu0 %v8913
    %11410 = vmatmul.bf16.gmra.mxu0 %v2802
    %v11411 = vpop.f32.mrf.mxu0
    %v11412 = vadd.f32 %v11399, %v11411
    %v11413 = vpop.f32.mrf.mxu0
    %11414 = vdwg.mxu0
    %11415 = vmatpush.bf16.msra.mxu0 %v7983
    %11416 = vmatpush.bf16.msra.mxu0 %v7964
    %11417 = vmatpush.bf16.msra.mxu0 %v7945
    %11418 = vmatpush.bf16.msra.mxu0 %v7926
    %11419 = vmatpush.bf16.msra.mxu0 %v7907
    %11420 = vmatpush.bf16.msra.mxu0 %v7888
    %11421 = vmatpush.bf16.msra.mxu0 %v7869
    %11422 = vmatpush.bf16.msra.mxu0 %v7850
    %11423 = vmatmul.bf16.gmra.mxu0 %v2795
    %v11424 = vpop.f32.mrf.mxu0
    %v11425 = vadd.f32 %v4100, %v11424
    %v11426 = vpop.f32.mrf.mxu0
    %11427 = vdwg.mxu0
    %11428 = vmatpush.bf16.msra.mxu0 %v8135
    %11429 = vmatpush.bf16.msra.mxu0 %v8116
    %11430 = vmatpush.bf16.msra.mxu0 %v8097
    %11431 = vmatpush.bf16.msra.mxu0 %v8078
    %11432 = vmatpush.bf16.msra.mxu0 %v8059
    %11433 = vmatpush.bf16.msra.mxu0 %v8040
    %11434 = vmatpush.bf16.msra.mxu0 %v8021
    %11435 = vmatpush.bf16.msra.mxu0 %v8002
    %11436 = vmatmul.bf16.gmra.mxu0 %v2796
    %v11437 = vpop.f32.mrf.mxu0
    %v11438 = vadd.f32 %v11425, %v11437
    %v11439 = vpop.f32.mrf.mxu0
    %11440 = vdwg.mxu0
    %11441 = vmatpush.bf16.msra.mxu0 %v8287
    %11442 = vmatpush.bf16.msra.mxu0 %v8268
    %11443 = vmatpush.bf16.msra.mxu0 %v8249
    %11444 = vmatpush.bf16.msra.mxu0 %v8230
    %11445 = vmatpush.bf16.msra.mxu0 %v8211
    %11446 = vmatpush.bf16.msra.mxu0 %v8192
    %11447 = vmatpush.bf16.msra.mxu0 %v8173
    %11448 = vmatpush.bf16.msra.mxu0 %v8154
    %11449 = vmatmul.bf16.gmra.mxu0 %v2797
    %v11450 = vpop.f32.mrf.mxu0
    %v11451 = vadd.f32 %v11438, %v11450
    %v11452 = vpop.f32.mrf.mxu0
    %11453 = vdwg.mxu0
    %11454 = vmatpush.bf16.msra.mxu0 %v8439
    %11455 = vmatpush.bf16.msra.mxu0 %v8420
    %11456 = vmatpush.bf16.msra.mxu0 %v8401
    %11457 = vmatpush.bf16.msra.mxu0 %v8382
    %11458 = vmatpush.bf16.msra.mxu0 %v8363
    %11459 = vmatpush.bf16.msra.mxu0 %v8344
    %11460 = vmatpush.bf16.msra.mxu0 %v8325
    %11461 = vmatpush.bf16.msra.mxu0 %v8306
    %11462 = vmatmul.bf16.gmra.mxu0 %v2798
    %v11463 = vpop.f32.mrf.mxu0
    %v11464 = vadd.f32 %v11451, %v11463
    %v11465 = vpop.f32.mrf.mxu0
    %11466 = vdwg.mxu0
    %11467 = vmatpush.bf16.msra.mxu0 %v8591
    %11468 = vmatpush.bf16.msra.mxu0 %v8572
    %11469 = vmatpush.bf16.msra.mxu0 %v8553
    %11470 = vmatpush.bf16.msra.mxu0 %v8534
    %11471 = vmatpush.bf16.msra.mxu0 %v8515
    %11472 = vmatpush.bf16.msra.mxu0 %v8496
    %11473 = vmatpush.bf16.msra.mxu0 %v8477
    %11474 = vmatpush.bf16.msra.mxu0 %v8458
    %11475 = vmatmul.bf16.gmra.mxu0 %v2799
    %v11476 = vpop.f32.mrf.mxu0
    %v11477 = vadd.f32 %v11464, %v11476
    %v11478 = vpop.f32.mrf.mxu0
    %11479 = vdwg.mxu0
    %11480 = vmatpush.bf16.msra.mxu0 %v8743
    %11481 = vmatpush.bf16.msra.mxu0 %v8724
    %11482 = vmatpush.bf16.msra.mxu0 %v8705
    %11483 = vmatpush.bf16.msra.mxu0 %v8686
    %11484 = vmatpush.bf16.msra.mxu0 %v8667
    %11485 = vmatpush.bf16.msra.mxu0 %v8648
    %11486 = vmatpush.bf16.msra.mxu0 %v8629
    %11487 = vmatpush.bf16.msra.mxu0 %v8610
    %11488 = vmatmul.bf16.gmra.mxu0 %v2800
    %v11489 = vpop.f32.mrf.mxu0
    %v11490 = vadd.f32 %v11477, %v11489
    %v11491 = vpop.f32.mrf.mxu0
    %11492 = vdwg.mxu0
    %11493 = vmatpush.bf16.msra.mxu0 %v8895
    %11494 = vmatpush.bf16.msra.mxu0 %v8876
    %11495 = vmatpush.bf16.msra.mxu0 %v8857
    %11496 = vmatpush.bf16.msra.mxu0 %v8838
    %11497 = vmatpush.bf16.msra.mxu0 %v8819
    %11498 = vmatpush.bf16.msra.mxu0 %v8800
    %11499 = vmatpush.bf16.msra.mxu0 %v8781
    %11500 = vmatpush.bf16.msra.mxu0 %v8762
    %11501 = vmatmul.bf16.gmra.mxu0 %v2801
    %v11502 = vpop.f32.mrf.mxu0
    %v11503 = vadd.f32 %v11490, %v11502
    %v11504 = vpop.f32.mrf.mxu0
    %11505 = vdwg.mxu0
    %11506 = vmatpush.bf16.msra.mxu0 %v9047
    %11507 = vmatpush.bf16.msra.mxu0 %v9028
    %11508 = vmatpush.bf16.msra.mxu0 %v9009
    %11509 = vmatpush.bf16.msra.mxu0 %v8990
    %11510 = vmatpush.bf16.msra.mxu0 %v8971
    %11511 = vmatpush.bf16.msra.mxu0 %v8952
    %11512 = vmatpush.bf16.msra.mxu0 %v8933
    %11513 = vmatpush.bf16.msra.mxu0 %v8914
    %11514 = vmatmul.bf16.gmra.mxu0 %v2802
    %v11515 = vpop.f32.mrf.mxu0
    %v11516 = vadd.f32 %v11503, %v11515
    %v11517 = vpop.f32.mrf.mxu0
    %11518 = vdwg.mxu0
    %11519 = vmatpush.bf16.msra.mxu0 %v7984
    %11520 = vmatpush.bf16.msra.mxu0 %v7965
    %11521 = vmatpush.bf16.msra.mxu0 %v7946
    %11522 = vmatpush.bf16.msra.mxu0 %v7927
    %11523 = vmatpush.bf16.msra.mxu0 %v7908
    %11524 = vmatpush.bf16.msra.mxu0 %v7889
    %11525 = vmatpush.bf16.msra.mxu0 %v7870
    %11526 = vmatpush.bf16.msra.mxu0 %v7851
    %11527 = vmatmul.bf16.gmra.mxu0 %v2795
    %v11528 = vpop.f32.mrf.mxu0
    %v11529 = vadd.f32 %v4101, %v11528
    %v11530 = vpop.f32.mrf.mxu0
    %11531 = vdwg.mxu0
    %11532 = vmatpush.bf16.msra.mxu0 %v8136
    %11533 = vmatpush.bf16.msra.mxu0 %v8117
    %11534 = vmatpush.bf16.msra.mxu0 %v8098
    %11535 = vmatpush.bf16.msra.mxu0 %v8079
    %11536 = vmatpush.bf16.msra.mxu0 %v8060
    %11537 = vmatpush.bf16.msra.mxu0 %v8041
    %11538 = vmatpush.bf16.msra.mxu0 %v8022
    %11539 = vmatpush.bf16.msra.mxu0 %v8003
    %11540 = vmatmul.bf16.gmra.mxu0 %v2796
    %v11541 = vpop.f32.mrf.mxu0
    %v11542 = vadd.f32 %v11529, %v11541
    %v11543 = vpop.f32.mrf.mxu0
    %11544 = vdwg.mxu0
    %11545 = vmatpush.bf16.msra.mxu0 %v8288
    %11546 = vmatpush.bf16.msra.mxu0 %v8269
    %11547 = vmatpush.bf16.msra.mxu0 %v8250
    %11548 = vmatpush.bf16.msra.mxu0 %v8231
    %11549 = vmatpush.bf16.msra.mxu0 %v8212
    %11550 = vmatpush.bf16.msra.mxu0 %v8193
    %11551 = vmatpush.bf16.msra.mxu0 %v8174
    %11552 = vmatpush.bf16.msra.mxu0 %v8155
    %11553 = vmatmul.bf16.gmra.mxu0 %v2797
    %v11554 = vpop.f32.mrf.mxu0
    %v11555 = vadd.f32 %v11542, %v11554
    %v11556 = vpop.f32.mrf.mxu0
    %11557 = vdwg.mxu0
    %11558 = vmatpush.bf16.msra.mxu0 %v8440
    %11559 = vmatpush.bf16.msra.mxu0 %v8421
    %11560 = vmatpush.bf16.msra.mxu0 %v8402
    %11561 = vmatpush.bf16.msra.mxu0 %v8383
    %11562 = vmatpush.bf16.msra.mxu0 %v8364
    %11563 = vmatpush.bf16.msra.mxu0 %v8345
    %11564 = vmatpush.bf16.msra.mxu0 %v8326
    %11565 = vmatpush.bf16.msra.mxu0 %v8307
    %11566 = vmatmul.bf16.gmra.mxu0 %v2798
    %v11567 = vpop.f32.mrf.mxu0
    %v11568 = vadd.f32 %v11555, %v11567
    %v11569 = vpop.f32.mrf.mxu0
    %11570 = vdwg.mxu0
    %11571 = vmatpush.bf16.msra.mxu0 %v8592
    %11572 = vmatpush.bf16.msra.mxu0 %v8573
    %11573 = vmatpush.bf16.msra.mxu0 %v8554
    %11574 = vmatpush.bf16.msra.mxu0 %v8535
    %11575 = vmatpush.bf16.msra.mxu0 %v8516
    %11576 = vmatpush.bf16.msra.mxu0 %v8497
    %11577 = vmatpush.bf16.msra.mxu0 %v8478
    %11578 = vmatpush.bf16.msra.mxu0 %v8459
    %11579 = vmatmul.bf16.gmra.mxu0 %v2799
    %v11580 = vpop.f32.mrf.mxu0
    %v11581 = vadd.f32 %v11568, %v11580
    %v11582 = vpop.f32.mrf.mxu0
    %11583 = vdwg.mxu0
    %11584 = vmatpush.bf16.msra.mxu0 %v8744
    %11585 = vmatpush.bf16.msra.mxu0 %v8725
    %11586 = vmatpush.bf16.msra.mxu0 %v8706
    %11587 = vmatpush.bf16.msra.mxu0 %v8687
    %11588 = vmatpush.bf16.msra.mxu0 %v8668
    %11589 = vmatpush.bf16.msra.mxu0 %v8649
    %11590 = vmatpush.bf16.msra.mxu0 %v8630
    %11591 = vmatpush.bf16.msra.mxu0 %v8611
    %11592 = vmatmul.bf16.gmra.mxu0 %v2800
    %v11593 = vpop.f32.mrf.mxu0
    %v11594 = vadd.f32 %v11581, %v11593
    %v11595 = vpop.f32.mrf.mxu0
    %11596 = vdwg.mxu0
    %11597 = vmatpush.bf16.msra.mxu0 %v8896
    %11598 = vmatpush.bf16.msra.mxu0 %v8877
    %11599 = vmatpush.bf16.msra.mxu0 %v8858
    %11600 = vmatpush.bf16.msra.mxu0 %v8839
    %11601 = vmatpush.bf16.msra.mxu0 %v8820
    %11602 = vmatpush.bf16.msra.mxu0 %v8801
    %11603 = vmatpush.bf16.msra.mxu0 %v8782
    %11604 = vmatpush.bf16.msra.mxu0 %v8763
    %11605 = vmatmul.bf16.gmra.mxu0 %v2801
    %v11606 = vpop.f32.mrf.mxu0
    %v11607 = vadd.f32 %v11594, %v11606
    %v11608 = vpop.f32.mrf.mxu0
    %11609 = vdwg.mxu0
    %11610 = vmatpush.bf16.msra.mxu0 %v9048
    %11611 = vmatpush.bf16.msra.mxu0 %v9029
    %11612 = vmatpush.bf16.msra.mxu0 %v9010
    %11613 = vmatpush.bf16.msra.mxu0 %v8991
    %11614 = vmatpush.bf16.msra.mxu0 %v8972
    %11615 = vmatpush.bf16.msra.mxu0 %v8953
    %11616 = vmatpush.bf16.msra.mxu0 %v8934
    %11617 = vmatpush.bf16.msra.mxu0 %v8915
    %11618 = vmatmul.bf16.gmra.mxu0 %v2802
    %v11619 = vpop.f32.mrf.mxu0
    %v11620 = vadd.f32 %v11607, %v11619
    %v11621 = vpop.f32.mrf.mxu0
    %11622 = vdwg.mxu0
    %11623 = vmatpush.bf16.msra.mxu0 %v7985
    %11624 = vmatpush.bf16.msra.mxu0 %v7966
    %11625 = vmatpush.bf16.msra.mxu0 %v7947
    %11626 = vmatpush.bf16.msra.mxu0 %v7928
    %11627 = vmatpush.bf16.msra.mxu0 %v7909
    %11628 = vmatpush.bf16.msra.mxu0 %v7890
    %11629 = vmatpush.bf16.msra.mxu0 %v7871
    %11630 = vmatpush.bf16.msra.mxu0 %v7852
    %11631 = vmatmul.bf16.gmra.mxu0 %v2795
    %v11632 = vpop.f32.mrf.mxu0
    %v11633 = vadd.f32 %v4102, %v11632
    %v11634 = vpop.f32.mrf.mxu0
    %11635 = vdwg.mxu0
    %11636 = vmatpush.bf16.msra.mxu0 %v8137
    %11637 = vmatpush.bf16.msra.mxu0 %v8118
    %11638 = vmatpush.bf16.msra.mxu0 %v8099
    %11639 = vmatpush.bf16.msra.mxu0 %v8080
    %11640 = vmatpush.bf16.msra.mxu0 %v8061
    %11641 = vmatpush.bf16.msra.mxu0 %v8042
    %11642 = vmatpush.bf16.msra.mxu0 %v8023
    %11643 = vmatpush.bf16.msra.mxu0 %v8004
    %11644 = vmatmul.bf16.gmra.mxu0 %v2796
    %v11645 = vpop.f32.mrf.mxu0
    %v11646 = vadd.f32 %v11633, %v11645
    %v11647 = vpop.f32.mrf.mxu0
    %11648 = vdwg.mxu0
    %11649 = vmatpush.bf16.msra.mxu0 %v8289
    %11650 = vmatpush.bf16.msra.mxu0 %v8270
    %11651 = vmatpush.bf16.msra.mxu0 %v8251
    %11652 = vmatpush.bf16.msra.mxu0 %v8232
    %11653 = vmatpush.bf16.msra.mxu0 %v8213
    %11654 = vmatpush.bf16.msra.mxu0 %v8194
    %11655 = vmatpush.bf16.msra.mxu0 %v8175
    %11656 = vmatpush.bf16.msra.mxu0 %v8156
    %11657 = vmatmul.bf16.gmra.mxu0 %v2797
    %v11658 = vpop.f32.mrf.mxu0
    %v11659 = vadd.f32 %v11646, %v11658
    %v11660 = vpop.f32.mrf.mxu0
    %11661 = vdwg.mxu0
    %11662 = vmatpush.bf16.msra.mxu0 %v8441
    %11663 = vmatpush.bf16.msra.mxu0 %v8422
    %11664 = vmatpush.bf16.msra.mxu0 %v8403
    %11665 = vmatpush.bf16.msra.mxu0 %v8384
    %11666 = vmatpush.bf16.msra.mxu0 %v8365
    %11667 = vmatpush.bf16.msra.mxu0 %v8346
    %11668 = vmatpush.bf16.msra.mxu0 %v8327
    %11669 = vmatpush.bf16.msra.mxu0 %v8308
    %11670 = vmatmul.bf16.gmra.mxu0 %v2798
    %v11671 = vpop.f32.mrf.mxu0
    %v11672 = vadd.f32 %v11659, %v11671
    %v11673 = vpop.f32.mrf.mxu0
    %11674 = vdwg.mxu0
    %11675 = vmatpush.bf16.msra.mxu0 %v8593
    %11676 = vmatpush.bf16.msra.mxu0 %v8574
    %11677 = vmatpush.bf16.msra.mxu0 %v8555
    %11678 = vmatpush.bf16.msra.mxu0 %v8536
    %11679 = vmatpush.bf16.msra.mxu0 %v8517
    %11680 = vmatpush.bf16.msra.mxu0 %v8498
    %11681 = vmatpush.bf16.msra.mxu0 %v8479
    %11682 = vmatpush.bf16.msra.mxu0 %v8460
    %11683 = vmatmul.bf16.gmra.mxu0 %v2799
    %v11684 = vpop.f32.mrf.mxu0
    %v11685 = vadd.f32 %v11672, %v11684
    %v11686 = vpop.f32.mrf.mxu0
    %11687 = vdwg.mxu0
    %11688 = vmatpush.bf16.msra.mxu0 %v8745
    %11689 = vmatpush.bf16.msra.mxu0 %v8726
    %11690 = vmatpush.bf16.msra.mxu0 %v8707
    %11691 = vmatpush.bf16.msra.mxu0 %v8688
    %11692 = vmatpush.bf16.msra.mxu0 %v8669
    %11693 = vmatpush.bf16.msra.mxu0 %v8650
    %11694 = vmatpush.bf16.msra.mxu0 %v8631
    %11695 = vmatpush.bf16.msra.mxu0 %v8612
    %11696 = vmatmul.bf16.gmra.mxu0 %v2800
    %v11697 = vpop.f32.mrf.mxu0
    %v11698 = vadd.f32 %v11685, %v11697
    %v11699 = vpop.f32.mrf.mxu0
    %11700 = vdwg.mxu0
    %11701 = vmatpush.bf16.msra.mxu0 %v8897
    %11702 = vmatpush.bf16.msra.mxu0 %v8878
    %11703 = vmatpush.bf16.msra.mxu0 %v8859
    %11704 = vmatpush.bf16.msra.mxu0 %v8840
    %11705 = vmatpush.bf16.msra.mxu0 %v8821
    %11706 = vmatpush.bf16.msra.mxu0 %v8802
    %11707 = vmatpush.bf16.msra.mxu0 %v8783
    %11708 = vmatpush.bf16.msra.mxu0 %v8764
    %11709 = vmatmul.bf16.gmra.mxu0 %v2801
    %v11710 = vpop.f32.mrf.mxu0
    %v11711 = vadd.f32 %v11698, %v11710
    %v11712 = vpop.f32.mrf.mxu0
    %11713 = vdwg.mxu0
    %11714 = vmatpush.bf16.msra.mxu0 %v9049
    %11715 = vmatpush.bf16.msra.mxu0 %v9030
    %11716 = vmatpush.bf16.msra.mxu0 %v9011
    %11717 = vmatpush.bf16.msra.mxu0 %v8992
    %11718 = vmatpush.bf16.msra.mxu0 %v8973
    %11719 = vmatpush.bf16.msra.mxu0 %v8954
    %11720 = vmatpush.bf16.msra.mxu0 %v8935
    %11721 = vmatpush.bf16.msra.mxu0 %v8916
    %11722 = vmatmul.bf16.gmra.mxu0 %v2802
    %v11723 = vpop.f32.mrf.mxu0
    %v11724 = vadd.f32 %v11711, %v11723
    %v11725 = vpop.f32.mrf.mxu0
    %11726 = vdwg.mxu0
    %11727 = vmatpush.bf16.msra.mxu0 %v7986
    %11728 = vmatpush.bf16.msra.mxu0 %v7967
    %11729 = vmatpush.bf16.msra.mxu0 %v7948
    %11730 = vmatpush.bf16.msra.mxu0 %v7929
    %11731 = vmatpush.bf16.msra.mxu0 %v7910
    %11732 = vmatpush.bf16.msra.mxu0 %v7891
    %11733 = vmatpush.bf16.msra.mxu0 %v7872
    %11734 = vmatpush.bf16.msra.mxu0 %v7853
    %11735 = vmatmul.bf16.gmra.mxu0 %v2795
    %v11736 = vpop.f32.mrf.mxu0
    %v11737 = vadd.f32 %v4103, %v11736
    %v11738 = vpop.f32.mrf.mxu0
    %11739 = vdwg.mxu0
    %11740 = vmatpush.bf16.msra.mxu0 %v8138
    %11741 = vmatpush.bf16.msra.mxu0 %v8119
    %11742 = vmatpush.bf16.msra.mxu0 %v8100
    %11743 = vmatpush.bf16.msra.mxu0 %v8081
    %11744 = vmatpush.bf16.msra.mxu0 %v8062
    %11745 = vmatpush.bf16.msra.mxu0 %v8043
    %11746 = vmatpush.bf16.msra.mxu0 %v8024
    %11747 = vmatpush.bf16.msra.mxu0 %v8005
    %11748 = vmatmul.bf16.gmra.mxu0 %v2796
    %v11749 = vpop.f32.mrf.mxu0
    %v11750 = vadd.f32 %v11737, %v11749
    %v11751 = vpop.f32.mrf.mxu0
    %11752 = vdwg.mxu0
    %11753 = vmatpush.bf16.msra.mxu0 %v8290
    %11754 = vmatpush.bf16.msra.mxu0 %v8271
    %11755 = vmatpush.bf16.msra.mxu0 %v8252
    %11756 = vmatpush.bf16.msra.mxu0 %v8233
    %11757 = vmatpush.bf16.msra.mxu0 %v8214
    %11758 = vmatpush.bf16.msra.mxu0 %v8195
    %11759 = vmatpush.bf16.msra.mxu0 %v8176
    %11760 = vmatpush.bf16.msra.mxu0 %v8157
    %11761 = vmatmul.bf16.gmra.mxu0 %v2797
    %v11762 = vpop.f32.mrf.mxu0
    %v11763 = vadd.f32 %v11750, %v11762
    %v11764 = vpop.f32.mrf.mxu0
    %11765 = vdwg.mxu0
    %11766 = vmatpush.bf16.msra.mxu0 %v8442
    %11767 = vmatpush.bf16.msra.mxu0 %v8423
    %11768 = vmatpush.bf16.msra.mxu0 %v8404
    %11769 = vmatpush.bf16.msra.mxu0 %v8385
    %11770 = vmatpush.bf16.msra.mxu0 %v8366
    %11771 = vmatpush.bf16.msra.mxu0 %v8347
    %11772 = vmatpush.bf16.msra.mxu0 %v8328
    %11773 = vmatpush.bf16.msra.mxu0 %v8309
    %11774 = vmatmul.bf16.gmra.mxu0 %v2798
    %v11775 = vpop.f32.mrf.mxu0
    %v11776 = vadd.f32 %v11763, %v11775
    %v11777 = vpop.f32.mrf.mxu0
    %11778 = vdwg.mxu0
    %11779 = vmatpush.bf16.msra.mxu0 %v8594
    %11780 = vmatpush.bf16.msra.mxu0 %v8575
    %11781 = vmatpush.bf16.msra.mxu0 %v8556
    %11782 = vmatpush.bf16.msra.mxu0 %v8537
    %11783 = vmatpush.bf16.msra.mxu0 %v8518
    %11784 = vmatpush.bf16.msra.mxu0 %v8499
    %11785 = vmatpush.bf16.msra.mxu0 %v8480
    %11786 = vmatpush.bf16.msra.mxu0 %v8461
    %11787 = vmatmul.bf16.gmra.mxu0 %v2799
    %v11788 = vpop.f32.mrf.mxu0
    %v11789 = vadd.f32 %v11776, %v11788
    %v11790 = vpop.f32.mrf.mxu0
    %11791 = vdwg.mxu0
    %11792 = vmatpush.bf16.msra.mxu0 %v8746
    %11793 = vmatpush.bf16.msra.mxu0 %v8727
    %11794 = vmatpush.bf16.msra.mxu0 %v8708
    %11795 = vmatpush.bf16.msra.mxu0 %v8689
    %11796 = vmatpush.bf16.msra.mxu0 %v8670
    %11797 = vmatpush.bf16.msra.mxu0 %v8651
    %11798 = vmatpush.bf16.msra.mxu0 %v8632
    %11799 = vmatpush.bf16.msra.mxu0 %v8613
    %11800 = vmatmul.bf16.gmra.mxu0 %v2800
    %v11801 = vpop.f32.mrf.mxu0
    %v11802 = vadd.f32 %v11789, %v11801
    %v11803 = vpop.f32.mrf.mxu0
    %11804 = vdwg.mxu0
    %11805 = vmatpush.bf16.msra.mxu0 %v8898
    %11806 = vmatpush.bf16.msra.mxu0 %v8879
    %11807 = vmatpush.bf16.msra.mxu0 %v8860
    %11808 = vmatpush.bf16.msra.mxu0 %v8841
    %11809 = vmatpush.bf16.msra.mxu0 %v8822
    %11810 = vmatpush.bf16.msra.mxu0 %v8803
    %11811 = vmatpush.bf16.msra.mxu0 %v8784
    %11812 = vmatpush.bf16.msra.mxu0 %v8765
    %11813 = vmatmul.bf16.gmra.mxu0 %v2801
    %v11814 = vpop.f32.mrf.mxu0
    %v11815 = vadd.f32 %v11802, %v11814
    %v11816 = vpop.f32.mrf.mxu0
    %11817 = vdwg.mxu0
    %11818 = vmatpush.bf16.msra.mxu0 %v9050
    %11819 = vmatpush.bf16.msra.mxu0 %v9031
    %11820 = vmatpush.bf16.msra.mxu0 %v9012
    %11821 = vmatpush.bf16.msra.mxu0 %v8993
    %11822 = vmatpush.bf16.msra.mxu0 %v8974
    %11823 = vmatpush.bf16.msra.mxu0 %v8955
    %11824 = vmatpush.bf16.msra.mxu0 %v8936
    %11825 = vmatpush.bf16.msra.mxu0 %v8917
    %11826 = vmatmul.bf16.gmra.mxu0 %v2802
    %v11827 = vpop.f32.mrf.mxu0
    %v11828 = vadd.f32 %v11815, %v11827
    %v11829 = vpop.f32.mrf.mxu0
    %11830 = vdwg.mxu0
    %11831 = vmatpush.bf16.msra.mxu0 %v7987
    %11832 = vmatpush.bf16.msra.mxu0 %v7968
    %11833 = vmatpush.bf16.msra.mxu0 %v7949
    %11834 = vmatpush.bf16.msra.mxu0 %v7930
    %11835 = vmatpush.bf16.msra.mxu0 %v7911
    %11836 = vmatpush.bf16.msra.mxu0 %v7892
    %11837 = vmatpush.bf16.msra.mxu0 %v7873
    %11838 = vmatpush.bf16.msra.mxu0 %v7854
    %11839 = vmatmul.bf16.gmra.mxu0 %v2795
    %v11840 = vpop.f32.mrf.mxu0
    %v11841 = vadd.f32 %v4104, %v11840
    %v11842 = vpop.f32.mrf.mxu0
    %11843 = vdwg.mxu0
    %11844 = vmatpush.bf16.msra.mxu0 %v8139
    %11845 = vmatpush.bf16.msra.mxu0 %v8120
    %11846 = vmatpush.bf16.msra.mxu0 %v8101
    %11847 = vmatpush.bf16.msra.mxu0 %v8082
    %11848 = vmatpush.bf16.msra.mxu0 %v8063
    %11849 = vmatpush.bf16.msra.mxu0 %v8044
    %11850 = vmatpush.bf16.msra.mxu0 %v8025
    %11851 = vmatpush.bf16.msra.mxu0 %v8006
    %11852 = vmatmul.bf16.gmra.mxu0 %v2796
    %v11853 = vpop.f32.mrf.mxu0
    %v11854 = vadd.f32 %v11841, %v11853
    %v11855 = vpop.f32.mrf.mxu0
    %11856 = vdwg.mxu0
    %11857 = vmatpush.bf16.msra.mxu0 %v8291
    %11858 = vmatpush.bf16.msra.mxu0 %v8272
    %11859 = vmatpush.bf16.msra.mxu0 %v8253
    %11860 = vmatpush.bf16.msra.mxu0 %v8234
    %11861 = vmatpush.bf16.msra.mxu0 %v8215
    %11862 = vmatpush.bf16.msra.mxu0 %v8196
    %11863 = vmatpush.bf16.msra.mxu0 %v8177
    %11864 = vmatpush.bf16.msra.mxu0 %v8158
    %11865 = vmatmul.bf16.gmra.mxu0 %v2797
    %v11866 = vpop.f32.mrf.mxu0
    %v11867 = vadd.f32 %v11854, %v11866
    %v11868 = vpop.f32.mrf.mxu0
    %11869 = vdwg.mxu0
    %11870 = vmatpush.bf16.msra.mxu0 %v8443
    %11871 = vmatpush.bf16.msra.mxu0 %v8424
    %11872 = vmatpush.bf16.msra.mxu0 %v8405
    %11873 = vmatpush.bf16.msra.mxu0 %v8386
    %11874 = vmatpush.bf16.msra.mxu0 %v8367
    %11875 = vmatpush.bf16.msra.mxu0 %v8348
    %11876 = vmatpush.bf16.msra.mxu0 %v8329
    %11877 = vmatpush.bf16.msra.mxu0 %v8310
    %11878 = vmatmul.bf16.gmra.mxu0 %v2798
    %v11879 = vpop.f32.mrf.mxu0
    %v11880 = vadd.f32 %v11867, %v11879
    %v11881 = vpop.f32.mrf.mxu0
    %11882 = vdwg.mxu0
    %11883 = vmatpush.bf16.msra.mxu0 %v8595
    %11884 = vmatpush.bf16.msra.mxu0 %v8576
    %11885 = vmatpush.bf16.msra.mxu0 %v8557
    %11886 = vmatpush.bf16.msra.mxu0 %v8538
    %11887 = vmatpush.bf16.msra.mxu0 %v8519
    %11888 = vmatpush.bf16.msra.mxu0 %v8500
    %11889 = vmatpush.bf16.msra.mxu0 %v8481
    %11890 = vmatpush.bf16.msra.mxu0 %v8462
    %11891 = vmatmul.bf16.gmra.mxu0 %v2799
    %v11892 = vpop.f32.mrf.mxu0
    %v11893 = vadd.f32 %v11880, %v11892
    %v11894 = vpop.f32.mrf.mxu0
    %11895 = vdwg.mxu0
    %11896 = vmatpush.bf16.msra.mxu0 %v8747
    %11897 = vmatpush.bf16.msra.mxu0 %v8728
    %11898 = vmatpush.bf16.msra.mxu0 %v8709
    %11899 = vmatpush.bf16.msra.mxu0 %v8690
    %11900 = vmatpush.bf16.msra.mxu0 %v8671
    %11901 = vmatpush.bf16.msra.mxu0 %v8652
    %11902 = vmatpush.bf16.msra.mxu0 %v8633
    %11903 = vmatpush.bf16.msra.mxu0 %v8614
    %11904 = vmatmul.bf16.gmra.mxu0 %v2800
    %v11905 = vpop.f32.mrf.mxu0
    %v11906 = vadd.f32 %v11893, %v11905
    %v11907 = vpop.f32.mrf.mxu0
    %11908 = vdwg.mxu0
    %11909 = vmatpush.bf16.msra.mxu0 %v8899
    %11910 = vmatpush.bf16.msra.mxu0 %v8880
    %11911 = vmatpush.bf16.msra.mxu0 %v8861
    %11912 = vmatpush.bf16.msra.mxu0 %v8842
    %11913 = vmatpush.bf16.msra.mxu0 %v8823
    %11914 = vmatpush.bf16.msra.mxu0 %v8804
    %11915 = vmatpush.bf16.msra.mxu0 %v8785
    %11916 = vmatpush.bf16.msra.mxu0 %v8766
    %11917 = vmatmul.bf16.gmra.mxu0 %v2801
    %v11918 = vpop.f32.mrf.mxu0
    %v11919 = vadd.f32 %v11906, %v11918
    %v11920 = vpop.f32.mrf.mxu0
    %11921 = vdwg.mxu0
    %11922 = vmatpush.bf16.msra.mxu0 %v9051
    %11923 = vmatpush.bf16.msra.mxu0 %v9032
    %11924 = vmatpush.bf16.msra.mxu0 %v9013
    %11925 = vmatpush.bf16.msra.mxu0 %v8994
    %11926 = vmatpush.bf16.msra.mxu0 %v8975
    %11927 = vmatpush.bf16.msra.mxu0 %v8956
    %11928 = vmatpush.bf16.msra.mxu0 %v8937
    %11929 = vmatpush.bf16.msra.mxu0 %v8918
    %11930 = vmatmul.bf16.gmra.mxu0 %v2802
    %v11931 = vpop.f32.mrf.mxu0
    %v11932 = vadd.f32 %v11919, %v11931
    %v11933 = vpop.f32.mrf.mxu0
    %11934 = vdwg.mxu0
    %11935 = vmatpush.bf16.msra.mxu0 %v7988
    %11936 = vmatpush.bf16.msra.mxu0 %v7969
    %11937 = vmatpush.bf16.msra.mxu0 %v7950
    %11938 = vmatpush.bf16.msra.mxu0 %v7931
    %11939 = vmatpush.bf16.msra.mxu0 %v7912
    %11940 = vmatpush.bf16.msra.mxu0 %v7893
    %11941 = vmatpush.bf16.msra.mxu0 %v7874
    %11942 = vmatpush.bf16.msra.mxu0 %v7855
    %11943 = vmatmul.bf16.gmra.mxu0 %v2795
    %v11944 = vpop.f32.mrf.mxu0
    %v11945 = vadd.f32 %v4105, %v11944
    %v11946 = vpop.f32.mrf.mxu0
    %11947 = vdwg.mxu0
    %11948 = vmatpush.bf16.msra.mxu0 %v8140
    %11949 = vmatpush.bf16.msra.mxu0 %v8121
    %11950 = vmatpush.bf16.msra.mxu0 %v8102
    %11951 = vmatpush.bf16.msra.mxu0 %v8083
    %11952 = vmatpush.bf16.msra.mxu0 %v8064
    %11953 = vmatpush.bf16.msra.mxu0 %v8045
    %11954 = vmatpush.bf16.msra.mxu0 %v8026
    %11955 = vmatpush.bf16.msra.mxu0 %v8007
    %11956 = vmatmul.bf16.gmra.mxu0 %v2796
    %v11957 = vpop.f32.mrf.mxu0
    %v11958 = vadd.f32 %v11945, %v11957
    %v11959 = vpop.f32.mrf.mxu0
    %11960 = vdwg.mxu0
    %11961 = vmatpush.bf16.msra.mxu0 %v8292
    %11962 = vmatpush.bf16.msra.mxu0 %v8273
    %11963 = vmatpush.bf16.msra.mxu0 %v8254
    %11964 = vmatpush.bf16.msra.mxu0 %v8235
    %11965 = vmatpush.bf16.msra.mxu0 %v8216
    %11966 = vmatpush.bf16.msra.mxu0 %v8197
    %11967 = vmatpush.bf16.msra.mxu0 %v8178
    %11968 = vmatpush.bf16.msra.mxu0 %v8159
    %11969 = vmatmul.bf16.gmra.mxu0 %v2797
    %v11970 = vpop.f32.mrf.mxu0
    %v11971 = vadd.f32 %v11958, %v11970
    %v11972 = vpop.f32.mrf.mxu0
    %11973 = vdwg.mxu0
    %11974 = vmatpush.bf16.msra.mxu0 %v8444
    %11975 = vmatpush.bf16.msra.mxu0 %v8425
    %11976 = vmatpush.bf16.msra.mxu0 %v8406
    %11977 = vmatpush.bf16.msra.mxu0 %v8387
    %11978 = vmatpush.bf16.msra.mxu0 %v8368
    %11979 = vmatpush.bf16.msra.mxu0 %v8349
    %11980 = vmatpush.bf16.msra.mxu0 %v8330
    %11981 = vmatpush.bf16.msra.mxu0 %v8311
    %11982 = vmatmul.bf16.gmra.mxu0 %v2798
    %v11983 = vpop.f32.mrf.mxu0
    %v11984 = vadd.f32 %v11971, %v11983
    %v11985 = vpop.f32.mrf.mxu0
    %11986 = vdwg.mxu0
    %11987 = vmatpush.bf16.msra.mxu0 %v8596
    %11988 = vmatpush.bf16.msra.mxu0 %v8577
    %11989 = vmatpush.bf16.msra.mxu0 %v8558
    %11990 = vmatpush.bf16.msra.mxu0 %v8539
    %11991 = vmatpush.bf16.msra.mxu0 %v8520
    %11992 = vmatpush.bf16.msra.mxu0 %v8501
    %11993 = vmatpush.bf16.msra.mxu0 %v8482
    %11994 = vmatpush.bf16.msra.mxu0 %v8463
    %11995 = vmatmul.bf16.gmra.mxu0 %v2799
    %v11996 = vpop.f32.mrf.mxu0
    %v11997 = vadd.f32 %v11984, %v11996
    %v11998 = vpop.f32.mrf.mxu0
    %11999 = vdwg.mxu0
    %12000 = vmatpush.bf16.msra.mxu0 %v8748
    %12001 = vmatpush.bf16.msra.mxu0 %v8729
    %12002 = vmatpush.bf16.msra.mxu0 %v8710
    %12003 = vmatpush.bf16.msra.mxu0 %v8691
    %12004 = vmatpush.bf16.msra.mxu0 %v8672
    %12005 = vmatpush.bf16.msra.mxu0 %v8653
    %12006 = vmatpush.bf16.msra.mxu0 %v8634
    %12007 = vmatpush.bf16.msra.mxu0 %v8615
    %12008 = vmatmul.bf16.gmra.mxu0 %v2800
    %v12009 = vpop.f32.mrf.mxu0
    %v12010 = vadd.f32 %v11997, %v12009
    %v12011 = vpop.f32.mrf.mxu0
    %12012 = vdwg.mxu0
    %12013 = vmatpush.bf16.msra.mxu0 %v8900
    %12014 = vmatpush.bf16.msra.mxu0 %v8881
    %12015 = vmatpush.bf16.msra.mxu0 %v8862
    %12016 = vmatpush.bf16.msra.mxu0 %v8843
    %12017 = vmatpush.bf16.msra.mxu0 %v8824
    %12018 = vmatpush.bf16.msra.mxu0 %v8805
    %12019 = vmatpush.bf16.msra.mxu0 %v8786
    %12020 = vmatpush.bf16.msra.mxu0 %v8767
    %12021 = vmatmul.bf16.gmra.mxu0 %v2801
    %v12022 = vpop.f32.mrf.mxu0
    %v12023 = vadd.f32 %v12010, %v12022
    %v12024 = vpop.f32.mrf.mxu0
    %12025 = vdwg.mxu0
    %12026 = vmatpush.bf16.msra.mxu0 %v9052
    %12027 = vmatpush.bf16.msra.mxu0 %v9033
    %12028 = vmatpush.bf16.msra.mxu0 %v9014
    %12029 = vmatpush.bf16.msra.mxu0 %v8995
    %12030 = vmatpush.bf16.msra.mxu0 %v8976
    %12031 = vmatpush.bf16.msra.mxu0 %v8957
    %12032 = vmatpush.bf16.msra.mxu0 %v8938
    %12033 = vmatpush.bf16.msra.mxu0 %v8919
    %12034 = vmatmul.bf16.gmra.mxu0 %v2802
    %v12035 = vpop.f32.mrf.mxu0
    %v12036 = vadd.f32 %v12023, %v12035
    %v12037 = vpop.f32.mrf.mxu0
    %12038 = vdwg.mxu0
    %12039 = vmatpush.bf16.msra.mxu0 %v7989
    %12040 = vmatpush.bf16.msra.mxu0 %v7970
    %12041 = vmatpush.bf16.msra.mxu0 %v7951
    %12042 = vmatpush.bf16.msra.mxu0 %v7932
    %12043 = vmatpush.bf16.msra.mxu0 %v7913
    %12044 = vmatpush.bf16.msra.mxu0 %v7894
    %12045 = vmatpush.bf16.msra.mxu0 %v7875
    %12046 = vmatpush.bf16.msra.mxu0 %v7856
    %12047 = vmatmul.bf16.gmra.mxu0 %v2795
    %v12048 = vpop.f32.mrf.mxu0
    %v12049 = vadd.f32 %v4106, %v12048
    %v12050 = vpop.f32.mrf.mxu0
    %12051 = vdwg.mxu0
    %12052 = vmatpush.bf16.msra.mxu0 %v8141
    %12053 = vmatpush.bf16.msra.mxu0 %v8122
    %12054 = vmatpush.bf16.msra.mxu0 %v8103
    %12055 = vmatpush.bf16.msra.mxu0 %v8084
    %12056 = vmatpush.bf16.msra.mxu0 %v8065
    %12057 = vmatpush.bf16.msra.mxu0 %v8046
    %12058 = vmatpush.bf16.msra.mxu0 %v8027
    %12059 = vmatpush.bf16.msra.mxu0 %v8008
    %12060 = vmatmul.bf16.gmra.mxu0 %v2796
    %v12061 = vpop.f32.mrf.mxu0
    %v12062 = vadd.f32 %v12049, %v12061
    %v12063 = vpop.f32.mrf.mxu0
    %12064 = vdwg.mxu0
    %12065 = vmatpush.bf16.msra.mxu0 %v8293
    %12066 = vmatpush.bf16.msra.mxu0 %v8274
    %12067 = vmatpush.bf16.msra.mxu0 %v8255
    %12068 = vmatpush.bf16.msra.mxu0 %v8236
    %12069 = vmatpush.bf16.msra.mxu0 %v8217
    %12070 = vmatpush.bf16.msra.mxu0 %v8198
    %12071 = vmatpush.bf16.msra.mxu0 %v8179
    %12072 = vmatpush.bf16.msra.mxu0 %v8160
    %12073 = vmatmul.bf16.gmra.mxu0 %v2797
    %v12074 = vpop.f32.mrf.mxu0
    %v12075 = vadd.f32 %v12062, %v12074
    %v12076 = vpop.f32.mrf.mxu0
    %12077 = vdwg.mxu0
    %12078 = vmatpush.bf16.msra.mxu0 %v8445
    %12079 = vmatpush.bf16.msra.mxu0 %v8426
    %12080 = vmatpush.bf16.msra.mxu0 %v8407
    %12081 = vmatpush.bf16.msra.mxu0 %v8388
    %12082 = vmatpush.bf16.msra.mxu0 %v8369
    %12083 = vmatpush.bf16.msra.mxu0 %v8350
    %12084 = vmatpush.bf16.msra.mxu0 %v8331
    %12085 = vmatpush.bf16.msra.mxu0 %v8312
    %12086 = vmatmul.bf16.gmra.mxu0 %v2798
    %v12087 = vpop.f32.mrf.mxu0
    %v12088 = vadd.f32 %v12075, %v12087
    %v12089 = vpop.f32.mrf.mxu0
    %12090 = vdwg.mxu0
    %12091 = vmatpush.bf16.msra.mxu0 %v8597
    %12092 = vmatpush.bf16.msra.mxu0 %v8578
    %12093 = vmatpush.bf16.msra.mxu0 %v8559
    %12094 = vmatpush.bf16.msra.mxu0 %v8540
    %12095 = vmatpush.bf16.msra.mxu0 %v8521
    %12096 = vmatpush.bf16.msra.mxu0 %v8502
    %12097 = vmatpush.bf16.msra.mxu0 %v8483
    %12098 = vmatpush.bf16.msra.mxu0 %v8464
    %12099 = vmatmul.bf16.gmra.mxu0 %v2799
    %v12100 = vpop.f32.mrf.mxu0
    %v12101 = vadd.f32 %v12088, %v12100
    %v12102 = vpop.f32.mrf.mxu0
    %12103 = vdwg.mxu0
    %12104 = vmatpush.bf16.msra.mxu0 %v8749
    %12105 = vmatpush.bf16.msra.mxu0 %v8730
    %12106 = vmatpush.bf16.msra.mxu0 %v8711
    %12107 = vmatpush.bf16.msra.mxu0 %v8692
    %12108 = vmatpush.bf16.msra.mxu0 %v8673
    %12109 = vmatpush.bf16.msra.mxu0 %v8654
    %12110 = vmatpush.bf16.msra.mxu0 %v8635
    %12111 = vmatpush.bf16.msra.mxu0 %v8616
    %12112 = vmatmul.bf16.gmra.mxu0 %v2800
    %v12113 = vpop.f32.mrf.mxu0
    %v12114 = vadd.f32 %v12101, %v12113
    %v12115 = vpop.f32.mrf.mxu0
    %12116 = vdwg.mxu0
    %12117 = vmatpush.bf16.msra.mxu0 %v8901
    %12118 = vmatpush.bf16.msra.mxu0 %v8882
    %12119 = vmatpush.bf16.msra.mxu0 %v8863
    %12120 = vmatpush.bf16.msra.mxu0 %v8844
    %12121 = vmatpush.bf16.msra.mxu0 %v8825
    %12122 = vmatpush.bf16.msra.mxu0 %v8806
    %12123 = vmatpush.bf16.msra.mxu0 %v8787
    %12124 = vmatpush.bf16.msra.mxu0 %v8768
    %12125 = vmatmul.bf16.gmra.mxu0 %v2801
    %v12126 = vpop.f32.mrf.mxu0
    %v12127 = vadd.f32 %v12114, %v12126
    %v12128 = vpop.f32.mrf.mxu0
    %12129 = vdwg.mxu0
    %12130 = vmatpush.bf16.msra.mxu0 %v9053
    %12131 = vmatpush.bf16.msra.mxu0 %v9034
    %12132 = vmatpush.bf16.msra.mxu0 %v9015
    %12133 = vmatpush.bf16.msra.mxu0 %v8996
    %12134 = vmatpush.bf16.msra.mxu0 %v8977
    %12135 = vmatpush.bf16.msra.mxu0 %v8958
    %12136 = vmatpush.bf16.msra.mxu0 %v8939
    %12137 = vmatpush.bf16.msra.mxu0 %v8920
    %12138 = vmatmul.bf16.gmra.mxu0 %v2802
    %v12139 = vpop.f32.mrf.mxu0
    %v12140 = vadd.f32 %v12127, %v12139
    %v12141 = vpop.f32.mrf.mxu0
    %12142 = vdwg.mxu0
    %12143 = vmatpush.bf16.msra.mxu0 %v7990
    %12144 = vmatpush.bf16.msra.mxu0 %v7971
    %12145 = vmatpush.bf16.msra.mxu0 %v7952
    %12146 = vmatpush.bf16.msra.mxu0 %v7933
    %12147 = vmatpush.bf16.msra.mxu0 %v7914
    %12148 = vmatpush.bf16.msra.mxu0 %v7895
    %12149 = vmatpush.bf16.msra.mxu0 %v7876
    %12150 = vmatpush.bf16.msra.mxu0 %v7857
    %12151 = vmatmul.bf16.gmra.mxu0 %v2795
    %v12152 = vpop.f32.mrf.mxu0
    %v12153 = vadd.f32 %v4107, %v12152
    %v12154 = vpop.f32.mrf.mxu0
    %12155 = vdwg.mxu0
    %12156 = vmatpush.bf16.msra.mxu0 %v8142
    %12157 = vmatpush.bf16.msra.mxu0 %v8123
    %12158 = vmatpush.bf16.msra.mxu0 %v8104
    %12159 = vmatpush.bf16.msra.mxu0 %v8085
    %12160 = vmatpush.bf16.msra.mxu0 %v8066
    %12161 = vmatpush.bf16.msra.mxu0 %v8047
    %12162 = vmatpush.bf16.msra.mxu0 %v8028
    %12163 = vmatpush.bf16.msra.mxu0 %v8009
    %12164 = vmatmul.bf16.gmra.mxu0 %v2796
    %v12165 = vpop.f32.mrf.mxu0
    %v12166 = vadd.f32 %v12153, %v12165
    %v12167 = vpop.f32.mrf.mxu0
    %12168 = vdwg.mxu0
    %12169 = vmatpush.bf16.msra.mxu0 %v8294
    %12170 = vmatpush.bf16.msra.mxu0 %v8275
    %12171 = vmatpush.bf16.msra.mxu0 %v8256
    %12172 = vmatpush.bf16.msra.mxu0 %v8237
    %12173 = vmatpush.bf16.msra.mxu0 %v8218
    %12174 = vmatpush.bf16.msra.mxu0 %v8199
    %12175 = vmatpush.bf16.msra.mxu0 %v8180
    %12176 = vmatpush.bf16.msra.mxu0 %v8161
    %12177 = vmatmul.bf16.gmra.mxu0 %v2797
    %v12178 = vpop.f32.mrf.mxu0
    %v12179 = vadd.f32 %v12166, %v12178
    %v12180 = vpop.f32.mrf.mxu0
    %12181 = vdwg.mxu0
    %12182 = vmatpush.bf16.msra.mxu0 %v8446
    %12183 = vmatpush.bf16.msra.mxu0 %v8427
    %12184 = vmatpush.bf16.msra.mxu0 %v8408
    %12185 = vmatpush.bf16.msra.mxu0 %v8389
    %12186 = vmatpush.bf16.msra.mxu0 %v8370
    %12187 = vmatpush.bf16.msra.mxu0 %v8351
    %12188 = vmatpush.bf16.msra.mxu0 %v8332
    %12189 = vmatpush.bf16.msra.mxu0 %v8313
    %12190 = vmatmul.bf16.gmra.mxu0 %v2798
    %v12191 = vpop.f32.mrf.mxu0
    %v12192 = vadd.f32 %v12179, %v12191
    %v12193 = vpop.f32.mrf.mxu0
    %12194 = vdwg.mxu0
    %12195 = vmatpush.bf16.msra.mxu0 %v8598
    %12196 = vmatpush.bf16.msra.mxu0 %v8579
    %12197 = vmatpush.bf16.msra.mxu0 %v8560
    %12198 = vmatpush.bf16.msra.mxu0 %v8541
    %12199 = vmatpush.bf16.msra.mxu0 %v8522
    %12200 = vmatpush.bf16.msra.mxu0 %v8503
    %12201 = vmatpush.bf16.msra.mxu0 %v8484
    %12202 = vmatpush.bf16.msra.mxu0 %v8465
    %12203 = vmatmul.bf16.gmra.mxu0 %v2799
    %v12204 = vpop.f32.mrf.mxu0
    %v12205 = vadd.f32 %v12192, %v12204
    %v12206 = vpop.f32.mrf.mxu0
    %12207 = vdwg.mxu0
    %12208 = vmatpush.bf16.msra.mxu0 %v8750
    %12209 = vmatpush.bf16.msra.mxu0 %v8731
    %12210 = vmatpush.bf16.msra.mxu0 %v8712
    %12211 = vmatpush.bf16.msra.mxu0 %v8693
    %12212 = vmatpush.bf16.msra.mxu0 %v8674
    %12213 = vmatpush.bf16.msra.mxu0 %v8655
    %12214 = vmatpush.bf16.msra.mxu0 %v8636
    %12215 = vmatpush.bf16.msra.mxu0 %v8617
    %12216 = vmatmul.bf16.gmra.mxu0 %v2800
    %v12217 = vpop.f32.mrf.mxu0
    %v12218 = vadd.f32 %v12205, %v12217
    %v12219 = vpop.f32.mrf.mxu0
    %12220 = vdwg.mxu0
    %12221 = vmatpush.bf16.msra.mxu0 %v8902
    %12222 = vmatpush.bf16.msra.mxu0 %v8883
    %12223 = vmatpush.bf16.msra.mxu0 %v8864
    %12224 = vmatpush.bf16.msra.mxu0 %v8845
    %12225 = vmatpush.bf16.msra.mxu0 %v8826
    %12226 = vmatpush.bf16.msra.mxu0 %v8807
    %12227 = vmatpush.bf16.msra.mxu0 %v8788
    %12228 = vmatpush.bf16.msra.mxu0 %v8769
    %12229 = vmatmul.bf16.gmra.mxu0 %v2801
    %v12230 = vpop.f32.mrf.mxu0
    %v12231 = vadd.f32 %v12218, %v12230
    %v12232 = vpop.f32.mrf.mxu0
    %12233 = vdwg.mxu0
    %12234 = vmatpush.bf16.msra.mxu0 %v9054
    %12235 = vmatpush.bf16.msra.mxu0 %v9035
    %12236 = vmatpush.bf16.msra.mxu0 %v9016
    %12237 = vmatpush.bf16.msra.mxu0 %v8997
    %12238 = vmatpush.bf16.msra.mxu0 %v8978
    %12239 = vmatpush.bf16.msra.mxu0 %v8959
    %12240 = vmatpush.bf16.msra.mxu0 %v8940
    %12241 = vmatpush.bf16.msra.mxu0 %v8921
    %12242 = vmatmul.bf16.gmra.mxu0 %v2802
    %v12243 = vpop.f32.mrf.mxu0
    %v12244 = vadd.f32 %v12231, %v12243
    %v12245 = vpop.f32.mrf.mxu0
    %12246 = vdwg.mxu0
    %v12247 = vtanh.pop %v10372
    %v12248 = vtanh.pop %v10476
    %v12249 = vtanh.pop %v10580
    %v12250 = vtanh.pop %v10684
    %v12251 = vtanh.pop %v10788
    %v12252 = vtanh.pop %v10892
    %v12253 = vtanh.pop %v10996
    %v12254 = vtanh.pop %v11100
    %v12255 = vtanh.pop %v11204
    %v12256 = vtanh.pop %v11308
    %v12257 = vtanh.pop %v11412
    %v12258 = vtanh.pop %v11516
    %v12259 = vtanh.pop %v11620
    %v12260 = vtanh.pop %v11724
    %v12261 = vtanh.pop %v11828
    %v12262 = vtanh.pop %v11932
    %v12263 = vtanh.pop %v12036
    %v12264 = vtanh.pop %v12140
    %v12265 = vtanh.pop %v12244
    %12266 = vst [vmem:[%s9] sm:$0xff] %v12247
    %12267 = vst [vmem:[%s9 + $0x8] sm:$0xff] %v12248
    %12268 = vst [vmem:[%s9 + $0x10] sm:$0xff] %v12249
    %12269 = vst [vmem:[%s9 + $0x18] sm:$0xff] %v12250
    %12270 = vst [vmem:[%s9 + $0x20] sm:$0xff] %v12251
    %12271 = vst [vmem:[%s9 + $0x28] sm:$0xff] %v12252
    %12272 = vst [vmem:[%s9 + $0x30] sm:$0xff] %v12253
    %12273 = vst [vmem:[%s9 + $0x38] sm:$0xff] %v12254
    %12274 = vst [vmem:[%s9 + $0x40] sm:$0xff] %v12255
    %12275 = vst [vmem:[%s9 + $0x48] sm:$0xff] %v12256
    %12276 = vst [vmem:[%s9 + $0x50] sm:$0xff] %v12257
    %12277 = vst [vmem:[%s9 + $0x58] sm:$0xff] %v12258
    %12278 = vst [vmem:[%s9 + $0x60] sm:$0xff] %v12259
    %12279 = vst [vmem:[%s9 + $0x68] sm:$0xff] %v12260
    %12280 = vst [vmem:[%s9 + $0x70] sm:$0xff] %v12261
    %12281 = vst [vmem:[%s9 + $0x78] sm:$0xff] %v12262
    %12282 = vst [vmem:[%s9 + $0x80] sm:$0xff] %v12263
    %12283 = vst [vmem:[%s9 + $0x88] sm:$0xff] %v12264
    %12284 = vst [vmem:[%s9 + $0x90] sm:$0xff] %v12265
    // Predicated region
    $region70: #{generator_forward.1} parent=1 // pred_check
      _
    $region71: #{generator_forward.1} parent=1 // pred_check_branch
      %12286 = sbr.rel (0) target = $region73
    $region72: #{generator_forward.1} parent=1 // pred_region
      _
    $region73: #{generator_forward.1} parent=1 // pred_fallthru
      _
    // Predicated region
    $region74: #{generator_forward.1} parent=1 // pred_check
      _
    $region75: #{generator_forward.1} parent=1 // pred_check_branch
      %12288 = sbr.rel (0) target = $region77
    $region76: #{generator_forward.1} parent=1 // pred_region
      _
    $region77: #{generator_forward.1} parent=1 // pred_fallthru
      _
    %12289 = vsyncpa [#allocation3], 1
    %12290 = vsyncpa [#allocation5], 1
    %12291 = vsyncpa [#allocation8], 1
    %12292 = vsyncpa [#allocation11], 1
    %12293 = vsyncpa [#allocation14], 1

</llo_original>
